<compile_context>
chip_gen: v6e
topology: v6e:2x2x1
jax: 0.10.0
libtpu: 0.0.40
codegen_flags: <defaults>
</compile_context>

<pallas_src>
import functools

import jax
import jax.numpy as jnp
from jax.experimental import pallas as pl
from jax.experimental.pallas import tpu as pltpu


def _upsample_conv_kernel(x_ref, w_ref, b_ref, o_ref, *,
                          s, k, p, H, W, Cin, Cout, Ho, Wo):
    # x_ref : (1, Cin, H, W)    VMEM, original input tile (NCHW)
    # w_ref : (Cout*Cin*k*k,)   SMEM, Conv2d weights flattened in OIHW order
    # b_ref : (Cout,)           SMEM, bias
    # o_ref : (1, Cout, Ho, Wo) VMEM, output tile (NCHW)

    # 0/1 selector matrices with the conv tap shift folded in:
    #   (E_kh @ x)[i, :] = padded-upsampled row (i + kh)
    #   (row @ F_kw)[:, j] = padded-upsampled col (j + kw)
    # i.e. tap(kh, kw) == pad(nearest_upsample(x))[kh:kh+Ho, kw:kw+Wo].
    io = jax.lax.broadcasted_iota(jnp.int32, (Ho, H), 0)   # output row
    im = jax.lax.broadcasted_iota(jnp.int32, (Ho, H), 1)   # source row
    E = []
    for kh in range(k):
        r = io + kh - p                                    # padded/upsampled row - p
        E.append(jnp.where((r >= s * im) & (r < s * im + s), 1.0, 0.0))

    jm = jax.lax.broadcasted_iota(jnp.int32, (W, Wo), 0)   # source col
    jo = jax.lax.broadcasted_iota(jnp.int32, (W, Wo), 1)   # output col
    F = []
    for kw in range(k):
        c = jo + kw - p                                    # padded/upsampled col - p
        F.append(jnp.where((c >= s * jm) & (c < s * jm + s), 1.0, 0.0))

    # Bias-initialized accumulators, one (Ho, Wo) plane per output channel.
    acc = [jnp.full((Ho, Wo), b_ref[co], dtype=jnp.float32) for co in range(Cout)]

    # Conv taps: selector matmuls on the MXU, scalar-weight FMAs on the VPU.
    for ci in range(Cin):
        x_ci = x_ref[0, ci]                                               # (H, W)
        for kh in range(k):
            row_view = jnp.dot(E[kh], x_ci,
                               preferred_element_type=jnp.float32)        # (Ho, W)
            for kw in range(k):
                tap = jnp.dot(row_view, F[kw],
                              preferred_element_type=jnp.float32)         # (Ho, Wo)
                for co in range(Cout):
                    w_s = w_ref[((co * Cin + ci) * k + kh) * k + kw]
                    acc[co] = acc[co] + w_s * tap

    for co in range(Cout):
        o_ref[0, co] = acc[co].astype(o_ref.dtype)


def conv_transpose2d_forward(x, weight, bias, *, stride, padding):
    """x: (N, Cin, H, W) f32, weight: (Cout, Cin, k, k) f32, bias: (Cout,) f32."""
    N, Cin, H, W = x.shape
    Cout, Cin_w, k, k2 = weight.shape
    assert Cin_w == Cin and k == k2
    s, p = stride, padding
    Ho = H * s + 2 * p - k + 1
    Wo = W * s + 2 * p - k + 1

    w_flat = weight.reshape(-1)          # OIHW, flattened for SMEM scalar reads

    kernel = functools.partial(_upsample_conv_kernel, s=s, k=k, p=p, H=H, W=W,
                               Cin=Cin, Cout=Cout, Ho=Ho, Wo=Wo)

    return pl.pallas_call(
        kernel,
        out_shape=jax.ShapeDtypeStruct((N, Cout, Ho, Wo), x.dtype),
        grid=(N,),
        in_specs=[
            pl.BlockSpec((1, Cin, H, W), lambda n: (n, 0, 0, 0)),      # x, NCHW
            pl.BlockSpec(memory_space=pltpu.MemorySpace.SMEM),          # weights
            pl.BlockSpec(memory_space=pltpu.MemorySpace.SMEM),          # bias
        ],
        out_specs=pl.BlockSpec((1, Cout, Ho, Wo), lambda n: (n, 0, 0, 0)),
        compiler_params=pltpu.CompilerParams(
            dimension_semantics=("parallel",),
            vmem_limit_bytes=32 * 1024 * 1024),
    )(x, w_flat, bias)


def _reference(x, weight, bias, *, stride, padding):
    """Pure-JAX reference of the same module (nearest upsample + Conv2d)."""
    s, p = stride, padding
    x_up = jnp.repeat(jnp.repeat(x, s, axis=2), s, axis=3)
    out = jax.lax.conv_general_dilated(
        x_up, weight, window_strides=(1, 1), padding=[(p, p), (p, p)],
        dimension_numbers=("NCHW", "OIHW", "NCHW"))
    return out + bias.reshape(1, -1, 1, 1)


if __name__ == "__main__":
    # module config: ConvTranspose2d(in_channel=4, out=8, kernel_size=3, stride=2, padding=1)
    in_channel, out_channel, kernel_size, stride, padding = 4, 8, 3, 2, 1
    N, H, W = 2, 16, 16

    key = jax.random.PRNGKey(0)
    kx, kw_, kb = jax.random.split(key, 3)
    x = jax.random.normal(kx, (N, in_channel, H, W), dtype=jnp.float32)
    fan_in = in_channel * kernel_size * kernel_size
    bound = 1.0 / float(fan_in) ** 0.5
    weight = jax.random.uniform(kw_, (out_channel, in_channel, kernel_size, kernel_size),
                                dtype=jnp.float32, minval=-bound, maxval=bound)
    bias = jax.random.uniform(kb, (out_channel,), dtype=jnp.float32,
                              minval=-bound, maxval=bound)

    y = conv_transpose2d_forward(x, weight, bias, stride=stride, padding=padding)
    y = jax.block_until_ready(y)

    y_ref = _reference(x, weight, bias, stride=stride, padding=padding)
    assert y.shape == y_ref.shape == (N, out_channel, H * stride, W * stride), y.shape
    assert jnp.allclose(y, y_ref, rtol=1e-4, atol=1e-4), "mismatch vs reference"

    print("KERNEL_OK")
</pallas_src>

<mosaic_0001>
module attributes {stable_mosaic.version = 11 : i64} {
  func.func @_upsample_conv_kernel(%arg0: i32, %arg1: memref<1x4x16x16xf32, #tpu.memory_space<vmem>>, %arg2: memref<288xf32, #tpu.memory_space<smem>>, %arg3: memref<8xf32, #tpu.memory_space<smem>>, %arg4: memref<1x8x32x32xf32, #tpu.memory_space<vmem>>) attributes {dimension_semantics = [#tpu.dimension_semantics<parallel>], iteration_bounds = array<i64: 2>, scalar_prefetch = 0 : i64, scratch_operands = 0 : i64, tpu.core_type = #tpu.core_type<tc>, window_params = [{transform_indices = @transform_0, window_bounds = array<i64: 1, 4, 16, 16>}, {transform_indices = @transform_1, window_bounds = array<i64: 288>}, {transform_indices = @transform_2, window_bounds = array<i64: 8>}, {transform_indices = @transform_3, window_bounds = array<i64: 1, 8, 32, 32>}]} {
    %0 = tpu.iota {dimensions = array<i32: 0>} : vector<32x16xi32>
    %1 = tpu.iota {dimensions = array<i32: 1>} : vector<32x16xi32>
    %c0_i32 = arith.constant 0 : i32
    %2 = vector.broadcast %c0_i32 : i32 to vector<32x16xi32>
    %3 = arith.addi %0, %2 : vector<32x16xi32>
    %c1_i32 = arith.constant 1 : i32
    %4 = vector.broadcast %c1_i32 : i32 to vector<32x16xi32>
    %5 = arith.subi %3, %4 : vector<32x16xi32>
    %c2_i32 = arith.constant 2 : i32
    %6 = vector.broadcast %c2_i32 : i32 to vector<32x16xi32>
    %7 = arith.muli %6, %1 : vector<32x16xi32>
    %8 = arith.cmpi sge, %5, %7 : vector<32x16xi32>
    %c2_i32_0 = arith.constant 2 : i32
    %9 = vector.broadcast %c2_i32_0 : i32 to vector<32x16xi32>
    %10 = arith.muli %9, %1 : vector<32x16xi32>
    %c2_i32_1 = arith.constant 2 : i32
    %11 = vector.broadcast %c2_i32_1 : i32 to vector<32x16xi32>
    %12 = arith.addi %10, %11 : vector<32x16xi32>
    %13 = arith.cmpi slt, %5, %12 : vector<32x16xi32>
    %14 = arith.andi %8, %13 : vector<32x16xi1>
    %cst = arith.constant 1.000000e+00 : f32
    %cst_2 = arith.constant 0.000000e+00 : f32
    %15 = vector.broadcast %cst : f32 to vector<32x16xf32>
    %16 = vector.broadcast %cst_2 : f32 to vector<32x16xf32>
    %17 = arith.select %14, %15, %16 : vector<32x16xi1>, vector<32x16xf32>
    %c1_i32_3 = arith.constant 1 : i32
    %18 = vector.broadcast %c1_i32_3 : i32 to vector<32x16xi32>
    %19 = arith.addi %0, %18 : vector<32x16xi32>
    %c1_i32_4 = arith.constant 1 : i32
    %20 = vector.broadcast %c1_i32_4 : i32 to vector<32x16xi32>
    %21 = arith.subi %19, %20 : vector<32x16xi32>
    %c2_i32_5 = arith.constant 2 : i32
    %22 = vector.broadcast %c2_i32_5 : i32 to vector<32x16xi32>
    %23 = arith.muli %22, %1 : vector<32x16xi32>
    %24 = arith.cmpi sge, %21, %23 : vector<32x16xi32>
    %c2_i32_6 = arith.constant 2 : i32
    %25 = vector.broadcast %c2_i32_6 : i32 to vector<32x16xi32>
    %26 = arith.muli %25, %1 : vector<32x16xi32>
    %c2_i32_7 = arith.constant 2 : i32
    %27 = vector.broadcast %c2_i32_7 : i32 to vector<32x16xi32>
    %28 = arith.addi %26, %27 : vector<32x16xi32>
    %29 = arith.cmpi slt, %21, %28 : vector<32x16xi32>
    %30 = arith.andi %24, %29 : vector<32x16xi1>
    %cst_8 = arith.constant 1.000000e+00 : f32
    %cst_9 = arith.constant 0.000000e+00 : f32
    %31 = vector.broadcast %cst_8 : f32 to vector<32x16xf32>
    %32 = vector.broadcast %cst_9 : f32 to vector<32x16xf32>
    %33 = arith.select %30, %31, %32 : vector<32x16xi1>, vector<32x16xf32>
    %c2_i32_10 = arith.constant 2 : i32
    %34 = vector.broadcast %c2_i32_10 : i32 to vector<32x16xi32>
    %35 = arith.addi %0, %34 : vector<32x16xi32>
    %c1_i32_11 = arith.constant 1 : i32
    %36 = vector.broadcast %c1_i32_11 : i32 to vector<32x16xi32>
    %37 = arith.subi %35, %36 : vector<32x16xi32>
    %c2_i32_12 = arith.constant 2 : i32
    %38 = vector.broadcast %c2_i32_12 : i32 to vector<32x16xi32>
    %39 = arith.muli %38, %1 : vector<32x16xi32>
    %40 = arith.cmpi sge, %37, %39 : vector<32x16xi32>
    %c2_i32_13 = arith.constant 2 : i32
    %41 = vector.broadcast %c2_i32_13 : i32 to vector<32x16xi32>
    %42 = arith.muli %41, %1 : vector<32x16xi32>
    %c2_i32_14 = arith.constant 2 : i32
    %43 = vector.broadcast %c2_i32_14 : i32 to vector<32x16xi32>
    %44 = arith.addi %42, %43 : vector<32x16xi32>
    %45 = arith.cmpi slt, %37, %44 : vector<32x16xi32>
    %46 = arith.andi %40, %45 : vector<32x16xi1>
    %cst_15 = arith.constant 1.000000e+00 : f32
    %cst_16 = arith.constant 0.000000e+00 : f32
    %47 = vector.broadcast %cst_15 : f32 to vector<32x16xf32>
    %48 = vector.broadcast %cst_16 : f32 to vector<32x16xf32>
    %49 = arith.select %46, %47, %48 : vector<32x16xi1>, vector<32x16xf32>
    %50 = tpu.iota {dimensions = array<i32: 0>} : vector<16x32xi32>
    %51 = tpu.iota {dimensions = array<i32: 1>} : vector<16x32xi32>
    %c0_i32_17 = arith.constant 0 : i32
    %52 = vector.broadcast %c0_i32_17 : i32 to vector<16x32xi32>
    %53 = arith.addi %51, %52 : vector<16x32xi32>
    %c1_i32_18 = arith.constant 1 : i32
    %54 = vector.broadcast %c1_i32_18 : i32 to vector<16x32xi32>
    %55 = arith.subi %53, %54 : vector<16x32xi32>
    %c2_i32_19 = arith.constant 2 : i32
    %56 = vector.broadcast %c2_i32_19 : i32 to vector<16x32xi32>
    %57 = arith.muli %56, %50 : vector<16x32xi32>
    %58 = arith.cmpi sge, %55, %57 : vector<16x32xi32>
    %c2_i32_20 = arith.constant 2 : i32
    %59 = vector.broadcast %c2_i32_20 : i32 to vector<16x32xi32>
    %60 = arith.muli %59, %50 : vector<16x32xi32>
    %c2_i32_21 = arith.constant 2 : i32
    %61 = vector.broadcast %c2_i32_21 : i32 to vector<16x32xi32>
    %62 = arith.addi %60, %61 : vector<16x32xi32>
    %63 = arith.cmpi slt, %55, %62 : vector<16x32xi32>
    %64 = arith.andi %58, %63 : vector<16x32xi1>
    %cst_22 = arith.constant 1.000000e+00 : f32
    %cst_23 = arith.constant 0.000000e+00 : f32
    %65 = vector.broadcast %cst_22 : f32 to vector<16x32xf32>
    %66 = vector.broadcast %cst_23 : f32 to vector<16x32xf32>
    %67 = arith.select %64, %65, %66 : vector<16x32xi1>, vector<16x32xf32>
    %c1_i32_24 = arith.constant 1 : i32
    %68 = vector.broadcast %c1_i32_24 : i32 to vector<16x32xi32>
    %69 = arith.addi %51, %68 : vector<16x32xi32>
    %c1_i32_25 = arith.constant 1 : i32
    %70 = vector.broadcast %c1_i32_25 : i32 to vector<16x32xi32>
    %71 = arith.subi %69, %70 : vector<16x32xi32>
    %c2_i32_26 = arith.constant 2 : i32
    %72 = vector.broadcast %c2_i32_26 : i32 to vector<16x32xi32>
    %73 = arith.muli %72, %50 : vector<16x32xi32>
    %74 = arith.cmpi sge, %71, %73 : vector<16x32xi32>
    %c2_i32_27 = arith.constant 2 : i32
    %75 = vector.broadcast %c2_i32_27 : i32 to vector<16x32xi32>
    %76 = arith.muli %75, %50 : vector<16x32xi32>
    %c2_i32_28 = arith.constant 2 : i32
    %77 = vector.broadcast %c2_i32_28 : i32 to vector<16x32xi32>
    %78 = arith.addi %76, %77 : vector<16x32xi32>
    %79 = arith.cmpi slt, %71, %78 : vector<16x32xi32>
    %80 = arith.andi %74, %79 : vector<16x32xi1>
    %cst_29 = arith.constant 1.000000e+00 : f32
    %cst_30 = arith.constant 0.000000e+00 : f32
    %81 = vector.broadcast %cst_29 : f32 to vector<16x32xf32>
    %82 = vector.broadcast %cst_30 : f32 to vector<16x32xf32>
    %83 = arith.select %80, %81, %82 : vector<16x32xi1>, vector<16x32xf32>
    %c2_i32_31 = arith.constant 2 : i32
    %84 = vector.broadcast %c2_i32_31 : i32 to vector<16x32xi32>
    %85 = arith.addi %51, %84 : vector<16x32xi32>
    %c1_i32_32 = arith.constant 1 : i32
    %86 = vector.broadcast %c1_i32_32 : i32 to vector<16x32xi32>
    %87 = arith.subi %85, %86 : vector<16x32xi32>
    %c2_i32_33 = arith.constant 2 : i32
    %88 = vector.broadcast %c2_i32_33 : i32 to vector<16x32xi32>
    %89 = arith.muli %88, %50 : vector<16x32xi32>
    %90 = arith.cmpi sge, %87, %89 : vector<16x32xi32>
    %c2_i32_34 = arith.constant 2 : i32
    %91 = vector.broadcast %c2_i32_34 : i32 to vector<16x32xi32>
    %92 = arith.muli %91, %50 : vector<16x32xi32>
    %c2_i32_35 = arith.constant 2 : i32
    %93 = vector.broadcast %c2_i32_35 : i32 to vector<16x32xi32>
    %94 = arith.addi %92, %93 : vector<16x32xi32>
    %95 = arith.cmpi slt, %87, %94 : vector<16x32xi32>
    %96 = arith.andi %90, %95 : vector<16x32xi1>
    %cst_36 = arith.constant 1.000000e+00 : f32
    %cst_37 = arith.constant 0.000000e+00 : f32
    %97 = vector.broadcast %cst_36 : f32 to vector<16x32xf32>
    %98 = vector.broadcast %cst_37 : f32 to vector<16x32xf32>
    %99 = arith.select %96, %97, %98 : vector<16x32xi1>, vector<16x32xf32>
    %c0 = arith.constant 0 : index
    %100 = memref.load %arg3[%c0] : memref<8xf32, #tpu.memory_space<smem>>
    %101 = vector.broadcast %100 : f32 to vector<32x32xf32>
    %c1 = arith.constant 1 : index
    %102 = memref.load %arg3[%c1] : memref<8xf32, #tpu.memory_space<smem>>
    %103 = vector.broadcast %102 : f32 to vector<32x32xf32>
    %c2 = arith.constant 2 : index
    %104 = memref.load %arg3[%c2] : memref<8xf32, #tpu.memory_space<smem>>
    %105 = vector.broadcast %104 : f32 to vector<32x32xf32>
    %c3 = arith.constant 3 : index
    %106 = memref.load %arg3[%c3] : memref<8xf32, #tpu.memory_space<smem>>
    %107 = vector.broadcast %106 : f32 to vector<32x32xf32>
    %c4 = arith.constant 4 : index
    %108 = memref.load %arg3[%c4] : memref<8xf32, #tpu.memory_space<smem>>
    %109 = vector.broadcast %108 : f32 to vector<32x32xf32>
    %c5 = arith.constant 5 : index
    %110 = memref.load %arg3[%c5] : memref<8xf32, #tpu.memory_space<smem>>
    %111 = vector.broadcast %110 : f32 to vector<32x32xf32>
    %c6 = arith.constant 6 : index
    %112 = memref.load %arg3[%c6] : memref<8xf32, #tpu.memory_space<smem>>
    %113 = vector.broadcast %112 : f32 to vector<32x32xf32>
    %c7 = arith.constant 7 : index
    %114 = memref.load %arg3[%c7] : memref<8xf32, #tpu.memory_space<smem>>
    %115 = vector.broadcast %114 : f32 to vector<32x32xf32>
    %c0_38 = arith.constant 0 : index
    %c0_39 = arith.constant 0 : index
    %c0_40 = arith.constant 0 : index
    %c0_41 = arith.constant 0 : index
    %116 = vector.load %arg1[%c0_38, %c0_39, %c0_40, %c0_41] : memref<1x4x16x16xf32, #tpu.memory_space<vmem>>, vector<1x1x16x16xf32>
    %117 = vector.shape_cast %116 : vector<1x1x16x16xf32> to vector<16x16xf32>
    %cst_42 = arith.constant dense<0.000000e+00> : vector<32x16xf32>
    %118 = tpu.matmul %17, %117, %cst_42 {dimension_numbers = #tpu.dot_dimension_numbers<[1], [0], [0], [1], [0, 0, 1, 1], [], []>} : vector<32x16xf32>, vector<16x16xf32>, vector<32x16xf32> -> vector<32x16xf32>
    %cst_43 = arith.constant dense<0.000000e+00> : vector<32x32xf32>
    %119 = tpu.matmul %118, %67, %cst_43 {dimension_numbers = #tpu.dot_dimension_numbers<[1], [0], [0], [1], [0, 0, 1, 1], [], []>} : vector<32x16xf32>, vector<16x32xf32>, vector<32x32xf32> -> vector<32x32xf32>
    %c0_44 = arith.constant 0 : index
    %120 = memref.load %arg2[%c0_44] : memref<288xf32, #tpu.memory_space<smem>>
    %121 = vector.broadcast %120 : f32 to vector<32x32xf32>
    %122 = arith.mulf %121, %119 : vector<32x32xf32>
    %123 = arith.addf %101, %122 : vector<32x32xf32>
    %c36 = arith.constant 36 : index
    %124 = memref.load %arg2[%c36] : memref<288xf32, #tpu.memory_space<smem>>
    %125 = vector.broadcast %124 : f32 to vector<32x32xf32>
    %126 = arith.mulf %125, %119 : vector<32x32xf32>
    %127 = arith.addf %103, %126 : vector<32x32xf32>
    %c72 = arith.constant 72 : index
    %128 = memref.load %arg2[%c72] : memref<288xf32, #tpu.memory_space<smem>>
    %129 = vector.broadcast %128 : f32 to vector<32x32xf32>
    %130 = arith.mulf %129, %119 : vector<32x32xf32>
    %131 = arith.addf %105, %130 : vector<32x32xf32>
    %c108 = arith.constant 108 : index
    %132 = memref.load %arg2[%c108] : memref<288xf32, #tpu.memory_space<smem>>
    %133 = vector.broadcast %132 : f32 to vector<32x32xf32>
    %134 = arith.mulf %133, %119 : vector<32x32xf32>
    %135 = arith.addf %107, %134 : vector<32x32xf32>
    %c144 = arith.constant 144 : index
    %136 = memref.load %arg2[%c144] : memref<288xf32, #tpu.memory_space<smem>>
    %137 = vector.broadcast %136 : f32 to vector<32x32xf32>
    %138 = arith.mulf %137, %119 : vector<32x32xf32>
    %139 = arith.addf %109, %138 : vector<32x32xf32>
    %c180 = arith.constant 180 : index
    %140 = memref.load %arg2[%c180] : memref<288xf32, #tpu.memory_space<smem>>
    %141 = vector.broadcast %140 : f32 to vector<32x32xf32>
    %142 = arith.mulf %141, %119 : vector<32x32xf32>
    %143 = arith.addf %111, %142 : vector<32x32xf32>
    %c216 = arith.constant 216 : index
    %144 = memref.load %arg2[%c216] : memref<288xf32, #tpu.memory_space<smem>>
    %145 = vector.broadcast %144 : f32 to vector<32x32xf32>
    %146 = arith.mulf %145, %119 : vector<32x32xf32>
    %147 = arith.addf %113, %146 : vector<32x32xf32>
    %c252 = arith.constant 252 : index
    %148 = memref.load %arg2[%c252] : memref<288xf32, #tpu.memory_space<smem>>
    %149 = vector.broadcast %148 : f32 to vector<32x32xf32>
    %150 = arith.mulf %149, %119 : vector<32x32xf32>
    %151 = arith.addf %115, %150 : vector<32x32xf32>
    %cst_45 = arith.constant dense<0.000000e+00> : vector<32x32xf32>
    %152 = tpu.matmul %118, %83, %cst_45 {dimension_numbers = #tpu.dot_dimension_numbers<[1], [0], [0], [1], [0, 0, 1, 1], [], []>} : vector<32x16xf32>, vector<16x32xf32>, vector<32x32xf32> -> vector<32x32xf32>
    %c1_46 = arith.constant 1 : index
    %153 = memref.load %arg2[%c1_46] : memref<288xf32, #tpu.memory_space<smem>>
    %154 = vector.broadcast %153 : f32 to vector<32x32xf32>
    %155 = arith.mulf %154, %152 : vector<32x32xf32>
    %156 = arith.addf %123, %155 : vector<32x32xf32>
    %c37 = arith.constant 37 : index
    %157 = memref.load %arg2[%c37] : memref<288xf32, #tpu.memory_space<smem>>
    %158 = vector.broadcast %157 : f32 to vector<32x32xf32>
    %159 = arith.mulf %158, %152 : vector<32x32xf32>
    %160 = arith.addf %127, %159 : vector<32x32xf32>
    %c73 = arith.constant 73 : index
    %161 = memref.load %arg2[%c73] : memref<288xf32, #tpu.memory_space<smem>>
    %162 = vector.broadcast %161 : f32 to vector<32x32xf32>
    %163 = arith.mulf %162, %152 : vector<32x32xf32>
    %164 = arith.addf %131, %163 : vector<32x32xf32>
    %c109 = arith.constant 109 : index
    %165 = memref.load %arg2[%c109] : memref<288xf32, #tpu.memory_space<smem>>
    %166 = vector.broadcast %165 : f32 to vector<32x32xf32>
    %167 = arith.mulf %166, %152 : vector<32x32xf32>
    %168 = arith.addf %135, %167 : vector<32x32xf32>
    %c145 = arith.constant 145 : index
    %169 = memref.load %arg2[%c145] : memref<288xf32, #tpu.memory_space<smem>>
    %170 = vector.broadcast %169 : f32 to vector<32x32xf32>
    %171 = arith.mulf %170, %152 : vector<32x32xf32>
    %172 = arith.addf %139, %171 : vector<32x32xf32>
    %c181 = arith.constant 181 : index
    %173 = memref.load %arg2[%c181] : memref<288xf32, #tpu.memory_space<smem>>
    %174 = vector.broadcast %173 : f32 to vector<32x32xf32>
    %175 = arith.mulf %174, %152 : vector<32x32xf32>
    %176 = arith.addf %143, %175 : vector<32x32xf32>
    %c217 = arith.constant 217 : index
    %177 = memref.load %arg2[%c217] : memref<288xf32, #tpu.memory_space<smem>>
    %178 = vector.broadcast %177 : f32 to vector<32x32xf32>
    %179 = arith.mulf %178, %152 : vector<32x32xf32>
    %180 = arith.addf %147, %179 : vector<32x32xf32>
    %c253 = arith.constant 253 : index
    %181 = memref.load %arg2[%c253] : memref<288xf32, #tpu.memory_space<smem>>
    %182 = vector.broadcast %181 : f32 to vector<32x32xf32>
    %183 = arith.mulf %182, %152 : vector<32x32xf32>
    %184 = arith.addf %151, %183 : vector<32x32xf32>
    %cst_47 = arith.constant dense<0.000000e+00> : vector<32x32xf32>
    %185 = tpu.matmul %118, %99, %cst_47 {dimension_numbers = #tpu.dot_dimension_numbers<[1], [0], [0], [1], [0, 0, 1, 1], [], []>} : vector<32x16xf32>, vector<16x32xf32>, vector<32x32xf32> -> vector<32x32xf32>
    %c2_48 = arith.constant 2 : index
    %186 = memref.load %arg2[%c2_48] : memref<288xf32, #tpu.memory_space<smem>>
    %187 = vector.broadcast %186 : f32 to vector<32x32xf32>
    %188 = arith.mulf %187, %185 : vector<32x32xf32>
    %189 = arith.addf %156, %188 : vector<32x32xf32>
    %c38 = arith.constant 38 : index
    %190 = memref.load %arg2[%c38] : memref<288xf32, #tpu.memory_space<smem>>
    %191 = vector.broadcast %190 : f32 to vector<32x32xf32>
    %192 = arith.mulf %191, %185 : vector<32x32xf32>
    %193 = arith.addf %160, %192 : vector<32x32xf32>
    %c74 = arith.constant 74 : index
    %194 = memref.load %arg2[%c74] : memref<288xf32, #tpu.memory_space<smem>>
    %195 = vector.broadcast %194 : f32 to vector<32x32xf32>
    %196 = arith.mulf %195, %185 : vector<32x32xf32>
    %197 = arith.addf %164, %196 : vector<32x32xf32>
    %c110 = arith.constant 110 : index
    %198 = memref.load %arg2[%c110] : memref<288xf32, #tpu.memory_space<smem>>
    %199 = vector.broadcast %198 : f32 to vector<32x32xf32>
    %200 = arith.mulf %199, %185 : vector<32x32xf32>
    %201 = arith.addf %168, %200 : vector<32x32xf32>
    %c146 = arith.constant 146 : index
    %202 = memref.load %arg2[%c146] : memref<288xf32, #tpu.memory_space<smem>>
    %203 = vector.broadcast %202 : f32 to vector<32x32xf32>
    %204 = arith.mulf %203, %185 : vector<32x32xf32>
    %205 = arith.addf %172, %204 : vector<32x32xf32>
    %c182 = arith.constant 182 : index
    %206 = memref.load %arg2[%c182] : memref<288xf32, #tpu.memory_space<smem>>
    %207 = vector.broadcast %206 : f32 to vector<32x32xf32>
    %208 = arith.mulf %207, %185 : vector<32x32xf32>
    %209 = arith.addf %176, %208 : vector<32x32xf32>
    %c218 = arith.constant 218 : index
    %210 = memref.load %arg2[%c218] : memref<288xf32, #tpu.memory_space<smem>>
    %211 = vector.broadcast %210 : f32 to vector<32x32xf32>
    %212 = arith.mulf %211, %185 : vector<32x32xf32>
    %213 = arith.addf %180, %212 : vector<32x32xf32>
    %c254 = arith.constant 254 : index
    %214 = memref.load %arg2[%c254] : memref<288xf32, #tpu.memory_space<smem>>
    %215 = vector.broadcast %214 : f32 to vector<32x32xf32>
    %216 = arith.mulf %215, %185 : vector<32x32xf32>
    %217 = arith.addf %184, %216 : vector<32x32xf32>
    %cst_49 = arith.constant dense<0.000000e+00> : vector<32x16xf32>
    %218 = tpu.matmul %33, %117, %cst_49 {dimension_numbers = #tpu.dot_dimension_numbers<[1], [0], [0], [1], [0, 0, 1, 1], [], []>} : vector<32x16xf32>, vector<16x16xf32>, vector<32x16xf32> -> vector<32x16xf32>
    %cst_50 = arith.constant dense<0.000000e+00> : vector<32x32xf32>
    %219 = tpu.matmul %218, %67, %cst_50 {dimension_numbers = #tpu.dot_dimension_numbers<[1], [0], [0], [1], [0, 0, 1, 1], [], []>} : vector<32x16xf32>, vector<16x32xf32>, vector<32x32xf32> -> vector<32x32xf32>
    %c3_51 = arith.constant 3 : index
    %220 = memref.load %arg2[%c3_51] : memref<288xf32, #tpu.memory_space<smem>>
    %221 = vector.broadcast %220 : f32 to vector<32x32xf32>
    %222 = arith.mulf %221, %219 : vector<32x32xf32>
    %223 = arith.addf %189, %222 : vector<32x32xf32>
    %c39 = arith.constant 39 : index
    %224 = memref.load %arg2[%c39] : memref<288xf32, #tpu.memory_space<smem>>
    %225 = vector.broadcast %224 : f32 to vector<32x32xf32>
    %226 = arith.mulf %225, %219 : vector<32x32xf32>
    %227 = arith.addf %193, %226 : vector<32x32xf32>
    %c75 = arith.constant 75 : index
    %228 = memref.load %arg2[%c75] : memref<288xf32, #tpu.memory_space<smem>>
    %229 = vector.broadcast %228 : f32 to vector<32x32xf32>
    %230 = arith.mulf %229, %219 : vector<32x32xf32>
    %231 = arith.addf %197, %230 : vector<32x32xf32>
    %c111 = arith.constant 111 : index
    %232 = memref.load %arg2[%c111] : memref<288xf32, #tpu.memory_space<smem>>
    %233 = vector.broadcast %232 : f32 to vector<32x32xf32>
    %234 = arith.mulf %233, %219 : vector<32x32xf32>
    %235 = arith.addf %201, %234 : vector<32x32xf32>
    %c147 = arith.constant 147 : index
    %236 = memref.load %arg2[%c147] : memref<288xf32, #tpu.memory_space<smem>>
    %237 = vector.broadcast %236 : f32 to vector<32x32xf32>
    %238 = arith.mulf %237, %219 : vector<32x32xf32>
    %239 = arith.addf %205, %238 : vector<32x32xf32>
    %c183 = arith.constant 183 : index
    %240 = memref.load %arg2[%c183] : memref<288xf32, #tpu.memory_space<smem>>
    %241 = vector.broadcast %240 : f32 to vector<32x32xf32>
    %242 = arith.mulf %241, %219 : vector<32x32xf32>
    %243 = arith.addf %209, %242 : vector<32x32xf32>
    %c219 = arith.constant 219 : index
    %244 = memref.load %arg2[%c219] : memref<288xf32, #tpu.memory_space<smem>>
    %245 = vector.broadcast %244 : f32 to vector<32x32xf32>
    %246 = arith.mulf %245, %219 : vector<32x32xf32>
    %247 = arith.addf %213, %246 : vector<32x32xf32>
    %c255 = arith.constant 255 : index
    %248 = memref.load %arg2[%c255] : memref<288xf32, #tpu.memory_space<smem>>
    %249 = vector.broadcast %248 : f32 to vector<32x32xf32>
    %250 = arith.mulf %249, %219 : vector<32x32xf32>
    %251 = arith.addf %217, %250 : vector<32x32xf32>
    %cst_52 = arith.constant dense<0.000000e+00> : vector<32x32xf32>
    %252 = tpu.matmul %218, %83, %cst_52 {dimension_numbers = #tpu.dot_dimension_numbers<[1], [0], [0], [1], [0, 0, 1, 1], [], []>} : vector<32x16xf32>, vector<16x32xf32>, vector<32x32xf32> -> vector<32x32xf32>
    %c4_53 = arith.constant 4 : index
    %253 = memref.load %arg2[%c4_53] : memref<288xf32, #tpu.memory_space<smem>>
    %254 = vector.broadcast %253 : f32 to vector<32x32xf32>
    %255 = arith.mulf %254, %252 : vector<32x32xf32>
    %256 = arith.addf %223, %255 : vector<32x32xf32>
    %c40 = arith.constant 40 : index
    %257 = memref.load %arg2[%c40] : memref<288xf32, #tpu.memory_space<smem>>
    %258 = vector.broadcast %257 : f32 to vector<32x32xf32>
    %259 = arith.mulf %258, %252 : vector<32x32xf32>
    %260 = arith.addf %227, %259 : vector<32x32xf32>
    %c76 = arith.constant 76 : index
    %261 = memref.load %arg2[%c76] : memref<288xf32, #tpu.memory_space<smem>>
    %262 = vector.broadcast %261 : f32 to vector<32x32xf32>
    %263 = arith.mulf %262, %252 : vector<32x32xf32>
    %264 = arith.addf %231, %263 : vector<32x32xf32>
    %c112 = arith.constant 112 : index
    %265 = memref.load %arg2[%c112] : memref<288xf32, #tpu.memory_space<smem>>
    %266 = vector.broadcast %265 : f32 to vector<32x32xf32>
    %267 = arith.mulf %266, %252 : vector<32x32xf32>
    %268 = arith.addf %235, %267 : vector<32x32xf32>
    %c148 = arith.constant 148 : index
    %269 = memref.load %arg2[%c148] : memref<288xf32, #tpu.memory_space<smem>>
    %270 = vector.broadcast %269 : f32 to vector<32x32xf32>
    %271 = arith.mulf %270, %252 : vector<32x32xf32>
    %272 = arith.addf %239, %271 : vector<32x32xf32>
    %c184 = arith.constant 184 : index
    %273 = memref.load %arg2[%c184] : memref<288xf32, #tpu.memory_space<smem>>
    %274 = vector.broadcast %273 : f32 to vector<32x32xf32>
    %275 = arith.mulf %274, %252 : vector<32x32xf32>
    %276 = arith.addf %243, %275 : vector<32x32xf32>
    %c220 = arith.constant 220 : index
    %277 = memref.load %arg2[%c220] : memref<288xf32, #tpu.memory_space<smem>>
    %278 = vector.broadcast %277 : f32 to vector<32x32xf32>
    %279 = arith.mulf %278, %252 : vector<32x32xf32>
    %280 = arith.addf %247, %279 : vector<32x32xf32>
    %c256 = arith.constant 256 : index
    %281 = memref.load %arg2[%c256] : memref<288xf32, #tpu.memory_space<smem>>
    %282 = vector.broadcast %281 : f32 to vector<32x32xf32>
    %283 = arith.mulf %282, %252 : vector<32x32xf32>
    %284 = arith.addf %251, %283 : vector<32x32xf32>
    %cst_54 = arith.constant dense<0.000000e+00> : vector<32x32xf32>
    %285 = tpu.matmul %218, %99, %cst_54 {dimension_numbers = #tpu.dot_dimension_numbers<[1], [0], [0], [1], [0, 0, 1, 1], [], []>} : vector<32x16xf32>, vector<16x32xf32>, vector<32x32xf32> -> vector<32x32xf32>
    %c5_55 = arith.constant 5 : index
    %286 = memref.load %arg2[%c5_55] : memref<288xf32, #tpu.memory_space<smem>>
    %287 = vector.broadcast %286 : f32 to vector<32x32xf32>
    %288 = arith.mulf %287, %285 : vector<32x32xf32>
    %289 = arith.addf %256, %288 : vector<32x32xf32>
    %c41 = arith.constant 41 : index
    %290 = memref.load %arg2[%c41] : memref<288xf32, #tpu.memory_space<smem>>
    %291 = vector.broadcast %290 : f32 to vector<32x32xf32>
    %292 = arith.mulf %291, %285 : vector<32x32xf32>
    %293 = arith.addf %260, %292 : vector<32x32xf32>
    %c77 = arith.constant 77 : index
    %294 = memref.load %arg2[%c77] : memref<288xf32, #tpu.memory_space<smem>>
    %295 = vector.broadcast %294 : f32 to vector<32x32xf32>
    %296 = arith.mulf %295, %285 : vector<32x32xf32>
    %297 = arith.addf %264, %296 : vector<32x32xf32>
    %c113 = arith.constant 113 : index
    %298 = memref.load %arg2[%c113] : memref<288xf32, #tpu.memory_space<smem>>
    %299 = vector.broadcast %298 : f32 to vector<32x32xf32>
    %300 = arith.mulf %299, %285 : vector<32x32xf32>
    %301 = arith.addf %268, %300 : vector<32x32xf32>
    %c149 = arith.constant 149 : index
    %302 = memref.load %arg2[%c149] : memref<288xf32, #tpu.memory_space<smem>>
    %303 = vector.broadcast %302 : f32 to vector<32x32xf32>
    %304 = arith.mulf %303, %285 : vector<32x32xf32>
    %305 = arith.addf %272, %304 : vector<32x32xf32>
    %c185 = arith.constant 185 : index
    %306 = memref.load %arg2[%c185] : memref<288xf32, #tpu.memory_space<smem>>
    %307 = vector.broadcast %306 : f32 to vector<32x32xf32>
    %308 = arith.mulf %307, %285 : vector<32x32xf32>
    %309 = arith.addf %276, %308 : vector<32x32xf32>
    %c221 = arith.constant 221 : index
    %310 = memref.load %arg2[%c221] : memref<288xf32, #tpu.memory_space<smem>>
    %311 = vector.broadcast %310 : f32 to vector<32x32xf32>
    %312 = arith.mulf %311, %285 : vector<32x32xf32>
    %313 = arith.addf %280, %312 : vector<32x32xf32>
    %c257 = arith.constant 257 : index
    %314 = memref.load %arg2[%c257] : memref<288xf32, #tpu.memory_space<smem>>
    %315 = vector.broadcast %314 : f32 to vector<32x32xf32>
    %316 = arith.mulf %315, %285 : vector<32x32xf32>
    %317 = arith.addf %284, %316 : vector<32x32xf32>
    %cst_56 = arith.constant dense<0.000000e+00> : vector<32x16xf32>
    %318 = tpu.matmul %49, %117, %cst_56 {dimension_numbers = #tpu.dot_dimension_numbers<[1], [0], [0], [1], [0, 0, 1, 1], [], []>} : vector<32x16xf32>, vector<16x16xf32>, vector<32x16xf32> -> vector<32x16xf32>
    %cst_57 = arith.constant dense<0.000000e+00> : vector<32x32xf32>
    %319 = tpu.matmul %318, %67, %cst_57 {dimension_numbers = #tpu.dot_dimension_numbers<[1], [0], [0], [1], [0, 0, 1, 1], [], []>} : vector<32x16xf32>, vector<16x32xf32>, vector<32x32xf32> -> vector<32x32xf32>
    %c6_58 = arith.constant 6 : index
    %320 = memref.load %arg2[%c6_58] : memref<288xf32, #tpu.memory_space<smem>>
    %321 = vector.broadcast %320 : f32 to vector<32x32xf32>
    %322 = arith.mulf %321, %319 : vector<32x32xf32>
    %323 = arith.addf %289, %322 : vector<32x32xf32>
    %c42 = arith.constant 42 : index
    %324 = memref.load %arg2[%c42] : memref<288xf32, #tpu.memory_space<smem>>
    %325 = vector.broadcast %324 : f32 to vector<32x32xf32>
    %326 = arith.mulf %325, %319 : vector<32x32xf32>
    %327 = arith.addf %293, %326 : vector<32x32xf32>
    %c78 = arith.constant 78 : index
    %328 = memref.load %arg2[%c78] : memref<288xf32, #tpu.memory_space<smem>>
    %329 = vector.broadcast %328 : f32 to vector<32x32xf32>
    %330 = arith.mulf %329, %319 : vector<32x32xf32>
    %331 = arith.addf %297, %330 : vector<32x32xf32>
    %c114 = arith.constant 114 : index
    %332 = memref.load %arg2[%c114] : memref<288xf32, #tpu.memory_space<smem>>
    %333 = vector.broadcast %332 : f32 to vector<32x32xf32>
    %334 = arith.mulf %333, %319 : vector<32x32xf32>
    %335 = arith.addf %301, %334 : vector<32x32xf32>
    %c150 = arith.constant 150 : index
    %336 = memref.load %arg2[%c150] : memref<288xf32, #tpu.memory_space<smem>>
    %337 = vector.broadcast %336 : f32 to vector<32x32xf32>
    %338 = arith.mulf %337, %319 : vector<32x32xf32>
    %339 = arith.addf %305, %338 : vector<32x32xf32>
    %c186 = arith.constant 186 : index
    %340 = memref.load %arg2[%c186] : memref<288xf32, #tpu.memory_space<smem>>
    %341 = vector.broadcast %340 : f32 to vector<32x32xf32>
    %342 = arith.mulf %341, %319 : vector<32x32xf32>
    %343 = arith.addf %309, %342 : vector<32x32xf32>
    %c222 = arith.constant 222 : index
    %344 = memref.load %arg2[%c222] : memref<288xf32, #tpu.memory_space<smem>>
    %345 = vector.broadcast %344 : f32 to vector<32x32xf32>
    %346 = arith.mulf %345, %319 : vector<32x32xf32>
    %347 = arith.addf %313, %346 : vector<32x32xf32>
    %c258 = arith.constant 258 : index
    %348 = memref.load %arg2[%c258] : memref<288xf32, #tpu.memory_space<smem>>
    %349 = vector.broadcast %348 : f32 to vector<32x32xf32>
    %350 = arith.mulf %349, %319 : vector<32x32xf32>
    %351 = arith.addf %317, %350 : vector<32x32xf32>
    %cst_59 = arith.constant dense<0.000000e+00> : vector<32x32xf32>
    %352 = tpu.matmul %318, %83, %cst_59 {dimension_numbers = #tpu.dot_dimension_numbers<[1], [0], [0], [1], [0, 0, 1, 1], [], []>} : vector<32x16xf32>, vector<16x32xf32>, vector<32x32xf32> -> vector<32x32xf32>
    %c7_60 = arith.constant 7 : index
    %353 = memref.load %arg2[%c7_60] : memref<288xf32, #tpu.memory_space<smem>>
    %354 = vector.broadcast %353 : f32 to vector<32x32xf32>
    %355 = arith.mulf %354, %352 : vector<32x32xf32>
    %356 = arith.addf %323, %355 : vector<32x32xf32>
    %c43 = arith.constant 43 : index
    %357 = memref.load %arg2[%c43] : memref<288xf32, #tpu.memory_space<smem>>
    %358 = vector.broadcast %357 : f32 to vector<32x32xf32>
    %359 = arith.mulf %358, %352 : vector<32x32xf32>
    %360 = arith.addf %327, %359 : vector<32x32xf32>
    %c79 = arith.constant 79 : index
    %361 = memref.load %arg2[%c79] : memref<288xf32, #tpu.memory_space<smem>>
    %362 = vector.broadcast %361 : f32 to vector<32x32xf32>
    %363 = arith.mulf %362, %352 : vector<32x32xf32>
    %364 = arith.addf %331, %363 : vector<32x32xf32>
    %c115 = arith.constant 115 : index
    %365 = memref.load %arg2[%c115] : memref<288xf32, #tpu.memory_space<smem>>
    %366 = vector.broadcast %365 : f32 to vector<32x32xf32>
    %367 = arith.mulf %366, %352 : vector<32x32xf32>
    %368 = arith.addf %335, %367 : vector<32x32xf32>
    %c151 = arith.constant 151 : index
    %369 = memref.load %arg2[%c151] : memref<288xf32, #tpu.memory_space<smem>>
    %370 = vector.broadcast %369 : f32 to vector<32x32xf32>
    %371 = arith.mulf %370, %352 : vector<32x32xf32>
    %372 = arith.addf %339, %371 : vector<32x32xf32>
    %c187 = arith.constant 187 : index
    %373 = memref.load %arg2[%c187] : memref<288xf32, #tpu.memory_space<smem>>
    %374 = vector.broadcast %373 : f32 to vector<32x32xf32>
    %375 = arith.mulf %374, %352 : vector<32x32xf32>
    %376 = arith.addf %343, %375 : vector<32x32xf32>
    %c223 = arith.constant 223 : index
    %377 = memref.load %arg2[%c223] : memref<288xf32, #tpu.memory_space<smem>>
    %378 = vector.broadcast %377 : f32 to vector<32x32xf32>
    %379 = arith.mulf %378, %352 : vector<32x32xf32>
    %380 = arith.addf %347, %379 : vector<32x32xf32>
    %c259 = arith.constant 259 : index
    %381 = memref.load %arg2[%c259] : memref<288xf32, #tpu.memory_space<smem>>
    %382 = vector.broadcast %381 : f32 to vector<32x32xf32>
    %383 = arith.mulf %382, %352 : vector<32x32xf32>
    %384 = arith.addf %351, %383 : vector<32x32xf32>
    %cst_61 = arith.constant dense<0.000000e+00> : vector<32x32xf32>
    %385 = tpu.matmul %318, %99, %cst_61 {dimension_numbers = #tpu.dot_dimension_numbers<[1], [0], [0], [1], [0, 0, 1, 1], [], []>} : vector<32x16xf32>, vector<16x32xf32>, vector<32x32xf32> -> vector<32x32xf32>
    %c8 = arith.constant 8 : index
    %386 = memref.load %arg2[%c8] : memref<288xf32, #tpu.memory_space<smem>>
    %387 = vector.broadcast %386 : f32 to vector<32x32xf32>
    %388 = arith.mulf %387, %385 : vector<32x32xf32>
    %389 = arith.addf %356, %388 : vector<32x32xf32>
    %c44 = arith.constant 44 : index
    %390 = memref.load %arg2[%c44] : memref<288xf32, #tpu.memory_space<smem>>
    %391 = vector.broadcast %390 : f32 to vector<32x32xf32>
    %392 = arith.mulf %391, %385 : vector<32x32xf32>
    %393 = arith.addf %360, %392 : vector<32x32xf32>
    %c80 = arith.constant 80 : index
    %394 = memref.load %arg2[%c80] : memref<288xf32, #tpu.memory_space<smem>>
    %395 = vector.broadcast %394 : f32 to vector<32x32xf32>
    %396 = arith.mulf %395, %385 : vector<32x32xf32>
    %397 = arith.addf %364, %396 : vector<32x32xf32>
    %c116 = arith.constant 116 : index
    %398 = memref.load %arg2[%c116] : memref<288xf32, #tpu.memory_space<smem>>
    %399 = vector.broadcast %398 : f32 to vector<32x32xf32>
    %400 = arith.mulf %399, %385 : vector<32x32xf32>
    %401 = arith.addf %368, %400 : vector<32x32xf32>
    %c152 = arith.constant 152 : index
    %402 = memref.load %arg2[%c152] : memref<288xf32, #tpu.memory_space<smem>>
    %403 = vector.broadcast %402 : f32 to vector<32x32xf32>
    %404 = arith.mulf %403, %385 : vector<32x32xf32>
    %405 = arith.addf %372, %404 : vector<32x32xf32>
    %c188 = arith.constant 188 : index
    %406 = memref.load %arg2[%c188] : memref<288xf32, #tpu.memory_space<smem>>
    %407 = vector.broadcast %406 : f32 to vector<32x32xf32>
    %408 = arith.mulf %407, %385 : vector<32x32xf32>
    %409 = arith.addf %376, %408 : vector<32x32xf32>
    %c224 = arith.constant 224 : index
    %410 = memref.load %arg2[%c224] : memref<288xf32, #tpu.memory_space<smem>>
    %411 = vector.broadcast %410 : f32 to vector<32x32xf32>
    %412 = arith.mulf %411, %385 : vector<32x32xf32>
    %413 = arith.addf %380, %412 : vector<32x32xf32>
    %c260 = arith.constant 260 : index
    %414 = memref.load %arg2[%c260] : memref<288xf32, #tpu.memory_space<smem>>
    %415 = vector.broadcast %414 : f32 to vector<32x32xf32>
    %416 = arith.mulf %415, %385 : vector<32x32xf32>
    %417 = arith.addf %384, %416 : vector<32x32xf32>
    %c0_62 = arith.constant 0 : index
    %c1_63 = arith.constant 1 : index
    %c0_64 = arith.constant 0 : index
    %c0_65 = arith.constant 0 : index
    %418 = vector.load %arg1[%c0_62, %c1_63, %c0_64, %c0_65] : memref<1x4x16x16xf32, #tpu.memory_space<vmem>>, vector<1x1x16x16xf32>
    %419 = vector.shape_cast %418 : vector<1x1x16x16xf32> to vector<16x16xf32>
    %cst_66 = arith.constant dense<0.000000e+00> : vector<32x16xf32>
    %420 = tpu.matmul %17, %419, %cst_66 {dimension_numbers = #tpu.dot_dimension_numbers<[1], [0], [0], [1], [0, 0, 1, 1], [], []>} : vector<32x16xf32>, vector<16x16xf32>, vector<32x16xf32> -> vector<32x16xf32>
    %cst_67 = arith.constant dense<0.000000e+00> : vector<32x32xf32>
    %421 = tpu.matmul %420, %67, %cst_67 {dimension_numbers = #tpu.dot_dimension_numbers<[1], [0], [0], [1], [0, 0, 1, 1], [], []>} : vector<32x16xf32>, vector<16x32xf32>, vector<32x32xf32> -> vector<32x32xf32>
    %c9 = arith.constant 9 : index
    %422 = memref.load %arg2[%c9] : memref<288xf32, #tpu.memory_space<smem>>
    %423 = vector.broadcast %422 : f32 to vector<32x32xf32>
    %424 = arith.mulf %423, %421 : vector<32x32xf32>
    %425 = arith.addf %389, %424 : vector<32x32xf32>
    %c45 = arith.constant 45 : index
    %426 = memref.load %arg2[%c45] : memref<288xf32, #tpu.memory_space<smem>>
    %427 = vector.broadcast %426 : f32 to vector<32x32xf32>
    %428 = arith.mulf %427, %421 : vector<32x32xf32>
    %429 = arith.addf %393, %428 : vector<32x32xf32>
    %c81 = arith.constant 81 : index
    %430 = memref.load %arg2[%c81] : memref<288xf32, #tpu.memory_space<smem>>
    %431 = vector.broadcast %430 : f32 to vector<32x32xf32>
    %432 = arith.mulf %431, %421 : vector<32x32xf32>
    %433 = arith.addf %397, %432 : vector<32x32xf32>
    %c117 = arith.constant 117 : index
    %434 = memref.load %arg2[%c117] : memref<288xf32, #tpu.memory_space<smem>>
    %435 = vector.broadcast %434 : f32 to vector<32x32xf32>
    %436 = arith.mulf %435, %421 : vector<32x32xf32>
    %437 = arith.addf %401, %436 : vector<32x32xf32>
    %c153 = arith.constant 153 : index
    %438 = memref.load %arg2[%c153] : memref<288xf32, #tpu.memory_space<smem>>
    %439 = vector.broadcast %438 : f32 to vector<32x32xf32>
    %440 = arith.mulf %439, %421 : vector<32x32xf32>
    %441 = arith.addf %405, %440 : vector<32x32xf32>
    %c189 = arith.constant 189 : index
    %442 = memref.load %arg2[%c189] : memref<288xf32, #tpu.memory_space<smem>>
    %443 = vector.broadcast %442 : f32 to vector<32x32xf32>
    %444 = arith.mulf %443, %421 : vector<32x32xf32>
    %445 = arith.addf %409, %444 : vector<32x32xf32>
    %c225 = arith.constant 225 : index
    %446 = memref.load %arg2[%c225] : memref<288xf32, #tpu.memory_space<smem>>
    %447 = vector.broadcast %446 : f32 to vector<32x32xf32>
    %448 = arith.mulf %447, %421 : vector<32x32xf32>
    %449 = arith.addf %413, %448 : vector<32x32xf32>
    %c261 = arith.constant 261 : index
    %450 = memref.load %arg2[%c261] : memref<288xf32, #tpu.memory_space<smem>>
    %451 = vector.broadcast %450 : f32 to vector<32x32xf32>
    %452 = arith.mulf %451, %421 : vector<32x32xf32>
    %453 = arith.addf %417, %452 : vector<32x32xf32>
    %cst_68 = arith.constant dense<0.000000e+00> : vector<32x32xf32>
    %454 = tpu.matmul %420, %83, %cst_68 {dimension_numbers = #tpu.dot_dimension_numbers<[1], [0], [0], [1], [0, 0, 1, 1], [], []>} : vector<32x16xf32>, vector<16x32xf32>, vector<32x32xf32> -> vector<32x32xf32>
    %c10 = arith.constant 10 : index
    %455 = memref.load %arg2[%c10] : memref<288xf32, #tpu.memory_space<smem>>
    %456 = vector.broadcast %455 : f32 to vector<32x32xf32>
    %457 = arith.mulf %456, %454 : vector<32x32xf32>
    %458 = arith.addf %425, %457 : vector<32x32xf32>
    %c46 = arith.constant 46 : index
    %459 = memref.load %arg2[%c46] : memref<288xf32, #tpu.memory_space<smem>>
    %460 = vector.broadcast %459 : f32 to vector<32x32xf32>
    %461 = arith.mulf %460, %454 : vector<32x32xf32>
    %462 = arith.addf %429, %461 : vector<32x32xf32>
    %c82 = arith.constant 82 : index
    %463 = memref.load %arg2[%c82] : memref<288xf32, #tpu.memory_space<smem>>
    %464 = vector.broadcast %463 : f32 to vector<32x32xf32>
    %465 = arith.mulf %464, %454 : vector<32x32xf32>
    %466 = arith.addf %433, %465 : vector<32x32xf32>
    %c118 = arith.constant 118 : index
    %467 = memref.load %arg2[%c118] : memref<288xf32, #tpu.memory_space<smem>>
    %468 = vector.broadcast %467 : f32 to vector<32x32xf32>
    %469 = arith.mulf %468, %454 : vector<32x32xf32>
    %470 = arith.addf %437, %469 : vector<32x32xf32>
    %c154 = arith.constant 154 : index
    %471 = memref.load %arg2[%c154] : memref<288xf32, #tpu.memory_space<smem>>
    %472 = vector.broadcast %471 : f32 to vector<32x32xf32>
    %473 = arith.mulf %472, %454 : vector<32x32xf32>
    %474 = arith.addf %441, %473 : vector<32x32xf32>
    %c190 = arith.constant 190 : index
    %475 = memref.load %arg2[%c190] : memref<288xf32, #tpu.memory_space<smem>>
    %476 = vector.broadcast %475 : f32 to vector<32x32xf32>
    %477 = arith.mulf %476, %454 : vector<32x32xf32>
    %478 = arith.addf %445, %477 : vector<32x32xf32>
    %c226 = arith.constant 226 : index
    %479 = memref.load %arg2[%c226] : memref<288xf32, #tpu.memory_space<smem>>
    %480 = vector.broadcast %479 : f32 to vector<32x32xf32>
    %481 = arith.mulf %480, %454 : vector<32x32xf32>
    %482 = arith.addf %449, %481 : vector<32x32xf32>
    %c262 = arith.constant 262 : index
    %483 = memref.load %arg2[%c262] : memref<288xf32, #tpu.memory_space<smem>>
    %484 = vector.broadcast %483 : f32 to vector<32x32xf32>
    %485 = arith.mulf %484, %454 : vector<32x32xf32>
    %486 = arith.addf %453, %485 : vector<32x32xf32>
    %cst_69 = arith.constant dense<0.000000e+00> : vector<32x32xf32>
    %487 = tpu.matmul %420, %99, %cst_69 {dimension_numbers = #tpu.dot_dimension_numbers<[1], [0], [0], [1], [0, 0, 1, 1], [], []>} : vector<32x16xf32>, vector<16x32xf32>, vector<32x32xf32> -> vector<32x32xf32>
    %c11 = arith.constant 11 : index
    %488 = memref.load %arg2[%c11] : memref<288xf32, #tpu.memory_space<smem>>
    %489 = vector.broadcast %488 : f32 to vector<32x32xf32>
    %490 = arith.mulf %489, %487 : vector<32x32xf32>
    %491 = arith.addf %458, %490 : vector<32x32xf32>
    %c47 = arith.constant 47 : index
    %492 = memref.load %arg2[%c47] : memref<288xf32, #tpu.memory_space<smem>>
    %493 = vector.broadcast %492 : f32 to vector<32x32xf32>
    %494 = arith.mulf %493, %487 : vector<32x32xf32>
    %495 = arith.addf %462, %494 : vector<32x32xf32>
    %c83 = arith.constant 83 : index
    %496 = memref.load %arg2[%c83] : memref<288xf32, #tpu.memory_space<smem>>
    %497 = vector.broadcast %496 : f32 to vector<32x32xf32>
    %498 = arith.mulf %497, %487 : vector<32x32xf32>
    %499 = arith.addf %466, %498 : vector<32x32xf32>
    %c119 = arith.constant 119 : index
    %500 = memref.load %arg2[%c119] : memref<288xf32, #tpu.memory_space<smem>>
    %501 = vector.broadcast %500 : f32 to vector<32x32xf32>
    %502 = arith.mulf %501, %487 : vector<32x32xf32>
    %503 = arith.addf %470, %502 : vector<32x32xf32>
    %c155 = arith.constant 155 : index
    %504 = memref.load %arg2[%c155] : memref<288xf32, #tpu.memory_space<smem>>
    %505 = vector.broadcast %504 : f32 to vector<32x32xf32>
    %506 = arith.mulf %505, %487 : vector<32x32xf32>
    %507 = arith.addf %474, %506 : vector<32x32xf32>
    %c191 = arith.constant 191 : index
    %508 = memref.load %arg2[%c191] : memref<288xf32, #tpu.memory_space<smem>>
    %509 = vector.broadcast %508 : f32 to vector<32x32xf32>
    %510 = arith.mulf %509, %487 : vector<32x32xf32>
    %511 = arith.addf %478, %510 : vector<32x32xf32>
    %c227 = arith.constant 227 : index
    %512 = memref.load %arg2[%c227] : memref<288xf32, #tpu.memory_space<smem>>
    %513 = vector.broadcast %512 : f32 to vector<32x32xf32>
    %514 = arith.mulf %513, %487 : vector<32x32xf32>
    %515 = arith.addf %482, %514 : vector<32x32xf32>
    %c263 = arith.constant 263 : index
    %516 = memref.load %arg2[%c263] : memref<288xf32, #tpu.memory_space<smem>>
    %517 = vector.broadcast %516 : f32 to vector<32x32xf32>
    %518 = arith.mulf %517, %487 : vector<32x32xf32>
    %519 = arith.addf %486, %518 : vector<32x32xf32>
    %cst_70 = arith.constant dense<0.000000e+00> : vector<32x16xf32>
    %520 = tpu.matmul %33, %419, %cst_70 {dimension_numbers = #tpu.dot_dimension_numbers<[1], [0], [0], [1], [0, 0, 1, 1], [], []>} : vector<32x16xf32>, vector<16x16xf32>, vector<32x16xf32> -> vector<32x16xf32>
    %cst_71 = arith.constant dense<0.000000e+00> : vector<32x32xf32>
    %521 = tpu.matmul %520, %67, %cst_71 {dimension_numbers = #tpu.dot_dimension_numbers<[1], [0], [0], [1], [0, 0, 1, 1], [], []>} : vector<32x16xf32>, vector<16x32xf32>, vector<32x32xf32> -> vector<32x32xf32>
    %c12 = arith.constant 12 : index
    %522 = memref.load %arg2[%c12] : memref<288xf32, #tpu.memory_space<smem>>
    %523 = vector.broadcast %522 : f32 to vector<32x32xf32>
    %524 = arith.mulf %523, %521 : vector<32x32xf32>
    %525 = arith.addf %491, %524 : vector<32x32xf32>
    %c48 = arith.constant 48 : index
    %526 = memref.load %arg2[%c48] : memref<288xf32, #tpu.memory_space<smem>>
    %527 = vector.broadcast %526 : f32 to vector<32x32xf32>
    %528 = arith.mulf %527, %521 : vector<32x32xf32>
    %529 = arith.addf %495, %528 : vector<32x32xf32>
    %c84 = arith.constant 84 : index
    %530 = memref.load %arg2[%c84] : memref<288xf32, #tpu.memory_space<smem>>
    %531 = vector.broadcast %530 : f32 to vector<32x32xf32>
    %532 = arith.mulf %531, %521 : vector<32x32xf32>
    %533 = arith.addf %499, %532 : vector<32x32xf32>
    %c120 = arith.constant 120 : index
    %534 = memref.load %arg2[%c120] : memref<288xf32, #tpu.memory_space<smem>>
    %535 = vector.broadcast %534 : f32 to vector<32x32xf32>
    %536 = arith.mulf %535, %521 : vector<32x32xf32>
    %537 = arith.addf %503, %536 : vector<32x32xf32>
    %c156 = arith.constant 156 : index
    %538 = memref.load %arg2[%c156] : memref<288xf32, #tpu.memory_space<smem>>
    %539 = vector.broadcast %538 : f32 to vector<32x32xf32>
    %540 = arith.mulf %539, %521 : vector<32x32xf32>
    %541 = arith.addf %507, %540 : vector<32x32xf32>
    %c192 = arith.constant 192 : index
    %542 = memref.load %arg2[%c192] : memref<288xf32, #tpu.memory_space<smem>>
    %543 = vector.broadcast %542 : f32 to vector<32x32xf32>
    %544 = arith.mulf %543, %521 : vector<32x32xf32>
    %545 = arith.addf %511, %544 : vector<32x32xf32>
    %c228 = arith.constant 228 : index
    %546 = memref.load %arg2[%c228] : memref<288xf32, #tpu.memory_space<smem>>
    %547 = vector.broadcast %546 : f32 to vector<32x32xf32>
    %548 = arith.mulf %547, %521 : vector<32x32xf32>
    %549 = arith.addf %515, %548 : vector<32x32xf32>
    %c264 = arith.constant 264 : index
    %550 = memref.load %arg2[%c264] : memref<288xf32, #tpu.memory_space<smem>>
    %551 = vector.broadcast %550 : f32 to vector<32x32xf32>
    %552 = arith.mulf %551, %521 : vector<32x32xf32>
    %553 = arith.addf %519, %552 : vector<32x32xf32>
    %cst_72 = arith.constant dense<0.000000e+00> : vector<32x32xf32>
    %554 = tpu.matmul %520, %83, %cst_72 {dimension_numbers = #tpu.dot_dimension_numbers<[1], [0], [0], [1], [0, 0, 1, 1], [], []>} : vector<32x16xf32>, vector<16x32xf32>, vector<32x32xf32> -> vector<32x32xf32>
    %c13 = arith.constant 13 : index
    %555 = memref.load %arg2[%c13] : memref<288xf32, #tpu.memory_space<smem>>
    %556 = vector.broadcast %555 : f32 to vector<32x32xf32>
    %557 = arith.mulf %556, %554 : vector<32x32xf32>
    %558 = arith.addf %525, %557 : vector<32x32xf32>
    %c49 = arith.constant 49 : index
    %559 = memref.load %arg2[%c49] : memref<288xf32, #tpu.memory_space<smem>>
    %560 = vector.broadcast %559 : f32 to vector<32x32xf32>
    %561 = arith.mulf %560, %554 : vector<32x32xf32>
    %562 = arith.addf %529, %561 : vector<32x32xf32>
    %c85 = arith.constant 85 : index
    %563 = memref.load %arg2[%c85] : memref<288xf32, #tpu.memory_space<smem>>
    %564 = vector.broadcast %563 : f32 to vector<32x32xf32>
    %565 = arith.mulf %564, %554 : vector<32x32xf32>
    %566 = arith.addf %533, %565 : vector<32x32xf32>
    %c121 = arith.constant 121 : index
    %567 = memref.load %arg2[%c121] : memref<288xf32, #tpu.memory_space<smem>>
    %568 = vector.broadcast %567 : f32 to vector<32x32xf32>
    %569 = arith.mulf %568, %554 : vector<32x32xf32>
    %570 = arith.addf %537, %569 : vector<32x32xf32>
    %c157 = arith.constant 157 : index
    %571 = memref.load %arg2[%c157] : memref<288xf32, #tpu.memory_space<smem>>
    %572 = vector.broadcast %571 : f32 to vector<32x32xf32>
    %573 = arith.mulf %572, %554 : vector<32x32xf32>
    %574 = arith.addf %541, %573 : vector<32x32xf32>
    %c193 = arith.constant 193 : index
    %575 = memref.load %arg2[%c193] : memref<288xf32, #tpu.memory_space<smem>>
    %576 = vector.broadcast %575 : f32 to vector<32x32xf32>
    %577 = arith.mulf %576, %554 : vector<32x32xf32>
    %578 = arith.addf %545, %577 : vector<32x32xf32>
    %c229 = arith.constant 229 : index
    %579 = memref.load %arg2[%c229] : memref<288xf32, #tpu.memory_space<smem>>
    %580 = vector.broadcast %579 : f32 to vector<32x32xf32>
    %581 = arith.mulf %580, %554 : vector<32x32xf32>
    %582 = arith.addf %549, %581 : vector<32x32xf32>
    %c265 = arith.constant 265 : index
    %583 = memref.load %arg2[%c265] : memref<288xf32, #tpu.memory_space<smem>>
    %584 = vector.broadcast %583 : f32 to vector<32x32xf32>
    %585 = arith.mulf %584, %554 : vector<32x32xf32>
    %586 = arith.addf %553, %585 : vector<32x32xf32>
    %cst_73 = arith.constant dense<0.000000e+00> : vector<32x32xf32>
    %587 = tpu.matmul %520, %99, %cst_73 {dimension_numbers = #tpu.dot_dimension_numbers<[1], [0], [0], [1], [0, 0, 1, 1], [], []>} : vector<32x16xf32>, vector<16x32xf32>, vector<32x32xf32> -> vector<32x32xf32>
    %c14 = arith.constant 14 : index
    %588 = memref.load %arg2[%c14] : memref<288xf32, #tpu.memory_space<smem>>
    %589 = vector.broadcast %588 : f32 to vector<32x32xf32>
    %590 = arith.mulf %589, %587 : vector<32x32xf32>
    %591 = arith.addf %558, %590 : vector<32x32xf32>
    %c50 = arith.constant 50 : index
    %592 = memref.load %arg2[%c50] : memref<288xf32, #tpu.memory_space<smem>>
    %593 = vector.broadcast %592 : f32 to vector<32x32xf32>
    %594 = arith.mulf %593, %587 : vector<32x32xf32>
    %595 = arith.addf %562, %594 : vector<32x32xf32>
    %c86 = arith.constant 86 : index
    %596 = memref.load %arg2[%c86] : memref<288xf32, #tpu.memory_space<smem>>
    %597 = vector.broadcast %596 : f32 to vector<32x32xf32>
    %598 = arith.mulf %597, %587 : vector<32x32xf32>
    %599 = arith.addf %566, %598 : vector<32x32xf32>
    %c122 = arith.constant 122 : index
    %600 = memref.load %arg2[%c122] : memref<288xf32, #tpu.memory_space<smem>>
    %601 = vector.broadcast %600 : f32 to vector<32x32xf32>
    %602 = arith.mulf %601, %587 : vector<32x32xf32>
    %603 = arith.addf %570, %602 : vector<32x32xf32>
    %c158 = arith.constant 158 : index
    %604 = memref.load %arg2[%c158] : memref<288xf32, #tpu.memory_space<smem>>
    %605 = vector.broadcast %604 : f32 to vector<32x32xf32>
    %606 = arith.mulf %605, %587 : vector<32x32xf32>
    %607 = arith.addf %574, %606 : vector<32x32xf32>
    %c194 = arith.constant 194 : index
    %608 = memref.load %arg2[%c194] : memref<288xf32, #tpu.memory_space<smem>>
    %609 = vector.broadcast %608 : f32 to vector<32x32xf32>
    %610 = arith.mulf %609, %587 : vector<32x32xf32>
    %611 = arith.addf %578, %610 : vector<32x32xf32>
    %c230 = arith.constant 230 : index
    %612 = memref.load %arg2[%c230] : memref<288xf32, #tpu.memory_space<smem>>
    %613 = vector.broadcast %612 : f32 to vector<32x32xf32>
    %614 = arith.mulf %613, %587 : vector<32x32xf32>
    %615 = arith.addf %582, %614 : vector<32x32xf32>
    %c266 = arith.constant 266 : index
    %616 = memref.load %arg2[%c266] : memref<288xf32, #tpu.memory_space<smem>>
    %617 = vector.broadcast %616 : f32 to vector<32x32xf32>
    %618 = arith.mulf %617, %587 : vector<32x32xf32>
    %619 = arith.addf %586, %618 : vector<32x32xf32>
    %cst_74 = arith.constant dense<0.000000e+00> : vector<32x16xf32>
    %620 = tpu.matmul %49, %419, %cst_74 {dimension_numbers = #tpu.dot_dimension_numbers<[1], [0], [0], [1], [0, 0, 1, 1], [], []>} : vector<32x16xf32>, vector<16x16xf32>, vector<32x16xf32> -> vector<32x16xf32>
    %cst_75 = arith.constant dense<0.000000e+00> : vector<32x32xf32>
    %621 = tpu.matmul %620, %67, %cst_75 {dimension_numbers = #tpu.dot_dimension_numbers<[1], [0], [0], [1], [0, 0, 1, 1], [], []>} : vector<32x16xf32>, vector<16x32xf32>, vector<32x32xf32> -> vector<32x32xf32>
    %c15 = arith.constant 15 : index
    %622 = memref.load %arg2[%c15] : memref<288xf32, #tpu.memory_space<smem>>
    %623 = vector.broadcast %622 : f32 to vector<32x32xf32>
    %624 = arith.mulf %623, %621 : vector<32x32xf32>
    %625 = arith.addf %591, %624 : vector<32x32xf32>
    %c51 = arith.constant 51 : index
    %626 = memref.load %arg2[%c51] : memref<288xf32, #tpu.memory_space<smem>>
    %627 = vector.broadcast %626 : f32 to vector<32x32xf32>
    %628 = arith.mulf %627, %621 : vector<32x32xf32>
    %629 = arith.addf %595, %628 : vector<32x32xf32>
    %c87 = arith.constant 87 : index
    %630 = memref.load %arg2[%c87] : memref<288xf32, #tpu.memory_space<smem>>
    %631 = vector.broadcast %630 : f32 to vector<32x32xf32>
    %632 = arith.mulf %631, %621 : vector<32x32xf32>
    %633 = arith.addf %599, %632 : vector<32x32xf32>
    %c123 = arith.constant 123 : index
    %634 = memref.load %arg2[%c123] : memref<288xf32, #tpu.memory_space<smem>>
    %635 = vector.broadcast %634 : f32 to vector<32x32xf32>
    %636 = arith.mulf %635, %621 : vector<32x32xf32>
    %637 = arith.addf %603, %636 : vector<32x32xf32>
    %c159 = arith.constant 159 : index
    %638 = memref.load %arg2[%c159] : memref<288xf32, #tpu.memory_space<smem>>
    %639 = vector.broadcast %638 : f32 to vector<32x32xf32>
    %640 = arith.mulf %639, %621 : vector<32x32xf32>
    %641 = arith.addf %607, %640 : vector<32x32xf32>
    %c195 = arith.constant 195 : index
    %642 = memref.load %arg2[%c195] : memref<288xf32, #tpu.memory_space<smem>>
    %643 = vector.broadcast %642 : f32 to vector<32x32xf32>
    %644 = arith.mulf %643, %621 : vector<32x32xf32>
    %645 = arith.addf %611, %644 : vector<32x32xf32>
    %c231 = arith.constant 231 : index
    %646 = memref.load %arg2[%c231] : memref<288xf32, #tpu.memory_space<smem>>
    %647 = vector.broadcast %646 : f32 to vector<32x32xf32>
    %648 = arith.mulf %647, %621 : vector<32x32xf32>
    %649 = arith.addf %615, %648 : vector<32x32xf32>
    %c267 = arith.constant 267 : index
    %650 = memref.load %arg2[%c267] : memref<288xf32, #tpu.memory_space<smem>>
    %651 = vector.broadcast %650 : f32 to vector<32x32xf32>
    %652 = arith.mulf %651, %621 : vector<32x32xf32>
    %653 = arith.addf %619, %652 : vector<32x32xf32>
    %cst_76 = arith.constant dense<0.000000e+00> : vector<32x32xf32>
    %654 = tpu.matmul %620, %83, %cst_76 {dimension_numbers = #tpu.dot_dimension_numbers<[1], [0], [0], [1], [0, 0, 1, 1], [], []>} : vector<32x16xf32>, vector<16x32xf32>, vector<32x32xf32> -> vector<32x32xf32>
    %c16 = arith.constant 16 : index
    %655 = memref.load %arg2[%c16] : memref<288xf32, #tpu.memory_space<smem>>
    %656 = vector.broadcast %655 : f32 to vector<32x32xf32>
    %657 = arith.mulf %656, %654 : vector<32x32xf32>
    %658 = arith.addf %625, %657 : vector<32x32xf32>
    %c52 = arith.constant 52 : index
    %659 = memref.load %arg2[%c52] : memref<288xf32, #tpu.memory_space<smem>>
    %660 = vector.broadcast %659 : f32 to vector<32x32xf32>
    %661 = arith.mulf %660, %654 : vector<32x32xf32>
    %662 = arith.addf %629, %661 : vector<32x32xf32>
    %c88 = arith.constant 88 : index
    %663 = memref.load %arg2[%c88] : memref<288xf32, #tpu.memory_space<smem>>
    %664 = vector.broadcast %663 : f32 to vector<32x32xf32>
    %665 = arith.mulf %664, %654 : vector<32x32xf32>
    %666 = arith.addf %633, %665 : vector<32x32xf32>
    %c124 = arith.constant 124 : index
    %667 = memref.load %arg2[%c124] : memref<288xf32, #tpu.memory_space<smem>>
    %668 = vector.broadcast %667 : f32 to vector<32x32xf32>
    %669 = arith.mulf %668, %654 : vector<32x32xf32>
    %670 = arith.addf %637, %669 : vector<32x32xf32>
    %c160 = arith.constant 160 : index
    %671 = memref.load %arg2[%c160] : memref<288xf32, #tpu.memory_space<smem>>
    %672 = vector.broadcast %671 : f32 to vector<32x32xf32>
    %673 = arith.mulf %672, %654 : vector<32x32xf32>
    %674 = arith.addf %641, %673 : vector<32x32xf32>
    %c196 = arith.constant 196 : index
    %675 = memref.load %arg2[%c196] : memref<288xf32, #tpu.memory_space<smem>>
    %676 = vector.broadcast %675 : f32 to vector<32x32xf32>
    %677 = arith.mulf %676, %654 : vector<32x32xf32>
    %678 = arith.addf %645, %677 : vector<32x32xf32>
    %c232 = arith.constant 232 : index
    %679 = memref.load %arg2[%c232] : memref<288xf32, #tpu.memory_space<smem>>
    %680 = vector.broadcast %679 : f32 to vector<32x32xf32>
    %681 = arith.mulf %680, %654 : vector<32x32xf32>
    %682 = arith.addf %649, %681 : vector<32x32xf32>
    %c268 = arith.constant 268 : index
    %683 = memref.load %arg2[%c268] : memref<288xf32, #tpu.memory_space<smem>>
    %684 = vector.broadcast %683 : f32 to vector<32x32xf32>
    %685 = arith.mulf %684, %654 : vector<32x32xf32>
    %686 = arith.addf %653, %685 : vector<32x32xf32>
    %cst_77 = arith.constant dense<0.000000e+00> : vector<32x32xf32>
    %687 = tpu.matmul %620, %99, %cst_77 {dimension_numbers = #tpu.dot_dimension_numbers<[1], [0], [0], [1], [0, 0, 1, 1], [], []>} : vector<32x16xf32>, vector<16x32xf32>, vector<32x32xf32> -> vector<32x32xf32>
    %c17 = arith.constant 17 : index
    %688 = memref.load %arg2[%c17] : memref<288xf32, #tpu.memory_space<smem>>
    %689 = vector.broadcast %688 : f32 to vector<32x32xf32>
    %690 = arith.mulf %689, %687 : vector<32x32xf32>
    %691 = arith.addf %658, %690 : vector<32x32xf32>
    %c53 = arith.constant 53 : index
    %692 = memref.load %arg2[%c53] : memref<288xf32, #tpu.memory_space<smem>>
    %693 = vector.broadcast %692 : f32 to vector<32x32xf32>
    %694 = arith.mulf %693, %687 : vector<32x32xf32>
    %695 = arith.addf %662, %694 : vector<32x32xf32>
    %c89 = arith.constant 89 : index
    %696 = memref.load %arg2[%c89] : memref<288xf32, #tpu.memory_space<smem>>
    %697 = vector.broadcast %696 : f32 to vector<32x32xf32>
    %698 = arith.mulf %697, %687 : vector<32x32xf32>
    %699 = arith.addf %666, %698 : vector<32x32xf32>
    %c125 = arith.constant 125 : index
    %700 = memref.load %arg2[%c125] : memref<288xf32, #tpu.memory_space<smem>>
    %701 = vector.broadcast %700 : f32 to vector<32x32xf32>
    %702 = arith.mulf %701, %687 : vector<32x32xf32>
    %703 = arith.addf %670, %702 : vector<32x32xf32>
    %c161 = arith.constant 161 : index
    %704 = memref.load %arg2[%c161] : memref<288xf32, #tpu.memory_space<smem>>
    %705 = vector.broadcast %704 : f32 to vector<32x32xf32>
    %706 = arith.mulf %705, %687 : vector<32x32xf32>
    %707 = arith.addf %674, %706 : vector<32x32xf32>
    %c197 = arith.constant 197 : index
    %708 = memref.load %arg2[%c197] : memref<288xf32, #tpu.memory_space<smem>>
    %709 = vector.broadcast %708 : f32 to vector<32x32xf32>
    %710 = arith.mulf %709, %687 : vector<32x32xf32>
    %711 = arith.addf %678, %710 : vector<32x32xf32>
    %c233 = arith.constant 233 : index
    %712 = memref.load %arg2[%c233] : memref<288xf32, #tpu.memory_space<smem>>
    %713 = vector.broadcast %712 : f32 to vector<32x32xf32>
    %714 = arith.mulf %713, %687 : vector<32x32xf32>
    %715 = arith.addf %682, %714 : vector<32x32xf32>
    %c269 = arith.constant 269 : index
    %716 = memref.load %arg2[%c269] : memref<288xf32, #tpu.memory_space<smem>>
    %717 = vector.broadcast %716 : f32 to vector<32x32xf32>
    %718 = arith.mulf %717, %687 : vector<32x32xf32>
    %719 = arith.addf %686, %718 : vector<32x32xf32>
    %c0_78 = arith.constant 0 : index
    %c2_79 = arith.constant 2 : index
    %c0_80 = arith.constant 0 : index
    %c0_81 = arith.constant 0 : index
    %720 = vector.load %arg1[%c0_78, %c2_79, %c0_80, %c0_81] : memref<1x4x16x16xf32, #tpu.memory_space<vmem>>, vector<1x1x16x16xf32>
    %721 = vector.shape_cast %720 : vector<1x1x16x16xf32> to vector<16x16xf32>
    %cst_82 = arith.constant dense<0.000000e+00> : vector<32x16xf32>
    %722 = tpu.matmul %17, %721, %cst_82 {dimension_numbers = #tpu.dot_dimension_numbers<[1], [0], [0], [1], [0, 0, 1, 1], [], []>} : vector<32x16xf32>, vector<16x16xf32>, vector<32x16xf32> -> vector<32x16xf32>
    %cst_83 = arith.constant dense<0.000000e+00> : vector<32x32xf32>
    %723 = tpu.matmul %722, %67, %cst_83 {dimension_numbers = #tpu.dot_dimension_numbers<[1], [0], [0], [1], [0, 0, 1, 1], [], []>} : vector<32x16xf32>, vector<16x32xf32>, vector<32x32xf32> -> vector<32x32xf32>
    %c18 = arith.constant 18 : index
    %724 = memref.load %arg2[%c18] : memref<288xf32, #tpu.memory_space<smem>>
    %725 = vector.broadcast %724 : f32 to vector<32x32xf32>
    %726 = arith.mulf %725, %723 : vector<32x32xf32>
    %727 = arith.addf %691, %726 : vector<32x32xf32>
    %c54 = arith.constant 54 : index
    %728 = memref.load %arg2[%c54] : memref<288xf32, #tpu.memory_space<smem>>
    %729 = vector.broadcast %728 : f32 to vector<32x32xf32>
    %730 = arith.mulf %729, %723 : vector<32x32xf32>
    %731 = arith.addf %695, %730 : vector<32x32xf32>
    %c90 = arith.constant 90 : index
    %732 = memref.load %arg2[%c90] : memref<288xf32, #tpu.memory_space<smem>>
    %733 = vector.broadcast %732 : f32 to vector<32x32xf32>
    %734 = arith.mulf %733, %723 : vector<32x32xf32>
    %735 = arith.addf %699, %734 : vector<32x32xf32>
    %c126 = arith.constant 126 : index
    %736 = memref.load %arg2[%c126] : memref<288xf32, #tpu.memory_space<smem>>
    %737 = vector.broadcast %736 : f32 to vector<32x32xf32>
    %738 = arith.mulf %737, %723 : vector<32x32xf32>
    %739 = arith.addf %703, %738 : vector<32x32xf32>
    %c162 = arith.constant 162 : index
    %740 = memref.load %arg2[%c162] : memref<288xf32, #tpu.memory_space<smem>>
    %741 = vector.broadcast %740 : f32 to vector<32x32xf32>
    %742 = arith.mulf %741, %723 : vector<32x32xf32>
    %743 = arith.addf %707, %742 : vector<32x32xf32>
    %c198 = arith.constant 198 : index
    %744 = memref.load %arg2[%c198] : memref<288xf32, #tpu.memory_space<smem>>
    %745 = vector.broadcast %744 : f32 to vector<32x32xf32>
    %746 = arith.mulf %745, %723 : vector<32x32xf32>
    %747 = arith.addf %711, %746 : vector<32x32xf32>
    %c234 = arith.constant 234 : index
    %748 = memref.load %arg2[%c234] : memref<288xf32, #tpu.memory_space<smem>>
    %749 = vector.broadcast %748 : f32 to vector<32x32xf32>
    %750 = arith.mulf %749, %723 : vector<32x32xf32>
    %751 = arith.addf %715, %750 : vector<32x32xf32>
    %c270 = arith.constant 270 : index
    %752 = memref.load %arg2[%c270] : memref<288xf32, #tpu.memory_space<smem>>
    %753 = vector.broadcast %752 : f32 to vector<32x32xf32>
    %754 = arith.mulf %753, %723 : vector<32x32xf32>
    %755 = arith.addf %719, %754 : vector<32x32xf32>
    %cst_84 = arith.constant dense<0.000000e+00> : vector<32x32xf32>
    %756 = tpu.matmul %722, %83, %cst_84 {dimension_numbers = #tpu.dot_dimension_numbers<[1], [0], [0], [1], [0, 0, 1, 1], [], []>} : vector<32x16xf32>, vector<16x32xf32>, vector<32x32xf32> -> vector<32x32xf32>
    %c19 = arith.constant 19 : index
    %757 = memref.load %arg2[%c19] : memref<288xf32, #tpu.memory_space<smem>>
    %758 = vector.broadcast %757 : f32 to vector<32x32xf32>
    %759 = arith.mulf %758, %756 : vector<32x32xf32>
    %760 = arith.addf %727, %759 : vector<32x32xf32>
    %c55 = arith.constant 55 : index
    %761 = memref.load %arg2[%c55] : memref<288xf32, #tpu.memory_space<smem>>
    %762 = vector.broadcast %761 : f32 to vector<32x32xf32>
    %763 = arith.mulf %762, %756 : vector<32x32xf32>
    %764 = arith.addf %731, %763 : vector<32x32xf32>
    %c91 = arith.constant 91 : index
    %765 = memref.load %arg2[%c91] : memref<288xf32, #tpu.memory_space<smem>>
    %766 = vector.broadcast %765 : f32 to vector<32x32xf32>
    %767 = arith.mulf %766, %756 : vector<32x32xf32>
    %768 = arith.addf %735, %767 : vector<32x32xf32>
    %c127 = arith.constant 127 : index
    %769 = memref.load %arg2[%c127] : memref<288xf32, #tpu.memory_space<smem>>
    %770 = vector.broadcast %769 : f32 to vector<32x32xf32>
    %771 = arith.mulf %770, %756 : vector<32x32xf32>
    %772 = arith.addf %739, %771 : vector<32x32xf32>
    %c163 = arith.constant 163 : index
    %773 = memref.load %arg2[%c163] : memref<288xf32, #tpu.memory_space<smem>>
    %774 = vector.broadcast %773 : f32 to vector<32x32xf32>
    %775 = arith.mulf %774, %756 : vector<32x32xf32>
    %776 = arith.addf %743, %775 : vector<32x32xf32>
    %c199 = arith.constant 199 : index
    %777 = memref.load %arg2[%c199] : memref<288xf32, #tpu.memory_space<smem>>
    %778 = vector.broadcast %777 : f32 to vector<32x32xf32>
    %779 = arith.mulf %778, %756 : vector<32x32xf32>
    %780 = arith.addf %747, %779 : vector<32x32xf32>
    %c235 = arith.constant 235 : index
    %781 = memref.load %arg2[%c235] : memref<288xf32, #tpu.memory_space<smem>>
    %782 = vector.broadcast %781 : f32 to vector<32x32xf32>
    %783 = arith.mulf %782, %756 : vector<32x32xf32>
    %784 = arith.addf %751, %783 : vector<32x32xf32>
    %c271 = arith.constant 271 : index
    %785 = memref.load %arg2[%c271] : memref<288xf32, #tpu.memory_space<smem>>
    %786 = vector.broadcast %785 : f32 to vector<32x32xf32>
    %787 = arith.mulf %786, %756 : vector<32x32xf32>
    %788 = arith.addf %755, %787 : vector<32x32xf32>
    %cst_85 = arith.constant dense<0.000000e+00> : vector<32x32xf32>
    %789 = tpu.matmul %722, %99, %cst_85 {dimension_numbers = #tpu.dot_dimension_numbers<[1], [0], [0], [1], [0, 0, 1, 1], [], []>} : vector<32x16xf32>, vector<16x32xf32>, vector<32x32xf32> -> vector<32x32xf32>
    %c20 = arith.constant 20 : index
    %790 = memref.load %arg2[%c20] : memref<288xf32, #tpu.memory_space<smem>>
    %791 = vector.broadcast %790 : f32 to vector<32x32xf32>
    %792 = arith.mulf %791, %789 : vector<32x32xf32>
    %793 = arith.addf %760, %792 : vector<32x32xf32>
    %c56 = arith.constant 56 : index
    %794 = memref.load %arg2[%c56] : memref<288xf32, #tpu.memory_space<smem>>
    %795 = vector.broadcast %794 : f32 to vector<32x32xf32>
    %796 = arith.mulf %795, %789 : vector<32x32xf32>
    %797 = arith.addf %764, %796 : vector<32x32xf32>
    %c92 = arith.constant 92 : index
    %798 = memref.load %arg2[%c92] : memref<288xf32, #tpu.memory_space<smem>>
    %799 = vector.broadcast %798 : f32 to vector<32x32xf32>
    %800 = arith.mulf %799, %789 : vector<32x32xf32>
    %801 = arith.addf %768, %800 : vector<32x32xf32>
    %c128 = arith.constant 128 : index
    %802 = memref.load %arg2[%c128] : memref<288xf32, #tpu.memory_space<smem>>
    %803 = vector.broadcast %802 : f32 to vector<32x32xf32>
    %804 = arith.mulf %803, %789 : vector<32x32xf32>
    %805 = arith.addf %772, %804 : vector<32x32xf32>
    %c164 = arith.constant 164 : index
    %806 = memref.load %arg2[%c164] : memref<288xf32, #tpu.memory_space<smem>>
    %807 = vector.broadcast %806 : f32 to vector<32x32xf32>
    %808 = arith.mulf %807, %789 : vector<32x32xf32>
    %809 = arith.addf %776, %808 : vector<32x32xf32>
    %c200 = arith.constant 200 : index
    %810 = memref.load %arg2[%c200] : memref<288xf32, #tpu.memory_space<smem>>
    %811 = vector.broadcast %810 : f32 to vector<32x32xf32>
    %812 = arith.mulf %811, %789 : vector<32x32xf32>
    %813 = arith.addf %780, %812 : vector<32x32xf32>
    %c236 = arith.constant 236 : index
    %814 = memref.load %arg2[%c236] : memref<288xf32, #tpu.memory_space<smem>>
    %815 = vector.broadcast %814 : f32 to vector<32x32xf32>
    %816 = arith.mulf %815, %789 : vector<32x32xf32>
    %817 = arith.addf %784, %816 : vector<32x32xf32>
    %c272 = arith.constant 272 : index
    %818 = memref.load %arg2[%c272] : memref<288xf32, #tpu.memory_space<smem>>
    %819 = vector.broadcast %818 : f32 to vector<32x32xf32>
    %820 = arith.mulf %819, %789 : vector<32x32xf32>
    %821 = arith.addf %788, %820 : vector<32x32xf32>
    %cst_86 = arith.constant dense<0.000000e+00> : vector<32x16xf32>
    %822 = tpu.matmul %33, %721, %cst_86 {dimension_numbers = #tpu.dot_dimension_numbers<[1], [0], [0], [1], [0, 0, 1, 1], [], []>} : vector<32x16xf32>, vector<16x16xf32>, vector<32x16xf32> -> vector<32x16xf32>
    %cst_87 = arith.constant dense<0.000000e+00> : vector<32x32xf32>
    %823 = tpu.matmul %822, %67, %cst_87 {dimension_numbers = #tpu.dot_dimension_numbers<[1], [0], [0], [1], [0, 0, 1, 1], [], []>} : vector<32x16xf32>, vector<16x32xf32>, vector<32x32xf32> -> vector<32x32xf32>
    %c21 = arith.constant 21 : index
    %824 = memref.load %arg2[%c21] : memref<288xf32, #tpu.memory_space<smem>>
    %825 = vector.broadcast %824 : f32 to vector<32x32xf32>
    %826 = arith.mulf %825, %823 : vector<32x32xf32>
    %827 = arith.addf %793, %826 : vector<32x32xf32>
    %c57 = arith.constant 57 : index
    %828 = memref.load %arg2[%c57] : memref<288xf32, #tpu.memory_space<smem>>
    %829 = vector.broadcast %828 : f32 to vector<32x32xf32>
    %830 = arith.mulf %829, %823 : vector<32x32xf32>
    %831 = arith.addf %797, %830 : vector<32x32xf32>
    %c93 = arith.constant 93 : index
    %832 = memref.load %arg2[%c93] : memref<288xf32, #tpu.memory_space<smem>>
    %833 = vector.broadcast %832 : f32 to vector<32x32xf32>
    %834 = arith.mulf %833, %823 : vector<32x32xf32>
    %835 = arith.addf %801, %834 : vector<32x32xf32>
    %c129 = arith.constant 129 : index
    %836 = memref.load %arg2[%c129] : memref<288xf32, #tpu.memory_space<smem>>
    %837 = vector.broadcast %836 : f32 to vector<32x32xf32>
    %838 = arith.mulf %837, %823 : vector<32x32xf32>
    %839 = arith.addf %805, %838 : vector<32x32xf32>
    %c165 = arith.constant 165 : index
    %840 = memref.load %arg2[%c165] : memref<288xf32, #tpu.memory_space<smem>>
    %841 = vector.broadcast %840 : f32 to vector<32x32xf32>
    %842 = arith.mulf %841, %823 : vector<32x32xf32>
    %843 = arith.addf %809, %842 : vector<32x32xf32>
    %c201 = arith.constant 201 : index
    %844 = memref.load %arg2[%c201] : memref<288xf32, #tpu.memory_space<smem>>
    %845 = vector.broadcast %844 : f32 to vector<32x32xf32>
    %846 = arith.mulf %845, %823 : vector<32x32xf32>
    %847 = arith.addf %813, %846 : vector<32x32xf32>
    %c237 = arith.constant 237 : index
    %848 = memref.load %arg2[%c237] : memref<288xf32, #tpu.memory_space<smem>>
    %849 = vector.broadcast %848 : f32 to vector<32x32xf32>
    %850 = arith.mulf %849, %823 : vector<32x32xf32>
    %851 = arith.addf %817, %850 : vector<32x32xf32>
    %c273 = arith.constant 273 : index
    %852 = memref.load %arg2[%c273] : memref<288xf32, #tpu.memory_space<smem>>
    %853 = vector.broadcast %852 : f32 to vector<32x32xf32>
    %854 = arith.mulf %853, %823 : vector<32x32xf32>
    %855 = arith.addf %821, %854 : vector<32x32xf32>
    %cst_88 = arith.constant dense<0.000000e+00> : vector<32x32xf32>
    %856 = tpu.matmul %822, %83, %cst_88 {dimension_numbers = #tpu.dot_dimension_numbers<[1], [0], [0], [1], [0, 0, 1, 1], [], []>} : vector<32x16xf32>, vector<16x32xf32>, vector<32x32xf32> -> vector<32x32xf32>
    %c22 = arith.constant 22 : index
    %857 = memref.load %arg2[%c22] : memref<288xf32, #tpu.memory_space<smem>>
    %858 = vector.broadcast %857 : f32 to vector<32x32xf32>
    %859 = arith.mulf %858, %856 : vector<32x32xf32>
    %860 = arith.addf %827, %859 : vector<32x32xf32>
    %c58 = arith.constant 58 : index
    %861 = memref.load %arg2[%c58] : memref<288xf32, #tpu.memory_space<smem>>
    %862 = vector.broadcast %861 : f32 to vector<32x32xf32>
    %863 = arith.mulf %862, %856 : vector<32x32xf32>
    %864 = arith.addf %831, %863 : vector<32x32xf32>
    %c94 = arith.constant 94 : index
    %865 = memref.load %arg2[%c94] : memref<288xf32, #tpu.memory_space<smem>>
    %866 = vector.broadcast %865 : f32 to vector<32x32xf32>
    %867 = arith.mulf %866, %856 : vector<32x32xf32>
    %868 = arith.addf %835, %867 : vector<32x32xf32>
    %c130 = arith.constant 130 : index
    %869 = memref.load %arg2[%c130] : memref<288xf32, #tpu.memory_space<smem>>
    %870 = vector.broadcast %869 : f32 to vector<32x32xf32>
    %871 = arith.mulf %870, %856 : vector<32x32xf32>
    %872 = arith.addf %839, %871 : vector<32x32xf32>
    %c166 = arith.constant 166 : index
    %873 = memref.load %arg2[%c166] : memref<288xf32, #tpu.memory_space<smem>>
    %874 = vector.broadcast %873 : f32 to vector<32x32xf32>
    %875 = arith.mulf %874, %856 : vector<32x32xf32>
    %876 = arith.addf %843, %875 : vector<32x32xf32>
    %c202 = arith.constant 202 : index
    %877 = memref.load %arg2[%c202] : memref<288xf32, #tpu.memory_space<smem>>
    %878 = vector.broadcast %877 : f32 to vector<32x32xf32>
    %879 = arith.mulf %878, %856 : vector<32x32xf32>
    %880 = arith.addf %847, %879 : vector<32x32xf32>
    %c238 = arith.constant 238 : index
    %881 = memref.load %arg2[%c238] : memref<288xf32, #tpu.memory_space<smem>>
    %882 = vector.broadcast %881 : f32 to vector<32x32xf32>
    %883 = arith.mulf %882, %856 : vector<32x32xf32>
    %884 = arith.addf %851, %883 : vector<32x32xf32>
    %c274 = arith.constant 274 : index
    %885 = memref.load %arg2[%c274] : memref<288xf32, #tpu.memory_space<smem>>
    %886 = vector.broadcast %885 : f32 to vector<32x32xf32>
    %887 = arith.mulf %886, %856 : vector<32x32xf32>
    %888 = arith.addf %855, %887 : vector<32x32xf32>
    %cst_89 = arith.constant dense<0.000000e+00> : vector<32x32xf32>
    %889 = tpu.matmul %822, %99, %cst_89 {dimension_numbers = #tpu.dot_dimension_numbers<[1], [0], [0], [1], [0, 0, 1, 1], [], []>} : vector<32x16xf32>, vector<16x32xf32>, vector<32x32xf32> -> vector<32x32xf32>
    %c23 = arith.constant 23 : index
    %890 = memref.load %arg2[%c23] : memref<288xf32, #tpu.memory_space<smem>>
    %891 = vector.broadcast %890 : f32 to vector<32x32xf32>
    %892 = arith.mulf %891, %889 : vector<32x32xf32>
    %893 = arith.addf %860, %892 : vector<32x32xf32>
    %c59 = arith.constant 59 : index
    %894 = memref.load %arg2[%c59] : memref<288xf32, #tpu.memory_space<smem>>
    %895 = vector.broadcast %894 : f32 to vector<32x32xf32>
    %896 = arith.mulf %895, %889 : vector<32x32xf32>
    %897 = arith.addf %864, %896 : vector<32x32xf32>
    %c95 = arith.constant 95 : index
    %898 = memref.load %arg2[%c95] : memref<288xf32, #tpu.memory_space<smem>>
    %899 = vector.broadcast %898 : f32 to vector<32x32xf32>
    %900 = arith.mulf %899, %889 : vector<32x32xf32>
    %901 = arith.addf %868, %900 : vector<32x32xf32>
    %c131 = arith.constant 131 : index
    %902 = memref.load %arg2[%c131] : memref<288xf32, #tpu.memory_space<smem>>
    %903 = vector.broadcast %902 : f32 to vector<32x32xf32>
    %904 = arith.mulf %903, %889 : vector<32x32xf32>
    %905 = arith.addf %872, %904 : vector<32x32xf32>
    %c167 = arith.constant 167 : index
    %906 = memref.load %arg2[%c167] : memref<288xf32, #tpu.memory_space<smem>>
    %907 = vector.broadcast %906 : f32 to vector<32x32xf32>
    %908 = arith.mulf %907, %889 : vector<32x32xf32>
    %909 = arith.addf %876, %908 : vector<32x32xf32>
    %c203 = arith.constant 203 : index
    %910 = memref.load %arg2[%c203] : memref<288xf32, #tpu.memory_space<smem>>
    %911 = vector.broadcast %910 : f32 to vector<32x32xf32>
    %912 = arith.mulf %911, %889 : vector<32x32xf32>
    %913 = arith.addf %880, %912 : vector<32x32xf32>
    %c239 = arith.constant 239 : index
    %914 = memref.load %arg2[%c239] : memref<288xf32, #tpu.memory_space<smem>>
    %915 = vector.broadcast %914 : f32 to vector<32x32xf32>
    %916 = arith.mulf %915, %889 : vector<32x32xf32>
    %917 = arith.addf %884, %916 : vector<32x32xf32>
    %c275 = arith.constant 275 : index
    %918 = memref.load %arg2[%c275] : memref<288xf32, #tpu.memory_space<smem>>
    %919 = vector.broadcast %918 : f32 to vector<32x32xf32>
    %920 = arith.mulf %919, %889 : vector<32x32xf32>
    %921 = arith.addf %888, %920 : vector<32x32xf32>
    %cst_90 = arith.constant dense<0.000000e+00> : vector<32x16xf32>
    %922 = tpu.matmul %49, %721, %cst_90 {dimension_numbers = #tpu.dot_dimension_numbers<[1], [0], [0], [1], [0, 0, 1, 1], [], []>} : vector<32x16xf32>, vector<16x16xf32>, vector<32x16xf32> -> vector<32x16xf32>
    %cst_91 = arith.constant dense<0.000000e+00> : vector<32x32xf32>
    %923 = tpu.matmul %922, %67, %cst_91 {dimension_numbers = #tpu.dot_dimension_numbers<[1], [0], [0], [1], [0, 0, 1, 1], [], []>} : vector<32x16xf32>, vector<16x32xf32>, vector<32x32xf32> -> vector<32x32xf32>
    %c24 = arith.constant 24 : index
    %924 = memref.load %arg2[%c24] : memref<288xf32, #tpu.memory_space<smem>>
    %925 = vector.broadcast %924 : f32 to vector<32x32xf32>
    %926 = arith.mulf %925, %923 : vector<32x32xf32>
    %927 = arith.addf %893, %926 : vector<32x32xf32>
    %c60 = arith.constant 60 : index
    %928 = memref.load %arg2[%c60] : memref<288xf32, #tpu.memory_space<smem>>
    %929 = vector.broadcast %928 : f32 to vector<32x32xf32>
    %930 = arith.mulf %929, %923 : vector<32x32xf32>
    %931 = arith.addf %897, %930 : vector<32x32xf32>
    %c96 = arith.constant 96 : index
    %932 = memref.load %arg2[%c96] : memref<288xf32, #tpu.memory_space<smem>>
    %933 = vector.broadcast %932 : f32 to vector<32x32xf32>
    %934 = arith.mulf %933, %923 : vector<32x32xf32>
    %935 = arith.addf %901, %934 : vector<32x32xf32>
    %c132 = arith.constant 132 : index
    %936 = memref.load %arg2[%c132] : memref<288xf32, #tpu.memory_space<smem>>
    %937 = vector.broadcast %936 : f32 to vector<32x32xf32>
    %938 = arith.mulf %937, %923 : vector<32x32xf32>
    %939 = arith.addf %905, %938 : vector<32x32xf32>
    %c168 = arith.constant 168 : index
    %940 = memref.load %arg2[%c168] : memref<288xf32, #tpu.memory_space<smem>>
    %941 = vector.broadcast %940 : f32 to vector<32x32xf32>
    %942 = arith.mulf %941, %923 : vector<32x32xf32>
    %943 = arith.addf %909, %942 : vector<32x32xf32>
    %c204 = arith.constant 204 : index
    %944 = memref.load %arg2[%c204] : memref<288xf32, #tpu.memory_space<smem>>
    %945 = vector.broadcast %944 : f32 to vector<32x32xf32>
    %946 = arith.mulf %945, %923 : vector<32x32xf32>
    %947 = arith.addf %913, %946 : vector<32x32xf32>
    %c240 = arith.constant 240 : index
    %948 = memref.load %arg2[%c240] : memref<288xf32, #tpu.memory_space<smem>>
    %949 = vector.broadcast %948 : f32 to vector<32x32xf32>
    %950 = arith.mulf %949, %923 : vector<32x32xf32>
    %951 = arith.addf %917, %950 : vector<32x32xf32>
    %c276 = arith.constant 276 : index
    %952 = memref.load %arg2[%c276] : memref<288xf32, #tpu.memory_space<smem>>
    %953 = vector.broadcast %952 : f32 to vector<32x32xf32>
    %954 = arith.mulf %953, %923 : vector<32x32xf32>
    %955 = arith.addf %921, %954 : vector<32x32xf32>
    %cst_92 = arith.constant dense<0.000000e+00> : vector<32x32xf32>
    %956 = tpu.matmul %922, %83, %cst_92 {dimension_numbers = #tpu.dot_dimension_numbers<[1], [0], [0], [1], [0, 0, 1, 1], [], []>} : vector<32x16xf32>, vector<16x32xf32>, vector<32x32xf32> -> vector<32x32xf32>
    %c25 = arith.constant 25 : index
    %957 = memref.load %arg2[%c25] : memref<288xf32, #tpu.memory_space<smem>>
    %958 = vector.broadcast %957 : f32 to vector<32x32xf32>
    %959 = arith.mulf %958, %956 : vector<32x32xf32>
    %960 = arith.addf %927, %959 : vector<32x32xf32>
    %c61 = arith.constant 61 : index
    %961 = memref.load %arg2[%c61] : memref<288xf32, #tpu.memory_space<smem>>
    %962 = vector.broadcast %961 : f32 to vector<32x32xf32>
    %963 = arith.mulf %962, %956 : vector<32x32xf32>
    %964 = arith.addf %931, %963 : vector<32x32xf32>
    %c97 = arith.constant 97 : index
    %965 = memref.load %arg2[%c97] : memref<288xf32, #tpu.memory_space<smem>>
    %966 = vector.broadcast %965 : f32 to vector<32x32xf32>
    %967 = arith.mulf %966, %956 : vector<32x32xf32>
    %968 = arith.addf %935, %967 : vector<32x32xf32>
    %c133 = arith.constant 133 : index
    %969 = memref.load %arg2[%c133] : memref<288xf32, #tpu.memory_space<smem>>
    %970 = vector.broadcast %969 : f32 to vector<32x32xf32>
    %971 = arith.mulf %970, %956 : vector<32x32xf32>
    %972 = arith.addf %939, %971 : vector<32x32xf32>
    %c169 = arith.constant 169 : index
    %973 = memref.load %arg2[%c169] : memref<288xf32, #tpu.memory_space<smem>>
    %974 = vector.broadcast %973 : f32 to vector<32x32xf32>
    %975 = arith.mulf %974, %956 : vector<32x32xf32>
    %976 = arith.addf %943, %975 : vector<32x32xf32>
    %c205 = arith.constant 205 : index
    %977 = memref.load %arg2[%c205] : memref<288xf32, #tpu.memory_space<smem>>
    %978 = vector.broadcast %977 : f32 to vector<32x32xf32>
    %979 = arith.mulf %978, %956 : vector<32x32xf32>
    %980 = arith.addf %947, %979 : vector<32x32xf32>
    %c241 = arith.constant 241 : index
    %981 = memref.load %arg2[%c241] : memref<288xf32, #tpu.memory_space<smem>>
    %982 = vector.broadcast %981 : f32 to vector<32x32xf32>
    %983 = arith.mulf %982, %956 : vector<32x32xf32>
    %984 = arith.addf %951, %983 : vector<32x32xf32>
    %c277 = arith.constant 277 : index
    %985 = memref.load %arg2[%c277] : memref<288xf32, #tpu.memory_space<smem>>
    %986 = vector.broadcast %985 : f32 to vector<32x32xf32>
    %987 = arith.mulf %986, %956 : vector<32x32xf32>
    %988 = arith.addf %955, %987 : vector<32x32xf32>
    %cst_93 = arith.constant dense<0.000000e+00> : vector<32x32xf32>
    %989 = tpu.matmul %922, %99, %cst_93 {dimension_numbers = #tpu.dot_dimension_numbers<[1], [0], [0], [1], [0, 0, 1, 1], [], []>} : vector<32x16xf32>, vector<16x32xf32>, vector<32x32xf32> -> vector<32x32xf32>
    %c26 = arith.constant 26 : index
    %990 = memref.load %arg2[%c26] : memref<288xf32, #tpu.memory_space<smem>>
    %991 = vector.broadcast %990 : f32 to vector<32x32xf32>
    %992 = arith.mulf %991, %989 : vector<32x32xf32>
    %993 = arith.addf %960, %992 : vector<32x32xf32>
    %c62 = arith.constant 62 : index
    %994 = memref.load %arg2[%c62] : memref<288xf32, #tpu.memory_space<smem>>
    %995 = vector.broadcast %994 : f32 to vector<32x32xf32>
    %996 = arith.mulf %995, %989 : vector<32x32xf32>
    %997 = arith.addf %964, %996 : vector<32x32xf32>
    %c98 = arith.constant 98 : index
    %998 = memref.load %arg2[%c98] : memref<288xf32, #tpu.memory_space<smem>>
    %999 = vector.broadcast %998 : f32 to vector<32x32xf32>
    %1000 = arith.mulf %999, %989 : vector<32x32xf32>
    %1001 = arith.addf %968, %1000 : vector<32x32xf32>
    %c134 = arith.constant 134 : index
    %1002 = memref.load %arg2[%c134] : memref<288xf32, #tpu.memory_space<smem>>
    %1003 = vector.broadcast %1002 : f32 to vector<32x32xf32>
    %1004 = arith.mulf %1003, %989 : vector<32x32xf32>
    %1005 = arith.addf %972, %1004 : vector<32x32xf32>
    %c170 = arith.constant 170 : index
    %1006 = memref.load %arg2[%c170] : memref<288xf32, #tpu.memory_space<smem>>
    %1007 = vector.broadcast %1006 : f32 to vector<32x32xf32>
    %1008 = arith.mulf %1007, %989 : vector<32x32xf32>
    %1009 = arith.addf %976, %1008 : vector<32x32xf32>
    %c206 = arith.constant 206 : index
    %1010 = memref.load %arg2[%c206] : memref<288xf32, #tpu.memory_space<smem>>
    %1011 = vector.broadcast %1010 : f32 to vector<32x32xf32>
    %1012 = arith.mulf %1011, %989 : vector<32x32xf32>
    %1013 = arith.addf %980, %1012 : vector<32x32xf32>
    %c242 = arith.constant 242 : index
    %1014 = memref.load %arg2[%c242] : memref<288xf32, #tpu.memory_space<smem>>
    %1015 = vector.broadcast %1014 : f32 to vector<32x32xf32>
    %1016 = arith.mulf %1015, %989 : vector<32x32xf32>
    %1017 = arith.addf %984, %1016 : vector<32x32xf32>
    %c278 = arith.constant 278 : index
    %1018 = memref.load %arg2[%c278] : memref<288xf32, #tpu.memory_space<smem>>
    %1019 = vector.broadcast %1018 : f32 to vector<32x32xf32>
    %1020 = arith.mulf %1019, %989 : vector<32x32xf32>
    %1021 = arith.addf %988, %1020 : vector<32x32xf32>
    %c0_94 = arith.constant 0 : index
    %c3_95 = arith.constant 3 : index
    %c0_96 = arith.constant 0 : index
    %c0_97 = arith.constant 0 : index
    %1022 = vector.load %arg1[%c0_94, %c3_95, %c0_96, %c0_97] : memref<1x4x16x16xf32, #tpu.memory_space<vmem>>, vector<1x1x16x16xf32>
    %1023 = vector.shape_cast %1022 : vector<1x1x16x16xf32> to vector<16x16xf32>
    %cst_98 = arith.constant dense<0.000000e+00> : vector<32x16xf32>
    %1024 = tpu.matmul %17, %1023, %cst_98 {dimension_numbers = #tpu.dot_dimension_numbers<[1], [0], [0], [1], [0, 0, 1, 1], [], []>} : vector<32x16xf32>, vector<16x16xf32>, vector<32x16xf32> -> vector<32x16xf32>
    %cst_99 = arith.constant dense<0.000000e+00> : vector<32x32xf32>
    %1025 = tpu.matmul %1024, %67, %cst_99 {dimension_numbers = #tpu.dot_dimension_numbers<[1], [0], [0], [1], [0, 0, 1, 1], [], []>} : vector<32x16xf32>, vector<16x32xf32>, vector<32x32xf32> -> vector<32x32xf32>
    %c27 = arith.constant 27 : index
    %1026 = memref.load %arg2[%c27] : memref<288xf32, #tpu.memory_space<smem>>
    %1027 = vector.broadcast %1026 : f32 to vector<32x32xf32>
    %1028 = arith.mulf %1027, %1025 : vector<32x32xf32>
    %1029 = arith.addf %993, %1028 : vector<32x32xf32>
    %c63 = arith.constant 63 : index
    %1030 = memref.load %arg2[%c63] : memref<288xf32, #tpu.memory_space<smem>>
    %1031 = vector.broadcast %1030 : f32 to vector<32x32xf32>
    %1032 = arith.mulf %1031, %1025 : vector<32x32xf32>
    %1033 = arith.addf %997, %1032 : vector<32x32xf32>
    %c99 = arith.constant 99 : index
    %1034 = memref.load %arg2[%c99] : memref<288xf32, #tpu.memory_space<smem>>
    %1035 = vector.broadcast %1034 : f32 to vector<32x32xf32>
    %1036 = arith.mulf %1035, %1025 : vector<32x32xf32>
    %1037 = arith.addf %1001, %1036 : vector<32x32xf32>
    %c135 = arith.constant 135 : index
    %1038 = memref.load %arg2[%c135] : memref<288xf32, #tpu.memory_space<smem>>
    %1039 = vector.broadcast %1038 : f32 to vector<32x32xf32>
    %1040 = arith.mulf %1039, %1025 : vector<32x32xf32>
    %1041 = arith.addf %1005, %1040 : vector<32x32xf32>
    %c171 = arith.constant 171 : index
    %1042 = memref.load %arg2[%c171] : memref<288xf32, #tpu.memory_space<smem>>
    %1043 = vector.broadcast %1042 : f32 to vector<32x32xf32>
    %1044 = arith.mulf %1043, %1025 : vector<32x32xf32>
    %1045 = arith.addf %1009, %1044 : vector<32x32xf32>
    %c207 = arith.constant 207 : index
    %1046 = memref.load %arg2[%c207] : memref<288xf32, #tpu.memory_space<smem>>
    %1047 = vector.broadcast %1046 : f32 to vector<32x32xf32>
    %1048 = arith.mulf %1047, %1025 : vector<32x32xf32>
    %1049 = arith.addf %1013, %1048 : vector<32x32xf32>
    %c243 = arith.constant 243 : index
    %1050 = memref.load %arg2[%c243] : memref<288xf32, #tpu.memory_space<smem>>
    %1051 = vector.broadcast %1050 : f32 to vector<32x32xf32>
    %1052 = arith.mulf %1051, %1025 : vector<32x32xf32>
    %1053 = arith.addf %1017, %1052 : vector<32x32xf32>
    %c279 = arith.constant 279 : index
    %1054 = memref.load %arg2[%c279] : memref<288xf32, #tpu.memory_space<smem>>
    %1055 = vector.broadcast %1054 : f32 to vector<32x32xf32>
    %1056 = arith.mulf %1055, %1025 : vector<32x32xf32>
    %1057 = arith.addf %1021, %1056 : vector<32x32xf32>
    %cst_100 = arith.constant dense<0.000000e+00> : vector<32x32xf32>
    %1058 = tpu.matmul %1024, %83, %cst_100 {dimension_numbers = #tpu.dot_dimension_numbers<[1], [0], [0], [1], [0, 0, 1, 1], [], []>} : vector<32x16xf32>, vector<16x32xf32>, vector<32x32xf32> -> vector<32x32xf32>
    %c28 = arith.constant 28 : index
    %1059 = memref.load %arg2[%c28] : memref<288xf32, #tpu.memory_space<smem>>
    %1060 = vector.broadcast %1059 : f32 to vector<32x32xf32>
    %1061 = arith.mulf %1060, %1058 : vector<32x32xf32>
    %1062 = arith.addf %1029, %1061 : vector<32x32xf32>
    %c64 = arith.constant 64 : index
    %1063 = memref.load %arg2[%c64] : memref<288xf32, #tpu.memory_space<smem>>
    %1064 = vector.broadcast %1063 : f32 to vector<32x32xf32>
    %1065 = arith.mulf %1064, %1058 : vector<32x32xf32>
    %1066 = arith.addf %1033, %1065 : vector<32x32xf32>
    %c100 = arith.constant 100 : index
    %1067 = memref.load %arg2[%c100] : memref<288xf32, #tpu.memory_space<smem>>
    %1068 = vector.broadcast %1067 : f32 to vector<32x32xf32>
    %1069 = arith.mulf %1068, %1058 : vector<32x32xf32>
    %1070 = arith.addf %1037, %1069 : vector<32x32xf32>
    %c136 = arith.constant 136 : index
    %1071 = memref.load %arg2[%c136] : memref<288xf32, #tpu.memory_space<smem>>
    %1072 = vector.broadcast %1071 : f32 to vector<32x32xf32>
    %1073 = arith.mulf %1072, %1058 : vector<32x32xf32>
    %1074 = arith.addf %1041, %1073 : vector<32x32xf32>
    %c172 = arith.constant 172 : index
    %1075 = memref.load %arg2[%c172] : memref<288xf32, #tpu.memory_space<smem>>
    %1076 = vector.broadcast %1075 : f32 to vector<32x32xf32>
    %1077 = arith.mulf %1076, %1058 : vector<32x32xf32>
    %1078 = arith.addf %1045, %1077 : vector<32x32xf32>
    %c208 = arith.constant 208 : index
    %1079 = memref.load %arg2[%c208] : memref<288xf32, #tpu.memory_space<smem>>
    %1080 = vector.broadcast %1079 : f32 to vector<32x32xf32>
    %1081 = arith.mulf %1080, %1058 : vector<32x32xf32>
    %1082 = arith.addf %1049, %1081 : vector<32x32xf32>
    %c244 = arith.constant 244 : index
    %1083 = memref.load %arg2[%c244] : memref<288xf32, #tpu.memory_space<smem>>
    %1084 = vector.broadcast %1083 : f32 to vector<32x32xf32>
    %1085 = arith.mulf %1084, %1058 : vector<32x32xf32>
    %1086 = arith.addf %1053, %1085 : vector<32x32xf32>
    %c280 = arith.constant 280 : index
    %1087 = memref.load %arg2[%c280] : memref<288xf32, #tpu.memory_space<smem>>
    %1088 = vector.broadcast %1087 : f32 to vector<32x32xf32>
    %1089 = arith.mulf %1088, %1058 : vector<32x32xf32>
    %1090 = arith.addf %1057, %1089 : vector<32x32xf32>
    %cst_101 = arith.constant dense<0.000000e+00> : vector<32x32xf32>
    %1091 = tpu.matmul %1024, %99, %cst_101 {dimension_numbers = #tpu.dot_dimension_numbers<[1], [0], [0], [1], [0, 0, 1, 1], [], []>} : vector<32x16xf32>, vector<16x32xf32>, vector<32x32xf32> -> vector<32x32xf32>
    %c29 = arith.constant 29 : index
    %1092 = memref.load %arg2[%c29] : memref<288xf32, #tpu.memory_space<smem>>
    %1093 = vector.broadcast %1092 : f32 to vector<32x32xf32>
    %1094 = arith.mulf %1093, %1091 : vector<32x32xf32>
    %1095 = arith.addf %1062, %1094 : vector<32x32xf32>
    %c65 = arith.constant 65 : index
    %1096 = memref.load %arg2[%c65] : memref<288xf32, #tpu.memory_space<smem>>
    %1097 = vector.broadcast %1096 : f32 to vector<32x32xf32>
    %1098 = arith.mulf %1097, %1091 : vector<32x32xf32>
    %1099 = arith.addf %1066, %1098 : vector<32x32xf32>
    %c101 = arith.constant 101 : index
    %1100 = memref.load %arg2[%c101] : memref<288xf32, #tpu.memory_space<smem>>
    %1101 = vector.broadcast %1100 : f32 to vector<32x32xf32>
    %1102 = arith.mulf %1101, %1091 : vector<32x32xf32>
    %1103 = arith.addf %1070, %1102 : vector<32x32xf32>
    %c137 = arith.constant 137 : index
    %1104 = memref.load %arg2[%c137] : memref<288xf32, #tpu.memory_space<smem>>
    %1105 = vector.broadcast %1104 : f32 to vector<32x32xf32>
    %1106 = arith.mulf %1105, %1091 : vector<32x32xf32>
    %1107 = arith.addf %1074, %1106 : vector<32x32xf32>
    %c173 = arith.constant 173 : index
    %1108 = memref.load %arg2[%c173] : memref<288xf32, #tpu.memory_space<smem>>
    %1109 = vector.broadcast %1108 : f32 to vector<32x32xf32>
    %1110 = arith.mulf %1109, %1091 : vector<32x32xf32>
    %1111 = arith.addf %1078, %1110 : vector<32x32xf32>
    %c209 = arith.constant 209 : index
    %1112 = memref.load %arg2[%c209] : memref<288xf32, #tpu.memory_space<smem>>
    %1113 = vector.broadcast %1112 : f32 to vector<32x32xf32>
    %1114 = arith.mulf %1113, %1091 : vector<32x32xf32>
    %1115 = arith.addf %1082, %1114 : vector<32x32xf32>
    %c245 = arith.constant 245 : index
    %1116 = memref.load %arg2[%c245] : memref<288xf32, #tpu.memory_space<smem>>
    %1117 = vector.broadcast %1116 : f32 to vector<32x32xf32>
    %1118 = arith.mulf %1117, %1091 : vector<32x32xf32>
    %1119 = arith.addf %1086, %1118 : vector<32x32xf32>
    %c281 = arith.constant 281 : index
    %1120 = memref.load %arg2[%c281] : memref<288xf32, #tpu.memory_space<smem>>
    %1121 = vector.broadcast %1120 : f32 to vector<32x32xf32>
    %1122 = arith.mulf %1121, %1091 : vector<32x32xf32>
    %1123 = arith.addf %1090, %1122 : vector<32x32xf32>
    %cst_102 = arith.constant dense<0.000000e+00> : vector<32x16xf32>
    %1124 = tpu.matmul %33, %1023, %cst_102 {dimension_numbers = #tpu.dot_dimension_numbers<[1], [0], [0], [1], [0, 0, 1, 1], [], []>} : vector<32x16xf32>, vector<16x16xf32>, vector<32x16xf32> -> vector<32x16xf32>
    %cst_103 = arith.constant dense<0.000000e+00> : vector<32x32xf32>
    %1125 = tpu.matmul %1124, %67, %cst_103 {dimension_numbers = #tpu.dot_dimension_numbers<[1], [0], [0], [1], [0, 0, 1, 1], [], []>} : vector<32x16xf32>, vector<16x32xf32>, vector<32x32xf32> -> vector<32x32xf32>
    %c30 = arith.constant 30 : index
    %1126 = memref.load %arg2[%c30] : memref<288xf32, #tpu.memory_space<smem>>
    %1127 = vector.broadcast %1126 : f32 to vector<32x32xf32>
    %1128 = arith.mulf %1127, %1125 : vector<32x32xf32>
    %1129 = arith.addf %1095, %1128 : vector<32x32xf32>
    %c66 = arith.constant 66 : index
    %1130 = memref.load %arg2[%c66] : memref<288xf32, #tpu.memory_space<smem>>
    %1131 = vector.broadcast %1130 : f32 to vector<32x32xf32>
    %1132 = arith.mulf %1131, %1125 : vector<32x32xf32>
    %1133 = arith.addf %1099, %1132 : vector<32x32xf32>
    %c102 = arith.constant 102 : index
    %1134 = memref.load %arg2[%c102] : memref<288xf32, #tpu.memory_space<smem>>
    %1135 = vector.broadcast %1134 : f32 to vector<32x32xf32>
    %1136 = arith.mulf %1135, %1125 : vector<32x32xf32>
    %1137 = arith.addf %1103, %1136 : vector<32x32xf32>
    %c138 = arith.constant 138 : index
    %1138 = memref.load %arg2[%c138] : memref<288xf32, #tpu.memory_space<smem>>
    %1139 = vector.broadcast %1138 : f32 to vector<32x32xf32>
    %1140 = arith.mulf %1139, %1125 : vector<32x32xf32>
    %1141 = arith.addf %1107, %1140 : vector<32x32xf32>
    %c174 = arith.constant 174 : index
    %1142 = memref.load %arg2[%c174] : memref<288xf32, #tpu.memory_space<smem>>
    %1143 = vector.broadcast %1142 : f32 to vector<32x32xf32>
    %1144 = arith.mulf %1143, %1125 : vector<32x32xf32>
    %1145 = arith.addf %1111, %1144 : vector<32x32xf32>
    %c210 = arith.constant 210 : index
    %1146 = memref.load %arg2[%c210] : memref<288xf32, #tpu.memory_space<smem>>
    %1147 = vector.broadcast %1146 : f32 to vector<32x32xf32>
    %1148 = arith.mulf %1147, %1125 : vector<32x32xf32>
    %1149 = arith.addf %1115, %1148 : vector<32x32xf32>
    %c246 = arith.constant 246 : index
    %1150 = memref.load %arg2[%c246] : memref<288xf32, #tpu.memory_space<smem>>
    %1151 = vector.broadcast %1150 : f32 to vector<32x32xf32>
    %1152 = arith.mulf %1151, %1125 : vector<32x32xf32>
    %1153 = arith.addf %1119, %1152 : vector<32x32xf32>
    %c282 = arith.constant 282 : index
    %1154 = memref.load %arg2[%c282] : memref<288xf32, #tpu.memory_space<smem>>
    %1155 = vector.broadcast %1154 : f32 to vector<32x32xf32>
    %1156 = arith.mulf %1155, %1125 : vector<32x32xf32>
    %1157 = arith.addf %1123, %1156 : vector<32x32xf32>
    %cst_104 = arith.constant dense<0.000000e+00> : vector<32x32xf32>
    %1158 = tpu.matmul %1124, %83, %cst_104 {dimension_numbers = #tpu.dot_dimension_numbers<[1], [0], [0], [1], [0, 0, 1, 1], [], []>} : vector<32x16xf32>, vector<16x32xf32>, vector<32x32xf32> -> vector<32x32xf32>
    %c31 = arith.constant 31 : index
    %1159 = memref.load %arg2[%c31] : memref<288xf32, #tpu.memory_space<smem>>
    %1160 = vector.broadcast %1159 : f32 to vector<32x32xf32>
    %1161 = arith.mulf %1160, %1158 : vector<32x32xf32>
    %1162 = arith.addf %1129, %1161 : vector<32x32xf32>
    %c67 = arith.constant 67 : index
    %1163 = memref.load %arg2[%c67] : memref<288xf32, #tpu.memory_space<smem>>
    %1164 = vector.broadcast %1163 : f32 to vector<32x32xf32>
    %1165 = arith.mulf %1164, %1158 : vector<32x32xf32>
    %1166 = arith.addf %1133, %1165 : vector<32x32xf32>
    %c103 = arith.constant 103 : index
    %1167 = memref.load %arg2[%c103] : memref<288xf32, #tpu.memory_space<smem>>
    %1168 = vector.broadcast %1167 : f32 to vector<32x32xf32>
    %1169 = arith.mulf %1168, %1158 : vector<32x32xf32>
    %1170 = arith.addf %1137, %1169 : vector<32x32xf32>
    %c139 = arith.constant 139 : index
    %1171 = memref.load %arg2[%c139] : memref<288xf32, #tpu.memory_space<smem>>
    %1172 = vector.broadcast %1171 : f32 to vector<32x32xf32>
    %1173 = arith.mulf %1172, %1158 : vector<32x32xf32>
    %1174 = arith.addf %1141, %1173 : vector<32x32xf32>
    %c175 = arith.constant 175 : index
    %1175 = memref.load %arg2[%c175] : memref<288xf32, #tpu.memory_space<smem>>
    %1176 = vector.broadcast %1175 : f32 to vector<32x32xf32>
    %1177 = arith.mulf %1176, %1158 : vector<32x32xf32>
    %1178 = arith.addf %1145, %1177 : vector<32x32xf32>
    %c211 = arith.constant 211 : index
    %1179 = memref.load %arg2[%c211] : memref<288xf32, #tpu.memory_space<smem>>
    %1180 = vector.broadcast %1179 : f32 to vector<32x32xf32>
    %1181 = arith.mulf %1180, %1158 : vector<32x32xf32>
    %1182 = arith.addf %1149, %1181 : vector<32x32xf32>
    %c247 = arith.constant 247 : index
    %1183 = memref.load %arg2[%c247] : memref<288xf32, #tpu.memory_space<smem>>
    %1184 = vector.broadcast %1183 : f32 to vector<32x32xf32>
    %1185 = arith.mulf %1184, %1158 : vector<32x32xf32>
    %1186 = arith.addf %1153, %1185 : vector<32x32xf32>
    %c283 = arith.constant 283 : index
    %1187 = memref.load %arg2[%c283] : memref<288xf32, #tpu.memory_space<smem>>
    %1188 = vector.broadcast %1187 : f32 to vector<32x32xf32>
    %1189 = arith.mulf %1188, %1158 : vector<32x32xf32>
    %1190 = arith.addf %1157, %1189 : vector<32x32xf32>
    %cst_105 = arith.constant dense<0.000000e+00> : vector<32x32xf32>
    %1191 = tpu.matmul %1124, %99, %cst_105 {dimension_numbers = #tpu.dot_dimension_numbers<[1], [0], [0], [1], [0, 0, 1, 1], [], []>} : vector<32x16xf32>, vector<16x32xf32>, vector<32x32xf32> -> vector<32x32xf32>
    %c32 = arith.constant 32 : index
    %1192 = memref.load %arg2[%c32] : memref<288xf32, #tpu.memory_space<smem>>
    %1193 = vector.broadcast %1192 : f32 to vector<32x32xf32>
    %1194 = arith.mulf %1193, %1191 : vector<32x32xf32>
    %1195 = arith.addf %1162, %1194 : vector<32x32xf32>
    %c68 = arith.constant 68 : index
    %1196 = memref.load %arg2[%c68] : memref<288xf32, #tpu.memory_space<smem>>
    %1197 = vector.broadcast %1196 : f32 to vector<32x32xf32>
    %1198 = arith.mulf %1197, %1191 : vector<32x32xf32>
    %1199 = arith.addf %1166, %1198 : vector<32x32xf32>
    %c104 = arith.constant 104 : index
    %1200 = memref.load %arg2[%c104] : memref<288xf32, #tpu.memory_space<smem>>
    %1201 = vector.broadcast %1200 : f32 to vector<32x32xf32>
    %1202 = arith.mulf %1201, %1191 : vector<32x32xf32>
    %1203 = arith.addf %1170, %1202 : vector<32x32xf32>
    %c140 = arith.constant 140 : index
    %1204 = memref.load %arg2[%c140] : memref<288xf32, #tpu.memory_space<smem>>
    %1205 = vector.broadcast %1204 : f32 to vector<32x32xf32>
    %1206 = arith.mulf %1205, %1191 : vector<32x32xf32>
    %1207 = arith.addf %1174, %1206 : vector<32x32xf32>
    %c176 = arith.constant 176 : index
    %1208 = memref.load %arg2[%c176] : memref<288xf32, #tpu.memory_space<smem>>
    %1209 = vector.broadcast %1208 : f32 to vector<32x32xf32>
    %1210 = arith.mulf %1209, %1191 : vector<32x32xf32>
    %1211 = arith.addf %1178, %1210 : vector<32x32xf32>
    %c212 = arith.constant 212 : index
    %1212 = memref.load %arg2[%c212] : memref<288xf32, #tpu.memory_space<smem>>
    %1213 = vector.broadcast %1212 : f32 to vector<32x32xf32>
    %1214 = arith.mulf %1213, %1191 : vector<32x32xf32>
    %1215 = arith.addf %1182, %1214 : vector<32x32xf32>
    %c248 = arith.constant 248 : index
    %1216 = memref.load %arg2[%c248] : memref<288xf32, #tpu.memory_space<smem>>
    %1217 = vector.broadcast %1216 : f32 to vector<32x32xf32>
    %1218 = arith.mulf %1217, %1191 : vector<32x32xf32>
    %1219 = arith.addf %1186, %1218 : vector<32x32xf32>
    %c284 = arith.constant 284 : index
    %1220 = memref.load %arg2[%c284] : memref<288xf32, #tpu.memory_space<smem>>
    %1221 = vector.broadcast %1220 : f32 to vector<32x32xf32>
    %1222 = arith.mulf %1221, %1191 : vector<32x32xf32>
    %1223 = arith.addf %1190, %1222 : vector<32x32xf32>
    %cst_106 = arith.constant dense<0.000000e+00> : vector<32x16xf32>
    %1224 = tpu.matmul %49, %1023, %cst_106 {dimension_numbers = #tpu.dot_dimension_numbers<[1], [0], [0], [1], [0, 0, 1, 1], [], []>} : vector<32x16xf32>, vector<16x16xf32>, vector<32x16xf32> -> vector<32x16xf32>
    %cst_107 = arith.constant dense<0.000000e+00> : vector<32x32xf32>
    %1225 = tpu.matmul %1224, %67, %cst_107 {dimension_numbers = #tpu.dot_dimension_numbers<[1], [0], [0], [1], [0, 0, 1, 1], [], []>} : vector<32x16xf32>, vector<16x32xf32>, vector<32x32xf32> -> vector<32x32xf32>
    %c33 = arith.constant 33 : index
    %1226 = memref.load %arg2[%c33] : memref<288xf32, #tpu.memory_space<smem>>
    %1227 = vector.broadcast %1226 : f32 to vector<32x32xf32>
    %1228 = arith.mulf %1227, %1225 : vector<32x32xf32>
    %1229 = arith.addf %1195, %1228 : vector<32x32xf32>
    %c69 = arith.constant 69 : index
    %1230 = memref.load %arg2[%c69] : memref<288xf32, #tpu.memory_space<smem>>
    %1231 = vector.broadcast %1230 : f32 to vector<32x32xf32>
    %1232 = arith.mulf %1231, %1225 : vector<32x32xf32>
    %1233 = arith.addf %1199, %1232 : vector<32x32xf32>
    %c105 = arith.constant 105 : index
    %1234 = memref.load %arg2[%c105] : memref<288xf32, #tpu.memory_space<smem>>
    %1235 = vector.broadcast %1234 : f32 to vector<32x32xf32>
    %1236 = arith.mulf %1235, %1225 : vector<32x32xf32>
    %1237 = arith.addf %1203, %1236 : vector<32x32xf32>
    %c141 = arith.constant 141 : index
    %1238 = memref.load %arg2[%c141] : memref<288xf32, #tpu.memory_space<smem>>
    %1239 = vector.broadcast %1238 : f32 to vector<32x32xf32>
    %1240 = arith.mulf %1239, %1225 : vector<32x32xf32>
    %1241 = arith.addf %1207, %1240 : vector<32x32xf32>
    %c177 = arith.constant 177 : index
    %1242 = memref.load %arg2[%c177] : memref<288xf32, #tpu.memory_space<smem>>
    %1243 = vector.broadcast %1242 : f32 to vector<32x32xf32>
    %1244 = arith.mulf %1243, %1225 : vector<32x32xf32>
    %1245 = arith.addf %1211, %1244 : vector<32x32xf32>
    %c213 = arith.constant 213 : index
    %1246 = memref.load %arg2[%c213] : memref<288xf32, #tpu.memory_space<smem>>
    %1247 = vector.broadcast %1246 : f32 to vector<32x32xf32>
    %1248 = arith.mulf %1247, %1225 : vector<32x32xf32>
    %1249 = arith.addf %1215, %1248 : vector<32x32xf32>
    %c249 = arith.constant 249 : index
    %1250 = memref.load %arg2[%c249] : memref<288xf32, #tpu.memory_space<smem>>
    %1251 = vector.broadcast %1250 : f32 to vector<32x32xf32>
    %1252 = arith.mulf %1251, %1225 : vector<32x32xf32>
    %1253 = arith.addf %1219, %1252 : vector<32x32xf32>
    %c285 = arith.constant 285 : index
    %1254 = memref.load %arg2[%c285] : memref<288xf32, #tpu.memory_space<smem>>
    %1255 = vector.broadcast %1254 : f32 to vector<32x32xf32>
    %1256 = arith.mulf %1255, %1225 : vector<32x32xf32>
    %1257 = arith.addf %1223, %1256 : vector<32x32xf32>
    %cst_108 = arith.constant dense<0.000000e+00> : vector<32x32xf32>
    %1258 = tpu.matmul %1224, %83, %cst_108 {dimension_numbers = #tpu.dot_dimension_numbers<[1], [0], [0], [1], [0, 0, 1, 1], [], []>} : vector<32x16xf32>, vector<16x32xf32>, vector<32x32xf32> -> vector<32x32xf32>
    %c34 = arith.constant 34 : index
    %1259 = memref.load %arg2[%c34] : memref<288xf32, #tpu.memory_space<smem>>
    %1260 = vector.broadcast %1259 : f32 to vector<32x32xf32>
    %1261 = arith.mulf %1260, %1258 : vector<32x32xf32>
    %1262 = arith.addf %1229, %1261 : vector<32x32xf32>
    %c70 = arith.constant 70 : index
    %1263 = memref.load %arg2[%c70] : memref<288xf32, #tpu.memory_space<smem>>
    %1264 = vector.broadcast %1263 : f32 to vector<32x32xf32>
    %1265 = arith.mulf %1264, %1258 : vector<32x32xf32>
    %1266 = arith.addf %1233, %1265 : vector<32x32xf32>
    %c106 = arith.constant 106 : index
    %1267 = memref.load %arg2[%c106] : memref<288xf32, #tpu.memory_space<smem>>
    %1268 = vector.broadcast %1267 : f32 to vector<32x32xf32>
    %1269 = arith.mulf %1268, %1258 : vector<32x32xf32>
    %1270 = arith.addf %1237, %1269 : vector<32x32xf32>
    %c142 = arith.constant 142 : index
    %1271 = memref.load %arg2[%c142] : memref<288xf32, #tpu.memory_space<smem>>
    %1272 = vector.broadcast %1271 : f32 to vector<32x32xf32>
    %1273 = arith.mulf %1272, %1258 : vector<32x32xf32>
    %1274 = arith.addf %1241, %1273 : vector<32x32xf32>
    %c178 = arith.constant 178 : index
    %1275 = memref.load %arg2[%c178] : memref<288xf32, #tpu.memory_space<smem>>
    %1276 = vector.broadcast %1275 : f32 to vector<32x32xf32>
    %1277 = arith.mulf %1276, %1258 : vector<32x32xf32>
    %1278 = arith.addf %1245, %1277 : vector<32x32xf32>
    %c214 = arith.constant 214 : index
    %1279 = memref.load %arg2[%c214] : memref<288xf32, #tpu.memory_space<smem>>
    %1280 = vector.broadcast %1279 : f32 to vector<32x32xf32>
    %1281 = arith.mulf %1280, %1258 : vector<32x32xf32>
    %1282 = arith.addf %1249, %1281 : vector<32x32xf32>
    %c250 = arith.constant 250 : index
    %1283 = memref.load %arg2[%c250] : memref<288xf32, #tpu.memory_space<smem>>
    %1284 = vector.broadcast %1283 : f32 to vector<32x32xf32>
    %1285 = arith.mulf %1284, %1258 : vector<32x32xf32>
    %1286 = arith.addf %1253, %1285 : vector<32x32xf32>
    %c286 = arith.constant 286 : index
    %1287 = memref.load %arg2[%c286] : memref<288xf32, #tpu.memory_space<smem>>
    %1288 = vector.broadcast %1287 : f32 to vector<32x32xf32>
    %1289 = arith.mulf %1288, %1258 : vector<32x32xf32>
    %1290 = arith.addf %1257, %1289 : vector<32x32xf32>
    %cst_109 = arith.constant dense<0.000000e+00> : vector<32x32xf32>
    %1291 = tpu.matmul %1224, %99, %cst_109 {dimension_numbers = #tpu.dot_dimension_numbers<[1], [0], [0], [1], [0, 0, 1, 1], [], []>} : vector<32x16xf32>, vector<16x32xf32>, vector<32x32xf32> -> vector<32x32xf32>
    %c35 = arith.constant 35 : index
    %1292 = memref.load %arg2[%c35] : memref<288xf32, #tpu.memory_space<smem>>
    %1293 = vector.broadcast %1292 : f32 to vector<32x32xf32>
    %1294 = arith.mulf %1293, %1291 : vector<32x32xf32>
    %1295 = arith.addf %1262, %1294 : vector<32x32xf32>
    %c71 = arith.constant 71 : index
    %1296 = memref.load %arg2[%c71] : memref<288xf32, #tpu.memory_space<smem>>
    %1297 = vector.broadcast %1296 : f32 to vector<32x32xf32>
    %1298 = arith.mulf %1297, %1291 : vector<32x32xf32>
    %1299 = arith.addf %1266, %1298 : vector<32x32xf32>
    %c107 = arith.constant 107 : index
    %1300 = memref.load %arg2[%c107] : memref<288xf32, #tpu.memory_space<smem>>
    %1301 = vector.broadcast %1300 : f32 to vector<32x32xf32>
    %1302 = arith.mulf %1301, %1291 : vector<32x32xf32>
    %1303 = arith.addf %1270, %1302 : vector<32x32xf32>
    %c143 = arith.constant 143 : index
    %1304 = memref.load %arg2[%c143] : memref<288xf32, #tpu.memory_space<smem>>
    %1305 = vector.broadcast %1304 : f32 to vector<32x32xf32>
    %1306 = arith.mulf %1305, %1291 : vector<32x32xf32>
    %1307 = arith.addf %1274, %1306 : vector<32x32xf32>
    %c179 = arith.constant 179 : index
    %1308 = memref.load %arg2[%c179] : memref<288xf32, #tpu.memory_space<smem>>
    %1309 = vector.broadcast %1308 : f32 to vector<32x32xf32>
    %1310 = arith.mulf %1309, %1291 : vector<32x32xf32>
    %1311 = arith.addf %1278, %1310 : vector<32x32xf32>
    %c215 = arith.constant 215 : index
    %1312 = memref.load %arg2[%c215] : memref<288xf32, #tpu.memory_space<smem>>
    %1313 = vector.broadcast %1312 : f32 to vector<32x32xf32>
    %1314 = arith.mulf %1313, %1291 : vector<32x32xf32>
    %1315 = arith.addf %1282, %1314 : vector<32x32xf32>
    %c251 = arith.constant 251 : index
    %1316 = memref.load %arg2[%c251] : memref<288xf32, #tpu.memory_space<smem>>
    %1317 = vector.broadcast %1316 : f32 to vector<32x32xf32>
    %1318 = arith.mulf %1317, %1291 : vector<32x32xf32>
    %1319 = arith.addf %1286, %1318 : vector<32x32xf32>
    %c287 = arith.constant 287 : index
    %1320 = memref.load %arg2[%c287] : memref<288xf32, #tpu.memory_space<smem>>
    %1321 = vector.broadcast %1320 : f32 to vector<32x32xf32>
    %1322 = arith.mulf %1321, %1291 : vector<32x32xf32>
    %1323 = arith.addf %1290, %1322 : vector<32x32xf32>
    %c0_110 = arith.constant 0 : index
    %c0_111 = arith.constant 0 : index
    %c0_112 = arith.constant 0 : index
    %c0_113 = arith.constant 0 : index
    %1324 = vector.load %arg4[%c0_110, %c0_111, %c0_112, %c0_113] : memref<1x8x32x32xf32, #tpu.memory_space<vmem>>, vector<1x1x32x32xf32>
    %1325 = vector.shape_cast %1324 : vector<1x1x32x32xf32> to vector<32x32xf32>
    %1326 = vector.shape_cast %1295 : vector<32x32xf32> to vector<1x1x32x32xf32>
    tpu.vector_store %arg4[%c0_110, %c0_111, %c0_112, %c0_113], %1326 {strides = array<i32>} : memref<1x8x32x32xf32, #tpu.memory_space<vmem>>, vector<1x1x32x32xf32>,
    %c0_114 = arith.constant 0 : index
    %c1_115 = arith.constant 1 : index
    %c0_116 = arith.constant 0 : index
    %c0_117 = arith.constant 0 : index
    %1327 = vector.load %arg4[%c0_114, %c1_115, %c0_116, %c0_117] : memref<1x8x32x32xf32, #tpu.memory_space<vmem>>, vector<1x1x32x32xf32>
    %1328 = vector.shape_cast %1327 : vector<1x1x32x32xf32> to vector<32x32xf32>
    %1329 = vector.shape_cast %1299 : vector<32x32xf32> to vector<1x1x32x32xf32>
    tpu.vector_store %arg4[%c0_114, %c1_115, %c0_116, %c0_117], %1329 {strides = array<i32>} : memref<1x8x32x32xf32, #tpu.memory_space<vmem>>, vector<1x1x32x32xf32>,
    %c0_118 = arith.constant 0 : index
    %c2_119 = arith.constant 2 : index
    %c0_120 = arith.constant 0 : index
    %c0_121 = arith.constant 0 : index
    %1330 = vector.load %arg4[%c0_118, %c2_119, %c0_120, %c0_121] : memref<1x8x32x32xf32, #tpu.memory_space<vmem>>, vector<1x1x32x32xf32>
    %1331 = vector.shape_cast %1330 : vector<1x1x32x32xf32> to vector<32x32xf32>
    %1332 = vector.shape_cast %1303 : vector<32x32xf32> to vector<1x1x32x32xf32>
    tpu.vector_store %arg4[%c0_118, %c2_119, %c0_120, %c0_121], %1332 {strides = array<i32>} : memref<1x8x32x32xf32, #tpu.memory_space<vmem>>, vector<1x1x32x32xf32>,
    %c0_122 = arith.constant 0 : index
    %c3_123 = arith.constant 3 : index
    %c0_124 = arith.constant 0 : index
    %c0_125 = arith.constant 0 : index
    %1333 = vector.load %arg4[%c0_122, %c3_123, %c0_124, %c0_125] : memref<1x8x32x32xf32, #tpu.memory_space<vmem>>, vector<1x1x32x32xf32>
    %1334 = vector.shape_cast %1333 : vector<1x1x32x32xf32> to vector<32x32xf32>
    %1335 = vector.shape_cast %1307 : vector<32x32xf32> to vector<1x1x32x32xf32>
    tpu.vector_store %arg4[%c0_122, %c3_123, %c0_124, %c0_125], %1335 {strides = array<i32>} : memref<1x8x32x32xf32, #tpu.memory_space<vmem>>, vector<1x1x32x32xf32>,
    %c0_126 = arith.constant 0 : index
    %c4_127 = arith.constant 4 : index
    %c0_128 = arith.constant 0 : index
    %c0_129 = arith.constant 0 : index
    %1336 = vector.load %arg4[%c0_126, %c4_127, %c0_128, %c0_129] : memref<1x8x32x32xf32, #tpu.memory_space<vmem>>, vector<1x1x32x32xf32>
    %1337 = vector.shape_cast %1336 : vector<1x1x32x32xf32> to vector<32x32xf32>
    %1338 = vector.shape_cast %1311 : vector<32x32xf32> to vector<1x1x32x32xf32>
    tpu.vector_store %arg4[%c0_126, %c4_127, %c0_128, %c0_129], %1338 {strides = array<i32>} : memref<1x8x32x32xf32, #tpu.memory_space<vmem>>, vector<1x1x32x32xf32>,
    %c0_130 = arith.constant 0 : index
    %c5_131 = arith.constant 5 : index
    %c0_132 = arith.constant 0 : index
    %c0_133 = arith.constant 0 : index
    %1339 = vector.load %arg4[%c0_130, %c5_131, %c0_132, %c0_133] : memref<1x8x32x32xf32, #tpu.memory_space<vmem>>, vector<1x1x32x32xf32>
    %1340 = vector.shape_cast %1339 : vector<1x1x32x32xf32> to vector<32x32xf32>
    %1341 = vector.shape_cast %1315 : vector<32x32xf32> to vector<1x1x32x32xf32>
    tpu.vector_store %arg4[%c0_130, %c5_131, %c0_132, %c0_133], %1341 {strides = array<i32>} : memref<1x8x32x32xf32, #tpu.memory_space<vmem>>, vector<1x1x32x32xf32>,
    %c0_134 = arith.constant 0 : index
    %c6_135 = arith.constant 6 : index
    %c0_136 = arith.constant 0 : index
    %c0_137 = arith.constant 0 : index
    %1342 = vector.load %arg4[%c0_134, %c6_135, %c0_136, %c0_137] : memref<1x8x32x32xf32, #tpu.memory_space<vmem>>, vector<1x1x32x32xf32>
    %1343 = vector.shape_cast %1342 : vector<1x1x32x32xf32> to vector<32x32xf32>
    %1344 = vector.shape_cast %1319 : vector<32x32xf32> to vector<1x1x32x32xf32>
    tpu.vector_store %arg4[%c0_134, %c6_135, %c0_136, %c0_137], %1344 {strides = array<i32>} : memref<1x8x32x32xf32, #tpu.memory_space<vmem>>, vector<1x1x32x32xf32>,
    %c0_138 = arith.constant 0 : index
    %c7_139 = arith.constant 7 : index
    %c0_140 = arith.constant 0 : index
    %c0_141 = arith.constant 0 : index
    %1345 = vector.load %arg4[%c0_138, %c7_139, %c0_140, %c0_141] : memref<1x8x32x32xf32, #tpu.memory_space<vmem>>, vector<1x1x32x32xf32>
    %1346 = vector.shape_cast %1345 : vector<1x1x32x32xf32> to vector<32x32xf32>
    %1347 = vector.shape_cast %1323 : vector<32x32xf32> to vector<1x1x32x32xf32>
    tpu.vector_store %arg4[%c0_138, %c7_139, %c0_140, %c0_141], %1347 {strides = array<i32>} : memref<1x8x32x32xf32, #tpu.memory_space<vmem>>, vector<1x1x32x32xf32>,
    return
  }
  func.func @transform_0(%arg0: i32) -> (i32, i32, i32, i32) {
    %c0_i32 = arith.constant 0 : i32
    %c0_i32_0 = arith.constant 0 : i32
    %c0_i32_1 = arith.constant 0 : i32
    %c0_i32_2 = arith.constant 0 : i32
    return %arg0, %c0_i32, %c0_i32_0, %c0_i32_1 : i32, i32, i32, i32
  }
  func.func @transform_1(%arg0: i32) -> i32 {
    %c0_i32 = arith.constant 0 : i32
    %c0_i32_0 = arith.constant 0 : i32
    return %c0_i32 : i32
  }
  func.func @transform_2(%arg0: i32) -> i32 {
    %c0_i32 = arith.constant 0 : i32
    %c0_i32_0 = arith.constant 0 : i32
    return %c0_i32 : i32
  }
  func.func @transform_3(%arg0: i32) -> (i32, i32, i32, i32) {
    %c0_i32 = arith.constant 0 : i32
    %c0_i32_0 = arith.constant 0 : i32
    %c0_i32_1 = arith.constant 0 : i32
    %c0_i32_2 = arith.constant 0 : i32
    return %arg0, %c0_i32, %c0_i32_0, %c0_i32_1 : i32, i32, i32, i32
  }
}

</mosaic_0001>

<llo_original>
// kernel: tpu_custom_call.1
$region0: #{tpu_custom_call.1}
  #allocation0 [shape = 'u32[]', space=smem, size = 0x4, offset = 0x4, fixed_abs, tag = 'smem constant byte address 0x4 - core index']
  #allocation1 [shape = 'u32[144,128]{1,0:T(1,128)}', space=vmem, size = 0x12000, scoped, tag = 'internal scratch']
  %s0 = inlined_call_operand.hbm [shape: f32[2,4,16,16], index: 0, kind: input, shape index: {}]
  %s1 = inlined_call_operand.hbm [shape: f32[288], index: 1, kind: input, shape index: {}]
  %s2 = inlined_call_operand.vmem [shape: f32[8], index: 2, kind: input, shape index: {}]
  %s3 = inlined_call_operand.hbm [shape: f32[2,8,32,32], index: 3, kind: output, shape index: {}]
  %s4 = sld [smem:[#allocation0]]
  $region57: #{tpu_custom_call.1} parent=0
    _
  %s6 = ssub.s32 1, %s4
  %s7 = scalar_select 0, %s6, %s4
  $region1: #{tpu_custom_call.1} parent=0
    #allocation2 [shape = 'u8[65536]{0}', space=vmem, size = 0x10000, scoped, tag = 'input window, operand 0']
    #allocation3 [shape = 's32[2]{0}', space=sflag, size = 0x8, scoped, tag = 'scoped memory for tpu_custom_call.1']
    #allocation4 [shape = 's32[2]{0}', space=sflag, size = 0x8, scoped, tag = 'scoped memory for tpu_custom_call.1']
    #allocation5 [shape = 's32[2]{0}', space=sflag, size = 0x8, scoped, tag = 'scoped memory for tpu_custom_call.1']
    #allocation6 [shape = 's32[2]{0}', space=sflag, size = 0x8, scoped, tag = 'scoped memory for tpu_custom_call.1']
    #allocation7 [shape = 'u8[1536]{0}', space=smem, size = 0x600, scoped, tag = 'input window, operand 1, single buffered']
    #allocation8 [shape = 'u8[512]{0}', space=smem, size = 0x200, scoped, tag = 'input window, operand 2, single buffered']
    #allocation9 [shape = 'u8[262144]{0}', space=vmem, size = 0x40000, scoped, tag = 'output window, operand 0']
    %8 = vsyncpa [#allocation3], 0
    %s9 = scalar_lea.sflag [#allocation3], 1
    %10 = vsyncpa %s9, 0
    %11 = vsyncpa [#allocation5], 0
    %12 = vsyncpa [#allocation6], 0
    %13 = vsyncpa [#allocation4], 0
    %s14 = scalar_lea.sflag [#allocation4], 1
    %15 = vsyncpa %s14, 0
    loop: start=0, step=1, limit=4
    $region2: #{tpu_custom_call.1} parent=1 // loop_pre_header
      _
    $region3: #{tpu_custom_call.1} parent=1 // loop_header
      %s17 = sphi 0, %s21
      %p18 = scmp.ge.s32.totalorder %s17, 4
      %s27 = sphi 0, %s29
      %s30 = sphi 0, %s27
      %s31 = sphi 0, %s30
      %s47 = sphi 0, %s31
      %s51 = sphi 0, %s51
      %s53 = sphi 0, %s51
      %s54 = sphi 0, %s53
      %s68 = sphi 0, %s54
      %s72 = sphi 0, %s72
      %s74 = sphi 0, %s72
      %s75 = sphi 0, %s74
      %s89 = sphi 0, %s75
      %s95 = sphi 0, %s97
      %s98 = sphi 0, %s95
      %s99 = sphi 0, %s98
      %s115 = sphi 0, %s99
    $region4: #{tpu_custom_call.1} parent=1 // loop_header_branch
      %20 = sbr.rel (%p18) target = $region8
    $region5: #{tpu_custom_call.1} parent=1 // loop_body
      %s22 = ssub.s32 %s17, 1
      %s23 = ssub.s32 %s17, 2
      %s24 = sadd.s32 %s17, 1
      %s25 = ssub.s32 %s17, %s24
      %p26 = scmp.eq.s32.totalorder %s25, 0
      %s28 = sadd.s32 %s27, 1
      %s29 = scalar_select %p26, %s27, %s28
      %p32 = pneg %p26
      %p33 = scmp.eq.s32.totalorder %s17, 1
      %p34 = por %p32, %p33
      %p35 = scmp.ne.s32.totalorder %s27, %s30
      %p36 = scmp.eq.s32.totalorder %s17, 0
      %p37 = por %p35, %p36
      %p38 = scmp.ne.s32.totalorder %s27, %s30
      %p39 = scmp.eq.s32.totalorder %s22, 1
      %p40 = por %p38, %p39
      %p41 = scmp.ne.s32.totalorder %s30, %s31
      %p42 = scmp.eq.s32.totalorder %s22, 0
      %p43 = por %p41, %p42
      %p44 = scmp.ne.s32.totalorder %s30, %s31
      %p45 = scmp.eq.s32.totalorder %s23, 1
      %p46 = por %p44, %p45
      %p48 = scmp.ne.s32.totalorder %s31, %s47
      %p49 = scmp.eq.s32.totalorder %s23, 0
      %p50 = por %p48, %p49
      %s52 = sadd.s32 %s51, 1
      %p55 = scmp.eq.s32.totalorder %s17, 1
      %p56 = scmp.ne.s32.totalorder %s51, %s53
      %p57 = scmp.eq.s32.totalorder %s17, 0
      %p58 = por %p56, %p57
      %p59 = scmp.ne.s32.totalorder %s51, %s53
      %p60 = scmp.eq.s32.totalorder %s22, 1
      %p61 = por %p59, %p60
      %p62 = scmp.ne.s32.totalorder %s53, %s54
      %p63 = scmp.eq.s32.totalorder %s22, 0
      %p64 = por %p62, %p63
      %p65 = scmp.ne.s32.totalorder %s53, %s54
      %p66 = scmp.eq.s32.totalorder %s23, 1
      %p67 = por %p65, %p66
      %p69 = scmp.ne.s32.totalorder %s54, %s68
      %p70 = scmp.eq.s32.totalorder %s23, 0
      %p71 = por %p69, %p70
      %s73 = sadd.s32 %s72, 1
      %p76 = scmp.eq.s32.totalorder %s17, 1
      %p77 = scmp.ne.s32.totalorder %s72, %s74
      %p78 = scmp.eq.s32.totalorder %s17, 0
      %p79 = por %p77, %p78
      %p80 = scmp.ne.s32.totalorder %s72, %s74
      %p81 = scmp.eq.s32.totalorder %s22, 1
      %p82 = por %p80, %p81
      %p83 = scmp.ne.s32.totalorder %s74, %s75
      %p84 = scmp.eq.s32.totalorder %s22, 0
      %p85 = por %p83, %p84
      %p86 = scmp.ne.s32.totalorder %s74, %s75
      %p87 = scmp.eq.s32.totalorder %s23, 1
      %p88 = por %p86, %p87
      %p90 = scmp.ne.s32.totalorder %s75, %s89
      %p91 = scmp.eq.s32.totalorder %s23, 0
      %p92 = por %p90, %p91
      %s93 = ssub.s32 %s17, %s24
      %p94 = scmp.eq.s32.totalorder %s93, 0
      %s96 = sadd.s32 %s95, 1
      %s97 = scalar_select %p94, %s95, %s96
      %p100 = pneg %p94
      %p101 = scmp.eq.s32.totalorder %s17, 1
      %p102 = por %p100, %p101
      %p103 = scmp.ne.s32.totalorder %s95, %s98
      %p104 = scmp.eq.s32.totalorder %s17, 0
      %p105 = por %p103, %p104
      %p106 = scmp.ne.s32.totalorder %s95, %s98
      %p107 = scmp.eq.s32.totalorder %s22, 1
      %p108 = por %p106, %p107
      %p109 = scmp.ne.s32.totalorder %s98, %s99
      %p110 = scmp.eq.s32.totalorder %s22, 0
      %p111 = por %p109, %p110
      %p112 = scmp.ne.s32.totalorder %s98, %s99
      %p113 = scmp.eq.s32.totalorder %s23, 1
      %p114 = por %p112, %p113
      %p116 = scmp.ne.s32.totalorder %s99, %s115
      %p117 = scmp.eq.s32.totalorder %s23, 0
      %p118 = por %p116, %p117
      %p119 = scmp.le.s32.totalorder 1, %s17
      %p120 = scmp.lt.s32.totalorder %s17, 3
      %p121 = pnand %p119, %p120
      %p122 = pneg %p121
      // Predicated region
      $region9: #{tpu_custom_call.1} parent=5 // pred_check
        _
      $region10: #{tpu_custom_call.1} parent=5 // pred_check_branch
        %124 = sbr.rel (%p121) target = $region12
      $region11: #{tpu_custom_call.1} parent=5 // pred_region
        %s125 = ssub.s32 %s17, 1
        // Predicated region
        $region13: #{tpu_custom_call.1} parent=11 // pred_check
          %p126 = pneg %p64
        $region14: #{tpu_custom_call.1} parent=11 // pred_check_branch
          %128 = sbr.rel (%p126) target = $region16
        $region15: #{tpu_custom_call.1} parent=11 // pred_region
          %s130 = ssub.s32 48, 48
          %131 = vsyncadd [#allocation5], %s130
          %134 = dma.hbm_to_smem %s1, 48, [#allocation7], [#allocation5]
        $region16: #{tpu_custom_call.1} parent=11 // pred_fallthru
          _
        // Predicated region
        $region17: #{tpu_custom_call.1} parent=11 // pred_check
          %p135 = pneg %p85
        $region18: #{tpu_custom_call.1} parent=11 // pred_check_branch
          %137 = sbr.rel (%p135) target = $region20
        $region19: #{tpu_custom_call.1} parent=11 // pred_region
          %s139 = ssub.s32 16, 16
          %140 = vsyncadd [#allocation6], %s139
          %s142 = sshll.u32 %s2, 4
          %s143 = int_to_ptr.vmem [resolvable:$true] %s142
          %145 = dma.vmem_to_smem %s143, 16, [#allocation8], [#allocation6]
        $region20: #{tpu_custom_call.1} parent=11 // pred_fallthru
          _
      $region12: #{tpu_custom_call.1} parent=5 // pred_fallthru
        _
      %p146 = scmp.lt.s32.totalorder %s17, 2
      // Predicated region
      $region21: #{tpu_custom_call.1} parent=5 // pred_check
        %p147 = pneg %p146
      $region22: #{tpu_custom_call.1} parent=5 // pred_check_branch
        %149 = sbr.rel (%p147) target = $region24
      $region23: #{tpu_custom_call.1} parent=5 // pred_region
        // Predicated region
        $region25: #{tpu_custom_call.1} parent=23 // pred_check
          %p150 = pneg %p37
        $region26: #{tpu_custom_call.1} parent=23 // pred_check_branch
          %152 = sbr.rel (%p150) target = $region28
        $region27: #{tpu_custom_call.1} parent=23 // pred_region
          %s153 = sand.u32 %s27, 1
          %s154 = scalar_lea.sflag [#allocation3], %s153
          %s155 = sand.u32 %s27, 1
          %s156 = smul.addr %s155, 64
          %s157 = scalar_lea.vmem [#allocation2], %s156
          %s159 = ssub.s32 1024, 1024
          %160 = vsyncadd %s154, %s159
          %s161 = smul.addr %s17, 8
          %s162 = smul.addr %s161, 128
          %s163 = scalar_lea.hbm %s0, %s162
          %s164 = sshll.u32 %s157, 4
          %s165 = int_to_ptr.vmem [resolvable:$true] %s164
          %170 = dma.hbm_to_vmem [thread:$0]  %s163, 1024, %s165, %s154, 128, 128, 8
        $region28: #{tpu_custom_call.1} parent=23 // pred_fallthru
          _
      $region24: #{tpu_custom_call.1} parent=5 // pred_fallthru
        _
      %p171 = scmp.le.s32.totalorder 1, %s17
      %p172 = scmp.lt.s32.totalorder %s17, 3
      %p173 = pnand %p171, %p172
      %p174 = pneg %p173
      // Predicated region
      $region29: #{tpu_custom_call.1} parent=5 // pred_check
        _
      $region30: #{tpu_custom_call.1} parent=5 // pred_check_branch
        %176 = sbr.rel (%p173) target = $region32
      $region31: #{tpu_custom_call.1} parent=5 // pred_region
        %s177 = ssub.s32 %s17, 1
        %s178 = sand.u32 %s30, 1
        %s179 = scalar_lea.sflag [#allocation3], %s178
        %s180 = sand.u32 %s30, 1
        %s181 = smul.addr %s180, 64
        %s182 = scalar_lea.vmem [#allocation2], %s181
        // Predicated region
        $region33: #{tpu_custom_call.1} parent=31 // pred_check
          %p183 = pneg %p43
        $region34: #{tpu_custom_call.1} parent=31 // pred_check_branch
          %185 = sbr.rel (%p183) target = $region36
        $region35: #{tpu_custom_call.1} parent=31 // pred_region
          %186 = dma.done %s179, 1024
        $region36: #{tpu_custom_call.1} parent=31 // pred_fallthru
          _
        // Predicated region
        $region37: #{tpu_custom_call.1} parent=31 // pred_check
          %p187 = pneg %p64
        $region38: #{tpu_custom_call.1} parent=31 // pred_check_branch
          %189 = sbr.rel (%p187) target = $region40
        $region39: #{tpu_custom_call.1} parent=31 // pred_region
          %190 = dma.done [#allocation5], 48
        $region40: #{tpu_custom_call.1} parent=31 // pred_fallthru
          _
        // Predicated region
        $region41: #{tpu_custom_call.1} parent=31 // pred_check
          %p191 = pneg %p85
        $region42: #{tpu_custom_call.1} parent=31 // pred_check_branch
          %193 = sbr.rel (%p191) target = $region44
        $region43: #{tpu_custom_call.1} parent=31 // pred_region
          %194 = dma.done [#allocation6], 16
        $region44: #{tpu_custom_call.1} parent=31 // pred_fallthru
          _
        %195 = sfence
        %s196 = sand.u32 %s30, 1
        %s197 = scalar_lea.sflag [#allocation3], %s196
        %s198 = sand.u32 %s30, 1
        %s199 = smul.addr %s198, 64
        %s200 = scalar_lea.vmem [#allocation2], %s199
        %p201 = pneg %p43
        %p202 = pneg %p40
        %p203 = pneg %p64
        %p204 = pneg %p61
        %p205 = pneg %p85
        %p206 = pneg %p82
        %p207 = pneg %p111
        %p208 = pneg %p108
        %s209 = sand.u32 %s98, 1
        %s210 = scalar_lea.sflag [#allocation4], %s209
        %s211 = sand.u32 %s98, 1
        %s212 = smul.addr %s211, 256
        %s213 = scalar_lea.vmem [#allocation9], %s212
        %v214 = vlaneseq
        %v215 = vshrl.u32 %v214, 7
        %v216 = vadd.s32 %v215, 8
        %v217 = vadd.s32 %v215, 16
        %v218 = vadd.s32 %v215, 24
        %v219 = vlaneseq
        %v220 = vand.u32 %v219, 127
        %v221 = vsub.s32 %v215, 1
        %v222 = vsub.s32 %v216, 1
        %v223 = vsub.s32 %v217, 1
        %v224 = vsub.s32 %v218, 1
        %v225 = vmul.u32 %v220, 2
        %vm226 = vcmp.ge.s32.totalorder %v221, %v225
        %vm227 = vcmp.ge.s32.totalorder %v222, %v225
        %vm228 = vcmp.ge.s32.totalorder %v223, %v225
        %vm229 = vcmp.ge.s32.totalorder %v224, %v225
        %v230 = vadd.s32 %v225, 2
        %vm231 = vcmp.lt.s32.totalorder %v221, %v230
        %vm232 = vcmp.lt.s32.totalorder %v222, %v230
        %vm233 = vcmp.lt.s32.totalorder %v223, %v230
        %vm234 = vcmp.lt.s32.totalorder %v224, %v230
        %vm235 = vmand %vm226, %vm231
        %vm236 = vmand %vm227, %vm232
        %vm237 = vmand %vm228, %vm233
        %vm238 = vmand %vm229, %vm234
        %v239 = vsel %vm235, 1.0, 0.0
        %v240 = vsel %vm236, 1.0, 0.0
        %v241 = vsel %vm237, 1.0, 0.0
        %v242 = vsel %vm238, 1.0, 0.0
        %vm243 = vcmp.ge.s32.totalorder %v215, %v225
        %vm244 = vcmp.ge.s32.totalorder %v216, %v225
        %vm245 = vcmp.ge.s32.totalorder %v217, %v225
        %vm246 = vcmp.ge.s32.totalorder %v218, %v225
        %vm247 = vcmp.lt.s32.totalorder %v215, %v230
        %vm248 = vcmp.lt.s32.totalorder %v216, %v230
        %vm249 = vcmp.lt.s32.totalorder %v217, %v230
        %vm250 = vcmp.lt.s32.totalorder %v218, %v230
        %vm251 = vmand %vm243, %vm247
        %vm252 = vmand %vm244, %vm248
        %vm253 = vmand %vm245, %vm249
        %vm254 = vmand %vm246, %vm250
        %v255 = vsel %vm251, 1.0, 0.0
        %v256 = vsel %vm252, 1.0, 0.0
        %v257 = vsel %vm253, 1.0, 0.0
        %v258 = vsel %vm254, 1.0, 0.0
        %v259 = vadd.s32 %v215, 2
        %v260 = vadd.s32 %v216, 2
        %v261 = vadd.s32 %v217, 2
        %v262 = vadd.s32 %v218, 2
        %v263 = vsub.s32 %v259, 1
        %v264 = vsub.s32 %v260, 1
        %v265 = vsub.s32 %v261, 1
        %v266 = vsub.s32 %v262, 1
        %vm267 = vcmp.ge.s32.totalorder %v263, %v225
        %vm268 = vcmp.ge.s32.totalorder %v264, %v225
        %vm269 = vcmp.ge.s32.totalorder %v265, %v225
        %vm270 = vcmp.ge.s32.totalorder %v266, %v225
        %vm271 = vcmp.lt.s32.totalorder %v263, %v230
        %vm272 = vcmp.lt.s32.totalorder %v264, %v230
        %vm273 = vcmp.lt.s32.totalorder %v265, %v230
        %vm274 = vcmp.lt.s32.totalorder %v266, %v230
        %vm275 = vmand %vm267, %vm271
        %vm276 = vmand %vm268, %vm272
        %vm277 = vmand %vm269, %vm273
        %vm278 = vmand %vm270, %vm274
        %v279 = vsel %vm275, 1.0, 0.0
        %v280 = vsel %vm276, 1.0, 0.0
        %v281 = vsel %vm277, 1.0, 0.0
        %v282 = vsel %vm278, 1.0, 0.0
        %v283 = vsub.s32 %v220, 1
        %v284 = vmul.u32 %v215, 2
        %v285 = vmul.u32 %v216, 2
        %vm286 = vcmp.ge.s32.totalorder %v283, %v284
        %vm287 = vcmp.ge.s32.totalorder %v283, %v285
        %v288 = vadd.s32 %v284, 2
        %v289 = vadd.s32 %v285, 2
        %vm290 = vcmp.lt.s32.totalorder %v283, %v288
        %vm291 = vcmp.lt.s32.totalorder %v283, %v289
        %vm292 = vmand %vm286, %vm290
        %vm293 = vmand %vm287, %vm291
        %v294 = vsel %vm292, 1.0, 0.0
        %v295 = vsel %vm293, 1.0, 0.0
        %vm296 = vcmp.ge.s32.totalorder %v220, %v284
        %vm297 = vcmp.ge.s32.totalorder %v220, %v285
        %vm298 = vcmp.lt.s32.totalorder %v220, %v288
        %vm299 = vcmp.lt.s32.totalorder %v220, %v289
        %vm300 = vmand %vm296, %vm298
        %vm301 = vmand %vm297, %vm299
        %v302 = vsel %vm300, 1.0, 0.0
        %v303 = vsel %vm301, 1.0, 0.0
        %v304 = vadd.s32 %v220, 2
        %v305 = vsub.s32 %v304, 1
        %vm306 = vcmp.ge.s32.totalorder %v305, %v284
        %vm307 = vcmp.ge.s32.totalorder %v305, %v285
        %vm308 = vcmp.lt.s32.totalorder %v305, %v288
        %vm309 = vcmp.lt.s32.totalorder %v305, %v289
        %vm310 = vmand %vm306, %vm308
        %vm311 = vmand %vm307, %vm309
        %v312 = vsel %vm310, 1.0, 0.0
        %v313 = vsel %vm311, 1.0, 0.0
        %s314 = sld [smem:[#allocation8]]
        %v315 = vstv %s314
        %s316 = sld [smem:[#allocation8 + $0x1]]
        %v317 = vstv %s316
        %s318 = sld [smem:[#allocation8 + $0x2]]
        %v319 = vstv %s318
        %s320 = sld [smem:[#allocation8 + $0x3]]
        %v321 = vstv %s320
        %s322 = sld [smem:[#allocation8 + $0x4]]
        %v323 = vstv %s322
        %s324 = sld [smem:[#allocation8 + $0x5]]
        %v325 = vstv %s324
        %s326 = sld [smem:[#allocation8 + $0x6]]
        %v327 = vstv %s326
        %s328 = sld [smem:[#allocation8 + $0x7]]
        %v329 = vstv %s328
        %v330 = vld [vmem:[%s182] sm:$0xff]
        %v331 = vld [vmem:[%s182 + $0x8] sm:$0xff]
        %vm332 = vcmask 130048
        %v334 = vsel %vm332, %v239, 0
        %v337 = vsel %vm332, %v240, 0
        %v340 = vsel %vm332, %v241, 0
        %v343 = vsel %vm332, %v242, 0
        %345 = vmatprep.subr.mxu0 0.0
        %346 = vmatpush1.msra.mxu0 0.0
        %347 = vmatprep.subr.mxu0 0.0
        %348 = vmatpush1.msra.mxu0 0.0
        %349 = vmatprep.subr.mxu0 0.0
        %350 = vmatpush1.msra.mxu0 0.0
        %351 = vmatprep.subr.mxu0 0.0
        %352 = vmatpush1.msra.mxu0 0.0
        %353 = vmatprep.subr.mxu0 0.0
        %354 = vmatpush1.msra.mxu0 0.0
        %355 = vmatprep.subr.mxu0 0.0
        %356 = vmatpush1.msra.mxu0 0.0
        %357 = vmatprep.subr.mxu0 0.0
        %358 = vmatpush1.msra.mxu0 0.0
        %359 = vmatprep.subr.mxu0 0.0
        %360 = vmatpush1.msra.mxu0 0.0
        %361 = vmatprep.subr.mxu0 0.0
        %362 = vmatpush1.msra.mxu0 0.0
        %363 = vmatprep.subr.mxu0 0.0
        %364 = vmatpush1.msra.mxu0 0.0
        %365 = vmatprep.subr.mxu0 0.0
        %366 = vmatpush1.msra.mxu0 0.0
        %367 = vmatprep.subr.mxu0 0.0
        %368 = vmatpush1.msra.mxu0 0.0
        %369 = vmatprep.subr.mxu0 0.0
        %370 = vmatpush1.msra.mxu0 0.0
        %371 = vmatprep.subr.mxu0 0.0
        %372 = vmatpush1.msra.mxu0 0.0
        %373 = vmatprep.subr.mxu0 0.0
        %374 = vmatpush1.msra.mxu0 %v331
        %375 = vmatprep.subr.mxu0 0.0
        %376 = vmatpush1.msra.mxu0 %v330
        %377 = vmatprep.subr.mxu0 0.0
        %378 = vmatpush2.msra.mxu0 0.0
        %379 = vmatprep.subr.mxu0 0.0
        %380 = vmatpush2.msra.mxu0 0.0
        %381 = vmatprep.subr.mxu0 0.0
        %382 = vmatpush2.msra.mxu0 0.0
        %383 = vmatprep.subr.mxu0 0.0
        %384 = vmatpush2.msra.mxu0 0.0
        %385 = vmatprep.subr.mxu0 0.0
        %386 = vmatpush2.msra.mxu0 0.0
        %387 = vmatprep.subr.mxu0 0.0
        %388 = vmatpush2.msra.mxu0 0.0
        %389 = vmatprep.subr.mxu0 0.0
        %390 = vmatpush2.msra.mxu0 0.0
        %391 = vmatprep.subr.mxu0 0.0
        %392 = vmatpush2.msra.mxu0 0.0
        %393 = vmatprep.subr.mxu0 0.0
        %394 = vmatpush2.msra.mxu0 0.0
        %395 = vmatprep.subr.mxu0 0.0
        %396 = vmatpush2.msra.mxu0 0.0
        %397 = vmatprep.subr.mxu0 0.0
        %398 = vmatpush2.msra.mxu0 0.0
        %399 = vmatprep.subr.mxu0 0.0
        %400 = vmatpush2.msra.mxu0 0.0
        %401 = vmatprep.subr.mxu0 0.0
        %402 = vmatpush2.msra.mxu0 0.0
        %403 = vmatprep.subr.mxu0 0.0
        %404 = vmatpush2.msra.mxu0 0.0
        %405 = vmatprep.subr.mxu0 0.0
        %406 = vmatpush2.msra.mxu0 0.0
        %407 = vmatprep.subr.mxu0 0.0
        %408 = vmatpush2.msra.mxu0 0.0
        %409 = vmatprep.mubr.f32.mxu0 0.0
        %410 = vmatmul.mubr.f32.gmra.mxu0 %v334
        %v411 = vpop.f32.mrf.mxu0
        %v412 = vadd.f32 0.0, %v411
        %v413 = vpop.f32.mrf.mxu0
        %414 = vmatprep.mubr.f32.mxu0 0.0
        %415 = vmatmul.mubr.f32.gmra.mxu0 %v337
        %v416 = vpop.f32.mrf.mxu0
        %v417 = vadd.f32 0.0, %v416
        %v418 = vpop.f32.mrf.mxu0
        %419 = vmatprep.mubr.f32.mxu0 0.0
        %420 = vmatmul.mubr.f32.gmra.mxu0 %v340
        %v421 = vpop.f32.mrf.mxu0
        %v422 = vadd.f32 0.0, %v421
        %v423 = vpop.f32.mrf.mxu0
        %424 = vmatprep.mubr.f32.mxu0 0.0
        %425 = vmatmul.mubr.f32.gmra.mxu0 %v343
        %v426 = vpop.f32.mrf.mxu0
        %v427 = vadd.f32 0.0, %v426
        %v428 = vpop.f32.mrf.mxu0
        %429 = vdwg.mxu0
        %v431 = vsel %vm332, %v412, 0
        %v434 = vsel %vm332, %v417, 0
        %v437 = vsel %vm332, %v422, 0
        %v440 = vsel %vm332, %v427, 0
        %442 = vmatprep.subr.mxu0 0.0
        %443 = vmatpush1.msra.mxu0 0.0
        %444 = vmatprep.subr.mxu0 0.0
        %445 = vmatpush1.msra.mxu0 0.0
        %446 = vmatprep.subr.mxu0 0.0
        %447 = vmatpush1.msra.mxu0 0.0
        %448 = vmatprep.subr.mxu0 0.0
        %449 = vmatpush1.msra.mxu0 0.0
        %450 = vmatprep.subr.mxu0 0.0
        %451 = vmatpush1.msra.mxu0 0.0
        %452 = vmatprep.subr.mxu0 0.0
        %453 = vmatpush1.msra.mxu0 0.0
        %454 = vmatprep.subr.mxu0 0.0
        %455 = vmatpush1.msra.mxu0 0.0
        %456 = vmatprep.subr.mxu0 0.0
        %457 = vmatpush1.msra.mxu0 0.0
        %458 = vmatprep.subr.mxu0 0.0
        %459 = vmatpush1.msra.mxu0 0.0
        %460 = vmatprep.subr.mxu0 0.0
        %461 = vmatpush1.msra.mxu0 0.0
        %462 = vmatprep.subr.mxu0 0.0
        %463 = vmatpush1.msra.mxu0 0.0
        %464 = vmatprep.subr.mxu0 0.0
        %465 = vmatpush1.msra.mxu0 0.0
        %466 = vmatprep.subr.mxu0 0.0
        %467 = vmatpush1.msra.mxu0 0.0
        %468 = vmatprep.subr.mxu0 0.0
        %469 = vmatpush1.msra.mxu0 0.0
        %470 = vmatprep.subr.mxu0 0.0
        %471 = vmatpush1.msra.mxu0 %v295
        %472 = vmatprep.subr.mxu0 0.0
        %473 = vmatpush1.msra.mxu0 %v294
        %474 = vmatprep.subr.mxu0 0.0
        %475 = vmatpush2.msra.mxu0 0.0
        %476 = vmatprep.subr.mxu0 0.0
        %477 = vmatpush2.msra.mxu0 0.0
        %478 = vmatprep.subr.mxu0 0.0
        %479 = vmatpush2.msra.mxu0 0.0
        %480 = vmatprep.subr.mxu0 0.0
        %481 = vmatpush2.msra.mxu0 0.0
        %482 = vmatprep.subr.mxu0 0.0
        %483 = vmatpush2.msra.mxu0 0.0
        %484 = vmatprep.subr.mxu0 0.0
        %485 = vmatpush2.msra.mxu0 0.0
        %486 = vmatprep.subr.mxu0 0.0
        %487 = vmatpush2.msra.mxu0 0.0
        %488 = vmatprep.subr.mxu0 0.0
        %489 = vmatpush2.msra.mxu0 0.0
        %490 = vmatprep.subr.mxu0 0.0
        %491 = vmatpush2.msra.mxu0 0.0
        %492 = vmatprep.subr.mxu0 0.0
        %493 = vmatpush2.msra.mxu0 0.0
        %494 = vmatprep.subr.mxu0 0.0
        %495 = vmatpush2.msra.mxu0 0.0
        %496 = vmatprep.subr.mxu0 0.0
        %497 = vmatpush2.msra.mxu0 0.0
        %498 = vmatprep.subr.mxu0 0.0
        %499 = vmatpush2.msra.mxu0 0.0
        %500 = vmatprep.subr.mxu0 0.0
        %501 = vmatpush2.msra.mxu0 0.0
        %502 = vmatprep.subr.mxu0 0.0
        %503 = vmatpush2.msra.mxu0 0.0
        %504 = vmatprep.subr.mxu0 0.0
        %505 = vmatpush2.msra.mxu0 0.0
        %506 = vmatprep.mubr.f32.mxu0 0.0
        %507 = vmatmul.mubr.f32.gmra.mxu0 %v431
        %v508 = vpop.f32.mrf.mxu0
        %v509 = vadd.f32 0.0, %v508
        %v510 = vpop.f32.mrf.mxu0
        %511 = vmatprep.mubr.f32.mxu0 0.0
        %512 = vmatmul.mubr.f32.gmra.mxu0 %v434
        %v513 = vpop.f32.mrf.mxu0
        %v514 = vadd.f32 0.0, %v513
        %v515 = vpop.f32.mrf.mxu0
        %516 = vmatprep.mubr.f32.mxu0 0.0
        %517 = vmatmul.mubr.f32.gmra.mxu0 %v437
        %v518 = vpop.f32.mrf.mxu0
        %v519 = vadd.f32 0.0, %v518
        %v520 = vpop.f32.mrf.mxu0
        %521 = vmatprep.mubr.f32.mxu0 0.0
        %522 = vmatmul.mubr.f32.gmra.mxu0 %v440
        %v523 = vpop.f32.mrf.mxu0
        %v524 = vadd.f32 0.0, %v523
        %v525 = vpop.f32.mrf.mxu0
        %526 = vdwg.mxu0
        %s527 = sld [smem:[#allocation7]]
        %v528 = vstv %s527
        %v529 = vmul.f32 %v528, %v509
        %v530 = vmul.f32 %v528, %v514
        %v531 = vmul.f32 %v528, %v519
        %v532 = vmul.f32 %v528, %v524
        %v533 = vadd.f32 %v315, %v529
        %v534 = vadd.f32 %v315, %v530
        %v535 = vadd.f32 %v315, %v531
        %v536 = vadd.f32 %v315, %v532
        %s537 = sld [smem:[#allocation7 + $0x24]]
        %v538 = vstv %s537
        %v539 = vmul.f32 %v538, %v509
        %v540 = vmul.f32 %v538, %v514
        %v541 = vmul.f32 %v538, %v519
        %v542 = vmul.f32 %v538, %v524
        %v543 = vadd.f32 %v317, %v539
        %v544 = vadd.f32 %v317, %v540
        %v545 = vadd.f32 %v317, %v541
        %v546 = vadd.f32 %v317, %v542
        %s547 = sld [smem:[#allocation7 + $0x48]]
        %v548 = vstv %s547
        %v549 = vmul.f32 %v548, %v509
        %v550 = vmul.f32 %v548, %v514
        %v551 = vmul.f32 %v548, %v519
        %v552 = vmul.f32 %v548, %v524
        %v553 = vadd.f32 %v319, %v549
        %v554 = vadd.f32 %v319, %v550
        %v555 = vadd.f32 %v319, %v551
        %v556 = vadd.f32 %v319, %v552
        %s557 = sld [smem:[#allocation7 + $0x6c]]
        %v558 = vstv %s557
        %v559 = vmul.f32 %v558, %v509
        %v560 = vmul.f32 %v558, %v514
        %v561 = vmul.f32 %v558, %v519
        %v562 = vmul.f32 %v558, %v524
        %v563 = vadd.f32 %v321, %v559
        %v564 = vadd.f32 %v321, %v560
        %v565 = vadd.f32 %v321, %v561
        %v566 = vadd.f32 %v321, %v562
        %s567 = sld [smem:[#allocation7 + $0x90]]
        %v568 = vstv %s567
        %v569 = vmul.f32 %v568, %v509
        %v570 = vmul.f32 %v568, %v514
        %v571 = vmul.f32 %v568, %v519
        %v572 = vmul.f32 %v568, %v524
        %v573 = vadd.f32 %v323, %v569
        %v574 = vadd.f32 %v323, %v570
        %v575 = vadd.f32 %v323, %v571
        %v576 = vadd.f32 %v323, %v572
        %s577 = sld [smem:[#allocation7 + $0xb4]]
        %v578 = vstv %s577
        %v579 = vmul.f32 %v578, %v509
        %v580 = vmul.f32 %v578, %v514
        %v581 = vmul.f32 %v578, %v519
        %v582 = vmul.f32 %v578, %v524
        %v583 = vadd.f32 %v325, %v579
        %v584 = vadd.f32 %v325, %v580
        %v585 = vadd.f32 %v325, %v581
        %v586 = vadd.f32 %v325, %v582
        %s587 = sld [smem:[#allocation7 + $0xd8]]
        %v588 = vstv %s587
        %v589 = vmul.f32 %v588, %v509
        %v590 = vmul.f32 %v588, %v514
        %v591 = vmul.f32 %v588, %v519
        %v592 = vmul.f32 %v588, %v524
        %v593 = vadd.f32 %v327, %v589
        %v594 = vadd.f32 %v327, %v590
        %v595 = vadd.f32 %v327, %v591
        %v596 = vadd.f32 %v327, %v592
        %s597 = sld [smem:[#allocation7 + $0xfc]]
        %v598 = vstv %s597
        %v599 = vmul.f32 %v598, %v509
        %v600 = vmul.f32 %v598, %v514
        %v601 = vmul.f32 %v598, %v519
        %v602 = vmul.f32 %v598, %v524
        %v603 = vadd.f32 %v329, %v599
        %v604 = vadd.f32 %v329, %v600
        %v605 = vadd.f32 %v329, %v601
        %v606 = vadd.f32 %v329, %v602
        %607 = vmatprep.subr.mxu0 0.0
        %608 = vmatpush1.msra.mxu0 0.0
        %609 = vmatprep.subr.mxu0 0.0
        %610 = vmatpush1.msra.mxu0 0.0
        %611 = vmatprep.subr.mxu0 0.0
        %612 = vmatpush1.msra.mxu0 0.0
        %613 = vmatprep.subr.mxu0 0.0
        %614 = vmatpush1.msra.mxu0 0.0
        %615 = vmatprep.subr.mxu0 0.0
        %616 = vmatpush1.msra.mxu0 0.0
        %617 = vmatprep.subr.mxu0 0.0
        %618 = vmatpush1.msra.mxu0 0.0
        %619 = vmatprep.subr.mxu0 0.0
        %620 = vmatpush1.msra.mxu0 0.0
        %621 = vmatprep.subr.mxu0 0.0
        %622 = vmatpush1.msra.mxu0 0.0
        %623 = vmatprep.subr.mxu0 0.0
        %624 = vmatpush1.msra.mxu0 0.0
        %625 = vmatprep.subr.mxu0 0.0
        %626 = vmatpush1.msra.mxu0 0.0
        %627 = vmatprep.subr.mxu0 0.0
        %628 = vmatpush1.msra.mxu0 0.0
        %629 = vmatprep.subr.mxu0 0.0
        %630 = vmatpush1.msra.mxu0 0.0
        %631 = vmatprep.subr.mxu0 0.0
        %632 = vmatpush1.msra.mxu0 0.0
        %633 = vmatprep.subr.mxu0 0.0
        %634 = vmatpush1.msra.mxu0 0.0
        %635 = vmatprep.subr.mxu0 0.0
        %636 = vmatpush1.msra.mxu0 %v303
        %637 = vmatprep.subr.mxu0 0.0
        %638 = vmatpush1.msra.mxu0 %v302
        %639 = vmatprep.subr.mxu0 0.0
        %640 = vmatpush2.msra.mxu0 0.0
        %641 = vmatprep.subr.mxu0 0.0
        %642 = vmatpush2.msra.mxu0 0.0
        %643 = vmatprep.subr.mxu0 0.0
        %644 = vmatpush2.msra.mxu0 0.0
        %645 = vmatprep.subr.mxu0 0.0
        %646 = vmatpush2.msra.mxu0 0.0
        %647 = vmatprep.subr.mxu0 0.0
        %648 = vmatpush2.msra.mxu0 0.0
        %649 = vmatprep.subr.mxu0 0.0
        %650 = vmatpush2.msra.mxu0 0.0
        %651 = vmatprep.subr.mxu0 0.0
        %652 = vmatpush2.msra.mxu0 0.0
        %653 = vmatprep.subr.mxu0 0.0
        %654 = vmatpush2.msra.mxu0 0.0
        %655 = vmatprep.subr.mxu0 0.0
        %656 = vmatpush2.msra.mxu0 0.0
        %657 = vmatprep.subr.mxu0 0.0
        %658 = vmatpush2.msra.mxu0 0.0
        %659 = vmatprep.subr.mxu0 0.0
        %660 = vmatpush2.msra.mxu0 0.0
        %661 = vmatprep.subr.mxu0 0.0
        %662 = vmatpush2.msra.mxu0 0.0
        %663 = vmatprep.subr.mxu0 0.0
        %664 = vmatpush2.msra.mxu0 0.0
        %665 = vmatprep.subr.mxu0 0.0
        %666 = vmatpush2.msra.mxu0 0.0
        %667 = vmatprep.subr.mxu0 0.0
        %668 = vmatpush2.msra.mxu0 0.0
        %669 = vmatprep.subr.mxu0 0.0
        %670 = vmatpush2.msra.mxu0 0.0
        %671 = vmatprep.mubr.f32.mxu0 0.0
        %672 = vmatmul.mubr.f32.gmra.mxu0 %v431
        %v673 = vpop.f32.mrf.mxu0
        %v674 = vadd.f32 0.0, %v673
        %v675 = vpop.f32.mrf.mxu0
        %676 = vmatprep.mubr.f32.mxu0 0.0
        %677 = vmatmul.mubr.f32.gmra.mxu0 %v434
        %v678 = vpop.f32.mrf.mxu0
        %v679 = vadd.f32 0.0, %v678
        %v680 = vpop.f32.mrf.mxu0
        %681 = vmatprep.mubr.f32.mxu0 0.0
        %682 = vmatmul.mubr.f32.gmra.mxu0 %v437
        %v683 = vpop.f32.mrf.mxu0
        %v684 = vadd.f32 0.0, %v683
        %v685 = vpop.f32.mrf.mxu0
        %686 = vmatprep.mubr.f32.mxu0 0.0
        %687 = vmatmul.mubr.f32.gmra.mxu0 %v440
        %v688 = vpop.f32.mrf.mxu0
        %v689 = vadd.f32 0.0, %v688
        %v690 = vpop.f32.mrf.mxu0
        %691 = vdwg.mxu0
        %s692 = sld [smem:[#allocation7 + $0x1]]
        %v693 = vstv %s692
        %v694 = vmul.f32 %v693, %v674
        %v695 = vmul.f32 %v693, %v679
        %v696 = vmul.f32 %v693, %v684
        %v697 = vmul.f32 %v693, %v689
        %v698 = vadd.f32 %v533, %v694
        %v699 = vadd.f32 %v534, %v695
        %v700 = vadd.f32 %v535, %v696
        %v701 = vadd.f32 %v536, %v697
        %s702 = sld [smem:[#allocation7 + $0x25]]
        %v703 = vstv %s702
        %v704 = vmul.f32 %v703, %v674
        %v705 = vmul.f32 %v703, %v679
        %v706 = vmul.f32 %v703, %v684
        %v707 = vmul.f32 %v703, %v689
        %v708 = vadd.f32 %v543, %v704
        %v709 = vadd.f32 %v544, %v705
        %v710 = vadd.f32 %v545, %v706
        %v711 = vadd.f32 %v546, %v707
        %s712 = sld [smem:[#allocation7 + $0x49]]
        %v713 = vstv %s712
        %v714 = vmul.f32 %v713, %v674
        %v715 = vmul.f32 %v713, %v679
        %v716 = vmul.f32 %v713, %v684
        %v717 = vmul.f32 %v713, %v689
        %v718 = vadd.f32 %v553, %v714
        %v719 = vadd.f32 %v554, %v715
        %v720 = vadd.f32 %v555, %v716
        %v721 = vadd.f32 %v556, %v717
        %s722 = sld [smem:[#allocation7 + $0x6d]]
        %v723 = vstv %s722
        %v724 = vmul.f32 %v723, %v674
        %v725 = vmul.f32 %v723, %v679
        %v726 = vmul.f32 %v723, %v684
        %v727 = vmul.f32 %v723, %v689
        %v728 = vadd.f32 %v563, %v724
        %v729 = vadd.f32 %v564, %v725
        %v730 = vadd.f32 %v565, %v726
        %v731 = vadd.f32 %v566, %v727
        %s732 = sld [smem:[#allocation7 + $0x91]]
        %v733 = vstv %s732
        %v734 = vmul.f32 %v733, %v674
        %v735 = vmul.f32 %v733, %v679
        %v736 = vmul.f32 %v733, %v684
        %v737 = vmul.f32 %v733, %v689
        %v738 = vadd.f32 %v573, %v734
        %v739 = vadd.f32 %v574, %v735
        %v740 = vadd.f32 %v575, %v736
        %v741 = vadd.f32 %v576, %v737
        %s742 = sld [smem:[#allocation7 + $0xb5]]
        %v743 = vstv %s742
        %v744 = vmul.f32 %v743, %v674
        %v745 = vmul.f32 %v743, %v679
        %v746 = vmul.f32 %v743, %v684
        %v747 = vmul.f32 %v743, %v689
        %v748 = vadd.f32 %v583, %v744
        %v749 = vadd.f32 %v584, %v745
        %v750 = vadd.f32 %v585, %v746
        %v751 = vadd.f32 %v586, %v747
        %s752 = sld [smem:[#allocation7 + $0xd9]]
        %v753 = vstv %s752
        %v754 = vmul.f32 %v753, %v674
        %v755 = vmul.f32 %v753, %v679
        %v756 = vmul.f32 %v753, %v684
        %v757 = vmul.f32 %v753, %v689
        %v758 = vadd.f32 %v593, %v754
        %v759 = vadd.f32 %v594, %v755
        %v760 = vadd.f32 %v595, %v756
        %v761 = vadd.f32 %v596, %v757
        %s762 = sld [smem:[#allocation7 + $0xfd]]
        %v763 = vstv %s762
        %v764 = vmul.f32 %v763, %v674
        %v765 = vmul.f32 %v763, %v679
        %v766 = vmul.f32 %v763, %v684
        %v767 = vmul.f32 %v763, %v689
        %v768 = vadd.f32 %v603, %v764
        %v769 = vadd.f32 %v604, %v765
        %v770 = vadd.f32 %v605, %v766
        %v771 = vadd.f32 %v606, %v767
        %772 = vmatprep.subr.mxu0 0.0
        %773 = vmatpush1.msra.mxu0 0.0
        %774 = vmatprep.subr.mxu0 0.0
        %775 = vmatpush1.msra.mxu0 0.0
        %776 = vmatprep.subr.mxu0 0.0
        %777 = vmatpush1.msra.mxu0 0.0
        %778 = vmatprep.subr.mxu0 0.0
        %779 = vmatpush1.msra.mxu0 0.0
        %780 = vmatprep.subr.mxu0 0.0
        %781 = vmatpush1.msra.mxu0 0.0
        %782 = vmatprep.subr.mxu0 0.0
        %783 = vmatpush1.msra.mxu0 0.0
        %784 = vmatprep.subr.mxu0 0.0
        %785 = vmatpush1.msra.mxu0 0.0
        %786 = vmatprep.subr.mxu0 0.0
        %787 = vmatpush1.msra.mxu0 0.0
        %788 = vmatprep.subr.mxu0 0.0
        %789 = vmatpush1.msra.mxu0 0.0
        %790 = vmatprep.subr.mxu0 0.0
        %791 = vmatpush1.msra.mxu0 0.0
        %792 = vmatprep.subr.mxu0 0.0
        %793 = vmatpush1.msra.mxu0 0.0
        %794 = vmatprep.subr.mxu0 0.0
        %795 = vmatpush1.msra.mxu0 0.0
        %796 = vmatprep.subr.mxu0 0.0
        %797 = vmatpush1.msra.mxu0 0.0
        %798 = vmatprep.subr.mxu0 0.0
        %799 = vmatpush1.msra.mxu0 0.0
        %800 = vmatprep.subr.mxu0 0.0
        %801 = vmatpush1.msra.mxu0 %v313
        %802 = vmatprep.subr.mxu0 0.0
        %803 = vmatpush1.msra.mxu0 %v312
        %804 = vmatprep.subr.mxu0 0.0
        %805 = vmatpush2.msra.mxu0 0.0
        %806 = vmatprep.subr.mxu0 0.0
        %807 = vmatpush2.msra.mxu0 0.0
        %808 = vmatprep.subr.mxu0 0.0
        %809 = vmatpush2.msra.mxu0 0.0
        %810 = vmatprep.subr.mxu0 0.0
        %811 = vmatpush2.msra.mxu0 0.0
        %812 = vmatprep.subr.mxu0 0.0
        %813 = vmatpush2.msra.mxu0 0.0
        %814 = vmatprep.subr.mxu0 0.0
        %815 = vmatpush2.msra.mxu0 0.0
        %816 = vmatprep.subr.mxu0 0.0
        %817 = vmatpush2.msra.mxu0 0.0
        %818 = vmatprep.subr.mxu0 0.0
        %819 = vmatpush2.msra.mxu0 0.0
        %820 = vmatprep.subr.mxu0 0.0
        %821 = vmatpush2.msra.mxu0 0.0
        %822 = vmatprep.subr.mxu0 0.0
        %823 = vmatpush2.msra.mxu0 0.0
        %824 = vmatprep.subr.mxu0 0.0
        %825 = vmatpush2.msra.mxu0 0.0
        %826 = vmatprep.subr.mxu0 0.0
        %827 = vmatpush2.msra.mxu0 0.0
        %828 = vmatprep.subr.mxu0 0.0
        %829 = vmatpush2.msra.mxu0 0.0
        %830 = vmatprep.subr.mxu0 0.0
        %831 = vmatpush2.msra.mxu0 0.0
        %832 = vmatprep.subr.mxu0 0.0
        %833 = vmatpush2.msra.mxu0 0.0
        %834 = vmatprep.subr.mxu0 0.0
        %835 = vmatpush2.msra.mxu0 0.0
        %836 = vmatprep.mubr.f32.mxu0 0.0
        %837 = vmatmul.mubr.f32.gmra.mxu0 %v431
        %v838 = vpop.f32.mrf.mxu0
        %v839 = vadd.f32 0.0, %v838
        %v840 = vpop.f32.mrf.mxu0
        %841 = vmatprep.mubr.f32.mxu0 0.0
        %842 = vmatmul.mubr.f32.gmra.mxu0 %v434
        %v843 = vpop.f32.mrf.mxu0
        %v844 = vadd.f32 0.0, %v843
        %v845 = vpop.f32.mrf.mxu0
        %846 = vmatprep.mubr.f32.mxu0 0.0
        %847 = vmatmul.mubr.f32.gmra.mxu0 %v437
        %v848 = vpop.f32.mrf.mxu0
        %v849 = vadd.f32 0.0, %v848
        %v850 = vpop.f32.mrf.mxu0
        %851 = vmatprep.mubr.f32.mxu0 0.0
        %852 = vmatmul.mubr.f32.gmra.mxu0 %v440
        %v853 = vpop.f32.mrf.mxu0
        %v854 = vadd.f32 0.0, %v853
        %v855 = vpop.f32.mrf.mxu0
        %856 = vdwg.mxu0
        %s857 = sld [smem:[#allocation7 + $0x2]]
        %v858 = vstv %s857
        %v859 = vmul.f32 %v858, %v839
        %v860 = vmul.f32 %v858, %v844
        %v861 = vmul.f32 %v858, %v849
        %v862 = vmul.f32 %v858, %v854
        %v863 = vadd.f32 %v698, %v859
        %v864 = vadd.f32 %v699, %v860
        %v865 = vadd.f32 %v700, %v861
        %v866 = vadd.f32 %v701, %v862
        %s867 = sld [smem:[#allocation7 + $0x26]]
        %v868 = vstv %s867
        %v869 = vmul.f32 %v868, %v839
        %v870 = vmul.f32 %v868, %v844
        %v871 = vmul.f32 %v868, %v849
        %v872 = vmul.f32 %v868, %v854
        %v873 = vadd.f32 %v708, %v869
        %v874 = vadd.f32 %v709, %v870
        %v875 = vadd.f32 %v710, %v871
        %v876 = vadd.f32 %v711, %v872
        %s877 = sld [smem:[#allocation7 + $0x4a]]
        %v878 = vstv %s877
        %v879 = vmul.f32 %v878, %v839
        %v880 = vmul.f32 %v878, %v844
        %v881 = vmul.f32 %v878, %v849
        %v882 = vmul.f32 %v878, %v854
        %v883 = vadd.f32 %v718, %v879
        %v884 = vadd.f32 %v719, %v880
        %v885 = vadd.f32 %v720, %v881
        %v886 = vadd.f32 %v721, %v882
        %s887 = sld [smem:[#allocation7 + $0x6e]]
        %v888 = vstv %s887
        %v889 = vmul.f32 %v888, %v839
        %v890 = vmul.f32 %v888, %v844
        %v891 = vmul.f32 %v888, %v849
        %v892 = vmul.f32 %v888, %v854
        %v893 = vadd.f32 %v728, %v889
        %v894 = vadd.f32 %v729, %v890
        %v895 = vadd.f32 %v730, %v891
        %v896 = vadd.f32 %v731, %v892
        %s897 = sld [smem:[#allocation7 + $0x92]]
        %v898 = vstv %s897
        %v899 = vmul.f32 %v898, %v839
        %v900 = vmul.f32 %v898, %v844
        %v901 = vmul.f32 %v898, %v849
        %v902 = vmul.f32 %v898, %v854
        %v903 = vadd.f32 %v738, %v899
        %v904 = vadd.f32 %v739, %v900
        %v905 = vadd.f32 %v740, %v901
        %v906 = vadd.f32 %v741, %v902
        %s907 = sld [smem:[#allocation7 + $0xb6]]
        %v908 = vstv %s907
        %v909 = vmul.f32 %v908, %v839
        %v910 = vmul.f32 %v908, %v844
        %v911 = vmul.f32 %v908, %v849
        %v912 = vmul.f32 %v908, %v854
        %v913 = vadd.f32 %v748, %v909
        %v914 = vadd.f32 %v749, %v910
        %v915 = vadd.f32 %v750, %v911
        %v916 = vadd.f32 %v751, %v912
        %s917 = sld [smem:[#allocation7 + $0xda]]
        %v918 = vstv %s917
        %v919 = vmul.f32 %v918, %v839
        %v920 = vmul.f32 %v918, %v844
        %v921 = vmul.f32 %v918, %v849
        %v922 = vmul.f32 %v918, %v854
        %v923 = vadd.f32 %v758, %v919
        %v924 = vadd.f32 %v759, %v920
        %v925 = vadd.f32 %v760, %v921
        %v926 = vadd.f32 %v761, %v922
        %s927 = sld [smem:[#allocation7 + $0xfe]]
        %v928 = vstv %s927
        %v929 = vmul.f32 %v928, %v839
        %v930 = vmul.f32 %v928, %v844
        %v931 = vmul.f32 %v928, %v849
        %v932 = vmul.f32 %v928, %v854
        %v933 = vadd.f32 %v768, %v929
        %v934 = vadd.f32 %v769, %v930
        %v935 = vadd.f32 %v770, %v931
        %v936 = vadd.f32 %v771, %v932
        %v938 = vsel %vm332, %v255, 0
        %v941 = vsel %vm332, %v256, 0
        %v944 = vsel %vm332, %v257, 0
        %v947 = vsel %vm332, %v258, 0
        %949 = vmatprep.subr.mxu0 0.0
        %950 = vmatpush1.msra.mxu0 0.0
        %951 = vmatprep.subr.mxu0 0.0
        %952 = vmatpush1.msra.mxu0 0.0
        %953 = vmatprep.subr.mxu0 0.0
        %954 = vmatpush1.msra.mxu0 0.0
        %955 = vmatprep.subr.mxu0 0.0
        %956 = vmatpush1.msra.mxu0 0.0
        %957 = vmatprep.subr.mxu0 0.0
        %958 = vmatpush1.msra.mxu0 0.0
        %959 = vmatprep.subr.mxu0 0.0
        %960 = vmatpush1.msra.mxu0 0.0
        %961 = vmatprep.subr.mxu0 0.0
        %962 = vmatpush1.msra.mxu0 0.0
        %963 = vmatprep.subr.mxu0 0.0
        %964 = vmatpush1.msra.mxu0 0.0
        %965 = vmatprep.subr.mxu0 0.0
        %966 = vmatpush1.msra.mxu0 0.0
        %967 = vmatprep.subr.mxu0 0.0
        %968 = vmatpush1.msra.mxu0 0.0
        %969 = vmatprep.subr.mxu0 0.0
        %970 = vmatpush1.msra.mxu0 0.0
        %971 = vmatprep.subr.mxu0 0.0
        %972 = vmatpush1.msra.mxu0 0.0
        %973 = vmatprep.subr.mxu0 0.0
        %974 = vmatpush1.msra.mxu0 0.0
        %975 = vmatprep.subr.mxu0 0.0
        %976 = vmatpush1.msra.mxu0 0.0
        %977 = vmatprep.subr.mxu0 0.0
        %978 = vmatpush1.msra.mxu0 %v331
        %979 = vmatprep.subr.mxu0 0.0
        %980 = vmatpush1.msra.mxu0 %v330
        %981 = vmatprep.subr.mxu0 0.0
        %982 = vmatpush2.msra.mxu0 0.0
        %983 = vmatprep.subr.mxu0 0.0
        %984 = vmatpush2.msra.mxu0 0.0
        %985 = vmatprep.subr.mxu0 0.0
        %986 = vmatpush2.msra.mxu0 0.0
        %987 = vmatprep.subr.mxu0 0.0
        %988 = vmatpush2.msra.mxu0 0.0
        %989 = vmatprep.subr.mxu0 0.0
        %990 = vmatpush2.msra.mxu0 0.0
        %991 = vmatprep.subr.mxu0 0.0
        %992 = vmatpush2.msra.mxu0 0.0
        %993 = vmatprep.subr.mxu0 0.0
        %994 = vmatpush2.msra.mxu0 0.0
        %995 = vmatprep.subr.mxu0 0.0
        %996 = vmatpush2.msra.mxu0 0.0
        %997 = vmatprep.subr.mxu0 0.0
        %998 = vmatpush2.msra.mxu0 0.0
        %999 = vmatprep.subr.mxu0 0.0
        %1000 = vmatpush2.msra.mxu0 0.0
        %1001 = vmatprep.subr.mxu0 0.0
        %1002 = vmatpush2.msra.mxu0 0.0
        %1003 = vmatprep.subr.mxu0 0.0
        %1004 = vmatpush2.msra.mxu0 0.0
        %1005 = vmatprep.subr.mxu0 0.0
        %1006 = vmatpush2.msra.mxu0 0.0
        %1007 = vmatprep.subr.mxu0 0.0
        %1008 = vmatpush2.msra.mxu0 0.0
        %1009 = vmatprep.subr.mxu0 0.0
        %1010 = vmatpush2.msra.mxu0 0.0
        %1011 = vmatprep.subr.mxu0 0.0
        %1012 = vmatpush2.msra.mxu0 0.0
        %1013 = vmatprep.mubr.f32.mxu0 0.0
        %1014 = vmatmul.mubr.f32.gmra.mxu0 %v938
        %v1015 = vpop.f32.mrf.mxu0
        %v1016 = vadd.f32 0.0, %v1015
        %v1017 = vpop.f32.mrf.mxu0
        %1018 = vmatprep.mubr.f32.mxu0 0.0
        %1019 = vmatmul.mubr.f32.gmra.mxu0 %v941
        %v1020 = vpop.f32.mrf.mxu0
        %v1021 = vadd.f32 0.0, %v1020
        %v1022 = vpop.f32.mrf.mxu0
        %1023 = vmatprep.mubr.f32.mxu0 0.0
        %1024 = vmatmul.mubr.f32.gmra.mxu0 %v944
        %v1025 = vpop.f32.mrf.mxu0
        %v1026 = vadd.f32 0.0, %v1025
        %v1027 = vpop.f32.mrf.mxu0
        %1028 = vmatprep.mubr.f32.mxu0 0.0
        %1029 = vmatmul.mubr.f32.gmra.mxu0 %v947
        %v1030 = vpop.f32.mrf.mxu0
        %v1031 = vadd.f32 0.0, %v1030
        %v1032 = vpop.f32.mrf.mxu0
        %1033 = vdwg.mxu0
        %v1035 = vsel %vm332, %v1016, 0
        %v1038 = vsel %vm332, %v1021, 0
        %v1041 = vsel %vm332, %v1026, 0
        %v1044 = vsel %vm332, %v1031, 0
        %1046 = vmatprep.subr.mxu0 0.0
        %1047 = vmatpush1.msra.mxu0 0.0
        %1048 = vmatprep.subr.mxu0 0.0
        %1049 = vmatpush1.msra.mxu0 0.0
        %1050 = vmatprep.subr.mxu0 0.0
        %1051 = vmatpush1.msra.mxu0 0.0
        %1052 = vmatprep.subr.mxu0 0.0
        %1053 = vmatpush1.msra.mxu0 0.0
        %1054 = vmatprep.subr.mxu0 0.0
        %1055 = vmatpush1.msra.mxu0 0.0
        %1056 = vmatprep.subr.mxu0 0.0
        %1057 = vmatpush1.msra.mxu0 0.0
        %1058 = vmatprep.subr.mxu0 0.0
        %1059 = vmatpush1.msra.mxu0 0.0
        %1060 = vmatprep.subr.mxu0 0.0
        %1061 = vmatpush1.msra.mxu0 0.0
        %1062 = vmatprep.subr.mxu0 0.0
        %1063 = vmatpush1.msra.mxu0 0.0
        %1064 = vmatprep.subr.mxu0 0.0
        %1065 = vmatpush1.msra.mxu0 0.0
        %1066 = vmatprep.subr.mxu0 0.0
        %1067 = vmatpush1.msra.mxu0 0.0
        %1068 = vmatprep.subr.mxu0 0.0
        %1069 = vmatpush1.msra.mxu0 0.0
        %1070 = vmatprep.subr.mxu0 0.0
        %1071 = vmatpush1.msra.mxu0 0.0
        %1072 = vmatprep.subr.mxu0 0.0
        %1073 = vmatpush1.msra.mxu0 0.0
        %1074 = vmatprep.subr.mxu0 0.0
        %1075 = vmatpush1.msra.mxu0 %v295
        %1076 = vmatprep.subr.mxu0 0.0
        %1077 = vmatpush1.msra.mxu0 %v294
        %1078 = vmatprep.subr.mxu0 0.0
        %1079 = vmatpush2.msra.mxu0 0.0
        %1080 = vmatprep.subr.mxu0 0.0
        %1081 = vmatpush2.msra.mxu0 0.0
        %1082 = vmatprep.subr.mxu0 0.0
        %1083 = vmatpush2.msra.mxu0 0.0
        %1084 = vmatprep.subr.mxu0 0.0
        %1085 = vmatpush2.msra.mxu0 0.0
        %1086 = vmatprep.subr.mxu0 0.0
        %1087 = vmatpush2.msra.mxu0 0.0
        %1088 = vmatprep.subr.mxu0 0.0
        %1089 = vmatpush2.msra.mxu0 0.0
        %1090 = vmatprep.subr.mxu0 0.0
        %1091 = vmatpush2.msra.mxu0 0.0
        %1092 = vmatprep.subr.mxu0 0.0
        %1093 = vmatpush2.msra.mxu0 0.0
        %1094 = vmatprep.subr.mxu0 0.0
        %1095 = vmatpush2.msra.mxu0 0.0
        %1096 = vmatprep.subr.mxu0 0.0
        %1097 = vmatpush2.msra.mxu0 0.0
        %1098 = vmatprep.subr.mxu0 0.0
        %1099 = vmatpush2.msra.mxu0 0.0
        %1100 = vmatprep.subr.mxu0 0.0
        %1101 = vmatpush2.msra.mxu0 0.0
        %1102 = vmatprep.subr.mxu0 0.0
        %1103 = vmatpush2.msra.mxu0 0.0
        %1104 = vmatprep.subr.mxu0 0.0
        %1105 = vmatpush2.msra.mxu0 0.0
        %1106 = vmatprep.subr.mxu0 0.0
        %1107 = vmatpush2.msra.mxu0 0.0
        %1108 = vmatprep.subr.mxu0 0.0
        %1109 = vmatpush2.msra.mxu0 0.0
        %1110 = vmatprep.mubr.f32.mxu0 0.0
        %1111 = vmatmul.mubr.f32.gmra.mxu0 %v1035
        %v1112 = vpop.f32.mrf.mxu0
        %v1113 = vadd.f32 0.0, %v1112
        %v1114 = vpop.f32.mrf.mxu0
        %1115 = vmatprep.mubr.f32.mxu0 0.0
        %1116 = vmatmul.mubr.f32.gmra.mxu0 %v1038
        %v1117 = vpop.f32.mrf.mxu0
        %v1118 = vadd.f32 0.0, %v1117
        %v1119 = vpop.f32.mrf.mxu0
        %1120 = vmatprep.mubr.f32.mxu0 0.0
        %1121 = vmatmul.mubr.f32.gmra.mxu0 %v1041
        %v1122 = vpop.f32.mrf.mxu0
        %v1123 = vadd.f32 0.0, %v1122
        %v1124 = vpop.f32.mrf.mxu0
        %1125 = vmatprep.mubr.f32.mxu0 0.0
        %1126 = vmatmul.mubr.f32.gmra.mxu0 %v1044
        %v1127 = vpop.f32.mrf.mxu0
        %v1128 = vadd.f32 0.0, %v1127
        %v1129 = vpop.f32.mrf.mxu0
        %1130 = vdwg.mxu0
        %s1131 = sld [smem:[#allocation7 + $0x3]]
        %v1132 = vstv %s1131
        %v1133 = vmul.f32 %v1132, %v1113
        %v1134 = vmul.f32 %v1132, %v1118
        %v1135 = vmul.f32 %v1132, %v1123
        %v1136 = vmul.f32 %v1132, %v1128
        %v1137 = vadd.f32 %v863, %v1133
        %v1138 = vadd.f32 %v864, %v1134
        %v1139 = vadd.f32 %v865, %v1135
        %v1140 = vadd.f32 %v866, %v1136
        %s1141 = sld [smem:[#allocation7 + $0x27]]
        %v1142 = vstv %s1141
        %v1143 = vmul.f32 %v1142, %v1113
        %v1144 = vmul.f32 %v1142, %v1118
        %v1145 = vmul.f32 %v1142, %v1123
        %v1146 = vmul.f32 %v1142, %v1128
        %v1147 = vadd.f32 %v873, %v1143
        %v1148 = vadd.f32 %v874, %v1144
        %v1149 = vadd.f32 %v875, %v1145
        %v1150 = vadd.f32 %v876, %v1146
        %s1151 = sld [smem:[#allocation7 + $0x4b]]
        %v1152 = vstv %s1151
        %v1153 = vmul.f32 %v1152, %v1113
        %v1154 = vmul.f32 %v1152, %v1118
        %v1155 = vmul.f32 %v1152, %v1123
        %v1156 = vmul.f32 %v1152, %v1128
        %v1157 = vadd.f32 %v883, %v1153
        %v1158 = vadd.f32 %v884, %v1154
        %v1159 = vadd.f32 %v885, %v1155
        %v1160 = vadd.f32 %v886, %v1156
        %s1161 = sld [smem:[#allocation7 + $0x6f]]
        %v1162 = vstv %s1161
        %v1163 = vmul.f32 %v1162, %v1113
        %v1164 = vmul.f32 %v1162, %v1118
        %v1165 = vmul.f32 %v1162, %v1123
        %v1166 = vmul.f32 %v1162, %v1128
        %v1167 = vadd.f32 %v893, %v1163
        %v1168 = vadd.f32 %v894, %v1164
        %v1169 = vadd.f32 %v895, %v1165
        %v1170 = vadd.f32 %v896, %v1166
        %s1171 = sld [smem:[#allocation7 + $0x93]]
        %v1172 = vstv %s1171
        %v1173 = vmul.f32 %v1172, %v1113
        %v1174 = vmul.f32 %v1172, %v1118
        %v1175 = vmul.f32 %v1172, %v1123
        %v1176 = vmul.f32 %v1172, %v1128
        %v1177 = vadd.f32 %v903, %v1173
        %v1178 = vadd.f32 %v904, %v1174
        %v1179 = vadd.f32 %v905, %v1175
        %v1180 = vadd.f32 %v906, %v1176
        %s1181 = sld [smem:[#allocation7 + $0xb7]]
        %v1182 = vstv %s1181
        %v1183 = vmul.f32 %v1182, %v1113
        %v1184 = vmul.f32 %v1182, %v1118
        %v1185 = vmul.f32 %v1182, %v1123
        %v1186 = vmul.f32 %v1182, %v1128
        %v1187 = vadd.f32 %v913, %v1183
        %v1188 = vadd.f32 %v914, %v1184
        %v1189 = vadd.f32 %v915, %v1185
        %v1190 = vadd.f32 %v916, %v1186
        %s1191 = sld [smem:[#allocation7 + $0xdb]]
        %v1192 = vstv %s1191
        %v1193 = vmul.f32 %v1192, %v1113
        %v1194 = vmul.f32 %v1192, %v1118
        %v1195 = vmul.f32 %v1192, %v1123
        %v1196 = vmul.f32 %v1192, %v1128
        %v1197 = vadd.f32 %v923, %v1193
        %v1198 = vadd.f32 %v924, %v1194
        %v1199 = vadd.f32 %v925, %v1195
        %v1200 = vadd.f32 %v926, %v1196
        %s1201 = sld [smem:[#allocation7 + $0xff]]
        %v1202 = vstv %s1201
        %v1203 = vmul.f32 %v1202, %v1113
        %v1204 = vmul.f32 %v1202, %v1118
        %v1205 = vmul.f32 %v1202, %v1123
        %v1206 = vmul.f32 %v1202, %v1128
        %v1207 = vadd.f32 %v933, %v1203
        %v1208 = vadd.f32 %v934, %v1204
        %v1209 = vadd.f32 %v935, %v1205
        %v1210 = vadd.f32 %v936, %v1206
        %1211 = vmatprep.subr.mxu0 0.0
        %1212 = vmatpush1.msra.mxu0 0.0
        %1213 = vmatprep.subr.mxu0 0.0
        %1214 = vmatpush1.msra.mxu0 0.0
        %1215 = vmatprep.subr.mxu0 0.0
        %1216 = vmatpush1.msra.mxu0 0.0
        %1217 = vmatprep.subr.mxu0 0.0
        %1218 = vmatpush1.msra.mxu0 0.0
        %1219 = vmatprep.subr.mxu0 0.0
        %1220 = vmatpush1.msra.mxu0 0.0
        %1221 = vmatprep.subr.mxu0 0.0
        %1222 = vmatpush1.msra.mxu0 0.0
        %1223 = vmatprep.subr.mxu0 0.0
        %1224 = vmatpush1.msra.mxu0 0.0
        %1225 = vmatprep.subr.mxu0 0.0
        %1226 = vmatpush1.msra.mxu0 0.0
        %1227 = vmatprep.subr.mxu0 0.0
        %1228 = vmatpush1.msra.mxu0 0.0
        %1229 = vmatprep.subr.mxu0 0.0
        %1230 = vmatpush1.msra.mxu0 0.0
        %1231 = vmatprep.subr.mxu0 0.0
        %1232 = vmatpush1.msra.mxu0 0.0
        %1233 = vmatprep.subr.mxu0 0.0
        %1234 = vmatpush1.msra.mxu0 0.0
        %1235 = vmatprep.subr.mxu0 0.0
        %1236 = vmatpush1.msra.mxu0 0.0
        %1237 = vmatprep.subr.mxu0 0.0
        %1238 = vmatpush1.msra.mxu0 0.0
        %1239 = vmatprep.subr.mxu0 0.0
        %1240 = vmatpush1.msra.mxu0 %v303
        %1241 = vmatprep.subr.mxu0 0.0
        %1242 = vmatpush1.msra.mxu0 %v302
        %1243 = vmatprep.subr.mxu0 0.0
        %1244 = vmatpush2.msra.mxu0 0.0
        %1245 = vmatprep.subr.mxu0 0.0
        %1246 = vmatpush2.msra.mxu0 0.0
        %1247 = vmatprep.subr.mxu0 0.0
        %1248 = vmatpush2.msra.mxu0 0.0
        %1249 = vmatprep.subr.mxu0 0.0
        %1250 = vmatpush2.msra.mxu0 0.0
        %1251 = vmatprep.subr.mxu0 0.0
        %1252 = vmatpush2.msra.mxu0 0.0
        %1253 = vmatprep.subr.mxu0 0.0
        %1254 = vmatpush2.msra.mxu0 0.0
        %1255 = vmatprep.subr.mxu0 0.0
        %1256 = vmatpush2.msra.mxu0 0.0
        %1257 = vmatprep.subr.mxu0 0.0
        %1258 = vmatpush2.msra.mxu0 0.0
        %1259 = vmatprep.subr.mxu0 0.0
        %1260 = vmatpush2.msra.mxu0 0.0
        %1261 = vmatprep.subr.mxu0 0.0
        %1262 = vmatpush2.msra.mxu0 0.0
        %1263 = vmatprep.subr.mxu0 0.0
        %1264 = vmatpush2.msra.mxu0 0.0
        %1265 = vmatprep.subr.mxu0 0.0
        %1266 = vmatpush2.msra.mxu0 0.0
        %1267 = vmatprep.subr.mxu0 0.0
        %1268 = vmatpush2.msra.mxu0 0.0
        %1269 = vmatprep.subr.mxu0 0.0
        %1270 = vmatpush2.msra.mxu0 0.0
        %1271 = vmatprep.subr.mxu0 0.0
        %1272 = vmatpush2.msra.mxu0 0.0
        %1273 = vmatprep.subr.mxu0 0.0
        %1274 = vmatpush2.msra.mxu0 0.0
        %1275 = vmatprep.mubr.f32.mxu0 0.0
        %1276 = vmatmul.mubr.f32.gmra.mxu0 %v1035
        %v1277 = vpop.f32.mrf.mxu0
        %v1278 = vadd.f32 0.0, %v1277
        %v1279 = vpop.f32.mrf.mxu0
        %1280 = vmatprep.mubr.f32.mxu0 0.0
        %1281 = vmatmul.mubr.f32.gmra.mxu0 %v1038
        %v1282 = vpop.f32.mrf.mxu0
        %v1283 = vadd.f32 0.0, %v1282
        %v1284 = vpop.f32.mrf.mxu0
        %1285 = vmatprep.mubr.f32.mxu0 0.0
        %1286 = vmatmul.mubr.f32.gmra.mxu0 %v1041
        %v1287 = vpop.f32.mrf.mxu0
        %v1288 = vadd.f32 0.0, %v1287
        %v1289 = vpop.f32.mrf.mxu0
        %1290 = vmatprep.mubr.f32.mxu0 0.0
        %1291 = vmatmul.mubr.f32.gmra.mxu0 %v1044
        %v1292 = vpop.f32.mrf.mxu0
        %v1293 = vadd.f32 0.0, %v1292
        %v1294 = vpop.f32.mrf.mxu0
        %1295 = vdwg.mxu0
        %s1296 = sld [smem:[#allocation7 + $0x4]]
        %v1297 = vstv %s1296
        %v1298 = vmul.f32 %v1297, %v1278
        %v1299 = vmul.f32 %v1297, %v1283
        %v1300 = vmul.f32 %v1297, %v1288
        %v1301 = vmul.f32 %v1297, %v1293
        %v1302 = vadd.f32 %v1137, %v1298
        %v1303 = vadd.f32 %v1138, %v1299
        %v1304 = vadd.f32 %v1139, %v1300
        %v1305 = vadd.f32 %v1140, %v1301
        %s1306 = sld [smem:[#allocation7 + $0x28]]
        %v1307 = vstv %s1306
        %v1308 = vmul.f32 %v1307, %v1278
        %v1309 = vmul.f32 %v1307, %v1283
        %v1310 = vmul.f32 %v1307, %v1288
        %v1311 = vmul.f32 %v1307, %v1293
        %v1312 = vadd.f32 %v1147, %v1308
        %v1313 = vadd.f32 %v1148, %v1309
        %v1314 = vadd.f32 %v1149, %v1310
        %v1315 = vadd.f32 %v1150, %v1311
        %s1316 = sld [smem:[#allocation7 + $0x4c]]
        %v1317 = vstv %s1316
        %v1318 = vmul.f32 %v1317, %v1278
        %v1319 = vmul.f32 %v1317, %v1283
        %v1320 = vmul.f32 %v1317, %v1288
        %v1321 = vmul.f32 %v1317, %v1293
        %v1322 = vadd.f32 %v1157, %v1318
        %v1323 = vadd.f32 %v1158, %v1319
        %v1324 = vadd.f32 %v1159, %v1320
        %v1325 = vadd.f32 %v1160, %v1321
        %s1326 = sld [smem:[#allocation7 + $0x70]]
        %v1327 = vstv %s1326
        %v1328 = vmul.f32 %v1327, %v1278
        %v1329 = vmul.f32 %v1327, %v1283
        %v1330 = vmul.f32 %v1327, %v1288
        %v1331 = vmul.f32 %v1327, %v1293
        %v1332 = vadd.f32 %v1167, %v1328
        %v1333 = vadd.f32 %v1168, %v1329
        %v1334 = vadd.f32 %v1169, %v1330
        %v1335 = vadd.f32 %v1170, %v1331
        %s1336 = sld [smem:[#allocation7 + $0x94]]
        %v1337 = vstv %s1336
        %v1338 = vmul.f32 %v1337, %v1278
        %v1339 = vmul.f32 %v1337, %v1283
        %v1340 = vmul.f32 %v1337, %v1288
        %v1341 = vmul.f32 %v1337, %v1293
        %v1342 = vadd.f32 %v1177, %v1338
        %v1343 = vadd.f32 %v1178, %v1339
        %v1344 = vadd.f32 %v1179, %v1340
        %v1345 = vadd.f32 %v1180, %v1341
        %s1346 = sld [smem:[#allocation7 + $0xb8]]
        %v1347 = vstv %s1346
        %v1348 = vmul.f32 %v1347, %v1278
        %v1349 = vmul.f32 %v1347, %v1283
        %v1350 = vmul.f32 %v1347, %v1288
        %v1351 = vmul.f32 %v1347, %v1293
        %v1352 = vadd.f32 %v1187, %v1348
        %v1353 = vadd.f32 %v1188, %v1349
        %v1354 = vadd.f32 %v1189, %v1350
        %v1355 = vadd.f32 %v1190, %v1351
        %s1356 = sld [smem:[#allocation7 + $0xdc]]
        %v1357 = vstv %s1356
        %v1358 = vmul.f32 %v1357, %v1278
        %v1359 = vmul.f32 %v1357, %v1283
        %v1360 = vmul.f32 %v1357, %v1288
        %v1361 = vmul.f32 %v1357, %v1293
        %v1362 = vadd.f32 %v1197, %v1358
        %v1363 = vadd.f32 %v1198, %v1359
        %v1364 = vadd.f32 %v1199, %v1360
        %v1365 = vadd.f32 %v1200, %v1361
        %s1366 = sld [smem:[#allocation7 + $0x100]]
        %v1367 = vstv %s1366
        %v1368 = vmul.f32 %v1367, %v1278
        %v1369 = vmul.f32 %v1367, %v1283
        %v1370 = vmul.f32 %v1367, %v1288
        %v1371 = vmul.f32 %v1367, %v1293
        %v1372 = vadd.f32 %v1207, %v1368
        %v1373 = vadd.f32 %v1208, %v1369
        %v1374 = vadd.f32 %v1209, %v1370
        %v1375 = vadd.f32 %v1210, %v1371
        %1376 = vmatprep.subr.mxu0 0.0
        %1377 = vmatpush1.msra.mxu0 0.0
        %1378 = vmatprep.subr.mxu0 0.0
        %1379 = vmatpush1.msra.mxu0 0.0
        %1380 = vmatprep.subr.mxu0 0.0
        %1381 = vmatpush1.msra.mxu0 0.0
        %1382 = vmatprep.subr.mxu0 0.0
        %1383 = vmatpush1.msra.mxu0 0.0
        %1384 = vmatprep.subr.mxu0 0.0
        %1385 = vmatpush1.msra.mxu0 0.0
        %1386 = vmatprep.subr.mxu0 0.0
        %1387 = vmatpush1.msra.mxu0 0.0
        %1388 = vmatprep.subr.mxu0 0.0
        %1389 = vmatpush1.msra.mxu0 0.0
        %1390 = vmatprep.subr.mxu0 0.0
        %1391 = vmatpush1.msra.mxu0 0.0
        %1392 = vmatprep.subr.mxu0 0.0
        %1393 = vmatpush1.msra.mxu0 0.0
        %1394 = vmatprep.subr.mxu0 0.0
        %1395 = vmatpush1.msra.mxu0 0.0
        %1396 = vmatprep.subr.mxu0 0.0
        %1397 = vmatpush1.msra.mxu0 0.0
        %1398 = vmatprep.subr.mxu0 0.0
        %1399 = vmatpush1.msra.mxu0 0.0
        %1400 = vmatprep.subr.mxu0 0.0
        %1401 = vmatpush1.msra.mxu0 0.0
        %1402 = vmatprep.subr.mxu0 0.0
        %1403 = vmatpush1.msra.mxu0 0.0
        %1404 = vmatprep.subr.mxu0 0.0
        %1405 = vmatpush1.msra.mxu0 %v313
        %1406 = vmatprep.subr.mxu0 0.0
        %1407 = vmatpush1.msra.mxu0 %v312
        %1408 = vmatprep.subr.mxu0 0.0
        %1409 = vmatpush2.msra.mxu0 0.0
        %1410 = vmatprep.subr.mxu0 0.0
        %1411 = vmatpush2.msra.mxu0 0.0
        %1412 = vmatprep.subr.mxu0 0.0
        %1413 = vmatpush2.msra.mxu0 0.0
        %1414 = vmatprep.subr.mxu0 0.0
        %1415 = vmatpush2.msra.mxu0 0.0
        %1416 = vmatprep.subr.mxu0 0.0
        %1417 = vmatpush2.msra.mxu0 0.0
        %1418 = vmatprep.subr.mxu0 0.0
        %1419 = vmatpush2.msra.mxu0 0.0
        %1420 = vmatprep.subr.mxu0 0.0
        %1421 = vmatpush2.msra.mxu0 0.0
        %1422 = vmatprep.subr.mxu0 0.0
        %1423 = vmatpush2.msra.mxu0 0.0
        %1424 = vmatprep.subr.mxu0 0.0
        %1425 = vmatpush2.msra.mxu0 0.0
        %1426 = vmatprep.subr.mxu0 0.0
        %1427 = vmatpush2.msra.mxu0 0.0
        %1428 = vmatprep.subr.mxu0 0.0
        %1429 = vmatpush2.msra.mxu0 0.0
        %1430 = vmatprep.subr.mxu0 0.0
        %1431 = vmatpush2.msra.mxu0 0.0
        %1432 = vmatprep.subr.mxu0 0.0
        %1433 = vmatpush2.msra.mxu0 0.0
        %1434 = vmatprep.subr.mxu0 0.0
        %1435 = vmatpush2.msra.mxu0 0.0
        %1436 = vmatprep.subr.mxu0 0.0
        %1437 = vmatpush2.msra.mxu0 0.0
        %1438 = vmatprep.subr.mxu0 0.0
        %1439 = vmatpush2.msra.mxu0 0.0
        %1440 = vmatprep.mubr.f32.mxu0 0.0
        %1441 = vmatmul.mubr.f32.gmra.mxu0 %v1035
        %v1442 = vpop.f32.mrf.mxu0
        %v1443 = vadd.f32 0.0, %v1442
        %v1444 = vpop.f32.mrf.mxu0
        %1445 = vmatprep.mubr.f32.mxu0 0.0
        %1446 = vmatmul.mubr.f32.gmra.mxu0 %v1038
        %v1447 = vpop.f32.mrf.mxu0
        %v1448 = vadd.f32 0.0, %v1447
        %v1449 = vpop.f32.mrf.mxu0
        %1450 = vmatprep.mubr.f32.mxu0 0.0
        %1451 = vmatmul.mubr.f32.gmra.mxu0 %v1041
        %v1452 = vpop.f32.mrf.mxu0
        %v1453 = vadd.f32 0.0, %v1452
        %v1454 = vpop.f32.mrf.mxu0
        %1455 = vmatprep.mubr.f32.mxu0 0.0
        %1456 = vmatmul.mubr.f32.gmra.mxu0 %v1044
        %v1457 = vpop.f32.mrf.mxu0
        %v1458 = vadd.f32 0.0, %v1457
        %v1459 = vpop.f32.mrf.mxu0
        %1460 = vdwg.mxu0
        %s1461 = sld [smem:[#allocation7 + $0x5]]
        %v1462 = vstv %s1461
        %v1463 = vmul.f32 %v1462, %v1443
        %v1464 = vmul.f32 %v1462, %v1448
        %v1465 = vmul.f32 %v1462, %v1453
        %v1466 = vmul.f32 %v1462, %v1458
        %v1467 = vadd.f32 %v1302, %v1463
        %v1468 = vadd.f32 %v1303, %v1464
        %v1469 = vadd.f32 %v1304, %v1465
        %v1470 = vadd.f32 %v1305, %v1466
        %s1471 = sld [smem:[#allocation7 + $0x29]]
        %v1472 = vstv %s1471
        %v1473 = vmul.f32 %v1472, %v1443
        %v1474 = vmul.f32 %v1472, %v1448
        %v1475 = vmul.f32 %v1472, %v1453
        %v1476 = vmul.f32 %v1472, %v1458
        %v1477 = vadd.f32 %v1312, %v1473
        %v1478 = vadd.f32 %v1313, %v1474
        %v1479 = vadd.f32 %v1314, %v1475
        %v1480 = vadd.f32 %v1315, %v1476
        %s1481 = sld [smem:[#allocation7 + $0x4d]]
        %v1482 = vstv %s1481
        %v1483 = vmul.f32 %v1482, %v1443
        %v1484 = vmul.f32 %v1482, %v1448
        %v1485 = vmul.f32 %v1482, %v1453
        %v1486 = vmul.f32 %v1482, %v1458
        %v1487 = vadd.f32 %v1322, %v1483
        %v1488 = vadd.f32 %v1323, %v1484
        %v1489 = vadd.f32 %v1324, %v1485
        %v1490 = vadd.f32 %v1325, %v1486
        %s1491 = sld [smem:[#allocation7 + $0x71]]
        %v1492 = vstv %s1491
        %v1493 = vmul.f32 %v1492, %v1443
        %v1494 = vmul.f32 %v1492, %v1448
        %v1495 = vmul.f32 %v1492, %v1453
        %v1496 = vmul.f32 %v1492, %v1458
        %v1497 = vadd.f32 %v1332, %v1493
        %v1498 = vadd.f32 %v1333, %v1494
        %v1499 = vadd.f32 %v1334, %v1495
        %v1500 = vadd.f32 %v1335, %v1496
        %s1501 = sld [smem:[#allocation7 + $0x95]]
        %v1502 = vstv %s1501
        %v1503 = vmul.f32 %v1502, %v1443
        %v1504 = vmul.f32 %v1502, %v1448
        %v1505 = vmul.f32 %v1502, %v1453
        %v1506 = vmul.f32 %v1502, %v1458
        %v1507 = vadd.f32 %v1342, %v1503
        %v1508 = vadd.f32 %v1343, %v1504
        %v1509 = vadd.f32 %v1344, %v1505
        %v1510 = vadd.f32 %v1345, %v1506
        %s1511 = sld [smem:[#allocation7 + $0xb9]]
        %v1512 = vstv %s1511
        %v1513 = vmul.f32 %v1512, %v1443
        %v1514 = vmul.f32 %v1512, %v1448
        %v1515 = vmul.f32 %v1512, %v1453
        %v1516 = vmul.f32 %v1512, %v1458
        %v1517 = vadd.f32 %v1352, %v1513
        %v1518 = vadd.f32 %v1353, %v1514
        %v1519 = vadd.f32 %v1354, %v1515
        %v1520 = vadd.f32 %v1355, %v1516
        %s1521 = sld [smem:[#allocation7 + $0xdd]]
        %v1522 = vstv %s1521
        %v1523 = vmul.f32 %v1522, %v1443
        %v1524 = vmul.f32 %v1522, %v1448
        %v1525 = vmul.f32 %v1522, %v1453
        %v1526 = vmul.f32 %v1522, %v1458
        %v1527 = vadd.f32 %v1362, %v1523
        %v1528 = vadd.f32 %v1363, %v1524
        %v1529 = vadd.f32 %v1364, %v1525
        %v1530 = vadd.f32 %v1365, %v1526
        %s1531 = sld [smem:[#allocation7 + $0x101]]
        %v1532 = vstv %s1531
        %v1533 = vmul.f32 %v1532, %v1443
        %v1534 = vmul.f32 %v1532, %v1448
        %v1535 = vmul.f32 %v1532, %v1453
        %v1536 = vmul.f32 %v1532, %v1458
        %v1537 = vadd.f32 %v1372, %v1533
        %v1538 = vadd.f32 %v1373, %v1534
        %v1539 = vadd.f32 %v1374, %v1535
        %v1540 = vadd.f32 %v1375, %v1536
        %v1542 = vsel %vm332, %v279, 0
        %v1545 = vsel %vm332, %v280, 0
        %v1548 = vsel %vm332, %v281, 0
        %v1551 = vsel %vm332, %v282, 0
        %1553 = vmatprep.subr.mxu0 0.0
        %1554 = vmatpush1.msra.mxu0 0.0
        %1555 = vmatprep.subr.mxu0 0.0
        %1556 = vmatpush1.msra.mxu0 0.0
        %1557 = vmatprep.subr.mxu0 0.0
        %1558 = vmatpush1.msra.mxu0 0.0
        %1559 = vmatprep.subr.mxu0 0.0
        %1560 = vmatpush1.msra.mxu0 0.0
        %1561 = vmatprep.subr.mxu0 0.0
        %1562 = vmatpush1.msra.mxu0 0.0
        %1563 = vmatprep.subr.mxu0 0.0
        %1564 = vmatpush1.msra.mxu0 0.0
        %1565 = vmatprep.subr.mxu0 0.0
        %1566 = vmatpush1.msra.mxu0 0.0
        %1567 = vmatprep.subr.mxu0 0.0
        %1568 = vmatpush1.msra.mxu0 0.0
        %1569 = vmatprep.subr.mxu0 0.0
        %1570 = vmatpush1.msra.mxu0 0.0
        %1571 = vmatprep.subr.mxu0 0.0
        %1572 = vmatpush1.msra.mxu0 0.0
        %1573 = vmatprep.subr.mxu0 0.0
        %1574 = vmatpush1.msra.mxu0 0.0
        %1575 = vmatprep.subr.mxu0 0.0
        %1576 = vmatpush1.msra.mxu0 0.0
        %1577 = vmatprep.subr.mxu0 0.0
        %1578 = vmatpush1.msra.mxu0 0.0
        %1579 = vmatprep.subr.mxu0 0.0
        %1580 = vmatpush1.msra.mxu0 0.0
        %1581 = vmatprep.subr.mxu0 0.0
        %1582 = vmatpush1.msra.mxu0 %v331
        %1583 = vmatprep.subr.mxu0 0.0
        %1584 = vmatpush1.msra.mxu0 %v330
        %1585 = vmatprep.subr.mxu0 0.0
        %1586 = vmatpush2.msra.mxu0 0.0
        %1587 = vmatprep.subr.mxu0 0.0
        %1588 = vmatpush2.msra.mxu0 0.0
        %1589 = vmatprep.subr.mxu0 0.0
        %1590 = vmatpush2.msra.mxu0 0.0
        %1591 = vmatprep.subr.mxu0 0.0
        %1592 = vmatpush2.msra.mxu0 0.0
        %1593 = vmatprep.subr.mxu0 0.0
        %1594 = vmatpush2.msra.mxu0 0.0
        %1595 = vmatprep.subr.mxu0 0.0
        %1596 = vmatpush2.msra.mxu0 0.0
        %1597 = vmatprep.subr.mxu0 0.0
        %1598 = vmatpush2.msra.mxu0 0.0
        %1599 = vmatprep.subr.mxu0 0.0
        %1600 = vmatpush2.msra.mxu0 0.0
        %1601 = vmatprep.subr.mxu0 0.0
        %1602 = vmatpush2.msra.mxu0 0.0
        %1603 = vmatprep.subr.mxu0 0.0
        %1604 = vmatpush2.msra.mxu0 0.0
        %1605 = vmatprep.subr.mxu0 0.0
        %1606 = vmatpush2.msra.mxu0 0.0
        %1607 = vmatprep.subr.mxu0 0.0
        %1608 = vmatpush2.msra.mxu0 0.0
        %1609 = vmatprep.subr.mxu0 0.0
        %1610 = vmatpush2.msra.mxu0 0.0
        %1611 = vmatprep.subr.mxu0 0.0
        %1612 = vmatpush2.msra.mxu0 0.0
        %1613 = vmatprep.subr.mxu0 0.0
        %1614 = vmatpush2.msra.mxu0 0.0
        %1615 = vmatprep.subr.mxu0 0.0
        %1616 = vmatpush2.msra.mxu0 0.0
        %1617 = vmatprep.mubr.f32.mxu0 0.0
        %1618 = vmatmul.mubr.f32.gmra.mxu0 %v1542
        %v1619 = vpop.f32.mrf.mxu0
        %v1620 = vadd.f32 0.0, %v1619
        %v1621 = vpop.f32.mrf.mxu0
        %1622 = vmatprep.mubr.f32.mxu0 0.0
        %1623 = vmatmul.mubr.f32.gmra.mxu0 %v1545
        %v1624 = vpop.f32.mrf.mxu0
        %v1625 = vadd.f32 0.0, %v1624
        %v1626 = vpop.f32.mrf.mxu0
        %1627 = vmatprep.mubr.f32.mxu0 0.0
        %1628 = vmatmul.mubr.f32.gmra.mxu0 %v1548
        %v1629 = vpop.f32.mrf.mxu0
        %v1630 = vadd.f32 0.0, %v1629
        %v1631 = vpop.f32.mrf.mxu0
        %1632 = vmatprep.mubr.f32.mxu0 0.0
        %1633 = vmatmul.mubr.f32.gmra.mxu0 %v1551
        %v1634 = vpop.f32.mrf.mxu0
        %v1635 = vadd.f32 0.0, %v1634
        %v1636 = vpop.f32.mrf.mxu0
        %1637 = vdwg.mxu0
        %v1639 = vsel %vm332, %v1620, 0
        %v1642 = vsel %vm332, %v1625, 0
        %v1645 = vsel %vm332, %v1630, 0
        %v1648 = vsel %vm332, %v1635, 0
        %1650 = vmatprep.subr.mxu0 0.0
        %1651 = vmatpush1.msra.mxu0 0.0
        %1652 = vmatprep.subr.mxu0 0.0
        %1653 = vmatpush1.msra.mxu0 0.0
        %1654 = vmatprep.subr.mxu0 0.0
        %1655 = vmatpush1.msra.mxu0 0.0
        %1656 = vmatprep.subr.mxu0 0.0
        %1657 = vmatpush1.msra.mxu0 0.0
        %1658 = vmatprep.subr.mxu0 0.0
        %1659 = vmatpush1.msra.mxu0 0.0
        %1660 = vmatprep.subr.mxu0 0.0
        %1661 = vmatpush1.msra.mxu0 0.0
        %1662 = vmatprep.subr.mxu0 0.0
        %1663 = vmatpush1.msra.mxu0 0.0
        %1664 = vmatprep.subr.mxu0 0.0
        %1665 = vmatpush1.msra.mxu0 0.0
        %1666 = vmatprep.subr.mxu0 0.0
        %1667 = vmatpush1.msra.mxu0 0.0
        %1668 = vmatprep.subr.mxu0 0.0
        %1669 = vmatpush1.msra.mxu0 0.0
        %1670 = vmatprep.subr.mxu0 0.0
        %1671 = vmatpush1.msra.mxu0 0.0
        %1672 = vmatprep.subr.mxu0 0.0
        %1673 = vmatpush1.msra.mxu0 0.0
        %1674 = vmatprep.subr.mxu0 0.0
        %1675 = vmatpush1.msra.mxu0 0.0
        %1676 = vmatprep.subr.mxu0 0.0
        %1677 = vmatpush1.msra.mxu0 0.0
        %1678 = vmatprep.subr.mxu0 0.0
        %1679 = vmatpush1.msra.mxu0 %v295
        %1680 = vmatprep.subr.mxu0 0.0
        %1681 = vmatpush1.msra.mxu0 %v294
        %1682 = vmatprep.subr.mxu0 0.0
        %1683 = vmatpush2.msra.mxu0 0.0
        %1684 = vmatprep.subr.mxu0 0.0
        %1685 = vmatpush2.msra.mxu0 0.0
        %1686 = vmatprep.subr.mxu0 0.0
        %1687 = vmatpush2.msra.mxu0 0.0
        %1688 = vmatprep.subr.mxu0 0.0
        %1689 = vmatpush2.msra.mxu0 0.0
        %1690 = vmatprep.subr.mxu0 0.0
        %1691 = vmatpush2.msra.mxu0 0.0
        %1692 = vmatprep.subr.mxu0 0.0
        %1693 = vmatpush2.msra.mxu0 0.0
        %1694 = vmatprep.subr.mxu0 0.0
        %1695 = vmatpush2.msra.mxu0 0.0
        %1696 = vmatprep.subr.mxu0 0.0
        %1697 = vmatpush2.msra.mxu0 0.0
        %1698 = vmatprep.subr.mxu0 0.0
        %1699 = vmatpush2.msra.mxu0 0.0
        %1700 = vmatprep.subr.mxu0 0.0
        %1701 = vmatpush2.msra.mxu0 0.0
        %1702 = vmatprep.subr.mxu0 0.0
        %1703 = vmatpush2.msra.mxu0 0.0
        %1704 = vmatprep.subr.mxu0 0.0
        %1705 = vmatpush2.msra.mxu0 0.0
        %1706 = vmatprep.subr.mxu0 0.0
        %1707 = vmatpush2.msra.mxu0 0.0
        %1708 = vmatprep.subr.mxu0 0.0
        %1709 = vmatpush2.msra.mxu0 0.0
        %1710 = vmatprep.subr.mxu0 0.0
        %1711 = vmatpush2.msra.mxu0 0.0
        %1712 = vmatprep.subr.mxu0 0.0
        %1713 = vmatpush2.msra.mxu0 0.0
        %1714 = vmatprep.mubr.f32.mxu0 0.0
        %1715 = vmatmul.mubr.f32.gmra.mxu0 %v1639
        %v1716 = vpop.f32.mrf.mxu0
        %v1717 = vadd.f32 0.0, %v1716
        %v1718 = vpop.f32.mrf.mxu0
        %1719 = vmatprep.mubr.f32.mxu0 0.0
        %1720 = vmatmul.mubr.f32.gmra.mxu0 %v1642
        %v1721 = vpop.f32.mrf.mxu0
        %v1722 = vadd.f32 0.0, %v1721
        %v1723 = vpop.f32.mrf.mxu0
        %1724 = vmatprep.mubr.f32.mxu0 0.0
        %1725 = vmatmul.mubr.f32.gmra.mxu0 %v1645
        %v1726 = vpop.f32.mrf.mxu0
        %v1727 = vadd.f32 0.0, %v1726
        %v1728 = vpop.f32.mrf.mxu0
        %1729 = vmatprep.mubr.f32.mxu0 0.0
        %1730 = vmatmul.mubr.f32.gmra.mxu0 %v1648
        %v1731 = vpop.f32.mrf.mxu0
        %v1732 = vadd.f32 0.0, %v1731
        %v1733 = vpop.f32.mrf.mxu0
        %1734 = vdwg.mxu0
        %s1735 = sld [smem:[#allocation7 + $0x6]]
        %v1736 = vstv %s1735
        %v1737 = vmul.f32 %v1736, %v1717
        %v1738 = vmul.f32 %v1736, %v1722
        %v1739 = vmul.f32 %v1736, %v1727
        %v1740 = vmul.f32 %v1736, %v1732
        %v1741 = vadd.f32 %v1467, %v1737
        %v1742 = vadd.f32 %v1468, %v1738
        %v1743 = vadd.f32 %v1469, %v1739
        %v1744 = vadd.f32 %v1470, %v1740
        %s1745 = sld [smem:[#allocation7 + $0x2a]]
        %v1746 = vstv %s1745
        %v1747 = vmul.f32 %v1746, %v1717
        %v1748 = vmul.f32 %v1746, %v1722
        %v1749 = vmul.f32 %v1746, %v1727
        %v1750 = vmul.f32 %v1746, %v1732
        %v1751 = vadd.f32 %v1477, %v1747
        %v1752 = vadd.f32 %v1478, %v1748
        %v1753 = vadd.f32 %v1479, %v1749
        %v1754 = vadd.f32 %v1480, %v1750
        %s1755 = sld [smem:[#allocation7 + $0x4e]]
        %v1756 = vstv %s1755
        %v1757 = vmul.f32 %v1756, %v1717
        %v1758 = vmul.f32 %v1756, %v1722
        %v1759 = vmul.f32 %v1756, %v1727
        %v1760 = vmul.f32 %v1756, %v1732
        %v1761 = vadd.f32 %v1487, %v1757
        %v1762 = vadd.f32 %v1488, %v1758
        %v1763 = vadd.f32 %v1489, %v1759
        %v1764 = vadd.f32 %v1490, %v1760
        %s1765 = sld [smem:[#allocation7 + $0x72]]
        %v1766 = vstv %s1765
        %v1767 = vmul.f32 %v1766, %v1717
        %v1768 = vmul.f32 %v1766, %v1722
        %v1769 = vmul.f32 %v1766, %v1727
        %v1770 = vmul.f32 %v1766, %v1732
        %v1771 = vadd.f32 %v1497, %v1767
        %v1772 = vadd.f32 %v1498, %v1768
        %v1773 = vadd.f32 %v1499, %v1769
        %v1774 = vadd.f32 %v1500, %v1770
        %s1775 = sld [smem:[#allocation7 + $0x96]]
        %v1776 = vstv %s1775
        %v1777 = vmul.f32 %v1776, %v1717
        %v1778 = vmul.f32 %v1776, %v1722
        %v1779 = vmul.f32 %v1776, %v1727
        %v1780 = vmul.f32 %v1776, %v1732
        %v1781 = vadd.f32 %v1507, %v1777
        %v1782 = vadd.f32 %v1508, %v1778
        %v1783 = vadd.f32 %v1509, %v1779
        %v1784 = vadd.f32 %v1510, %v1780
        %s1785 = sld [smem:[#allocation7 + $0xba]]
        %v1786 = vstv %s1785
        %v1787 = vmul.f32 %v1786, %v1717
        %v1788 = vmul.f32 %v1786, %v1722
        %v1789 = vmul.f32 %v1786, %v1727
        %v1790 = vmul.f32 %v1786, %v1732
        %v1791 = vadd.f32 %v1517, %v1787
        %v1792 = vadd.f32 %v1518, %v1788
        %v1793 = vadd.f32 %v1519, %v1789
        %v1794 = vadd.f32 %v1520, %v1790
        %s1795 = sld [smem:[#allocation7 + $0xde]]
        %v1796 = vstv %s1795
        %v1797 = vmul.f32 %v1796, %v1717
        %v1798 = vmul.f32 %v1796, %v1722
        %v1799 = vmul.f32 %v1796, %v1727
        %v1800 = vmul.f32 %v1796, %v1732
        %v1801 = vadd.f32 %v1527, %v1797
        %v1802 = vadd.f32 %v1528, %v1798
        %v1803 = vadd.f32 %v1529, %v1799
        %v1804 = vadd.f32 %v1530, %v1800
        %s1805 = sld [smem:[#allocation7 + $0x102]]
        %v1806 = vstv %s1805
        %v1807 = vmul.f32 %v1806, %v1717
        %v1808 = vmul.f32 %v1806, %v1722
        %v1809 = vmul.f32 %v1806, %v1727
        %v1810 = vmul.f32 %v1806, %v1732
        %v1811 = vadd.f32 %v1537, %v1807
        %v1812 = vadd.f32 %v1538, %v1808
        %v1813 = vadd.f32 %v1539, %v1809
        %v1814 = vadd.f32 %v1540, %v1810
        %1815 = vmatprep.subr.mxu0 0.0
        %1816 = vmatpush1.msra.mxu0 0.0
        %1817 = vmatprep.subr.mxu0 0.0
        %1818 = vmatpush1.msra.mxu0 0.0
        %1819 = vmatprep.subr.mxu0 0.0
        %1820 = vmatpush1.msra.mxu0 0.0
        %1821 = vmatprep.subr.mxu0 0.0
        %1822 = vmatpush1.msra.mxu0 0.0
        %1823 = vmatprep.subr.mxu0 0.0
        %1824 = vmatpush1.msra.mxu0 0.0
        %1825 = vmatprep.subr.mxu0 0.0
        %1826 = vmatpush1.msra.mxu0 0.0
        %1827 = vmatprep.subr.mxu0 0.0
        %1828 = vmatpush1.msra.mxu0 0.0
        %1829 = vmatprep.subr.mxu0 0.0
        %1830 = vmatpush1.msra.mxu0 0.0
        %1831 = vmatprep.subr.mxu0 0.0
        %1832 = vmatpush1.msra.mxu0 0.0
        %1833 = vmatprep.subr.mxu0 0.0
        %1834 = vmatpush1.msra.mxu0 0.0
        %1835 = vmatprep.subr.mxu0 0.0
        %1836 = vmatpush1.msra.mxu0 0.0
        %1837 = vmatprep.subr.mxu0 0.0
        %1838 = vmatpush1.msra.mxu0 0.0
        %1839 = vmatprep.subr.mxu0 0.0
        %1840 = vmatpush1.msra.mxu0 0.0
        %1841 = vmatprep.subr.mxu0 0.0
        %1842 = vmatpush1.msra.mxu0 0.0
        %1843 = vmatprep.subr.mxu0 0.0
        %1844 = vmatpush1.msra.mxu0 %v303
        %1845 = vmatprep.subr.mxu0 0.0
        %1846 = vmatpush1.msra.mxu0 %v302
        %1847 = vmatprep.subr.mxu0 0.0
        %1848 = vmatpush2.msra.mxu0 0.0
        %1849 = vmatprep.subr.mxu0 0.0
        %1850 = vmatpush2.msra.mxu0 0.0
        %1851 = vmatprep.subr.mxu0 0.0
        %1852 = vmatpush2.msra.mxu0 0.0
        %1853 = vmatprep.subr.mxu0 0.0
        %1854 = vmatpush2.msra.mxu0 0.0
        %1855 = vmatprep.subr.mxu0 0.0
        %1856 = vmatpush2.msra.mxu0 0.0
        %1857 = vmatprep.subr.mxu0 0.0
        %1858 = vmatpush2.msra.mxu0 0.0
        %1859 = vmatprep.subr.mxu0 0.0
        %1860 = vmatpush2.msra.mxu0 0.0
        %1861 = vmatprep.subr.mxu0 0.0
        %1862 = vmatpush2.msra.mxu0 0.0
        %1863 = vmatprep.subr.mxu0 0.0
        %1864 = vmatpush2.msra.mxu0 0.0
        %1865 = vmatprep.subr.mxu0 0.0
        %1866 = vmatpush2.msra.mxu0 0.0
        %1867 = vmatprep.subr.mxu0 0.0
        %1868 = vmatpush2.msra.mxu0 0.0
        %1869 = vmatprep.subr.mxu0 0.0
        %1870 = vmatpush2.msra.mxu0 0.0
        %1871 = vmatprep.subr.mxu0 0.0
        %1872 = vmatpush2.msra.mxu0 0.0
        %1873 = vmatprep.subr.mxu0 0.0
        %1874 = vmatpush2.msra.mxu0 0.0
        %1875 = vmatprep.subr.mxu0 0.0
        %1876 = vmatpush2.msra.mxu0 0.0
        %1877 = vmatprep.subr.mxu0 0.0
        %1878 = vmatpush2.msra.mxu0 0.0
        %1879 = vmatprep.mubr.f32.mxu0 0.0
        %1880 = vmatmul.mubr.f32.gmra.mxu0 %v1639
        %v1881 = vpop.f32.mrf.mxu0
        %v1882 = vadd.f32 0.0, %v1881
        %v1883 = vpop.f32.mrf.mxu0
        %1884 = vmatprep.mubr.f32.mxu0 0.0
        %1885 = vmatmul.mubr.f32.gmra.mxu0 %v1642
        %v1886 = vpop.f32.mrf.mxu0
        %v1887 = vadd.f32 0.0, %v1886
        %v1888 = vpop.f32.mrf.mxu0
        %1889 = vmatprep.mubr.f32.mxu0 0.0
        %1890 = vmatmul.mubr.f32.gmra.mxu0 %v1645
        %v1891 = vpop.f32.mrf.mxu0
        %v1892 = vadd.f32 0.0, %v1891
        %v1893 = vpop.f32.mrf.mxu0
        %1894 = vmatprep.mubr.f32.mxu0 0.0
        %1895 = vmatmul.mubr.f32.gmra.mxu0 %v1648
        %v1896 = vpop.f32.mrf.mxu0
        %v1897 = vadd.f32 0.0, %v1896
        %v1898 = vpop.f32.mrf.mxu0
        %1899 = vdwg.mxu0
        %s1900 = sld [smem:[#allocation7 + $0x7]]
        %v1901 = vstv %s1900
        %v1902 = vmul.f32 %v1901, %v1882
        %v1903 = vmul.f32 %v1901, %v1887
        %v1904 = vmul.f32 %v1901, %v1892
        %v1905 = vmul.f32 %v1901, %v1897
        %v1906 = vadd.f32 %v1741, %v1902
        %v1907 = vadd.f32 %v1742, %v1903
        %v1908 = vadd.f32 %v1743, %v1904
        %v1909 = vadd.f32 %v1744, %v1905
        %s1910 = sld [smem:[#allocation7 + $0x2b]]
        %v1911 = vstv %s1910
        %v1912 = vmul.f32 %v1911, %v1882
        %v1913 = vmul.f32 %v1911, %v1887
        %v1914 = vmul.f32 %v1911, %v1892
        %v1915 = vmul.f32 %v1911, %v1897
        %v1916 = vadd.f32 %v1751, %v1912
        %v1917 = vadd.f32 %v1752, %v1913
        %v1918 = vadd.f32 %v1753, %v1914
        %v1919 = vadd.f32 %v1754, %v1915
        %s1920 = sld [smem:[#allocation7 + $0x4f]]
        %v1921 = vstv %s1920
        %v1922 = vmul.f32 %v1921, %v1882
        %v1923 = vmul.f32 %v1921, %v1887
        %v1924 = vmul.f32 %v1921, %v1892
        %v1925 = vmul.f32 %v1921, %v1897
        %v1926 = vadd.f32 %v1761, %v1922
        %v1927 = vadd.f32 %v1762, %v1923
        %v1928 = vadd.f32 %v1763, %v1924
        %v1929 = vadd.f32 %v1764, %v1925
        %s1930 = sld [smem:[#allocation7 + $0x73]]
        %v1931 = vstv %s1930
        %v1932 = vmul.f32 %v1931, %v1882
        %v1933 = vmul.f32 %v1931, %v1887
        %v1934 = vmul.f32 %v1931, %v1892
        %v1935 = vmul.f32 %v1931, %v1897
        %v1936 = vadd.f32 %v1771, %v1932
        %v1937 = vadd.f32 %v1772, %v1933
        %v1938 = vadd.f32 %v1773, %v1934
        %v1939 = vadd.f32 %v1774, %v1935
        %s1940 = sld [smem:[#allocation7 + $0x97]]
        %v1941 = vstv %s1940
        %v1942 = vmul.f32 %v1941, %v1882
        %v1943 = vmul.f32 %v1941, %v1887
        %v1944 = vmul.f32 %v1941, %v1892
        %v1945 = vmul.f32 %v1941, %v1897
        %v1946 = vadd.f32 %v1781, %v1942
        %v1947 = vadd.f32 %v1782, %v1943
        %v1948 = vadd.f32 %v1783, %v1944
        %v1949 = vadd.f32 %v1784, %v1945
        %s1950 = sld [smem:[#allocation7 + $0xbb]]
        %v1951 = vstv %s1950
        %v1952 = vmul.f32 %v1951, %v1882
        %v1953 = vmul.f32 %v1951, %v1887
        %v1954 = vmul.f32 %v1951, %v1892
        %v1955 = vmul.f32 %v1951, %v1897
        %v1956 = vadd.f32 %v1791, %v1952
        %v1957 = vadd.f32 %v1792, %v1953
        %v1958 = vadd.f32 %v1793, %v1954
        %v1959 = vadd.f32 %v1794, %v1955
        %s1960 = sld [smem:[#allocation7 + $0xdf]]
        %v1961 = vstv %s1960
        %v1962 = vmul.f32 %v1961, %v1882
        %v1963 = vmul.f32 %v1961, %v1887
        %v1964 = vmul.f32 %v1961, %v1892
        %v1965 = vmul.f32 %v1961, %v1897
        %v1966 = vadd.f32 %v1801, %v1962
        %v1967 = vadd.f32 %v1802, %v1963
        %v1968 = vadd.f32 %v1803, %v1964
        %v1969 = vadd.f32 %v1804, %v1965
        %s1970 = sld [smem:[#allocation7 + $0x103]]
        %v1971 = vstv %s1970
        %v1972 = vmul.f32 %v1971, %v1882
        %v1973 = vmul.f32 %v1971, %v1887
        %v1974 = vmul.f32 %v1971, %v1892
        %v1975 = vmul.f32 %v1971, %v1897
        %v1976 = vadd.f32 %v1811, %v1972
        %v1977 = vadd.f32 %v1812, %v1973
        %v1978 = vadd.f32 %v1813, %v1974
        %v1979 = vadd.f32 %v1814, %v1975
        %1980 = vmatprep.subr.mxu0 0.0
        %1981 = vmatpush1.msra.mxu0 0.0
        %1982 = vmatprep.subr.mxu0 0.0
        %1983 = vmatpush1.msra.mxu0 0.0
        %1984 = vmatprep.subr.mxu0 0.0
        %1985 = vmatpush1.msra.mxu0 0.0
        %1986 = vmatprep.subr.mxu0 0.0
        %1987 = vmatpush1.msra.mxu0 0.0
        %1988 = vmatprep.subr.mxu0 0.0
        %1989 = vmatpush1.msra.mxu0 0.0
        %1990 = vmatprep.subr.mxu0 0.0
        %1991 = vmatpush1.msra.mxu0 0.0
        %1992 = vmatprep.subr.mxu0 0.0
        %1993 = vmatpush1.msra.mxu0 0.0
        %1994 = vmatprep.subr.mxu0 0.0
        %1995 = vmatpush1.msra.mxu0 0.0
        %1996 = vmatprep.subr.mxu0 0.0
        %1997 = vmatpush1.msra.mxu0 0.0
        %1998 = vmatprep.subr.mxu0 0.0
        %1999 = vmatpush1.msra.mxu0 0.0
        %2000 = vmatprep.subr.mxu0 0.0
        %2001 = vmatpush1.msra.mxu0 0.0
        %2002 = vmatprep.subr.mxu0 0.0
        %2003 = vmatpush1.msra.mxu0 0.0
        %2004 = vmatprep.subr.mxu0 0.0
        %2005 = vmatpush1.msra.mxu0 0.0
        %2006 = vmatprep.subr.mxu0 0.0
        %2007 = vmatpush1.msra.mxu0 0.0
        %2008 = vmatprep.subr.mxu0 0.0
        %2009 = vmatpush1.msra.mxu0 %v313
        %2010 = vmatprep.subr.mxu0 0.0
        %2011 = vmatpush1.msra.mxu0 %v312
        %2012 = vmatprep.subr.mxu0 0.0
        %2013 = vmatpush2.msra.mxu0 0.0
        %2014 = vmatprep.subr.mxu0 0.0
        %2015 = vmatpush2.msra.mxu0 0.0
        %2016 = vmatprep.subr.mxu0 0.0
        %2017 = vmatpush2.msra.mxu0 0.0
        %2018 = vmatprep.subr.mxu0 0.0
        %2019 = vmatpush2.msra.mxu0 0.0
        %2020 = vmatprep.subr.mxu0 0.0
        %2021 = vmatpush2.msra.mxu0 0.0
        %2022 = vmatprep.subr.mxu0 0.0
        %2023 = vmatpush2.msra.mxu0 0.0
        %2024 = vmatprep.subr.mxu0 0.0
        %2025 = vmatpush2.msra.mxu0 0.0
        %2026 = vmatprep.subr.mxu0 0.0
        %2027 = vmatpush2.msra.mxu0 0.0
        %2028 = vmatprep.subr.mxu0 0.0
        %2029 = vmatpush2.msra.mxu0 0.0
        %2030 = vmatprep.subr.mxu0 0.0
        %2031 = vmatpush2.msra.mxu0 0.0
        %2032 = vmatprep.subr.mxu0 0.0
        %2033 = vmatpush2.msra.mxu0 0.0
        %2034 = vmatprep.subr.mxu0 0.0
        %2035 = vmatpush2.msra.mxu0 0.0
        %2036 = vmatprep.subr.mxu0 0.0
        %2037 = vmatpush2.msra.mxu0 0.0
        %2038 = vmatprep.subr.mxu0 0.0
        %2039 = vmatpush2.msra.mxu0 0.0
        %2040 = vmatprep.subr.mxu0 0.0
        %2041 = vmatpush2.msra.mxu0 0.0
        %2042 = vmatprep.subr.mxu0 0.0
        %2043 = vmatpush2.msra.mxu0 0.0
        %2044 = vmatprep.mubr.f32.mxu0 0.0
        %2045 = vmatmul.mubr.f32.gmra.mxu0 %v1639
        %v2046 = vpop.f32.mrf.mxu0
        %v2047 = vadd.f32 0.0, %v2046
        %v2048 = vpop.f32.mrf.mxu0
        %2049 = vmatprep.mubr.f32.mxu0 0.0
        %2050 = vmatmul.mubr.f32.gmra.mxu0 %v1642
        %v2051 = vpop.f32.mrf.mxu0
        %v2052 = vadd.f32 0.0, %v2051
        %v2053 = vpop.f32.mrf.mxu0
        %2054 = vmatprep.mubr.f32.mxu0 0.0
        %2055 = vmatmul.mubr.f32.gmra.mxu0 %v1645
        %v2056 = vpop.f32.mrf.mxu0
        %v2057 = vadd.f32 0.0, %v2056
        %v2058 = vpop.f32.mrf.mxu0
        %2059 = vmatprep.mubr.f32.mxu0 0.0
        %2060 = vmatmul.mubr.f32.gmra.mxu0 %v1648
        %v2061 = vpop.f32.mrf.mxu0
        %v2062 = vadd.f32 0.0, %v2061
        %v2063 = vpop.f32.mrf.mxu0
        %2064 = vdwg.mxu0
        %s2065 = sld [smem:[#allocation7 + $0x8]]
        %v2066 = vstv %s2065
        %v2067 = vmul.f32 %v2066, %v2047
        %v2068 = vmul.f32 %v2066, %v2052
        %v2069 = vmul.f32 %v2066, %v2057
        %v2070 = vmul.f32 %v2066, %v2062
        %v2071 = vadd.f32 %v1906, %v2067
        %v2072 = vadd.f32 %v1907, %v2068
        %v2073 = vadd.f32 %v1908, %v2069
        %v2074 = vadd.f32 %v1909, %v2070
        %s2075 = sld [smem:[#allocation7 + $0x2c]]
        %v2076 = vstv %s2075
        %v2077 = vmul.f32 %v2076, %v2047
        %v2078 = vmul.f32 %v2076, %v2052
        %v2079 = vmul.f32 %v2076, %v2057
        %v2080 = vmul.f32 %v2076, %v2062
        %v2081 = vadd.f32 %v1916, %v2077
        %v2082 = vadd.f32 %v1917, %v2078
        %v2083 = vadd.f32 %v1918, %v2079
        %v2084 = vadd.f32 %v1919, %v2080
        %s2085 = sld [smem:[#allocation7 + $0x50]]
        %v2086 = vstv %s2085
        %v2087 = vmul.f32 %v2086, %v2047
        %v2088 = vmul.f32 %v2086, %v2052
        %v2089 = vmul.f32 %v2086, %v2057
        %v2090 = vmul.f32 %v2086, %v2062
        %v2091 = vadd.f32 %v1926, %v2087
        %v2092 = vadd.f32 %v1927, %v2088
        %v2093 = vadd.f32 %v1928, %v2089
        %v2094 = vadd.f32 %v1929, %v2090
        %s2095 = sld [smem:[#allocation7 + $0x74]]
        %v2096 = vstv %s2095
        %v2097 = vmul.f32 %v2096, %v2047
        %v2098 = vmul.f32 %v2096, %v2052
        %v2099 = vmul.f32 %v2096, %v2057
        %v2100 = vmul.f32 %v2096, %v2062
        %v2101 = vadd.f32 %v1936, %v2097
        %v2102 = vadd.f32 %v1937, %v2098
        %v2103 = vadd.f32 %v1938, %v2099
        %v2104 = vadd.f32 %v1939, %v2100
        %s2105 = sld [smem:[#allocation7 + $0x98]]
        %v2106 = vstv %s2105
        %v2107 = vmul.f32 %v2106, %v2047
        %v2108 = vmul.f32 %v2106, %v2052
        %v2109 = vmul.f32 %v2106, %v2057
        %v2110 = vmul.f32 %v2106, %v2062
        %v2111 = vadd.f32 %v1946, %v2107
        %v2112 = vadd.f32 %v1947, %v2108
        %v2113 = vadd.f32 %v1948, %v2109
        %v2114 = vadd.f32 %v1949, %v2110
        %s2115 = sld [smem:[#allocation7 + $0xbc]]
        %v2116 = vstv %s2115
        %v2117 = vmul.f32 %v2116, %v2047
        %v2118 = vmul.f32 %v2116, %v2052
        %v2119 = vmul.f32 %v2116, %v2057
        %v2120 = vmul.f32 %v2116, %v2062
        %v2121 = vadd.f32 %v1956, %v2117
        %v2122 = vadd.f32 %v1957, %v2118
        %v2123 = vadd.f32 %v1958, %v2119
        %v2124 = vadd.f32 %v1959, %v2120
        %s2125 = sld [smem:[#allocation7 + $0xe0]]
        %v2126 = vstv %s2125
        %v2127 = vmul.f32 %v2126, %v2047
        %v2128 = vmul.f32 %v2126, %v2052
        %v2129 = vmul.f32 %v2126, %v2057
        %v2130 = vmul.f32 %v2126, %v2062
        %v2131 = vadd.f32 %v1966, %v2127
        %v2132 = vadd.f32 %v1967, %v2128
        %v2133 = vadd.f32 %v1968, %v2129
        %v2134 = vadd.f32 %v1969, %v2130
        %s2135 = sld [smem:[#allocation7 + $0x104]]
        %v2136 = vstv %s2135
        %v2137 = vmul.f32 %v2136, %v2047
        %v2138 = vmul.f32 %v2136, %v2052
        %v2139 = vmul.f32 %v2136, %v2057
        %v2140 = vmul.f32 %v2136, %v2062
        %v2141 = vadd.f32 %v1976, %v2137
        %v2142 = vadd.f32 %v1977, %v2138
        %v2143 = vadd.f32 %v1978, %v2139
        %v2144 = vadd.f32 %v1979, %v2140
        %s2145 = scalar_lea.vmem %s182, 16 [#allocation2]
        %v2146 = vld [vmem:[%s2145] sm:$0xff]
        %v2147 = vld [vmem:[%s2145 + $0x8] sm:$0xff]
        %2148 = vmatprep.subr.mxu0 0.0
        %2149 = vmatpush1.msra.mxu0 0.0
        %2150 = vmatprep.subr.mxu0 0.0
        %2151 = vmatpush1.msra.mxu0 0.0
        %2152 = vmatprep.subr.mxu0 0.0
        %2153 = vmatpush1.msra.mxu0 0.0
        %2154 = vmatprep.subr.mxu0 0.0
        %2155 = vmatpush1.msra.mxu0 0.0
        %2156 = vmatprep.subr.mxu0 0.0
        %2157 = vmatpush1.msra.mxu0 0.0
        %2158 = vmatprep.subr.mxu0 0.0
        %2159 = vmatpush1.msra.mxu0 0.0
        %2160 = vmatprep.subr.mxu0 0.0
        %2161 = vmatpush1.msra.mxu0 0.0
        %2162 = vmatprep.subr.mxu0 0.0
        %2163 = vmatpush1.msra.mxu0 0.0
        %2164 = vmatprep.subr.mxu0 0.0
        %2165 = vmatpush1.msra.mxu0 0.0
        %2166 = vmatprep.subr.mxu0 0.0
        %2167 = vmatpush1.msra.mxu0 0.0
        %2168 = vmatprep.subr.mxu0 0.0
        %2169 = vmatpush1.msra.mxu0 0.0
        %2170 = vmatprep.subr.mxu0 0.0
        %2171 = vmatpush1.msra.mxu0 0.0
        %2172 = vmatprep.subr.mxu0 0.0
        %2173 = vmatpush1.msra.mxu0 0.0
        %2174 = vmatprep.subr.mxu0 0.0
        %2175 = vmatpush1.msra.mxu0 0.0
        %2176 = vmatprep.subr.mxu0 0.0
        %2177 = vmatpush1.msra.mxu0 %v2147
        %2178 = vmatprep.subr.mxu0 0.0
        %2179 = vmatpush1.msra.mxu0 %v2146
        %2180 = vmatprep.subr.mxu0 0.0
        %2181 = vmatpush2.msra.mxu0 0.0
        %2182 = vmatprep.subr.mxu0 0.0
        %2183 = vmatpush2.msra.mxu0 0.0
        %2184 = vmatprep.subr.mxu0 0.0
        %2185 = vmatpush2.msra.mxu0 0.0
        %2186 = vmatprep.subr.mxu0 0.0
        %2187 = vmatpush2.msra.mxu0 0.0
        %2188 = vmatprep.subr.mxu0 0.0
        %2189 = vmatpush2.msra.mxu0 0.0
        %2190 = vmatprep.subr.mxu0 0.0
        %2191 = vmatpush2.msra.mxu0 0.0
        %2192 = vmatprep.subr.mxu0 0.0
        %2193 = vmatpush2.msra.mxu0 0.0
        %2194 = vmatprep.subr.mxu0 0.0
        %2195 = vmatpush2.msra.mxu0 0.0
        %2196 = vmatprep.subr.mxu0 0.0
        %2197 = vmatpush2.msra.mxu0 0.0
        %2198 = vmatprep.subr.mxu0 0.0
        %2199 = vmatpush2.msra.mxu0 0.0
        %2200 = vmatprep.subr.mxu0 0.0
        %2201 = vmatpush2.msra.mxu0 0.0
        %2202 = vmatprep.subr.mxu0 0.0
        %2203 = vmatpush2.msra.mxu0 0.0
        %2204 = vmatprep.subr.mxu0 0.0
        %2205 = vmatpush2.msra.mxu0 0.0
        %2206 = vmatprep.subr.mxu0 0.0
        %2207 = vmatpush2.msra.mxu0 0.0
        %2208 = vmatprep.subr.mxu0 0.0
        %2209 = vmatpush2.msra.mxu0 0.0
        %2210 = vmatprep.subr.mxu0 0.0
        %2211 = vmatpush2.msra.mxu0 0.0
        %2212 = vmatprep.mubr.f32.mxu0 0.0
        %2213 = vmatmul.mubr.f32.gmra.mxu0 %v334
        %v2214 = vpop.f32.mrf.mxu0
        %v2215 = vadd.f32 0.0, %v2214
        %v2216 = vpop.f32.mrf.mxu0
        %2217 = vmatprep.mubr.f32.mxu0 0.0
        %2218 = vmatmul.mubr.f32.gmra.mxu0 %v337
        %v2219 = vpop.f32.mrf.mxu0
        %v2220 = vadd.f32 0.0, %v2219
        %v2221 = vpop.f32.mrf.mxu0
        %2222 = vmatprep.mubr.f32.mxu0 0.0
        %2223 = vmatmul.mubr.f32.gmra.mxu0 %v340
        %v2224 = vpop.f32.mrf.mxu0
        %v2225 = vadd.f32 0.0, %v2224
        %v2226 = vpop.f32.mrf.mxu0
        %2227 = vmatprep.mubr.f32.mxu0 0.0
        %2228 = vmatmul.mubr.f32.gmra.mxu0 %v343
        %v2229 = vpop.f32.mrf.mxu0
        %v2230 = vadd.f32 0.0, %v2229
        %v2231 = vpop.f32.mrf.mxu0
        %2232 = vdwg.mxu0
        %v2234 = vsel %vm332, %v2215, 0
        %v2237 = vsel %vm332, %v2220, 0
        %v2240 = vsel %vm332, %v2225, 0
        %v2243 = vsel %vm332, %v2230, 0
        %2245 = vmatprep.subr.mxu0 0.0
        %2246 = vmatpush1.msra.mxu0 0.0
        %2247 = vmatprep.subr.mxu0 0.0
        %2248 = vmatpush1.msra.mxu0 0.0
        %2249 = vmatprep.subr.mxu0 0.0
        %2250 = vmatpush1.msra.mxu0 0.0
        %2251 = vmatprep.subr.mxu0 0.0
        %2252 = vmatpush1.msra.mxu0 0.0
        %2253 = vmatprep.subr.mxu0 0.0
        %2254 = vmatpush1.msra.mxu0 0.0
        %2255 = vmatprep.subr.mxu0 0.0
        %2256 = vmatpush1.msra.mxu0 0.0
        %2257 = vmatprep.subr.mxu0 0.0
        %2258 = vmatpush1.msra.mxu0 0.0
        %2259 = vmatprep.subr.mxu0 0.0
        %2260 = vmatpush1.msra.mxu0 0.0
        %2261 = vmatprep.subr.mxu0 0.0
        %2262 = vmatpush1.msra.mxu0 0.0
        %2263 = vmatprep.subr.mxu0 0.0
        %2264 = vmatpush1.msra.mxu0 0.0
        %2265 = vmatprep.subr.mxu0 0.0
        %2266 = vmatpush1.msra.mxu0 0.0
        %2267 = vmatprep.subr.mxu0 0.0
        %2268 = vmatpush1.msra.mxu0 0.0
        %2269 = vmatprep.subr.mxu0 0.0
        %2270 = vmatpush1.msra.mxu0 0.0
        %2271 = vmatprep.subr.mxu0 0.0
        %2272 = vmatpush1.msra.mxu0 0.0
        %2273 = vmatprep.subr.mxu0 0.0
        %2274 = vmatpush1.msra.mxu0 %v295
        %2275 = vmatprep.subr.mxu0 0.0
        %2276 = vmatpush1.msra.mxu0 %v294
        %2277 = vmatprep.subr.mxu0 0.0
        %2278 = vmatpush2.msra.mxu0 0.0
        %2279 = vmatprep.subr.mxu0 0.0
        %2280 = vmatpush2.msra.mxu0 0.0
        %2281 = vmatprep.subr.mxu0 0.0
        %2282 = vmatpush2.msra.mxu0 0.0
        %2283 = vmatprep.subr.mxu0 0.0
        %2284 = vmatpush2.msra.mxu0 0.0
        %2285 = vmatprep.subr.mxu0 0.0
        %2286 = vmatpush2.msra.mxu0 0.0
        %2287 = vmatprep.subr.mxu0 0.0
        %2288 = vmatpush2.msra.mxu0 0.0
        %2289 = vmatprep.subr.mxu0 0.0
        %2290 = vmatpush2.msra.mxu0 0.0
        %2291 = vmatprep.subr.mxu0 0.0
        %2292 = vmatpush2.msra.mxu0 0.0
        %2293 = vmatprep.subr.mxu0 0.0
        %2294 = vmatpush2.msra.mxu0 0.0
        %2295 = vmatprep.subr.mxu0 0.0
        %2296 = vmatpush2.msra.mxu0 0.0
        %2297 = vmatprep.subr.mxu0 0.0
        %2298 = vmatpush2.msra.mxu0 0.0
        %2299 = vmatprep.subr.mxu0 0.0
        %2300 = vmatpush2.msra.mxu0 0.0
        %2301 = vmatprep.subr.mxu0 0.0
        %2302 = vmatpush2.msra.mxu0 0.0
        %2303 = vmatprep.subr.mxu0 0.0
        %2304 = vmatpush2.msra.mxu0 0.0
        %2305 = vmatprep.subr.mxu0 0.0
        %2306 = vmatpush2.msra.mxu0 0.0
        %2307 = vmatprep.subr.mxu0 0.0
        %2308 = vmatpush2.msra.mxu0 0.0
        %2309 = vmatprep.mubr.f32.mxu0 0.0
        %2310 = vmatmul.mubr.f32.gmra.mxu0 %v2234
        %v2311 = vpop.f32.mrf.mxu0
        %v2312 = vadd.f32 0.0, %v2311
        %v2313 = vpop.f32.mrf.mxu0
        %2314 = vmatprep.mubr.f32.mxu0 0.0
        %2315 = vmatmul.mubr.f32.gmra.mxu0 %v2237
        %v2316 = vpop.f32.mrf.mxu0
        %v2317 = vadd.f32 0.0, %v2316
        %v2318 = vpop.f32.mrf.mxu0
        %2319 = vmatprep.mubr.f32.mxu0 0.0
        %2320 = vmatmul.mubr.f32.gmra.mxu0 %v2240
        %v2321 = vpop.f32.mrf.mxu0
        %v2322 = vadd.f32 0.0, %v2321
        %v2323 = vpop.f32.mrf.mxu0
        %2324 = vmatprep.mubr.f32.mxu0 0.0
        %2325 = vmatmul.mubr.f32.gmra.mxu0 %v2243
        %v2326 = vpop.f32.mrf.mxu0
        %v2327 = vadd.f32 0.0, %v2326
        %v2328 = vpop.f32.mrf.mxu0
        %2329 = vdwg.mxu0
        %s2330 = sld [smem:[#allocation7 + $0x9]]
        %v2331 = vstv %s2330
        %v2332 = vmul.f32 %v2331, %v2312
        %v2333 = vmul.f32 %v2331, %v2317
        %v2334 = vmul.f32 %v2331, %v2322
        %v2335 = vmul.f32 %v2331, %v2327
        %v2336 = vadd.f32 %v2071, %v2332
        %v2337 = vadd.f32 %v2072, %v2333
        %v2338 = vadd.f32 %v2073, %v2334
        %v2339 = vadd.f32 %v2074, %v2335
        %s2340 = sld [smem:[#allocation7 + $0x2d]]
        %v2341 = vstv %s2340
        %v2342 = vmul.f32 %v2341, %v2312
        %v2343 = vmul.f32 %v2341, %v2317
        %v2344 = vmul.f32 %v2341, %v2322
        %v2345 = vmul.f32 %v2341, %v2327
        %v2346 = vadd.f32 %v2081, %v2342
        %v2347 = vadd.f32 %v2082, %v2343
        %v2348 = vadd.f32 %v2083, %v2344
        %v2349 = vadd.f32 %v2084, %v2345
        %s2350 = sld [smem:[#allocation7 + $0x51]]
        %v2351 = vstv %s2350
        %v2352 = vmul.f32 %v2351, %v2312
        %v2353 = vmul.f32 %v2351, %v2317
        %v2354 = vmul.f32 %v2351, %v2322
        %v2355 = vmul.f32 %v2351, %v2327
        %v2356 = vadd.f32 %v2091, %v2352
        %v2357 = vadd.f32 %v2092, %v2353
        %v2358 = vadd.f32 %v2093, %v2354
        %v2359 = vadd.f32 %v2094, %v2355
        %s2360 = sld [smem:[#allocation7 + $0x75]]
        %v2361 = vstv %s2360
        %v2362 = vmul.f32 %v2361, %v2312
        %v2363 = vmul.f32 %v2361, %v2317
        %v2364 = vmul.f32 %v2361, %v2322
        %v2365 = vmul.f32 %v2361, %v2327
        %v2366 = vadd.f32 %v2101, %v2362
        %v2367 = vadd.f32 %v2102, %v2363
        %v2368 = vadd.f32 %v2103, %v2364
        %v2369 = vadd.f32 %v2104, %v2365
        %s2370 = sld [smem:[#allocation7 + $0x99]]
        %v2371 = vstv %s2370
        %v2372 = vmul.f32 %v2371, %v2312
        %v2373 = vmul.f32 %v2371, %v2317
        %v2374 = vmul.f32 %v2371, %v2322
        %v2375 = vmul.f32 %v2371, %v2327
        %v2376 = vadd.f32 %v2111, %v2372
        %v2377 = vadd.f32 %v2112, %v2373
        %v2378 = vadd.f32 %v2113, %v2374
        %v2379 = vadd.f32 %v2114, %v2375
        %s2380 = sld [smem:[#allocation7 + $0xbd]]
        %v2381 = vstv %s2380
        %v2382 = vmul.f32 %v2381, %v2312
        %v2383 = vmul.f32 %v2381, %v2317
        %v2384 = vmul.f32 %v2381, %v2322
        %v2385 = vmul.f32 %v2381, %v2327
        %v2386 = vadd.f32 %v2121, %v2382
        %v2387 = vadd.f32 %v2122, %v2383
        %v2388 = vadd.f32 %v2123, %v2384
        %v2389 = vadd.f32 %v2124, %v2385
        %s2390 = sld [smem:[#allocation7 + $0xe1]]
        %v2391 = vstv %s2390
        %v2392 = vmul.f32 %v2391, %v2312
        %v2393 = vmul.f32 %v2391, %v2317
        %v2394 = vmul.f32 %v2391, %v2322
        %v2395 = vmul.f32 %v2391, %v2327
        %v2396 = vadd.f32 %v2131, %v2392
        %v2397 = vadd.f32 %v2132, %v2393
        %v2398 = vadd.f32 %v2133, %v2394
        %v2399 = vadd.f32 %v2134, %v2395
        %s2400 = sld [smem:[#allocation7 + $0x105]]
        %v2401 = vstv %s2400
        %v2402 = vmul.f32 %v2401, %v2312
        %v2403 = vmul.f32 %v2401, %v2317
        %v2404 = vmul.f32 %v2401, %v2322
        %v2405 = vmul.f32 %v2401, %v2327
        %v2406 = vadd.f32 %v2141, %v2402
        %v2407 = vadd.f32 %v2142, %v2403
        %v2408 = vadd.f32 %v2143, %v2404
        %v2409 = vadd.f32 %v2144, %v2405
        %2410 = vmatprep.subr.mxu0 0.0
        %2411 = vmatpush1.msra.mxu0 0.0
        %2412 = vmatprep.subr.mxu0 0.0
        %2413 = vmatpush1.msra.mxu0 0.0
        %2414 = vmatprep.subr.mxu0 0.0
        %2415 = vmatpush1.msra.mxu0 0.0
        %2416 = vmatprep.subr.mxu0 0.0
        %2417 = vmatpush1.msra.mxu0 0.0
        %2418 = vmatprep.subr.mxu0 0.0
        %2419 = vmatpush1.msra.mxu0 0.0
        %2420 = vmatprep.subr.mxu0 0.0
        %2421 = vmatpush1.msra.mxu0 0.0
        %2422 = vmatprep.subr.mxu0 0.0
        %2423 = vmatpush1.msra.mxu0 0.0
        %2424 = vmatprep.subr.mxu0 0.0
        %2425 = vmatpush1.msra.mxu0 0.0
        %2426 = vmatprep.subr.mxu0 0.0
        %2427 = vmatpush1.msra.mxu0 0.0
        %2428 = vmatprep.subr.mxu0 0.0
        %2429 = vmatpush1.msra.mxu0 0.0
        %2430 = vmatprep.subr.mxu0 0.0
        %2431 = vmatpush1.msra.mxu0 0.0
        %2432 = vmatprep.subr.mxu0 0.0
        %2433 = vmatpush1.msra.mxu0 0.0
        %2434 = vmatprep.subr.mxu0 0.0
        %2435 = vmatpush1.msra.mxu0 0.0
        %2436 = vmatprep.subr.mxu0 0.0
        %2437 = vmatpush1.msra.mxu0 0.0
        %2438 = vmatprep.subr.mxu0 0.0
        %2439 = vmatpush1.msra.mxu0 %v303
        %2440 = vmatprep.subr.mxu0 0.0
        %2441 = vmatpush1.msra.mxu0 %v302
        %2442 = vmatprep.subr.mxu0 0.0
        %2443 = vmatpush2.msra.mxu0 0.0
        %2444 = vmatprep.subr.mxu0 0.0
        %2445 = vmatpush2.msra.mxu0 0.0
        %2446 = vmatprep.subr.mxu0 0.0
        %2447 = vmatpush2.msra.mxu0 0.0
        %2448 = vmatprep.subr.mxu0 0.0
        %2449 = vmatpush2.msra.mxu0 0.0
        %2450 = vmatprep.subr.mxu0 0.0
        %2451 = vmatpush2.msra.mxu0 0.0
        %2452 = vmatprep.subr.mxu0 0.0
        %2453 = vmatpush2.msra.mxu0 0.0
        %2454 = vmatprep.subr.mxu0 0.0
        %2455 = vmatpush2.msra.mxu0 0.0
        %2456 = vmatprep.subr.mxu0 0.0
        %2457 = vmatpush2.msra.mxu0 0.0
        %2458 = vmatprep.subr.mxu0 0.0
        %2459 = vmatpush2.msra.mxu0 0.0
        %2460 = vmatprep.subr.mxu0 0.0
        %2461 = vmatpush2.msra.mxu0 0.0
        %2462 = vmatprep.subr.mxu0 0.0
        %2463 = vmatpush2.msra.mxu0 0.0
        %2464 = vmatprep.subr.mxu0 0.0
        %2465 = vmatpush2.msra.mxu0 0.0
        %2466 = vmatprep.subr.mxu0 0.0
        %2467 = vmatpush2.msra.mxu0 0.0
        %2468 = vmatprep.subr.mxu0 0.0
        %2469 = vmatpush2.msra.mxu0 0.0
        %2470 = vmatprep.subr.mxu0 0.0
        %2471 = vmatpush2.msra.mxu0 0.0
        %2472 = vmatprep.subr.mxu0 0.0
        %2473 = vmatpush2.msra.mxu0 0.0
        %2474 = vmatprep.mubr.f32.mxu0 0.0
        %2475 = vmatmul.mubr.f32.gmra.mxu0 %v2234
        %v2476 = vpop.f32.mrf.mxu0
        %v2477 = vadd.f32 0.0, %v2476
        %v2478 = vpop.f32.mrf.mxu0
        %2479 = vmatprep.mubr.f32.mxu0 0.0
        %2480 = vmatmul.mubr.f32.gmra.mxu0 %v2237
        %v2481 = vpop.f32.mrf.mxu0
        %v2482 = vadd.f32 0.0, %v2481
        %v2483 = vpop.f32.mrf.mxu0
        %2484 = vmatprep.mubr.f32.mxu0 0.0
        %2485 = vmatmul.mubr.f32.gmra.mxu0 %v2240
        %v2486 = vpop.f32.mrf.mxu0
        %v2487 = vadd.f32 0.0, %v2486
        %v2488 = vpop.f32.mrf.mxu0
        %2489 = vmatprep.mubr.f32.mxu0 0.0
        %2490 = vmatmul.mubr.f32.gmra.mxu0 %v2243
        %v2491 = vpop.f32.mrf.mxu0
        %v2492 = vadd.f32 0.0, %v2491
        %v2493 = vpop.f32.mrf.mxu0
        %2494 = vdwg.mxu0
        %s2495 = sld [smem:[#allocation7 + $0xa]]
        %v2496 = vstv %s2495
        %v2497 = vmul.f32 %v2496, %v2477
        %v2498 = vmul.f32 %v2496, %v2482
        %v2499 = vmul.f32 %v2496, %v2487
        %v2500 = vmul.f32 %v2496, %v2492
        %v2501 = vadd.f32 %v2336, %v2497
        %v2502 = vadd.f32 %v2337, %v2498
        %v2503 = vadd.f32 %v2338, %v2499
        %v2504 = vadd.f32 %v2339, %v2500
        %s2505 = sld [smem:[#allocation7 + $0x2e]]
        %v2506 = vstv %s2505
        %v2507 = vmul.f32 %v2506, %v2477
        %v2508 = vmul.f32 %v2506, %v2482
        %v2509 = vmul.f32 %v2506, %v2487
        %v2510 = vmul.f32 %v2506, %v2492
        %v2511 = vadd.f32 %v2346, %v2507
        %v2512 = vadd.f32 %v2347, %v2508
        %v2513 = vadd.f32 %v2348, %v2509
        %v2514 = vadd.f32 %v2349, %v2510
        %s2515 = sld [smem:[#allocation7 + $0x52]]
        %v2516 = vstv %s2515
        %v2517 = vmul.f32 %v2516, %v2477
        %v2518 = vmul.f32 %v2516, %v2482
        %v2519 = vmul.f32 %v2516, %v2487
        %v2520 = vmul.f32 %v2516, %v2492
        %v2521 = vadd.f32 %v2356, %v2517
        %v2522 = vadd.f32 %v2357, %v2518
        %v2523 = vadd.f32 %v2358, %v2519
        %v2524 = vadd.f32 %v2359, %v2520
        %s2525 = sld [smem:[#allocation7 + $0x76]]
        %v2526 = vstv %s2525
        %v2527 = vmul.f32 %v2526, %v2477
        %v2528 = vmul.f32 %v2526, %v2482
        %v2529 = vmul.f32 %v2526, %v2487
        %v2530 = vmul.f32 %v2526, %v2492
        %v2531 = vadd.f32 %v2366, %v2527
        %v2532 = vadd.f32 %v2367, %v2528
        %v2533 = vadd.f32 %v2368, %v2529
        %v2534 = vadd.f32 %v2369, %v2530
        %s2535 = sld [smem:[#allocation7 + $0x9a]]
        %v2536 = vstv %s2535
        %v2537 = vmul.f32 %v2536, %v2477
        %v2538 = vmul.f32 %v2536, %v2482
        %v2539 = vmul.f32 %v2536, %v2487
        %v2540 = vmul.f32 %v2536, %v2492
        %v2541 = vadd.f32 %v2376, %v2537
        %v2542 = vadd.f32 %v2377, %v2538
        %v2543 = vadd.f32 %v2378, %v2539
        %v2544 = vadd.f32 %v2379, %v2540
        %s2545 = sld [smem:[#allocation7 + $0xbe]]
        %v2546 = vstv %s2545
        %v2547 = vmul.f32 %v2546, %v2477
        %v2548 = vmul.f32 %v2546, %v2482
        %v2549 = vmul.f32 %v2546, %v2487
        %v2550 = vmul.f32 %v2546, %v2492
        %v2551 = vadd.f32 %v2386, %v2547
        %v2552 = vadd.f32 %v2387, %v2548
        %v2553 = vadd.f32 %v2388, %v2549
        %v2554 = vadd.f32 %v2389, %v2550
        %s2555 = sld [smem:[#allocation7 + $0xe2]]
        %v2556 = vstv %s2555
        %v2557 = vmul.f32 %v2556, %v2477
        %v2558 = vmul.f32 %v2556, %v2482
        %v2559 = vmul.f32 %v2556, %v2487
        %v2560 = vmul.f32 %v2556, %v2492
        %v2561 = vadd.f32 %v2396, %v2557
        %v2562 = vadd.f32 %v2397, %v2558
        %v2563 = vadd.f32 %v2398, %v2559
        %v2564 = vadd.f32 %v2399, %v2560
        %s2565 = sld [smem:[#allocation7 + $0x106]]
        %v2566 = vstv %s2565
        %v2567 = vmul.f32 %v2566, %v2477
        %v2568 = vmul.f32 %v2566, %v2482
        %v2569 = vmul.f32 %v2566, %v2487
        %v2570 = vmul.f32 %v2566, %v2492
        %v2571 = vadd.f32 %v2406, %v2567
        %v2572 = vadd.f32 %v2407, %v2568
        %v2573 = vadd.f32 %v2408, %v2569
        %v2574 = vadd.f32 %v2409, %v2570
        %2575 = vmatprep.subr.mxu0 0.0
        %2576 = vmatpush1.msra.mxu0 0.0
        %2577 = vmatprep.subr.mxu0 0.0
        %2578 = vmatpush1.msra.mxu0 0.0
        %2579 = vmatprep.subr.mxu0 0.0
        %2580 = vmatpush1.msra.mxu0 0.0
        %2581 = vmatprep.subr.mxu0 0.0
        %2582 = vmatpush1.msra.mxu0 0.0
        %2583 = vmatprep.subr.mxu0 0.0
        %2584 = vmatpush1.msra.mxu0 0.0
        %2585 = vmatprep.subr.mxu0 0.0
        %2586 = vmatpush1.msra.mxu0 0.0
        %2587 = vmatprep.subr.mxu0 0.0
        %2588 = vmatpush1.msra.mxu0 0.0
        %2589 = vmatprep.subr.mxu0 0.0
        %2590 = vmatpush1.msra.mxu0 0.0
        %2591 = vmatprep.subr.mxu0 0.0
        %2592 = vmatpush1.msra.mxu0 0.0
        %2593 = vmatprep.subr.mxu0 0.0
        %2594 = vmatpush1.msra.mxu0 0.0
        %2595 = vmatprep.subr.mxu0 0.0
        %2596 = vmatpush1.msra.mxu0 0.0
        %2597 = vmatprep.subr.mxu0 0.0
        %2598 = vmatpush1.msra.mxu0 0.0
        %2599 = vmatprep.subr.mxu0 0.0
        %2600 = vmatpush1.msra.mxu0 0.0
        %2601 = vmatprep.subr.mxu0 0.0
        %2602 = vmatpush1.msra.mxu0 0.0
        %2603 = vmatprep.subr.mxu0 0.0
        %2604 = vmatpush1.msra.mxu0 %v313
        %2605 = vmatprep.subr.mxu0 0.0
        %2606 = vmatpush1.msra.mxu0 %v312
        %2607 = vmatprep.subr.mxu0 0.0
        %2608 = vmatpush2.msra.mxu0 0.0
        %2609 = vmatprep.subr.mxu0 0.0
        %2610 = vmatpush2.msra.mxu0 0.0
        %2611 = vmatprep.subr.mxu0 0.0
        %2612 = vmatpush2.msra.mxu0 0.0
        %2613 = vmatprep.subr.mxu0 0.0
        %2614 = vmatpush2.msra.mxu0 0.0
        %2615 = vmatprep.subr.mxu0 0.0
        %2616 = vmatpush2.msra.mxu0 0.0
        %2617 = vmatprep.subr.mxu0 0.0
        %2618 = vmatpush2.msra.mxu0 0.0
        %2619 = vmatprep.subr.mxu0 0.0
        %2620 = vmatpush2.msra.mxu0 0.0
        %2621 = vmatprep.subr.mxu0 0.0
        %2622 = vmatpush2.msra.mxu0 0.0
        %2623 = vmatprep.subr.mxu0 0.0
        %2624 = vmatpush2.msra.mxu0 0.0
        %2625 = vmatprep.subr.mxu0 0.0
        %2626 = vmatpush2.msra.mxu0 0.0
        %2627 = vmatprep.subr.mxu0 0.0
        %2628 = vmatpush2.msra.mxu0 0.0
        %2629 = vmatprep.subr.mxu0 0.0
        %2630 = vmatpush2.msra.mxu0 0.0
        %2631 = vmatprep.subr.mxu0 0.0
        %2632 = vmatpush2.msra.mxu0 0.0
        %2633 = vmatprep.subr.mxu0 0.0
        %2634 = vmatpush2.msra.mxu0 0.0
        %2635 = vmatprep.subr.mxu0 0.0
        %2636 = vmatpush2.msra.mxu0 0.0
        %2637 = vmatprep.subr.mxu0 0.0
        %2638 = vmatpush2.msra.mxu0 0.0
        %2639 = vmatprep.mubr.f32.mxu0 0.0
        %2640 = vmatmul.mubr.f32.gmra.mxu0 %v2234
        %v2641 = vpop.f32.mrf.mxu0
        %v2642 = vadd.f32 0.0, %v2641
        %v2643 = vpop.f32.mrf.mxu0
        %2644 = vmatprep.mubr.f32.mxu0 0.0
        %2645 = vmatmul.mubr.f32.gmra.mxu0 %v2237
        %v2646 = vpop.f32.mrf.mxu0
        %v2647 = vadd.f32 0.0, %v2646
        %v2648 = vpop.f32.mrf.mxu0
        %2649 = vmatprep.mubr.f32.mxu0 0.0
        %2650 = vmatmul.mubr.f32.gmra.mxu0 %v2240
        %v2651 = vpop.f32.mrf.mxu0
        %v2652 = vadd.f32 0.0, %v2651
        %v2653 = vpop.f32.mrf.mxu0
        %2654 = vmatprep.mubr.f32.mxu0 0.0
        %2655 = vmatmul.mubr.f32.gmra.mxu0 %v2243
        %v2656 = vpop.f32.mrf.mxu0
        %v2657 = vadd.f32 0.0, %v2656
        %v2658 = vpop.f32.mrf.mxu0
        %2659 = vdwg.mxu0
        %s2660 = sld [smem:[#allocation7 + $0xb]]
        %v2661 = vstv %s2660
        %v2662 = vmul.f32 %v2661, %v2642
        %v2663 = vmul.f32 %v2661, %v2647
        %v2664 = vmul.f32 %v2661, %v2652
        %v2665 = vmul.f32 %v2661, %v2657
        %v2666 = vadd.f32 %v2501, %v2662
        %v2667 = vadd.f32 %v2502, %v2663
        %v2668 = vadd.f32 %v2503, %v2664
        %v2669 = vadd.f32 %v2504, %v2665
        %s2670 = sld [smem:[#allocation7 + $0x2f]]
        %v2671 = vstv %s2670
        %v2672 = vmul.f32 %v2671, %v2642
        %v2673 = vmul.f32 %v2671, %v2647
        %v2674 = vmul.f32 %v2671, %v2652
        %v2675 = vmul.f32 %v2671, %v2657
        %v2676 = vadd.f32 %v2511, %v2672
        %v2677 = vadd.f32 %v2512, %v2673
        %v2678 = vadd.f32 %v2513, %v2674
        %v2679 = vadd.f32 %v2514, %v2675
        %s2680 = sld [smem:[#allocation7 + $0x53]]
        %v2681 = vstv %s2680
        %v2682 = vmul.f32 %v2681, %v2642
        %v2683 = vmul.f32 %v2681, %v2647
        %v2684 = vmul.f32 %v2681, %v2652
        %v2685 = vmul.f32 %v2681, %v2657
        %v2686 = vadd.f32 %v2521, %v2682
        %v2687 = vadd.f32 %v2522, %v2683
        %v2688 = vadd.f32 %v2523, %v2684
        %v2689 = vadd.f32 %v2524, %v2685
        %s2690 = sld [smem:[#allocation7 + $0x77]]
        %v2691 = vstv %s2690
        %v2692 = vmul.f32 %v2691, %v2642
        %v2693 = vmul.f32 %v2691, %v2647
        %v2694 = vmul.f32 %v2691, %v2652
        %v2695 = vmul.f32 %v2691, %v2657
        %v2696 = vadd.f32 %v2531, %v2692
        %v2697 = vadd.f32 %v2532, %v2693
        %v2698 = vadd.f32 %v2533, %v2694
        %v2699 = vadd.f32 %v2534, %v2695
        %s2700 = sld [smem:[#allocation7 + $0x9b]]
        %v2701 = vstv %s2700
        %v2702 = vmul.f32 %v2701, %v2642
        %v2703 = vmul.f32 %v2701, %v2647
        %v2704 = vmul.f32 %v2701, %v2652
        %v2705 = vmul.f32 %v2701, %v2657
        %v2706 = vadd.f32 %v2541, %v2702
        %v2707 = vadd.f32 %v2542, %v2703
        %v2708 = vadd.f32 %v2543, %v2704
        %v2709 = vadd.f32 %v2544, %v2705
        %s2710 = sld [smem:[#allocation7 + $0xbf]]
        %v2711 = vstv %s2710
        %v2712 = vmul.f32 %v2711, %v2642
        %v2713 = vmul.f32 %v2711, %v2647
        %v2714 = vmul.f32 %v2711, %v2652
        %v2715 = vmul.f32 %v2711, %v2657
        %v2716 = vadd.f32 %v2551, %v2712
        %v2717 = vadd.f32 %v2552, %v2713
        %v2718 = vadd.f32 %v2553, %v2714
        %v2719 = vadd.f32 %v2554, %v2715
        %s2720 = sld [smem:[#allocation7 + $0xe3]]
        %v2721 = vstv %s2720
        %v2722 = vmul.f32 %v2721, %v2642
        %v2723 = vmul.f32 %v2721, %v2647
        %v2724 = vmul.f32 %v2721, %v2652
        %v2725 = vmul.f32 %v2721, %v2657
        %v2726 = vadd.f32 %v2561, %v2722
        %v2727 = vadd.f32 %v2562, %v2723
        %v2728 = vadd.f32 %v2563, %v2724
        %v2729 = vadd.f32 %v2564, %v2725
        %s2730 = sld [smem:[#allocation7 + $0x107]]
        %v2731 = vstv %s2730
        %v2732 = vmul.f32 %v2731, %v2642
        %v2733 = vmul.f32 %v2731, %v2647
        %v2734 = vmul.f32 %v2731, %v2652
        %v2735 = vmul.f32 %v2731, %v2657
        %v2736 = vadd.f32 %v2571, %v2732
        %v2737 = vadd.f32 %v2572, %v2733
        %v2738 = vadd.f32 %v2573, %v2734
        %v2739 = vadd.f32 %v2574, %v2735
        %2740 = vmatprep.subr.mxu0 0.0
        %2741 = vmatpush1.msra.mxu0 0.0
        %2742 = vmatprep.subr.mxu0 0.0
        %2743 = vmatpush1.msra.mxu0 0.0
        %2744 = vmatprep.subr.mxu0 0.0
        %2745 = vmatpush1.msra.mxu0 0.0
        %2746 = vmatprep.subr.mxu0 0.0
        %2747 = vmatpush1.msra.mxu0 0.0
        %2748 = vmatprep.subr.mxu0 0.0
        %2749 = vmatpush1.msra.mxu0 0.0
        %2750 = vmatprep.subr.mxu0 0.0
        %2751 = vmatpush1.msra.mxu0 0.0
        %2752 = vmatprep.subr.mxu0 0.0
        %2753 = vmatpush1.msra.mxu0 0.0
        %2754 = vmatprep.subr.mxu0 0.0
        %2755 = vmatpush1.msra.mxu0 0.0
        %2756 = vmatprep.subr.mxu0 0.0
        %2757 = vmatpush1.msra.mxu0 0.0
        %2758 = vmatprep.subr.mxu0 0.0
        %2759 = vmatpush1.msra.mxu0 0.0
        %2760 = vmatprep.subr.mxu0 0.0
        %2761 = vmatpush1.msra.mxu0 0.0
        %2762 = vmatprep.subr.mxu0 0.0
        %2763 = vmatpush1.msra.mxu0 0.0
        %2764 = vmatprep.subr.mxu0 0.0
        %2765 = vmatpush1.msra.mxu0 0.0
        %2766 = vmatprep.subr.mxu0 0.0
        %2767 = vmatpush1.msra.mxu0 0.0
        %2768 = vmatprep.subr.mxu0 0.0
        %2769 = vmatpush1.msra.mxu0 %v2147
        %2770 = vmatprep.subr.mxu0 0.0
        %2771 = vmatpush1.msra.mxu0 %v2146
        %2772 = vmatprep.subr.mxu0 0.0
        %2773 = vmatpush2.msra.mxu0 0.0
        %2774 = vmatprep.subr.mxu0 0.0
        %2775 = vmatpush2.msra.mxu0 0.0
        %2776 = vmatprep.subr.mxu0 0.0
        %2777 = vmatpush2.msra.mxu0 0.0
        %2778 = vmatprep.subr.mxu0 0.0
        %2779 = vmatpush2.msra.mxu0 0.0
        %2780 = vmatprep.subr.mxu0 0.0
        %2781 = vmatpush2.msra.mxu0 0.0
        %2782 = vmatprep.subr.mxu0 0.0
        %2783 = vmatpush2.msra.mxu0 0.0
        %2784 = vmatprep.subr.mxu0 0.0
        %2785 = vmatpush2.msra.mxu0 0.0
        %2786 = vmatprep.subr.mxu0 0.0
        %2787 = vmatpush2.msra.mxu0 0.0
        %2788 = vmatprep.subr.mxu0 0.0
        %2789 = vmatpush2.msra.mxu0 0.0
        %2790 = vmatprep.subr.mxu0 0.0
        %2791 = vmatpush2.msra.mxu0 0.0
        %2792 = vmatprep.subr.mxu0 0.0
        %2793 = vmatpush2.msra.mxu0 0.0
        %2794 = vmatprep.subr.mxu0 0.0
        %2795 = vmatpush2.msra.mxu0 0.0
        %2796 = vmatprep.subr.mxu0 0.0
        %2797 = vmatpush2.msra.mxu0 0.0
        %2798 = vmatprep.subr.mxu0 0.0
        %2799 = vmatpush2.msra.mxu0 0.0
        %2800 = vmatprep.subr.mxu0 0.0
        %2801 = vmatpush2.msra.mxu0 0.0
        %2802 = vmatprep.subr.mxu0 0.0
        %2803 = vmatpush2.msra.mxu0 0.0
        %2804 = vmatprep.mubr.f32.mxu0 0.0
        %2805 = vmatmul.mubr.f32.gmra.mxu0 %v938
        %v2806 = vpop.f32.mrf.mxu0
        %v2807 = vadd.f32 0.0, %v2806
        %v2808 = vpop.f32.mrf.mxu0
        %2809 = vmatprep.mubr.f32.mxu0 0.0
        %2810 = vmatmul.mubr.f32.gmra.mxu0 %v941
        %v2811 = vpop.f32.mrf.mxu0
        %v2812 = vadd.f32 0.0, %v2811
        %v2813 = vpop.f32.mrf.mxu0
        %2814 = vmatprep.mubr.f32.mxu0 0.0
        %2815 = vmatmul.mubr.f32.gmra.mxu0 %v944
        %v2816 = vpop.f32.mrf.mxu0
        %v2817 = vadd.f32 0.0, %v2816
        %v2818 = vpop.f32.mrf.mxu0
        %2819 = vmatprep.mubr.f32.mxu0 0.0
        %2820 = vmatmul.mubr.f32.gmra.mxu0 %v947
        %v2821 = vpop.f32.mrf.mxu0
        %v2822 = vadd.f32 0.0, %v2821
        %v2823 = vpop.f32.mrf.mxu0
        %2824 = vdwg.mxu0
        %v2826 = vsel %vm332, %v2807, 0
        %v2829 = vsel %vm332, %v2812, 0
        %v2832 = vsel %vm332, %v2817, 0
        %v2835 = vsel %vm332, %v2822, 0
        %2837 = vmatprep.subr.mxu0 0.0
        %2838 = vmatpush1.msra.mxu0 0.0
        %2839 = vmatprep.subr.mxu0 0.0
        %2840 = vmatpush1.msra.mxu0 0.0
        %2841 = vmatprep.subr.mxu0 0.0
        %2842 = vmatpush1.msra.mxu0 0.0
        %2843 = vmatprep.subr.mxu0 0.0
        %2844 = vmatpush1.msra.mxu0 0.0
        %2845 = vmatprep.subr.mxu0 0.0
        %2846 = vmatpush1.msra.mxu0 0.0
        %2847 = vmatprep.subr.mxu0 0.0
        %2848 = vmatpush1.msra.mxu0 0.0
        %2849 = vmatprep.subr.mxu0 0.0
        %2850 = vmatpush1.msra.mxu0 0.0
        %2851 = vmatprep.subr.mxu0 0.0
        %2852 = vmatpush1.msra.mxu0 0.0
        %2853 = vmatprep.subr.mxu0 0.0
        %2854 = vmatpush1.msra.mxu0 0.0
        %2855 = vmatprep.subr.mxu0 0.0
        %2856 = vmatpush1.msra.mxu0 0.0
        %2857 = vmatprep.subr.mxu0 0.0
        %2858 = vmatpush1.msra.mxu0 0.0
        %2859 = vmatprep.subr.mxu0 0.0
        %2860 = vmatpush1.msra.mxu0 0.0
        %2861 = vmatprep.subr.mxu0 0.0
        %2862 = vmatpush1.msra.mxu0 0.0
        %2863 = vmatprep.subr.mxu0 0.0
        %2864 = vmatpush1.msra.mxu0 0.0
        %2865 = vmatprep.subr.mxu0 0.0
        %2866 = vmatpush1.msra.mxu0 %v295
        %2867 = vmatprep.subr.mxu0 0.0
        %2868 = vmatpush1.msra.mxu0 %v294
        %2869 = vmatprep.subr.mxu0 0.0
        %2870 = vmatpush2.msra.mxu0 0.0
        %2871 = vmatprep.subr.mxu0 0.0
        %2872 = vmatpush2.msra.mxu0 0.0
        %2873 = vmatprep.subr.mxu0 0.0
        %2874 = vmatpush2.msra.mxu0 0.0
        %2875 = vmatprep.subr.mxu0 0.0
        %2876 = vmatpush2.msra.mxu0 0.0
        %2877 = vmatprep.subr.mxu0 0.0
        %2878 = vmatpush2.msra.mxu0 0.0
        %2879 = vmatprep.subr.mxu0 0.0
        %2880 = vmatpush2.msra.mxu0 0.0
        %2881 = vmatprep.subr.mxu0 0.0
        %2882 = vmatpush2.msra.mxu0 0.0
        %2883 = vmatprep.subr.mxu0 0.0
        %2884 = vmatpush2.msra.mxu0 0.0
        %2885 = vmatprep.subr.mxu0 0.0
        %2886 = vmatpush2.msra.mxu0 0.0
        %2887 = vmatprep.subr.mxu0 0.0
        %2888 = vmatpush2.msra.mxu0 0.0
        %2889 = vmatprep.subr.mxu0 0.0
        %2890 = vmatpush2.msra.mxu0 0.0
        %2891 = vmatprep.subr.mxu0 0.0
        %2892 = vmatpush2.msra.mxu0 0.0
        %2893 = vmatprep.subr.mxu0 0.0
        %2894 = vmatpush2.msra.mxu0 0.0
        %2895 = vmatprep.subr.mxu0 0.0
        %2896 = vmatpush2.msra.mxu0 0.0
        %2897 = vmatprep.subr.mxu0 0.0
        %2898 = vmatpush2.msra.mxu0 0.0
        %2899 = vmatprep.subr.mxu0 0.0
        %2900 = vmatpush2.msra.mxu0 0.0
        %2901 = vmatprep.mubr.f32.mxu0 0.0
        %2902 = vmatmul.mubr.f32.gmra.mxu0 %v2826
        %v2903 = vpop.f32.mrf.mxu0
        %v2904 = vadd.f32 0.0, %v2903
        %v2905 = vpop.f32.mrf.mxu0
        %2906 = vmatprep.mubr.f32.mxu0 0.0
        %2907 = vmatmul.mubr.f32.gmra.mxu0 %v2829
        %v2908 = vpop.f32.mrf.mxu0
        %v2909 = vadd.f32 0.0, %v2908
        %v2910 = vpop.f32.mrf.mxu0
        %2911 = vmatprep.mubr.f32.mxu0 0.0
        %2912 = vmatmul.mubr.f32.gmra.mxu0 %v2832
        %v2913 = vpop.f32.mrf.mxu0
        %v2914 = vadd.f32 0.0, %v2913
        %v2915 = vpop.f32.mrf.mxu0
        %2916 = vmatprep.mubr.f32.mxu0 0.0
        %2917 = vmatmul.mubr.f32.gmra.mxu0 %v2835
        %v2918 = vpop.f32.mrf.mxu0
        %v2919 = vadd.f32 0.0, %v2918
        %v2920 = vpop.f32.mrf.mxu0
        %2921 = vdwg.mxu0
        %s2922 = sld [smem:[#allocation7 + $0xc]]
        %v2923 = vstv %s2922
        %v2924 = vmul.f32 %v2923, %v2904
        %v2925 = vmul.f32 %v2923, %v2909
        %v2926 = vmul.f32 %v2923, %v2914
        %v2927 = vmul.f32 %v2923, %v2919
        %v2928 = vadd.f32 %v2666, %v2924
        %v2929 = vadd.f32 %v2667, %v2925
        %v2930 = vadd.f32 %v2668, %v2926
        %v2931 = vadd.f32 %v2669, %v2927
        %s2932 = sld [smem:[#allocation7 + $0x30]]
        %v2933 = vstv %s2932
        %v2934 = vmul.f32 %v2933, %v2904
        %v2935 = vmul.f32 %v2933, %v2909
        %v2936 = vmul.f32 %v2933, %v2914
        %v2937 = vmul.f32 %v2933, %v2919
        %v2938 = vadd.f32 %v2676, %v2934
        %v2939 = vadd.f32 %v2677, %v2935
        %v2940 = vadd.f32 %v2678, %v2936
        %v2941 = vadd.f32 %v2679, %v2937
        %s2942 = sld [smem:[#allocation7 + $0x54]]
        %v2943 = vstv %s2942
        %v2944 = vmul.f32 %v2943, %v2904
        %v2945 = vmul.f32 %v2943, %v2909
        %v2946 = vmul.f32 %v2943, %v2914
        %v2947 = vmul.f32 %v2943, %v2919
        %v2948 = vadd.f32 %v2686, %v2944
        %v2949 = vadd.f32 %v2687, %v2945
        %v2950 = vadd.f32 %v2688, %v2946
        %v2951 = vadd.f32 %v2689, %v2947
        %s2952 = sld [smem:[#allocation7 + $0x78]]
        %v2953 = vstv %s2952
        %v2954 = vmul.f32 %v2953, %v2904
        %v2955 = vmul.f32 %v2953, %v2909
        %v2956 = vmul.f32 %v2953, %v2914
        %v2957 = vmul.f32 %v2953, %v2919
        %v2958 = vadd.f32 %v2696, %v2954
        %v2959 = vadd.f32 %v2697, %v2955
        %v2960 = vadd.f32 %v2698, %v2956
        %v2961 = vadd.f32 %v2699, %v2957
        %s2962 = sld [smem:[#allocation7 + $0x9c]]
        %v2963 = vstv %s2962
        %v2964 = vmul.f32 %v2963, %v2904
        %v2965 = vmul.f32 %v2963, %v2909
        %v2966 = vmul.f32 %v2963, %v2914
        %v2967 = vmul.f32 %v2963, %v2919
        %v2968 = vadd.f32 %v2706, %v2964
        %v2969 = vadd.f32 %v2707, %v2965
        %v2970 = vadd.f32 %v2708, %v2966
        %v2971 = vadd.f32 %v2709, %v2967
        %s2972 = sld [smem:[#allocation7 + $0xc0]]
        %v2973 = vstv %s2972
        %v2974 = vmul.f32 %v2973, %v2904
        %v2975 = vmul.f32 %v2973, %v2909
        %v2976 = vmul.f32 %v2973, %v2914
        %v2977 = vmul.f32 %v2973, %v2919
        %v2978 = vadd.f32 %v2716, %v2974
        %v2979 = vadd.f32 %v2717, %v2975
        %v2980 = vadd.f32 %v2718, %v2976
        %v2981 = vadd.f32 %v2719, %v2977
        %s2982 = sld [smem:[#allocation7 + $0xe4]]
        %v2983 = vstv %s2982
        %v2984 = vmul.f32 %v2983, %v2904
        %v2985 = vmul.f32 %v2983, %v2909
        %v2986 = vmul.f32 %v2983, %v2914
        %v2987 = vmul.f32 %v2983, %v2919
        %v2988 = vadd.f32 %v2726, %v2984
        %v2989 = vadd.f32 %v2727, %v2985
        %v2990 = vadd.f32 %v2728, %v2986
        %v2991 = vadd.f32 %v2729, %v2987
        %s2992 = sld [smem:[#allocation7 + $0x108]]
        %v2993 = vstv %s2992
        %v2994 = vmul.f32 %v2993, %v2904
        %v2995 = vmul.f32 %v2993, %v2909
        %v2996 = vmul.f32 %v2993, %v2914
        %v2997 = vmul.f32 %v2993, %v2919
        %v2998 = vadd.f32 %v2736, %v2994
        %v2999 = vadd.f32 %v2737, %v2995
        %v3000 = vadd.f32 %v2738, %v2996
        %v3001 = vadd.f32 %v2739, %v2997
        %3002 = vmatprep.subr.mxu0 0.0
        %3003 = vmatpush1.msra.mxu0 0.0
        %3004 = vmatprep.subr.mxu0 0.0
        %3005 = vmatpush1.msra.mxu0 0.0
        %3006 = vmatprep.subr.mxu0 0.0
        %3007 = vmatpush1.msra.mxu0 0.0
        %3008 = vmatprep.subr.mxu0 0.0
        %3009 = vmatpush1.msra.mxu0 0.0
        %3010 = vmatprep.subr.mxu0 0.0
        %3011 = vmatpush1.msra.mxu0 0.0
        %3012 = vmatprep.subr.mxu0 0.0
        %3013 = vmatpush1.msra.mxu0 0.0
        %3014 = vmatprep.subr.mxu0 0.0
        %3015 = vmatpush1.msra.mxu0 0.0
        %3016 = vmatprep.subr.mxu0 0.0
        %3017 = vmatpush1.msra.mxu0 0.0
        %3018 = vmatprep.subr.mxu0 0.0
        %3019 = vmatpush1.msra.mxu0 0.0
        %3020 = vmatprep.subr.mxu0 0.0
        %3021 = vmatpush1.msra.mxu0 0.0
        %3022 = vmatprep.subr.mxu0 0.0
        %3023 = vmatpush1.msra.mxu0 0.0
        %3024 = vmatprep.subr.mxu0 0.0
        %3025 = vmatpush1.msra.mxu0 0.0
        %3026 = vmatprep.subr.mxu0 0.0
        %3027 = vmatpush1.msra.mxu0 0.0
        %3028 = vmatprep.subr.mxu0 0.0
        %3029 = vmatpush1.msra.mxu0 0.0
        %3030 = vmatprep.subr.mxu0 0.0
        %3031 = vmatpush1.msra.mxu0 %v303
        %3032 = vmatprep.subr.mxu0 0.0
        %3033 = vmatpush1.msra.mxu0 %v302
        %3034 = vmatprep.subr.mxu0 0.0
        %3035 = vmatpush2.msra.mxu0 0.0
        %3036 = vmatprep.subr.mxu0 0.0
        %3037 = vmatpush2.msra.mxu0 0.0
        %3038 = vmatprep.subr.mxu0 0.0
        %3039 = vmatpush2.msra.mxu0 0.0
        %3040 = vmatprep.subr.mxu0 0.0
        %3041 = vmatpush2.msra.mxu0 0.0
        %3042 = vmatprep.subr.mxu0 0.0
        %3043 = vmatpush2.msra.mxu0 0.0
        %3044 = vmatprep.subr.mxu0 0.0
        %3045 = vmatpush2.msra.mxu0 0.0
        %3046 = vmatprep.subr.mxu0 0.0
        %3047 = vmatpush2.msra.mxu0 0.0
        %3048 = vmatprep.subr.mxu0 0.0
        %3049 = vmatpush2.msra.mxu0 0.0
        %3050 = vmatprep.subr.mxu0 0.0
        %3051 = vmatpush2.msra.mxu0 0.0
        %3052 = vmatprep.subr.mxu0 0.0
        %3053 = vmatpush2.msra.mxu0 0.0
        %3054 = vmatprep.subr.mxu0 0.0
        %3055 = vmatpush2.msra.mxu0 0.0
        %3056 = vmatprep.subr.mxu0 0.0
        %3057 = vmatpush2.msra.mxu0 0.0
        %3058 = vmatprep.subr.mxu0 0.0
        %3059 = vmatpush2.msra.mxu0 0.0
        %3060 = vmatprep.subr.mxu0 0.0
        %3061 = vmatpush2.msra.mxu0 0.0
        %3062 = vmatprep.subr.mxu0 0.0
        %3063 = vmatpush2.msra.mxu0 0.0
        %3064 = vmatprep.subr.mxu0 0.0
        %3065 = vmatpush2.msra.mxu0 0.0
        %3066 = vmatprep.mubr.f32.mxu0 0.0
        %3067 = vmatmul.mubr.f32.gmra.mxu0 %v2826
        %v3068 = vpop.f32.mrf.mxu0
        %v3069 = vadd.f32 0.0, %v3068
        %v3070 = vpop.f32.mrf.mxu0
        %3071 = vmatprep.mubr.f32.mxu0 0.0
        %3072 = vmatmul.mubr.f32.gmra.mxu0 %v2829
        %v3073 = vpop.f32.mrf.mxu0
        %v3074 = vadd.f32 0.0, %v3073
        %v3075 = vpop.f32.mrf.mxu0
        %3076 = vmatprep.mubr.f32.mxu0 0.0
        %3077 = vmatmul.mubr.f32.gmra.mxu0 %v2832
        %v3078 = vpop.f32.mrf.mxu0
        %v3079 = vadd.f32 0.0, %v3078
        %v3080 = vpop.f32.mrf.mxu0
        %3081 = vmatprep.mubr.f32.mxu0 0.0
        %3082 = vmatmul.mubr.f32.gmra.mxu0 %v2835
        %v3083 = vpop.f32.mrf.mxu0
        %v3084 = vadd.f32 0.0, %v3083
        %v3085 = vpop.f32.mrf.mxu0
        %3086 = vdwg.mxu0
        %s3087 = sld [smem:[#allocation7 + $0xd]]
        %v3088 = vstv %s3087
        %v3089 = vmul.f32 %v3088, %v3069
        %v3090 = vmul.f32 %v3088, %v3074
        %v3091 = vmul.f32 %v3088, %v3079
        %v3092 = vmul.f32 %v3088, %v3084
        %v3093 = vadd.f32 %v2928, %v3089
        %v3094 = vadd.f32 %v2929, %v3090
        %v3095 = vadd.f32 %v2930, %v3091
        %v3096 = vadd.f32 %v2931, %v3092
        %s3097 = sld [smem:[#allocation7 + $0x31]]
        %v3098 = vstv %s3097
        %v3099 = vmul.f32 %v3098, %v3069
        %v3100 = vmul.f32 %v3098, %v3074
        %v3101 = vmul.f32 %v3098, %v3079
        %v3102 = vmul.f32 %v3098, %v3084
        %v3103 = vadd.f32 %v2938, %v3099
        %v3104 = vadd.f32 %v2939, %v3100
        %v3105 = vadd.f32 %v2940, %v3101
        %v3106 = vadd.f32 %v2941, %v3102
        %s3107 = sld [smem:[#allocation7 + $0x55]]
        %v3108 = vstv %s3107
        %v3109 = vmul.f32 %v3108, %v3069
        %v3110 = vmul.f32 %v3108, %v3074
        %v3111 = vmul.f32 %v3108, %v3079
        %v3112 = vmul.f32 %v3108, %v3084
        %v3113 = vadd.f32 %v2948, %v3109
        %v3114 = vadd.f32 %v2949, %v3110
        %v3115 = vadd.f32 %v2950, %v3111
        %v3116 = vadd.f32 %v2951, %v3112
        %s3117 = sld [smem:[#allocation7 + $0x79]]
        %v3118 = vstv %s3117
        %v3119 = vmul.f32 %v3118, %v3069
        %v3120 = vmul.f32 %v3118, %v3074
        %v3121 = vmul.f32 %v3118, %v3079
        %v3122 = vmul.f32 %v3118, %v3084
        %v3123 = vadd.f32 %v2958, %v3119
        %v3124 = vadd.f32 %v2959, %v3120
        %v3125 = vadd.f32 %v2960, %v3121
        %v3126 = vadd.f32 %v2961, %v3122
        %s3127 = sld [smem:[#allocation7 + $0x9d]]
        %v3128 = vstv %s3127
        %v3129 = vmul.f32 %v3128, %v3069
        %v3130 = vmul.f32 %v3128, %v3074
        %v3131 = vmul.f32 %v3128, %v3079
        %v3132 = vmul.f32 %v3128, %v3084
        %v3133 = vadd.f32 %v2968, %v3129
        %v3134 = vadd.f32 %v2969, %v3130
        %v3135 = vadd.f32 %v2970, %v3131
        %v3136 = vadd.f32 %v2971, %v3132
        %s3137 = sld [smem:[#allocation7 + $0xc1]]
        %v3138 = vstv %s3137
        %v3139 = vmul.f32 %v3138, %v3069
        %v3140 = vmul.f32 %v3138, %v3074
        %v3141 = vmul.f32 %v3138, %v3079
        %v3142 = vmul.f32 %v3138, %v3084
        %v3143 = vadd.f32 %v2978, %v3139
        %v3144 = vadd.f32 %v2979, %v3140
        %v3145 = vadd.f32 %v2980, %v3141
        %v3146 = vadd.f32 %v2981, %v3142
        %s3147 = sld [smem:[#allocation7 + $0xe5]]
        %v3148 = vstv %s3147
        %v3149 = vmul.f32 %v3148, %v3069
        %v3150 = vmul.f32 %v3148, %v3074
        %v3151 = vmul.f32 %v3148, %v3079
        %v3152 = vmul.f32 %v3148, %v3084
        %v3153 = vadd.f32 %v2988, %v3149
        %v3154 = vadd.f32 %v2989, %v3150
        %v3155 = vadd.f32 %v2990, %v3151
        %v3156 = vadd.f32 %v2991, %v3152
        %s3157 = sld [smem:[#allocation7 + $0x109]]
        %v3158 = vstv %s3157
        %v3159 = vmul.f32 %v3158, %v3069
        %v3160 = vmul.f32 %v3158, %v3074
        %v3161 = vmul.f32 %v3158, %v3079
        %v3162 = vmul.f32 %v3158, %v3084
        %v3163 = vadd.f32 %v2998, %v3159
        %v3164 = vadd.f32 %v2999, %v3160
        %v3165 = vadd.f32 %v3000, %v3161
        %v3166 = vadd.f32 %v3001, %v3162
        %3167 = vmatprep.subr.mxu0 0.0
        %3168 = vmatpush1.msra.mxu0 0.0
        %3169 = vmatprep.subr.mxu0 0.0
        %3170 = vmatpush1.msra.mxu0 0.0
        %3171 = vmatprep.subr.mxu0 0.0
        %3172 = vmatpush1.msra.mxu0 0.0
        %3173 = vmatprep.subr.mxu0 0.0
        %3174 = vmatpush1.msra.mxu0 0.0
        %3175 = vmatprep.subr.mxu0 0.0
        %3176 = vmatpush1.msra.mxu0 0.0
        %3177 = vmatprep.subr.mxu0 0.0
        %3178 = vmatpush1.msra.mxu0 0.0
        %3179 = vmatprep.subr.mxu0 0.0
        %3180 = vmatpush1.msra.mxu0 0.0
        %3181 = vmatprep.subr.mxu0 0.0
        %3182 = vmatpush1.msra.mxu0 0.0
        %3183 = vmatprep.subr.mxu0 0.0
        %3184 = vmatpush1.msra.mxu0 0.0
        %3185 = vmatprep.subr.mxu0 0.0
        %3186 = vmatpush1.msra.mxu0 0.0
        %3187 = vmatprep.subr.mxu0 0.0
        %3188 = vmatpush1.msra.mxu0 0.0
        %3189 = vmatprep.subr.mxu0 0.0
        %3190 = vmatpush1.msra.mxu0 0.0
        %3191 = vmatprep.subr.mxu0 0.0
        %3192 = vmatpush1.msra.mxu0 0.0
        %3193 = vmatprep.subr.mxu0 0.0
        %3194 = vmatpush1.msra.mxu0 0.0
        %3195 = vmatprep.subr.mxu0 0.0
        %3196 = vmatpush1.msra.mxu0 %v313
        %3197 = vmatprep.subr.mxu0 0.0
        %3198 = vmatpush1.msra.mxu0 %v312
        %3199 = vmatprep.subr.mxu0 0.0
        %3200 = vmatpush2.msra.mxu0 0.0
        %3201 = vmatprep.subr.mxu0 0.0
        %3202 = vmatpush2.msra.mxu0 0.0
        %3203 = vmatprep.subr.mxu0 0.0
        %3204 = vmatpush2.msra.mxu0 0.0
        %3205 = vmatprep.subr.mxu0 0.0
        %3206 = vmatpush2.msra.mxu0 0.0
        %3207 = vmatprep.subr.mxu0 0.0
        %3208 = vmatpush2.msra.mxu0 0.0
        %3209 = vmatprep.subr.mxu0 0.0
        %3210 = vmatpush2.msra.mxu0 0.0
        %3211 = vmatprep.subr.mxu0 0.0
        %3212 = vmatpush2.msra.mxu0 0.0
        %3213 = vmatprep.subr.mxu0 0.0
        %3214 = vmatpush2.msra.mxu0 0.0
        %3215 = vmatprep.subr.mxu0 0.0
        %3216 = vmatpush2.msra.mxu0 0.0
        %3217 = vmatprep.subr.mxu0 0.0
        %3218 = vmatpush2.msra.mxu0 0.0
        %3219 = vmatprep.subr.mxu0 0.0
        %3220 = vmatpush2.msra.mxu0 0.0
        %3221 = vmatprep.subr.mxu0 0.0
        %3222 = vmatpush2.msra.mxu0 0.0
        %3223 = vmatprep.subr.mxu0 0.0
        %3224 = vmatpush2.msra.mxu0 0.0
        %3225 = vmatprep.subr.mxu0 0.0
        %3226 = vmatpush2.msra.mxu0 0.0
        %3227 = vmatprep.subr.mxu0 0.0
        %3228 = vmatpush2.msra.mxu0 0.0
        %3229 = vmatprep.subr.mxu0 0.0
        %3230 = vmatpush2.msra.mxu0 0.0
        %3231 = vmatprep.mubr.f32.mxu0 0.0
        %3232 = vmatmul.mubr.f32.gmra.mxu0 %v2826
        %v3233 = vpop.f32.mrf.mxu0
        %v3234 = vadd.f32 0.0, %v3233
        %v3235 = vpop.f32.mrf.mxu0
        %3236 = vmatprep.mubr.f32.mxu0 0.0
        %3237 = vmatmul.mubr.f32.gmra.mxu0 %v2829
        %v3238 = vpop.f32.mrf.mxu0
        %v3239 = vadd.f32 0.0, %v3238
        %v3240 = vpop.f32.mrf.mxu0
        %3241 = vmatprep.mubr.f32.mxu0 0.0
        %3242 = vmatmul.mubr.f32.gmra.mxu0 %v2832
        %v3243 = vpop.f32.mrf.mxu0
        %v3244 = vadd.f32 0.0, %v3243
        %v3245 = vpop.f32.mrf.mxu0
        %3246 = vmatprep.mubr.f32.mxu0 0.0
        %3247 = vmatmul.mubr.f32.gmra.mxu0 %v2835
        %v3248 = vpop.f32.mrf.mxu0
        %v3249 = vadd.f32 0.0, %v3248
        %v3250 = vpop.f32.mrf.mxu0
        %3251 = vdwg.mxu0
        %s3252 = sld [smem:[#allocation7 + $0xe]]
        %v3253 = vstv %s3252
        %v3254 = vmul.f32 %v3253, %v3234
        %v3255 = vmul.f32 %v3253, %v3239
        %v3256 = vmul.f32 %v3253, %v3244
        %v3257 = vmul.f32 %v3253, %v3249
        %v3258 = vadd.f32 %v3093, %v3254
        %v3259 = vadd.f32 %v3094, %v3255
        %v3260 = vadd.f32 %v3095, %v3256
        %v3261 = vadd.f32 %v3096, %v3257
        %s3262 = sld [smem:[#allocation7 + $0x32]]
        %v3263 = vstv %s3262
        %v3264 = vmul.f32 %v3263, %v3234
        %v3265 = vmul.f32 %v3263, %v3239
        %v3266 = vmul.f32 %v3263, %v3244
        %v3267 = vmul.f32 %v3263, %v3249
        %v3268 = vadd.f32 %v3103, %v3264
        %v3269 = vadd.f32 %v3104, %v3265
        %v3270 = vadd.f32 %v3105, %v3266
        %v3271 = vadd.f32 %v3106, %v3267
        %s3272 = sld [smem:[#allocation7 + $0x56]]
        %v3273 = vstv %s3272
        %v3274 = vmul.f32 %v3273, %v3234
        %v3275 = vmul.f32 %v3273, %v3239
        %v3276 = vmul.f32 %v3273, %v3244
        %v3277 = vmul.f32 %v3273, %v3249
        %v3278 = vadd.f32 %v3113, %v3274
        %v3279 = vadd.f32 %v3114, %v3275
        %v3280 = vadd.f32 %v3115, %v3276
        %v3281 = vadd.f32 %v3116, %v3277
        %s3282 = sld [smem:[#allocation7 + $0x7a]]
        %v3283 = vstv %s3282
        %v3284 = vmul.f32 %v3283, %v3234
        %v3285 = vmul.f32 %v3283, %v3239
        %v3286 = vmul.f32 %v3283, %v3244
        %v3287 = vmul.f32 %v3283, %v3249
        %v3288 = vadd.f32 %v3123, %v3284
        %v3289 = vadd.f32 %v3124, %v3285
        %v3290 = vadd.f32 %v3125, %v3286
        %v3291 = vadd.f32 %v3126, %v3287
        %s3292 = sld [smem:[#allocation7 + $0x9e]]
        %v3293 = vstv %s3292
        %v3294 = vmul.f32 %v3293, %v3234
        %v3295 = vmul.f32 %v3293, %v3239
        %v3296 = vmul.f32 %v3293, %v3244
        %v3297 = vmul.f32 %v3293, %v3249
        %v3298 = vadd.f32 %v3133, %v3294
        %v3299 = vadd.f32 %v3134, %v3295
        %v3300 = vadd.f32 %v3135, %v3296
        %v3301 = vadd.f32 %v3136, %v3297
        %s3302 = sld [smem:[#allocation7 + $0xc2]]
        %v3303 = vstv %s3302
        %v3304 = vmul.f32 %v3303, %v3234
        %v3305 = vmul.f32 %v3303, %v3239
        %v3306 = vmul.f32 %v3303, %v3244
        %v3307 = vmul.f32 %v3303, %v3249
        %v3308 = vadd.f32 %v3143, %v3304
        %v3309 = vadd.f32 %v3144, %v3305
        %v3310 = vadd.f32 %v3145, %v3306
        %v3311 = vadd.f32 %v3146, %v3307
        %s3312 = sld [smem:[#allocation7 + $0xe6]]
        %v3313 = vstv %s3312
        %v3314 = vmul.f32 %v3313, %v3234
        %v3315 = vmul.f32 %v3313, %v3239
        %v3316 = vmul.f32 %v3313, %v3244
        %v3317 = vmul.f32 %v3313, %v3249
        %v3318 = vadd.f32 %v3153, %v3314
        %v3319 = vadd.f32 %v3154, %v3315
        %v3320 = vadd.f32 %v3155, %v3316
        %v3321 = vadd.f32 %v3156, %v3317
        %s3322 = sld [smem:[#allocation7 + $0x10a]]
        %v3323 = vstv %s3322
        %v3324 = vmul.f32 %v3323, %v3234
        %v3325 = vmul.f32 %v3323, %v3239
        %v3326 = vmul.f32 %v3323, %v3244
        %v3327 = vmul.f32 %v3323, %v3249
        %v3328 = vadd.f32 %v3163, %v3324
        %v3329 = vadd.f32 %v3164, %v3325
        %v3330 = vadd.f32 %v3165, %v3326
        %v3331 = vadd.f32 %v3166, %v3327
        %3332 = vmatprep.subr.mxu0 0.0
        %3333 = vmatpush1.msra.mxu0 0.0
        %3334 = vmatprep.subr.mxu0 0.0
        %3335 = vmatpush1.msra.mxu0 0.0
        %3336 = vmatprep.subr.mxu0 0.0
        %3337 = vmatpush1.msra.mxu0 0.0
        %3338 = vmatprep.subr.mxu0 0.0
        %3339 = vmatpush1.msra.mxu0 0.0
        %3340 = vmatprep.subr.mxu0 0.0
        %3341 = vmatpush1.msra.mxu0 0.0
        %3342 = vmatprep.subr.mxu0 0.0
        %3343 = vmatpush1.msra.mxu0 0.0
        %3344 = vmatprep.subr.mxu0 0.0
        %3345 = vmatpush1.msra.mxu0 0.0
        %3346 = vmatprep.subr.mxu0 0.0
        %3347 = vmatpush1.msra.mxu0 0.0
        %3348 = vmatprep.subr.mxu0 0.0
        %3349 = vmatpush1.msra.mxu0 0.0
        %3350 = vmatprep.subr.mxu0 0.0
        %3351 = vmatpush1.msra.mxu0 0.0
        %3352 = vmatprep.subr.mxu0 0.0
        %3353 = vmatpush1.msra.mxu0 0.0
        %3354 = vmatprep.subr.mxu0 0.0
        %3355 = vmatpush1.msra.mxu0 0.0
        %3356 = vmatprep.subr.mxu0 0.0
        %3357 = vmatpush1.msra.mxu0 0.0
        %3358 = vmatprep.subr.mxu0 0.0
        %3359 = vmatpush1.msra.mxu0 0.0
        %3360 = vmatprep.subr.mxu0 0.0
        %3361 = vmatpush1.msra.mxu0 %v2147
        %3362 = vmatprep.subr.mxu0 0.0
        %3363 = vmatpush1.msra.mxu0 %v2146
        %3364 = vmatprep.subr.mxu0 0.0
        %3365 = vmatpush2.msra.mxu0 0.0
        %3366 = vmatprep.subr.mxu0 0.0
        %3367 = vmatpush2.msra.mxu0 0.0
        %3368 = vmatprep.subr.mxu0 0.0
        %3369 = vmatpush2.msra.mxu0 0.0
        %3370 = vmatprep.subr.mxu0 0.0
        %3371 = vmatpush2.msra.mxu0 0.0
        %3372 = vmatprep.subr.mxu0 0.0
        %3373 = vmatpush2.msra.mxu0 0.0
        %3374 = vmatprep.subr.mxu0 0.0
        %3375 = vmatpush2.msra.mxu0 0.0
        %3376 = vmatprep.subr.mxu0 0.0
        %3377 = vmatpush2.msra.mxu0 0.0
        %3378 = vmatprep.subr.mxu0 0.0
        %3379 = vmatpush2.msra.mxu0 0.0
        %3380 = vmatprep.subr.mxu0 0.0
        %3381 = vmatpush2.msra.mxu0 0.0
        %3382 = vmatprep.subr.mxu0 0.0
        %3383 = vmatpush2.msra.mxu0 0.0
        %3384 = vmatprep.subr.mxu0 0.0
        %3385 = vmatpush2.msra.mxu0 0.0
        %3386 = vmatprep.subr.mxu0 0.0
        %3387 = vmatpush2.msra.mxu0 0.0
        %3388 = vmatprep.subr.mxu0 0.0
        %3389 = vmatpush2.msra.mxu0 0.0
        %3390 = vmatprep.subr.mxu0 0.0
        %3391 = vmatpush2.msra.mxu0 0.0
        %3392 = vmatprep.subr.mxu0 0.0
        %3393 = vmatpush2.msra.mxu0 0.0
        %3394 = vmatprep.subr.mxu0 0.0
        %3395 = vmatpush2.msra.mxu0 0.0
        %3396 = vmatprep.mubr.f32.mxu0 0.0
        %3397 = vmatmul.mubr.f32.gmra.mxu0 %v1542
        %v3398 = vpop.f32.mrf.mxu0
        %v3399 = vadd.f32 0.0, %v3398
        %v3400 = vpop.f32.mrf.mxu0
        %3401 = vmatprep.mubr.f32.mxu0 0.0
        %3402 = vmatmul.mubr.f32.gmra.mxu0 %v1545
        %v3403 = vpop.f32.mrf.mxu0
        %v3404 = vadd.f32 0.0, %v3403
        %v3405 = vpop.f32.mrf.mxu0
        %3406 = vmatprep.mubr.f32.mxu0 0.0
        %3407 = vmatmul.mubr.f32.gmra.mxu0 %v1548
        %v3408 = vpop.f32.mrf.mxu0
        %v3409 = vadd.f32 0.0, %v3408
        %v3410 = vpop.f32.mrf.mxu0
        %3411 = vmatprep.mubr.f32.mxu0 0.0
        %3412 = vmatmul.mubr.f32.gmra.mxu0 %v1551
        %v3413 = vpop.f32.mrf.mxu0
        %v3414 = vadd.f32 0.0, %v3413
        %v3415 = vpop.f32.mrf.mxu0
        %3416 = vdwg.mxu0
        %v3418 = vsel %vm332, %v3399, 0
        %v3421 = vsel %vm332, %v3404, 0
        %v3424 = vsel %vm332, %v3409, 0
        %v3427 = vsel %vm332, %v3414, 0
        %3429 = vmatprep.subr.mxu0 0.0
        %3430 = vmatpush1.msra.mxu0 0.0
        %3431 = vmatprep.subr.mxu0 0.0
        %3432 = vmatpush1.msra.mxu0 0.0
        %3433 = vmatprep.subr.mxu0 0.0
        %3434 = vmatpush1.msra.mxu0 0.0
        %3435 = vmatprep.subr.mxu0 0.0
        %3436 = vmatpush1.msra.mxu0 0.0
        %3437 = vmatprep.subr.mxu0 0.0
        %3438 = vmatpush1.msra.mxu0 0.0
        %3439 = vmatprep.subr.mxu0 0.0
        %3440 = vmatpush1.msra.mxu0 0.0
        %3441 = vmatprep.subr.mxu0 0.0
        %3442 = vmatpush1.msra.mxu0 0.0
        %3443 = vmatprep.subr.mxu0 0.0
        %3444 = vmatpush1.msra.mxu0 0.0
        %3445 = vmatprep.subr.mxu0 0.0
        %3446 = vmatpush1.msra.mxu0 0.0
        %3447 = vmatprep.subr.mxu0 0.0
        %3448 = vmatpush1.msra.mxu0 0.0
        %3449 = vmatprep.subr.mxu0 0.0
        %3450 = vmatpush1.msra.mxu0 0.0
        %3451 = vmatprep.subr.mxu0 0.0
        %3452 = vmatpush1.msra.mxu0 0.0
        %3453 = vmatprep.subr.mxu0 0.0
        %3454 = vmatpush1.msra.mxu0 0.0
        %3455 = vmatprep.subr.mxu0 0.0
        %3456 = vmatpush1.msra.mxu0 0.0
        %3457 = vmatprep.subr.mxu0 0.0
        %3458 = vmatpush1.msra.mxu0 %v295
        %3459 = vmatprep.subr.mxu0 0.0
        %3460 = vmatpush1.msra.mxu0 %v294
        %3461 = vmatprep.subr.mxu0 0.0
        %3462 = vmatpush2.msra.mxu0 0.0
        %3463 = vmatprep.subr.mxu0 0.0
        %3464 = vmatpush2.msra.mxu0 0.0
        %3465 = vmatprep.subr.mxu0 0.0
        %3466 = vmatpush2.msra.mxu0 0.0
        %3467 = vmatprep.subr.mxu0 0.0
        %3468 = vmatpush2.msra.mxu0 0.0
        %3469 = vmatprep.subr.mxu0 0.0
        %3470 = vmatpush2.msra.mxu0 0.0
        %3471 = vmatprep.subr.mxu0 0.0
        %3472 = vmatpush2.msra.mxu0 0.0
        %3473 = vmatprep.subr.mxu0 0.0
        %3474 = vmatpush2.msra.mxu0 0.0
        %3475 = vmatprep.subr.mxu0 0.0
        %3476 = vmatpush2.msra.mxu0 0.0
        %3477 = vmatprep.subr.mxu0 0.0
        %3478 = vmatpush2.msra.mxu0 0.0
        %3479 = vmatprep.subr.mxu0 0.0
        %3480 = vmatpush2.msra.mxu0 0.0
        %3481 = vmatprep.subr.mxu0 0.0
        %3482 = vmatpush2.msra.mxu0 0.0
        %3483 = vmatprep.subr.mxu0 0.0
        %3484 = vmatpush2.msra.mxu0 0.0
        %3485 = vmatprep.subr.mxu0 0.0
        %3486 = vmatpush2.msra.mxu0 0.0
        %3487 = vmatprep.subr.mxu0 0.0
        %3488 = vmatpush2.msra.mxu0 0.0
        %3489 = vmatprep.subr.mxu0 0.0
        %3490 = vmatpush2.msra.mxu0 0.0
        %3491 = vmatprep.subr.mxu0 0.0
        %3492 = vmatpush2.msra.mxu0 0.0
        %3493 = vmatprep.mubr.f32.mxu0 0.0
        %3494 = vmatmul.mubr.f32.gmra.mxu0 %v3418
        %v3495 = vpop.f32.mrf.mxu0
        %v3496 = vadd.f32 0.0, %v3495
        %v3497 = vpop.f32.mrf.mxu0
        %3498 = vmatprep.mubr.f32.mxu0 0.0
        %3499 = vmatmul.mubr.f32.gmra.mxu0 %v3421
        %v3500 = vpop.f32.mrf.mxu0
        %v3501 = vadd.f32 0.0, %v3500
        %v3502 = vpop.f32.mrf.mxu0
        %3503 = vmatprep.mubr.f32.mxu0 0.0
        %3504 = vmatmul.mubr.f32.gmra.mxu0 %v3424
        %v3505 = vpop.f32.mrf.mxu0
        %v3506 = vadd.f32 0.0, %v3505
        %v3507 = vpop.f32.mrf.mxu0
        %3508 = vmatprep.mubr.f32.mxu0 0.0
        %3509 = vmatmul.mubr.f32.gmra.mxu0 %v3427
        %v3510 = vpop.f32.mrf.mxu0
        %v3511 = vadd.f32 0.0, %v3510
        %v3512 = vpop.f32.mrf.mxu0
        %3513 = vdwg.mxu0
        %s3514 = sld [smem:[#allocation7 + $0xf]]
        %v3515 = vstv %s3514
        %v3516 = vmul.f32 %v3515, %v3496
        %v3517 = vmul.f32 %v3515, %v3501
        %v3518 = vmul.f32 %v3515, %v3506
        %v3519 = vmul.f32 %v3515, %v3511
        %v3520 = vadd.f32 %v3258, %v3516
        %v3521 = vadd.f32 %v3259, %v3517
        %v3522 = vadd.f32 %v3260, %v3518
        %v3523 = vadd.f32 %v3261, %v3519
        %s3524 = sld [smem:[#allocation7 + $0x33]]
        %v3525 = vstv %s3524
        %v3526 = vmul.f32 %v3525, %v3496
        %v3527 = vmul.f32 %v3525, %v3501
        %v3528 = vmul.f32 %v3525, %v3506
        %v3529 = vmul.f32 %v3525, %v3511
        %v3530 = vadd.f32 %v3268, %v3526
        %v3531 = vadd.f32 %v3269, %v3527
        %v3532 = vadd.f32 %v3270, %v3528
        %v3533 = vadd.f32 %v3271, %v3529
        %s3534 = sld [smem:[#allocation7 + $0x57]]
        %v3535 = vstv %s3534
        %v3536 = vmul.f32 %v3535, %v3496
        %v3537 = vmul.f32 %v3535, %v3501
        %v3538 = vmul.f32 %v3535, %v3506
        %v3539 = vmul.f32 %v3535, %v3511
        %v3540 = vadd.f32 %v3278, %v3536
        %v3541 = vadd.f32 %v3279, %v3537
        %v3542 = vadd.f32 %v3280, %v3538
        %v3543 = vadd.f32 %v3281, %v3539
        %s3544 = sld [smem:[#allocation7 + $0x7b]]
        %v3545 = vstv %s3544
        %v3546 = vmul.f32 %v3545, %v3496
        %v3547 = vmul.f32 %v3545, %v3501
        %v3548 = vmul.f32 %v3545, %v3506
        %v3549 = vmul.f32 %v3545, %v3511
        %v3550 = vadd.f32 %v3288, %v3546
        %v3551 = vadd.f32 %v3289, %v3547
        %v3552 = vadd.f32 %v3290, %v3548
        %v3553 = vadd.f32 %v3291, %v3549
        %s3554 = sld [smem:[#allocation7 + $0x9f]]
        %v3555 = vstv %s3554
        %v3556 = vmul.f32 %v3555, %v3496
        %v3557 = vmul.f32 %v3555, %v3501
        %v3558 = vmul.f32 %v3555, %v3506
        %v3559 = vmul.f32 %v3555, %v3511
        %v3560 = vadd.f32 %v3298, %v3556
        %v3561 = vadd.f32 %v3299, %v3557
        %v3562 = vadd.f32 %v3300, %v3558
        %v3563 = vadd.f32 %v3301, %v3559
        %s3564 = sld [smem:[#allocation7 + $0xc3]]
        %v3565 = vstv %s3564
        %v3566 = vmul.f32 %v3565, %v3496
        %v3567 = vmul.f32 %v3565, %v3501
        %v3568 = vmul.f32 %v3565, %v3506
        %v3569 = vmul.f32 %v3565, %v3511
        %v3570 = vadd.f32 %v3308, %v3566
        %v3571 = vadd.f32 %v3309, %v3567
        %v3572 = vadd.f32 %v3310, %v3568
        %v3573 = vadd.f32 %v3311, %v3569
        %s3574 = sld [smem:[#allocation7 + $0xe7]]
        %v3575 = vstv %s3574
        %v3576 = vmul.f32 %v3575, %v3496
        %v3577 = vmul.f32 %v3575, %v3501
        %v3578 = vmul.f32 %v3575, %v3506
        %v3579 = vmul.f32 %v3575, %v3511
        %v3580 = vadd.f32 %v3318, %v3576
        %v3581 = vadd.f32 %v3319, %v3577
        %v3582 = vadd.f32 %v3320, %v3578
        %v3583 = vadd.f32 %v3321, %v3579
        %s3584 = sld [smem:[#allocation7 + $0x10b]]
        %v3585 = vstv %s3584
        %v3586 = vmul.f32 %v3585, %v3496
        %v3587 = vmul.f32 %v3585, %v3501
        %v3588 = vmul.f32 %v3585, %v3506
        %v3589 = vmul.f32 %v3585, %v3511
        %v3590 = vadd.f32 %v3328, %v3586
        %v3591 = vadd.f32 %v3329, %v3587
        %v3592 = vadd.f32 %v3330, %v3588
        %v3593 = vadd.f32 %v3331, %v3589
        %3594 = vmatprep.subr.mxu0 0.0
        %3595 = vmatpush1.msra.mxu0 0.0
        %3596 = vmatprep.subr.mxu0 0.0
        %3597 = vmatpush1.msra.mxu0 0.0
        %3598 = vmatprep.subr.mxu0 0.0
        %3599 = vmatpush1.msra.mxu0 0.0
        %3600 = vmatprep.subr.mxu0 0.0
        %3601 = vmatpush1.msra.mxu0 0.0
        %3602 = vmatprep.subr.mxu0 0.0
        %3603 = vmatpush1.msra.mxu0 0.0
        %3604 = vmatprep.subr.mxu0 0.0
        %3605 = vmatpush1.msra.mxu0 0.0
        %3606 = vmatprep.subr.mxu0 0.0
        %3607 = vmatpush1.msra.mxu0 0.0
        %3608 = vmatprep.subr.mxu0 0.0
        %3609 = vmatpush1.msra.mxu0 0.0
        %3610 = vmatprep.subr.mxu0 0.0
        %3611 = vmatpush1.msra.mxu0 0.0
        %3612 = vmatprep.subr.mxu0 0.0
        %3613 = vmatpush1.msra.mxu0 0.0
        %3614 = vmatprep.subr.mxu0 0.0
        %3615 = vmatpush1.msra.mxu0 0.0
        %3616 = vmatprep.subr.mxu0 0.0
        %3617 = vmatpush1.msra.mxu0 0.0
        %3618 = vmatprep.subr.mxu0 0.0
        %3619 = vmatpush1.msra.mxu0 0.0
        %3620 = vmatprep.subr.mxu0 0.0
        %3621 = vmatpush1.msra.mxu0 0.0
        %3622 = vmatprep.subr.mxu0 0.0
        %3623 = vmatpush1.msra.mxu0 %v303
        %3624 = vmatprep.subr.mxu0 0.0
        %3625 = vmatpush1.msra.mxu0 %v302
        %3626 = vmatprep.subr.mxu0 0.0
        %3627 = vmatpush2.msra.mxu0 0.0
        %3628 = vmatprep.subr.mxu0 0.0
        %3629 = vmatpush2.msra.mxu0 0.0
        %3630 = vmatprep.subr.mxu0 0.0
        %3631 = vmatpush2.msra.mxu0 0.0
        %3632 = vmatprep.subr.mxu0 0.0
        %3633 = vmatpush2.msra.mxu0 0.0
        %3634 = vmatprep.subr.mxu0 0.0
        %3635 = vmatpush2.msra.mxu0 0.0
        %3636 = vmatprep.subr.mxu0 0.0
        %3637 = vmatpush2.msra.mxu0 0.0
        %3638 = vmatprep.subr.mxu0 0.0
        %3639 = vmatpush2.msra.mxu0 0.0
        %3640 = vmatprep.subr.mxu0 0.0
        %3641 = vmatpush2.msra.mxu0 0.0
        %3642 = vmatprep.subr.mxu0 0.0
        %3643 = vmatpush2.msra.mxu0 0.0
        %3644 = vmatprep.subr.mxu0 0.0
        %3645 = vmatpush2.msra.mxu0 0.0
        %3646 = vmatprep.subr.mxu0 0.0
        %3647 = vmatpush2.msra.mxu0 0.0
        %3648 = vmatprep.subr.mxu0 0.0
        %3649 = vmatpush2.msra.mxu0 0.0
        %3650 = vmatprep.subr.mxu0 0.0
        %3651 = vmatpush2.msra.mxu0 0.0
        %3652 = vmatprep.subr.mxu0 0.0
        %3653 = vmatpush2.msra.mxu0 0.0
        %3654 = vmatprep.subr.mxu0 0.0
        %3655 = vmatpush2.msra.mxu0 0.0
        %3656 = vmatprep.subr.mxu0 0.0
        %3657 = vmatpush2.msra.mxu0 0.0
        %3658 = vmatprep.mubr.f32.mxu0 0.0
        %3659 = vmatmul.mubr.f32.gmra.mxu0 %v3418
        %v3660 = vpop.f32.mrf.mxu0
        %v3661 = vadd.f32 0.0, %v3660
        %v3662 = vpop.f32.mrf.mxu0
        %3663 = vmatprep.mubr.f32.mxu0 0.0
        %3664 = vmatmul.mubr.f32.gmra.mxu0 %v3421
        %v3665 = vpop.f32.mrf.mxu0
        %v3666 = vadd.f32 0.0, %v3665
        %v3667 = vpop.f32.mrf.mxu0
        %3668 = vmatprep.mubr.f32.mxu0 0.0
        %3669 = vmatmul.mubr.f32.gmra.mxu0 %v3424
        %v3670 = vpop.f32.mrf.mxu0
        %v3671 = vadd.f32 0.0, %v3670
        %v3672 = vpop.f32.mrf.mxu0
        %3673 = vmatprep.mubr.f32.mxu0 0.0
        %3674 = vmatmul.mubr.f32.gmra.mxu0 %v3427
        %v3675 = vpop.f32.mrf.mxu0
        %v3676 = vadd.f32 0.0, %v3675
        %v3677 = vpop.f32.mrf.mxu0
        %3678 = vdwg.mxu0
        %s3679 = sld [smem:[#allocation7 + $0x10]]
        %v3680 = vstv %s3679
        %v3681 = vmul.f32 %v3680, %v3661
        %v3682 = vmul.f32 %v3680, %v3666
        %v3683 = vmul.f32 %v3680, %v3671
        %v3684 = vmul.f32 %v3680, %v3676
        %v3685 = vadd.f32 %v3520, %v3681
        %v3686 = vadd.f32 %v3521, %v3682
        %v3687 = vadd.f32 %v3522, %v3683
        %v3688 = vadd.f32 %v3523, %v3684
        %s3689 = sld [smem:[#allocation7 + $0x34]]
        %v3690 = vstv %s3689
        %v3691 = vmul.f32 %v3690, %v3661
        %v3692 = vmul.f32 %v3690, %v3666
        %v3693 = vmul.f32 %v3690, %v3671
        %v3694 = vmul.f32 %v3690, %v3676
        %v3695 = vadd.f32 %v3530, %v3691
        %v3696 = vadd.f32 %v3531, %v3692
        %v3697 = vadd.f32 %v3532, %v3693
        %v3698 = vadd.f32 %v3533, %v3694
        %s3699 = sld [smem:[#allocation7 + $0x58]]
        %v3700 = vstv %s3699
        %v3701 = vmul.f32 %v3700, %v3661
        %v3702 = vmul.f32 %v3700, %v3666
        %v3703 = vmul.f32 %v3700, %v3671
        %v3704 = vmul.f32 %v3700, %v3676
        %v3705 = vadd.f32 %v3540, %v3701
        %v3706 = vadd.f32 %v3541, %v3702
        %v3707 = vadd.f32 %v3542, %v3703
        %v3708 = vadd.f32 %v3543, %v3704
        %s3709 = sld [smem:[#allocation7 + $0x7c]]
        %v3710 = vstv %s3709
        %v3711 = vmul.f32 %v3710, %v3661
        %v3712 = vmul.f32 %v3710, %v3666
        %v3713 = vmul.f32 %v3710, %v3671
        %v3714 = vmul.f32 %v3710, %v3676
        %v3715 = vadd.f32 %v3550, %v3711
        %v3716 = vadd.f32 %v3551, %v3712
        %v3717 = vadd.f32 %v3552, %v3713
        %v3718 = vadd.f32 %v3553, %v3714
        %s3719 = sld [smem:[#allocation7 + $0xa0]]
        %v3720 = vstv %s3719
        %v3721 = vmul.f32 %v3720, %v3661
        %v3722 = vmul.f32 %v3720, %v3666
        %v3723 = vmul.f32 %v3720, %v3671
        %v3724 = vmul.f32 %v3720, %v3676
        %v3725 = vadd.f32 %v3560, %v3721
        %v3726 = vadd.f32 %v3561, %v3722
        %v3727 = vadd.f32 %v3562, %v3723
        %v3728 = vadd.f32 %v3563, %v3724
        %s3729 = sld [smem:[#allocation7 + $0xc4]]
        %v3730 = vstv %s3729
        %v3731 = vmul.f32 %v3730, %v3661
        %v3732 = vmul.f32 %v3730, %v3666
        %v3733 = vmul.f32 %v3730, %v3671
        %v3734 = vmul.f32 %v3730, %v3676
        %v3735 = vadd.f32 %v3570, %v3731
        %v3736 = vadd.f32 %v3571, %v3732
        %v3737 = vadd.f32 %v3572, %v3733
        %v3738 = vadd.f32 %v3573, %v3734
        %s3739 = sld [smem:[#allocation7 + $0xe8]]
        %v3740 = vstv %s3739
        %v3741 = vmul.f32 %v3740, %v3661
        %v3742 = vmul.f32 %v3740, %v3666
        %v3743 = vmul.f32 %v3740, %v3671
        %v3744 = vmul.f32 %v3740, %v3676
        %v3745 = vadd.f32 %v3580, %v3741
        %v3746 = vadd.f32 %v3581, %v3742
        %v3747 = vadd.f32 %v3582, %v3743
        %v3748 = vadd.f32 %v3583, %v3744
        %s3749 = sld [smem:[#allocation7 + $0x10c]]
        %v3750 = vstv %s3749
        %v3751 = vmul.f32 %v3750, %v3661
        %v3752 = vmul.f32 %v3750, %v3666
        %v3753 = vmul.f32 %v3750, %v3671
        %v3754 = vmul.f32 %v3750, %v3676
        %v3755 = vadd.f32 %v3590, %v3751
        %v3756 = vadd.f32 %v3591, %v3752
        %v3757 = vadd.f32 %v3592, %v3753
        %v3758 = vadd.f32 %v3593, %v3754
        %3759 = vmatprep.subr.mxu0 0.0
        %3760 = vmatpush1.msra.mxu0 0.0
        %3761 = vmatprep.subr.mxu0 0.0
        %3762 = vmatpush1.msra.mxu0 0.0
        %3763 = vmatprep.subr.mxu0 0.0
        %3764 = vmatpush1.msra.mxu0 0.0
        %3765 = vmatprep.subr.mxu0 0.0
        %3766 = vmatpush1.msra.mxu0 0.0
        %3767 = vmatprep.subr.mxu0 0.0
        %3768 = vmatpush1.msra.mxu0 0.0
        %3769 = vmatprep.subr.mxu0 0.0
        %3770 = vmatpush1.msra.mxu0 0.0
        %3771 = vmatprep.subr.mxu0 0.0
        %3772 = vmatpush1.msra.mxu0 0.0
        %3773 = vmatprep.subr.mxu0 0.0
        %3774 = vmatpush1.msra.mxu0 0.0
        %3775 = vmatprep.subr.mxu0 0.0
        %3776 = vmatpush1.msra.mxu0 0.0
        %3777 = vmatprep.subr.mxu0 0.0
        %3778 = vmatpush1.msra.mxu0 0.0
        %3779 = vmatprep.subr.mxu0 0.0
        %3780 = vmatpush1.msra.mxu0 0.0
        %3781 = vmatprep.subr.mxu0 0.0
        %3782 = vmatpush1.msra.mxu0 0.0
        %3783 = vmatprep.subr.mxu0 0.0
        %3784 = vmatpush1.msra.mxu0 0.0
        %3785 = vmatprep.subr.mxu0 0.0
        %3786 = vmatpush1.msra.mxu0 0.0
        %3787 = vmatprep.subr.mxu0 0.0
        %3788 = vmatpush1.msra.mxu0 %v313
        %3789 = vmatprep.subr.mxu0 0.0
        %3790 = vmatpush1.msra.mxu0 %v312
        %3791 = vmatprep.subr.mxu0 0.0
        %3792 = vmatpush2.msra.mxu0 0.0
        %3793 = vmatprep.subr.mxu0 0.0
        %3794 = vmatpush2.msra.mxu0 0.0
        %3795 = vmatprep.subr.mxu0 0.0
        %3796 = vmatpush2.msra.mxu0 0.0
        %3797 = vmatprep.subr.mxu0 0.0
        %3798 = vmatpush2.msra.mxu0 0.0
        %3799 = vmatprep.subr.mxu0 0.0
        %3800 = vmatpush2.msra.mxu0 0.0
        %3801 = vmatprep.subr.mxu0 0.0
        %3802 = vmatpush2.msra.mxu0 0.0
        %3803 = vmatprep.subr.mxu0 0.0
        %3804 = vmatpush2.msra.mxu0 0.0
        %3805 = vmatprep.subr.mxu0 0.0
        %3806 = vmatpush2.msra.mxu0 0.0
        %3807 = vmatprep.subr.mxu0 0.0
        %3808 = vmatpush2.msra.mxu0 0.0
        %3809 = vmatprep.subr.mxu0 0.0
        %3810 = vmatpush2.msra.mxu0 0.0
        %3811 = vmatprep.subr.mxu0 0.0
        %3812 = vmatpush2.msra.mxu0 0.0
        %3813 = vmatprep.subr.mxu0 0.0
        %3814 = vmatpush2.msra.mxu0 0.0
        %3815 = vmatprep.subr.mxu0 0.0
        %3816 = vmatpush2.msra.mxu0 0.0
        %3817 = vmatprep.subr.mxu0 0.0
        %3818 = vmatpush2.msra.mxu0 0.0
        %3819 = vmatprep.subr.mxu0 0.0
        %3820 = vmatpush2.msra.mxu0 0.0
        %3821 = vmatprep.subr.mxu0 0.0
        %3822 = vmatpush2.msra.mxu0 0.0
        %3823 = vmatprep.mubr.f32.mxu0 0.0
        %3824 = vmatmul.mubr.f32.gmra.mxu0 %v3418
        %v3825 = vpop.f32.mrf.mxu0
        %v3826 = vadd.f32 0.0, %v3825
        %v3827 = vpop.f32.mrf.mxu0
        %3828 = vmatprep.mubr.f32.mxu0 0.0
        %3829 = vmatmul.mubr.f32.gmra.mxu0 %v3421
        %v3830 = vpop.f32.mrf.mxu0
        %v3831 = vadd.f32 0.0, %v3830
        %v3832 = vpop.f32.mrf.mxu0
        %3833 = vmatprep.mubr.f32.mxu0 0.0
        %3834 = vmatmul.mubr.f32.gmra.mxu0 %v3424
        %v3835 = vpop.f32.mrf.mxu0
        %v3836 = vadd.f32 0.0, %v3835
        %v3837 = vpop.f32.mrf.mxu0
        %3838 = vmatprep.mubr.f32.mxu0 0.0
        %3839 = vmatmul.mubr.f32.gmra.mxu0 %v3427
        %v3840 = vpop.f32.mrf.mxu0
        %v3841 = vadd.f32 0.0, %v3840
        %v3842 = vpop.f32.mrf.mxu0
        %3843 = vdwg.mxu0
        %s3844 = sld [smem:[#allocation7 + $0x11]]
        %v3845 = vstv %s3844
        %v3846 = vmul.f32 %v3845, %v3826
        %v3847 = vmul.f32 %v3845, %v3831
        %v3848 = vmul.f32 %v3845, %v3836
        %v3849 = vmul.f32 %v3845, %v3841
        %v3850 = vadd.f32 %v3685, %v3846
        %v3851 = vadd.f32 %v3686, %v3847
        %v3852 = vadd.f32 %v3687, %v3848
        %v3853 = vadd.f32 %v3688, %v3849
        %s3854 = sld [smem:[#allocation7 + $0x35]]
        %v3855 = vstv %s3854
        %v3856 = vmul.f32 %v3855, %v3826
        %v3857 = vmul.f32 %v3855, %v3831
        %v3858 = vmul.f32 %v3855, %v3836
        %v3859 = vmul.f32 %v3855, %v3841
        %v3860 = vadd.f32 %v3695, %v3856
        %v3861 = vadd.f32 %v3696, %v3857
        %v3862 = vadd.f32 %v3697, %v3858
        %v3863 = vadd.f32 %v3698, %v3859
        %s3864 = sld [smem:[#allocation7 + $0x59]]
        %v3865 = vstv %s3864
        %v3866 = vmul.f32 %v3865, %v3826
        %v3867 = vmul.f32 %v3865, %v3831
        %v3868 = vmul.f32 %v3865, %v3836
        %v3869 = vmul.f32 %v3865, %v3841
        %v3870 = vadd.f32 %v3705, %v3866
        %v3871 = vadd.f32 %v3706, %v3867
        %v3872 = vadd.f32 %v3707, %v3868
        %v3873 = vadd.f32 %v3708, %v3869
        %s3874 = sld [smem:[#allocation7 + $0x7d]]
        %v3875 = vstv %s3874
        %v3876 = vmul.f32 %v3875, %v3826
        %v3877 = vmul.f32 %v3875, %v3831
        %v3878 = vmul.f32 %v3875, %v3836
        %v3879 = vmul.f32 %v3875, %v3841
        %v3880 = vadd.f32 %v3715, %v3876
        %v3881 = vadd.f32 %v3716, %v3877
        %v3882 = vadd.f32 %v3717, %v3878
        %v3883 = vadd.f32 %v3718, %v3879
        %s3884 = sld [smem:[#allocation7 + $0xa1]]
        %v3885 = vstv %s3884
        %v3886 = vmul.f32 %v3885, %v3826
        %v3887 = vmul.f32 %v3885, %v3831
        %v3888 = vmul.f32 %v3885, %v3836
        %v3889 = vmul.f32 %v3885, %v3841
        %v3890 = vadd.f32 %v3725, %v3886
        %v3891 = vadd.f32 %v3726, %v3887
        %v3892 = vadd.f32 %v3727, %v3888
        %v3893 = vadd.f32 %v3728, %v3889
        %s3894 = sld [smem:[#allocation7 + $0xc5]]
        %v3895 = vstv %s3894
        %v3896 = vmul.f32 %v3895, %v3826
        %v3897 = vmul.f32 %v3895, %v3831
        %v3898 = vmul.f32 %v3895, %v3836
        %v3899 = vmul.f32 %v3895, %v3841
        %v3900 = vadd.f32 %v3735, %v3896
        %v3901 = vadd.f32 %v3736, %v3897
        %v3902 = vadd.f32 %v3737, %v3898
        %v3903 = vadd.f32 %v3738, %v3899
        %s3904 = sld [smem:[#allocation7 + $0xe9]]
        %v3905 = vstv %s3904
        %v3906 = vmul.f32 %v3905, %v3826
        %v3907 = vmul.f32 %v3905, %v3831
        %v3908 = vmul.f32 %v3905, %v3836
        %v3909 = vmul.f32 %v3905, %v3841
        %v3910 = vadd.f32 %v3745, %v3906
        %v3911 = vadd.f32 %v3746, %v3907
        %v3912 = vadd.f32 %v3747, %v3908
        %v3913 = vadd.f32 %v3748, %v3909
        %s3914 = sld [smem:[#allocation7 + $0x10d]]
        %v3915 = vstv %s3914
        %v3916 = vmul.f32 %v3915, %v3826
        %v3917 = vmul.f32 %v3915, %v3831
        %v3918 = vmul.f32 %v3915, %v3836
        %v3919 = vmul.f32 %v3915, %v3841
        %v3920 = vadd.f32 %v3755, %v3916
        %v3921 = vadd.f32 %v3756, %v3917
        %v3922 = vadd.f32 %v3757, %v3918
        %v3923 = vadd.f32 %v3758, %v3919
        %s3924 = scalar_lea.vmem %s182, 32 [#allocation2]
        %v3925 = vld [vmem:[%s3924] sm:$0xff]
        %v3926 = vld [vmem:[%s3924 + $0x8] sm:$0xff]
        %3927 = vmatprep.subr.mxu0 0.0
        %3928 = vmatpush1.msra.mxu0 0.0
        %3929 = vmatprep.subr.mxu0 0.0
        %3930 = vmatpush1.msra.mxu0 0.0
        %3931 = vmatprep.subr.mxu0 0.0
        %3932 = vmatpush1.msra.mxu0 0.0
        %3933 = vmatprep.subr.mxu0 0.0
        %3934 = vmatpush1.msra.mxu0 0.0
        %3935 = vmatprep.subr.mxu0 0.0
        %3936 = vmatpush1.msra.mxu0 0.0
        %3937 = vmatprep.subr.mxu0 0.0
        %3938 = vmatpush1.msra.mxu0 0.0
        %3939 = vmatprep.subr.mxu0 0.0
        %3940 = vmatpush1.msra.mxu0 0.0
        %3941 = vmatprep.subr.mxu0 0.0
        %3942 = vmatpush1.msra.mxu0 0.0
        %3943 = vmatprep.subr.mxu0 0.0
        %3944 = vmatpush1.msra.mxu0 0.0
        %3945 = vmatprep.subr.mxu0 0.0
        %3946 = vmatpush1.msra.mxu0 0.0
        %3947 = vmatprep.subr.mxu0 0.0
        %3948 = vmatpush1.msra.mxu0 0.0
        %3949 = vmatprep.subr.mxu0 0.0
        %3950 = vmatpush1.msra.mxu0 0.0
        %3951 = vmatprep.subr.mxu0 0.0
        %3952 = vmatpush1.msra.mxu0 0.0
        %3953 = vmatprep.subr.mxu0 0.0
        %3954 = vmatpush1.msra.mxu0 0.0
        %3955 = vmatprep.subr.mxu0 0.0
        %3956 = vmatpush1.msra.mxu0 %v3926
        %3957 = vmatprep.subr.mxu0 0.0
        %3958 = vmatpush1.msra.mxu0 %v3925
        %3959 = vmatprep.subr.mxu0 0.0
        %3960 = vmatpush2.msra.mxu0 0.0
        %3961 = vmatprep.subr.mxu0 0.0
        %3962 = vmatpush2.msra.mxu0 0.0
        %3963 = vmatprep.subr.mxu0 0.0
        %3964 = vmatpush2.msra.mxu0 0.0
        %3965 = vmatprep.subr.mxu0 0.0
        %3966 = vmatpush2.msra.mxu0 0.0
        %3967 = vmatprep.subr.mxu0 0.0
        %3968 = vmatpush2.msra.mxu0 0.0
        %3969 = vmatprep.subr.mxu0 0.0
        %3970 = vmatpush2.msra.mxu0 0.0
        %3971 = vmatprep.subr.mxu0 0.0
        %3972 = vmatpush2.msra.mxu0 0.0
        %3973 = vmatprep.subr.mxu0 0.0
        %3974 = vmatpush2.msra.mxu0 0.0
        %3975 = vmatprep.subr.mxu0 0.0
        %3976 = vmatpush2.msra.mxu0 0.0
        %3977 = vmatprep.subr.mxu0 0.0
        %3978 = vmatpush2.msra.mxu0 0.0
        %3979 = vmatprep.subr.mxu0 0.0
        %3980 = vmatpush2.msra.mxu0 0.0
        %3981 = vmatprep.subr.mxu0 0.0
        %3982 = vmatpush2.msra.mxu0 0.0
        %3983 = vmatprep.subr.mxu0 0.0
        %3984 = vmatpush2.msra.mxu0 0.0
        %3985 = vmatprep.subr.mxu0 0.0
        %3986 = vmatpush2.msra.mxu0 0.0
        %3987 = vmatprep.subr.mxu0 0.0
        %3988 = vmatpush2.msra.mxu0 0.0
        %3989 = vmatprep.subr.mxu0 0.0
        %3990 = vmatpush2.msra.mxu0 0.0
        %3991 = vmatprep.mubr.f32.mxu0 0.0
        %3992 = vmatmul.mubr.f32.gmra.mxu0 %v334
        %v3993 = vpop.f32.mrf.mxu0
        %v3994 = vadd.f32 0.0, %v3993
        %v3995 = vpop.f32.mrf.mxu0
        %3996 = vmatprep.mubr.f32.mxu0 0.0
        %3997 = vmatmul.mubr.f32.gmra.mxu0 %v337
        %v3998 = vpop.f32.mrf.mxu0
        %v3999 = vadd.f32 0.0, %v3998
        %v4000 = vpop.f32.mrf.mxu0
        %4001 = vmatprep.mubr.f32.mxu0 0.0
        %4002 = vmatmul.mubr.f32.gmra.mxu0 %v340
        %v4003 = vpop.f32.mrf.mxu0
        %v4004 = vadd.f32 0.0, %v4003
        %v4005 = vpop.f32.mrf.mxu0
        %4006 = vmatprep.mubr.f32.mxu0 0.0
        %4007 = vmatmul.mubr.f32.gmra.mxu0 %v343
        %v4008 = vpop.f32.mrf.mxu0
        %v4009 = vadd.f32 0.0, %v4008
        %v4010 = vpop.f32.mrf.mxu0
        %4011 = vdwg.mxu0
        %v4013 = vsel %vm332, %v3994, 0
        %v4016 = vsel %vm332, %v3999, 0
        %v4019 = vsel %vm332, %v4004, 0
        %v4022 = vsel %vm332, %v4009, 0
        %4024 = vmatprep.subr.mxu0 0.0
        %4025 = vmatpush1.msra.mxu0 0.0
        %4026 = vmatprep.subr.mxu0 0.0
        %4027 = vmatpush1.msra.mxu0 0.0
        %4028 = vmatprep.subr.mxu0 0.0
        %4029 = vmatpush1.msra.mxu0 0.0
        %4030 = vmatprep.subr.mxu0 0.0
        %4031 = vmatpush1.msra.mxu0 0.0
        %4032 = vmatprep.subr.mxu0 0.0
        %4033 = vmatpush1.msra.mxu0 0.0
        %4034 = vmatprep.subr.mxu0 0.0
        %4035 = vmatpush1.msra.mxu0 0.0
        %4036 = vmatprep.subr.mxu0 0.0
        %4037 = vmatpush1.msra.mxu0 0.0
        %4038 = vmatprep.subr.mxu0 0.0
        %4039 = vmatpush1.msra.mxu0 0.0
        %4040 = vmatprep.subr.mxu0 0.0
        %4041 = vmatpush1.msra.mxu0 0.0
        %4042 = vmatprep.subr.mxu0 0.0
        %4043 = vmatpush1.msra.mxu0 0.0
        %4044 = vmatprep.subr.mxu0 0.0
        %4045 = vmatpush1.msra.mxu0 0.0
        %4046 = vmatprep.subr.mxu0 0.0
        %4047 = vmatpush1.msra.mxu0 0.0
        %4048 = vmatprep.subr.mxu0 0.0
        %4049 = vmatpush1.msra.mxu0 0.0
        %4050 = vmatprep.subr.mxu0 0.0
        %4051 = vmatpush1.msra.mxu0 0.0
        %4052 = vmatprep.subr.mxu0 0.0
        %4053 = vmatpush1.msra.mxu0 %v295
        %4054 = vmatprep.subr.mxu0 0.0
        %4055 = vmatpush1.msra.mxu0 %v294
        %4056 = vmatprep.subr.mxu0 0.0
        %4057 = vmatpush2.msra.mxu0 0.0
        %4058 = vmatprep.subr.mxu0 0.0
        %4059 = vmatpush2.msra.mxu0 0.0
        %4060 = vmatprep.subr.mxu0 0.0
        %4061 = vmatpush2.msra.mxu0 0.0
        %4062 = vmatprep.subr.mxu0 0.0
        %4063 = vmatpush2.msra.mxu0 0.0
        %4064 = vmatprep.subr.mxu0 0.0
        %4065 = vmatpush2.msra.mxu0 0.0
        %4066 = vmatprep.subr.mxu0 0.0
        %4067 = vmatpush2.msra.mxu0 0.0
        %4068 = vmatprep.subr.mxu0 0.0
        %4069 = vmatpush2.msra.mxu0 0.0
        %4070 = vmatprep.subr.mxu0 0.0
        %4071 = vmatpush2.msra.mxu0 0.0
        %4072 = vmatprep.subr.mxu0 0.0
        %4073 = vmatpush2.msra.mxu0 0.0
        %4074 = vmatprep.subr.mxu0 0.0
        %4075 = vmatpush2.msra.mxu0 0.0
        %4076 = vmatprep.subr.mxu0 0.0
        %4077 = vmatpush2.msra.mxu0 0.0
        %4078 = vmatprep.subr.mxu0 0.0
        %4079 = vmatpush2.msra.mxu0 0.0
        %4080 = vmatprep.subr.mxu0 0.0
        %4081 = vmatpush2.msra.mxu0 0.0
        %4082 = vmatprep.subr.mxu0 0.0
        %4083 = vmatpush2.msra.mxu0 0.0
        %4084 = vmatprep.subr.mxu0 0.0
        %4085 = vmatpush2.msra.mxu0 0.0
        %4086 = vmatprep.subr.mxu0 0.0
        %4087 = vmatpush2.msra.mxu0 0.0
        %4088 = vmatprep.mubr.f32.mxu0 0.0
        %4089 = vmatmul.mubr.f32.gmra.mxu0 %v4013
        %v4090 = vpop.f32.mrf.mxu0
        %v4091 = vadd.f32 0.0, %v4090
        %v4092 = vpop.f32.mrf.mxu0
        %4093 = vmatprep.mubr.f32.mxu0 0.0
        %4094 = vmatmul.mubr.f32.gmra.mxu0 %v4016
        %v4095 = vpop.f32.mrf.mxu0
        %v4096 = vadd.f32 0.0, %v4095
        %v4097 = vpop.f32.mrf.mxu0
        %4098 = vmatprep.mubr.f32.mxu0 0.0
        %4099 = vmatmul.mubr.f32.gmra.mxu0 %v4019
        %v4100 = vpop.f32.mrf.mxu0
        %v4101 = vadd.f32 0.0, %v4100
        %v4102 = vpop.f32.mrf.mxu0
        %4103 = vmatprep.mubr.f32.mxu0 0.0
        %4104 = vmatmul.mubr.f32.gmra.mxu0 %v4022
        %v4105 = vpop.f32.mrf.mxu0
        %v4106 = vadd.f32 0.0, %v4105
        %v4107 = vpop.f32.mrf.mxu0
        %4108 = vdwg.mxu0
        %s4109 = sld [smem:[#allocation7 + $0x12]]
        %v4110 = vstv %s4109
        %v4111 = vmul.f32 %v4110, %v4091
        %v4112 = vmul.f32 %v4110, %v4096
        %v4113 = vmul.f32 %v4110, %v4101
        %v4114 = vmul.f32 %v4110, %v4106
        %v4115 = vadd.f32 %v3850, %v4111
        %v4116 = vadd.f32 %v3851, %v4112
        %v4117 = vadd.f32 %v3852, %v4113
        %v4118 = vadd.f32 %v3853, %v4114
        %s4119 = sld [smem:[#allocation7 + $0x36]]
        %v4120 = vstv %s4119
        %v4121 = vmul.f32 %v4120, %v4091
        %v4122 = vmul.f32 %v4120, %v4096
        %v4123 = vmul.f32 %v4120, %v4101
        %v4124 = vmul.f32 %v4120, %v4106
        %v4125 = vadd.f32 %v3860, %v4121
        %v4126 = vadd.f32 %v3861, %v4122
        %v4127 = vadd.f32 %v3862, %v4123
        %v4128 = vadd.f32 %v3863, %v4124
        %s4129 = sld [smem:[#allocation7 + $0x5a]]
        %v4130 = vstv %s4129
        %v4131 = vmul.f32 %v4130, %v4091
        %v4132 = vmul.f32 %v4130, %v4096
        %v4133 = vmul.f32 %v4130, %v4101
        %v4134 = vmul.f32 %v4130, %v4106
        %v4135 = vadd.f32 %v3870, %v4131
        %v4136 = vadd.f32 %v3871, %v4132
        %v4137 = vadd.f32 %v3872, %v4133
        %v4138 = vadd.f32 %v3873, %v4134
        %s4139 = sld [smem:[#allocation7 + $0x7e]]
        %v4140 = vstv %s4139
        %v4141 = vmul.f32 %v4140, %v4091
        %v4142 = vmul.f32 %v4140, %v4096
        %v4143 = vmul.f32 %v4140, %v4101
        %v4144 = vmul.f32 %v4140, %v4106
        %v4145 = vadd.f32 %v3880, %v4141
        %v4146 = vadd.f32 %v3881, %v4142
        %v4147 = vadd.f32 %v3882, %v4143
        %v4148 = vadd.f32 %v3883, %v4144
        %s4149 = sld [smem:[#allocation7 + $0xa2]]
        %v4150 = vstv %s4149
        %v4151 = vmul.f32 %v4150, %v4091
        %v4152 = vmul.f32 %v4150, %v4096
        %v4153 = vmul.f32 %v4150, %v4101
        %v4154 = vmul.f32 %v4150, %v4106
        %v4155 = vadd.f32 %v3890, %v4151
        %v4156 = vadd.f32 %v3891, %v4152
        %v4157 = vadd.f32 %v3892, %v4153
        %v4158 = vadd.f32 %v3893, %v4154
        %s4159 = sld [smem:[#allocation7 + $0xc6]]
        %v4160 = vstv %s4159
        %v4161 = vmul.f32 %v4160, %v4091
        %v4162 = vmul.f32 %v4160, %v4096
        %v4163 = vmul.f32 %v4160, %v4101
        %v4164 = vmul.f32 %v4160, %v4106
        %v4165 = vadd.f32 %v3900, %v4161
        %v4166 = vadd.f32 %v3901, %v4162
        %v4167 = vadd.f32 %v3902, %v4163
        %v4168 = vadd.f32 %v3903, %v4164
        %s4169 = sld [smem:[#allocation7 + $0xea]]
        %v4170 = vstv %s4169
        %v4171 = vmul.f32 %v4170, %v4091
        %v4172 = vmul.f32 %v4170, %v4096
        %v4173 = vmul.f32 %v4170, %v4101
        %v4174 = vmul.f32 %v4170, %v4106
        %v4175 = vadd.f32 %v3910, %v4171
        %v4176 = vadd.f32 %v3911, %v4172
        %v4177 = vadd.f32 %v3912, %v4173
        %v4178 = vadd.f32 %v3913, %v4174
        %s4179 = sld [smem:[#allocation7 + $0x10e]]
        %v4180 = vstv %s4179
        %v4181 = vmul.f32 %v4180, %v4091
        %v4182 = vmul.f32 %v4180, %v4096
        %v4183 = vmul.f32 %v4180, %v4101
        %v4184 = vmul.f32 %v4180, %v4106
        %v4185 = vadd.f32 %v3920, %v4181
        %v4186 = vadd.f32 %v3921, %v4182
        %v4187 = vadd.f32 %v3922, %v4183
        %v4188 = vadd.f32 %v3923, %v4184
        %4189 = vmatprep.subr.mxu0 0.0
        %4190 = vmatpush1.msra.mxu0 0.0
        %4191 = vmatprep.subr.mxu0 0.0
        %4192 = vmatpush1.msra.mxu0 0.0
        %4193 = vmatprep.subr.mxu0 0.0
        %4194 = vmatpush1.msra.mxu0 0.0
        %4195 = vmatprep.subr.mxu0 0.0
        %4196 = vmatpush1.msra.mxu0 0.0
        %4197 = vmatprep.subr.mxu0 0.0
        %4198 = vmatpush1.msra.mxu0 0.0
        %4199 = vmatprep.subr.mxu0 0.0
        %4200 = vmatpush1.msra.mxu0 0.0
        %4201 = vmatprep.subr.mxu0 0.0
        %4202 = vmatpush1.msra.mxu0 0.0
        %4203 = vmatprep.subr.mxu0 0.0
        %4204 = vmatpush1.msra.mxu0 0.0
        %4205 = vmatprep.subr.mxu0 0.0
        %4206 = vmatpush1.msra.mxu0 0.0
        %4207 = vmatprep.subr.mxu0 0.0
        %4208 = vmatpush1.msra.mxu0 0.0
        %4209 = vmatprep.subr.mxu0 0.0
        %4210 = vmatpush1.msra.mxu0 0.0
        %4211 = vmatprep.subr.mxu0 0.0
        %4212 = vmatpush1.msra.mxu0 0.0
        %4213 = vmatprep.subr.mxu0 0.0
        %4214 = vmatpush1.msra.mxu0 0.0
        %4215 = vmatprep.subr.mxu0 0.0
        %4216 = vmatpush1.msra.mxu0 0.0
        %4217 = vmatprep.subr.mxu0 0.0
        %4218 = vmatpush1.msra.mxu0 %v303
        %4219 = vmatprep.subr.mxu0 0.0
        %4220 = vmatpush1.msra.mxu0 %v302
        %4221 = vmatprep.subr.mxu0 0.0
        %4222 = vmatpush2.msra.mxu0 0.0
        %4223 = vmatprep.subr.mxu0 0.0
        %4224 = vmatpush2.msra.mxu0 0.0
        %4225 = vmatprep.subr.mxu0 0.0
        %4226 = vmatpush2.msra.mxu0 0.0
        %4227 = vmatprep.subr.mxu0 0.0
        %4228 = vmatpush2.msra.mxu0 0.0
        %4229 = vmatprep.subr.mxu0 0.0
        %4230 = vmatpush2.msra.mxu0 0.0
        %4231 = vmatprep.subr.mxu0 0.0
        %4232 = vmatpush2.msra.mxu0 0.0
        %4233 = vmatprep.subr.mxu0 0.0
        %4234 = vmatpush2.msra.mxu0 0.0
        %4235 = vmatprep.subr.mxu0 0.0
        %4236 = vmatpush2.msra.mxu0 0.0
        %4237 = vmatprep.subr.mxu0 0.0
        %4238 = vmatpush2.msra.mxu0 0.0
        %4239 = vmatprep.subr.mxu0 0.0
        %4240 = vmatpush2.msra.mxu0 0.0
        %4241 = vmatprep.subr.mxu0 0.0
        %4242 = vmatpush2.msra.mxu0 0.0
        %4243 = vmatprep.subr.mxu0 0.0
        %4244 = vmatpush2.msra.mxu0 0.0
        %4245 = vmatprep.subr.mxu0 0.0
        %4246 = vmatpush2.msra.mxu0 0.0
        %4247 = vmatprep.subr.mxu0 0.0
        %4248 = vmatpush2.msra.mxu0 0.0
        %4249 = vmatprep.subr.mxu0 0.0
        %4250 = vmatpush2.msra.mxu0 0.0
        %4251 = vmatprep.subr.mxu0 0.0
        %4252 = vmatpush2.msra.mxu0 0.0
        %4253 = vmatprep.mubr.f32.mxu0 0.0
        %4254 = vmatmul.mubr.f32.gmra.mxu0 %v4013
        %v4255 = vpop.f32.mrf.mxu0
        %v4256 = vadd.f32 0.0, %v4255
        %v4257 = vpop.f32.mrf.mxu0
        %4258 = vmatprep.mubr.f32.mxu0 0.0
        %4259 = vmatmul.mubr.f32.gmra.mxu0 %v4016
        %v4260 = vpop.f32.mrf.mxu0
        %v4261 = vadd.f32 0.0, %v4260
        %v4262 = vpop.f32.mrf.mxu0
        %4263 = vmatprep.mubr.f32.mxu0 0.0
        %4264 = vmatmul.mubr.f32.gmra.mxu0 %v4019
        %v4265 = vpop.f32.mrf.mxu0
        %v4266 = vadd.f32 0.0, %v4265
        %v4267 = vpop.f32.mrf.mxu0
        %4268 = vmatprep.mubr.f32.mxu0 0.0
        %4269 = vmatmul.mubr.f32.gmra.mxu0 %v4022
        %v4270 = vpop.f32.mrf.mxu0
        %v4271 = vadd.f32 0.0, %v4270
        %v4272 = vpop.f32.mrf.mxu0
        %4273 = vdwg.mxu0
        %s4274 = sld [smem:[#allocation7 + $0x13]]
        %v4275 = vstv %s4274
        %v4276 = vmul.f32 %v4275, %v4256
        %v4277 = vmul.f32 %v4275, %v4261
        %v4278 = vmul.f32 %v4275, %v4266
        %v4279 = vmul.f32 %v4275, %v4271
        %v4280 = vadd.f32 %v4115, %v4276
        %v4281 = vadd.f32 %v4116, %v4277
        %v4282 = vadd.f32 %v4117, %v4278
        %v4283 = vadd.f32 %v4118, %v4279
        %s4284 = sld [smem:[#allocation7 + $0x37]]
        %v4285 = vstv %s4284
        %v4286 = vmul.f32 %v4285, %v4256
        %v4287 = vmul.f32 %v4285, %v4261
        %v4288 = vmul.f32 %v4285, %v4266
        %v4289 = vmul.f32 %v4285, %v4271
        %v4290 = vadd.f32 %v4125, %v4286
        %v4291 = vadd.f32 %v4126, %v4287
        %v4292 = vadd.f32 %v4127, %v4288
        %v4293 = vadd.f32 %v4128, %v4289
        %s4294 = sld [smem:[#allocation7 + $0x5b]]
        %v4295 = vstv %s4294
        %v4296 = vmul.f32 %v4295, %v4256
        %v4297 = vmul.f32 %v4295, %v4261
        %v4298 = vmul.f32 %v4295, %v4266
        %v4299 = vmul.f32 %v4295, %v4271
        %v4300 = vadd.f32 %v4135, %v4296
        %v4301 = vadd.f32 %v4136, %v4297
        %v4302 = vadd.f32 %v4137, %v4298
        %v4303 = vadd.f32 %v4138, %v4299
        %s4304 = sld [smem:[#allocation7 + $0x7f]]
        %v4305 = vstv %s4304
        %v4306 = vmul.f32 %v4305, %v4256
        %v4307 = vmul.f32 %v4305, %v4261
        %v4308 = vmul.f32 %v4305, %v4266
        %v4309 = vmul.f32 %v4305, %v4271
        %v4310 = vadd.f32 %v4145, %v4306
        %v4311 = vadd.f32 %v4146, %v4307
        %v4312 = vadd.f32 %v4147, %v4308
        %v4313 = vadd.f32 %v4148, %v4309
        %s4314 = sld [smem:[#allocation7 + $0xa3]]
        %v4315 = vstv %s4314
        %v4316 = vmul.f32 %v4315, %v4256
        %v4317 = vmul.f32 %v4315, %v4261
        %v4318 = vmul.f32 %v4315, %v4266
        %v4319 = vmul.f32 %v4315, %v4271
        %v4320 = vadd.f32 %v4155, %v4316
        %v4321 = vadd.f32 %v4156, %v4317
        %v4322 = vadd.f32 %v4157, %v4318
        %v4323 = vadd.f32 %v4158, %v4319
        %s4324 = sld [smem:[#allocation7 + $0xc7]]
        %v4325 = vstv %s4324
        %v4326 = vmul.f32 %v4325, %v4256
        %v4327 = vmul.f32 %v4325, %v4261
        %v4328 = vmul.f32 %v4325, %v4266
        %v4329 = vmul.f32 %v4325, %v4271
        %v4330 = vadd.f32 %v4165, %v4326
        %v4331 = vadd.f32 %v4166, %v4327
        %v4332 = vadd.f32 %v4167, %v4328
        %v4333 = vadd.f32 %v4168, %v4329
        %s4334 = sld [smem:[#allocation7 + $0xeb]]
        %v4335 = vstv %s4334
        %v4336 = vmul.f32 %v4335, %v4256
        %v4337 = vmul.f32 %v4335, %v4261
        %v4338 = vmul.f32 %v4335, %v4266
        %v4339 = vmul.f32 %v4335, %v4271
        %v4340 = vadd.f32 %v4175, %v4336
        %v4341 = vadd.f32 %v4176, %v4337
        %v4342 = vadd.f32 %v4177, %v4338
        %v4343 = vadd.f32 %v4178, %v4339
        %s4344 = sld [smem:[#allocation7 + $0x10f]]
        %v4345 = vstv %s4344
        %v4346 = vmul.f32 %v4345, %v4256
        %v4347 = vmul.f32 %v4345, %v4261
        %v4348 = vmul.f32 %v4345, %v4266
        %v4349 = vmul.f32 %v4345, %v4271
        %v4350 = vadd.f32 %v4185, %v4346
        %v4351 = vadd.f32 %v4186, %v4347
        %v4352 = vadd.f32 %v4187, %v4348
        %v4353 = vadd.f32 %v4188, %v4349
        %4354 = vmatprep.subr.mxu0 0.0
        %4355 = vmatpush1.msra.mxu0 0.0
        %4356 = vmatprep.subr.mxu0 0.0
        %4357 = vmatpush1.msra.mxu0 0.0
        %4358 = vmatprep.subr.mxu0 0.0
        %4359 = vmatpush1.msra.mxu0 0.0
        %4360 = vmatprep.subr.mxu0 0.0
        %4361 = vmatpush1.msra.mxu0 0.0
        %4362 = vmatprep.subr.mxu0 0.0
        %4363 = vmatpush1.msra.mxu0 0.0
        %4364 = vmatprep.subr.mxu0 0.0
        %4365 = vmatpush1.msra.mxu0 0.0
        %4366 = vmatprep.subr.mxu0 0.0
        %4367 = vmatpush1.msra.mxu0 0.0
        %4368 = vmatprep.subr.mxu0 0.0
        %4369 = vmatpush1.msra.mxu0 0.0
        %4370 = vmatprep.subr.mxu0 0.0
        %4371 = vmatpush1.msra.mxu0 0.0
        %4372 = vmatprep.subr.mxu0 0.0
        %4373 = vmatpush1.msra.mxu0 0.0
        %4374 = vmatprep.subr.mxu0 0.0
        %4375 = vmatpush1.msra.mxu0 0.0
        %4376 = vmatprep.subr.mxu0 0.0
        %4377 = vmatpush1.msra.mxu0 0.0
        %4378 = vmatprep.subr.mxu0 0.0
        %4379 = vmatpush1.msra.mxu0 0.0
        %4380 = vmatprep.subr.mxu0 0.0
        %4381 = vmatpush1.msra.mxu0 0.0
        %4382 = vmatprep.subr.mxu0 0.0
        %4383 = vmatpush1.msra.mxu0 %v313
        %4384 = vmatprep.subr.mxu0 0.0
        %4385 = vmatpush1.msra.mxu0 %v312
        %4386 = vmatprep.subr.mxu0 0.0
        %4387 = vmatpush2.msra.mxu0 0.0
        %4388 = vmatprep.subr.mxu0 0.0
        %4389 = vmatpush2.msra.mxu0 0.0
        %4390 = vmatprep.subr.mxu0 0.0
        %4391 = vmatpush2.msra.mxu0 0.0
        %4392 = vmatprep.subr.mxu0 0.0
        %4393 = vmatpush2.msra.mxu0 0.0
        %4394 = vmatprep.subr.mxu0 0.0
        %4395 = vmatpush2.msra.mxu0 0.0
        %4396 = vmatprep.subr.mxu0 0.0
        %4397 = vmatpush2.msra.mxu0 0.0
        %4398 = vmatprep.subr.mxu0 0.0
        %4399 = vmatpush2.msra.mxu0 0.0
        %4400 = vmatprep.subr.mxu0 0.0
        %4401 = vmatpush2.msra.mxu0 0.0
        %4402 = vmatprep.subr.mxu0 0.0
        %4403 = vmatpush2.msra.mxu0 0.0
        %4404 = vmatprep.subr.mxu0 0.0
        %4405 = vmatpush2.msra.mxu0 0.0
        %4406 = vmatprep.subr.mxu0 0.0
        %4407 = vmatpush2.msra.mxu0 0.0
        %4408 = vmatprep.subr.mxu0 0.0
        %4409 = vmatpush2.msra.mxu0 0.0
        %4410 = vmatprep.subr.mxu0 0.0
        %4411 = vmatpush2.msra.mxu0 0.0
        %4412 = vmatprep.subr.mxu0 0.0
        %4413 = vmatpush2.msra.mxu0 0.0
        %4414 = vmatprep.subr.mxu0 0.0
        %4415 = vmatpush2.msra.mxu0 0.0
        %4416 = vmatprep.subr.mxu0 0.0
        %4417 = vmatpush2.msra.mxu0 0.0
        %4418 = vmatprep.mubr.f32.mxu0 0.0
        %4419 = vmatmul.mubr.f32.gmra.mxu0 %v4013
        %v4420 = vpop.f32.mrf.mxu0
        %v4421 = vadd.f32 0.0, %v4420
        %v4422 = vpop.f32.mrf.mxu0
        %4423 = vmatprep.mubr.f32.mxu0 0.0
        %4424 = vmatmul.mubr.f32.gmra.mxu0 %v4016
        %v4425 = vpop.f32.mrf.mxu0
        %v4426 = vadd.f32 0.0, %v4425
        %v4427 = vpop.f32.mrf.mxu0
        %4428 = vmatprep.mubr.f32.mxu0 0.0
        %4429 = vmatmul.mubr.f32.gmra.mxu0 %v4019
        %v4430 = vpop.f32.mrf.mxu0
        %v4431 = vadd.f32 0.0, %v4430
        %v4432 = vpop.f32.mrf.mxu0
        %4433 = vmatprep.mubr.f32.mxu0 0.0
        %4434 = vmatmul.mubr.f32.gmra.mxu0 %v4022
        %v4435 = vpop.f32.mrf.mxu0
        %v4436 = vadd.f32 0.0, %v4435
        %v4437 = vpop.f32.mrf.mxu0
        %4438 = vdwg.mxu0
        %s4439 = sld [smem:[#allocation7 + $0x14]]
        %v4440 = vstv %s4439
        %v4441 = vmul.f32 %v4440, %v4421
        %v4442 = vmul.f32 %v4440, %v4426
        %v4443 = vmul.f32 %v4440, %v4431
        %v4444 = vmul.f32 %v4440, %v4436
        %v4445 = vadd.f32 %v4280, %v4441
        %v4446 = vadd.f32 %v4281, %v4442
        %v4447 = vadd.f32 %v4282, %v4443
        %v4448 = vadd.f32 %v4283, %v4444
        %s4449 = sld [smem:[#allocation7 + $0x38]]
        %v4450 = vstv %s4449
        %v4451 = vmul.f32 %v4450, %v4421
        %v4452 = vmul.f32 %v4450, %v4426
        %v4453 = vmul.f32 %v4450, %v4431
        %v4454 = vmul.f32 %v4450, %v4436
        %v4455 = vadd.f32 %v4290, %v4451
        %v4456 = vadd.f32 %v4291, %v4452
        %v4457 = vadd.f32 %v4292, %v4453
        %v4458 = vadd.f32 %v4293, %v4454
        %s4459 = sld [smem:[#allocation7 + $0x5c]]
        %v4460 = vstv %s4459
        %v4461 = vmul.f32 %v4460, %v4421
        %v4462 = vmul.f32 %v4460, %v4426
        %v4463 = vmul.f32 %v4460, %v4431
        %v4464 = vmul.f32 %v4460, %v4436
        %v4465 = vadd.f32 %v4300, %v4461
        %v4466 = vadd.f32 %v4301, %v4462
        %v4467 = vadd.f32 %v4302, %v4463
        %v4468 = vadd.f32 %v4303, %v4464
        %s4469 = sld [smem:[#allocation7 + $0x80]]
        %v4470 = vstv %s4469
        %v4471 = vmul.f32 %v4470, %v4421
        %v4472 = vmul.f32 %v4470, %v4426
        %v4473 = vmul.f32 %v4470, %v4431
        %v4474 = vmul.f32 %v4470, %v4436
        %v4475 = vadd.f32 %v4310, %v4471
        %v4476 = vadd.f32 %v4311, %v4472
        %v4477 = vadd.f32 %v4312, %v4473
        %v4478 = vadd.f32 %v4313, %v4474
        %s4479 = sld [smem:[#allocation7 + $0xa4]]
        %v4480 = vstv %s4479
        %v4481 = vmul.f32 %v4480, %v4421
        %v4482 = vmul.f32 %v4480, %v4426
        %v4483 = vmul.f32 %v4480, %v4431
        %v4484 = vmul.f32 %v4480, %v4436
        %v4485 = vadd.f32 %v4320, %v4481
        %v4486 = vadd.f32 %v4321, %v4482
        %v4487 = vadd.f32 %v4322, %v4483
        %v4488 = vadd.f32 %v4323, %v4484
        %s4489 = sld [smem:[#allocation7 + $0xc8]]
        %v4490 = vstv %s4489
        %v4491 = vmul.f32 %v4490, %v4421
        %v4492 = vmul.f32 %v4490, %v4426
        %v4493 = vmul.f32 %v4490, %v4431
        %v4494 = vmul.f32 %v4490, %v4436
        %v4495 = vadd.f32 %v4330, %v4491
        %v4496 = vadd.f32 %v4331, %v4492
        %v4497 = vadd.f32 %v4332, %v4493
        %v4498 = vadd.f32 %v4333, %v4494
        %s4499 = sld [smem:[#allocation7 + $0xec]]
        %v4500 = vstv %s4499
        %v4501 = vmul.f32 %v4500, %v4421
        %v4502 = vmul.f32 %v4500, %v4426
        %v4503 = vmul.f32 %v4500, %v4431
        %v4504 = vmul.f32 %v4500, %v4436
        %v4505 = vadd.f32 %v4340, %v4501
        %v4506 = vadd.f32 %v4341, %v4502
        %v4507 = vadd.f32 %v4342, %v4503
        %v4508 = vadd.f32 %v4343, %v4504
        %s4509 = sld [smem:[#allocation7 + $0x110]]
        %v4510 = vstv %s4509
        %v4511 = vmul.f32 %v4510, %v4421
        %v4512 = vmul.f32 %v4510, %v4426
        %v4513 = vmul.f32 %v4510, %v4431
        %v4514 = vmul.f32 %v4510, %v4436
        %v4515 = vadd.f32 %v4350, %v4511
        %v4516 = vadd.f32 %v4351, %v4512
        %v4517 = vadd.f32 %v4352, %v4513
        %v4518 = vadd.f32 %v4353, %v4514
        %4519 = vmatprep.subr.mxu0 0.0
        %4520 = vmatpush1.msra.mxu0 0.0
        %4521 = vmatprep.subr.mxu0 0.0
        %4522 = vmatpush1.msra.mxu0 0.0
        %4523 = vmatprep.subr.mxu0 0.0
        %4524 = vmatpush1.msra.mxu0 0.0
        %4525 = vmatprep.subr.mxu0 0.0
        %4526 = vmatpush1.msra.mxu0 0.0
        %4527 = vmatprep.subr.mxu0 0.0
        %4528 = vmatpush1.msra.mxu0 0.0
        %4529 = vmatprep.subr.mxu0 0.0
        %4530 = vmatpush1.msra.mxu0 0.0
        %4531 = vmatprep.subr.mxu0 0.0
        %4532 = vmatpush1.msra.mxu0 0.0
        %4533 = vmatprep.subr.mxu0 0.0
        %4534 = vmatpush1.msra.mxu0 0.0
        %4535 = vmatprep.subr.mxu0 0.0
        %4536 = vmatpush1.msra.mxu0 0.0
        %4537 = vmatprep.subr.mxu0 0.0
        %4538 = vmatpush1.msra.mxu0 0.0
        %4539 = vmatprep.subr.mxu0 0.0
        %4540 = vmatpush1.msra.mxu0 0.0
        %4541 = vmatprep.subr.mxu0 0.0
        %4542 = vmatpush1.msra.mxu0 0.0
        %4543 = vmatprep.subr.mxu0 0.0
        %4544 = vmatpush1.msra.mxu0 0.0
        %4545 = vmatprep.subr.mxu0 0.0
        %4546 = vmatpush1.msra.mxu0 0.0
        %4547 = vmatprep.subr.mxu0 0.0
        %4548 = vmatpush1.msra.mxu0 %v3926
        %4549 = vmatprep.subr.mxu0 0.0
        %4550 = vmatpush1.msra.mxu0 %v3925
        %4551 = vmatprep.subr.mxu0 0.0
        %4552 = vmatpush2.msra.mxu0 0.0
        %4553 = vmatprep.subr.mxu0 0.0
        %4554 = vmatpush2.msra.mxu0 0.0
        %4555 = vmatprep.subr.mxu0 0.0
        %4556 = vmatpush2.msra.mxu0 0.0
        %4557 = vmatprep.subr.mxu0 0.0
        %4558 = vmatpush2.msra.mxu0 0.0
        %4559 = vmatprep.subr.mxu0 0.0
        %4560 = vmatpush2.msra.mxu0 0.0
        %4561 = vmatprep.subr.mxu0 0.0
        %4562 = vmatpush2.msra.mxu0 0.0
        %4563 = vmatprep.subr.mxu0 0.0
        %4564 = vmatpush2.msra.mxu0 0.0
        %4565 = vmatprep.subr.mxu0 0.0
        %4566 = vmatpush2.msra.mxu0 0.0
        %4567 = vmatprep.subr.mxu0 0.0
        %4568 = vmatpush2.msra.mxu0 0.0
        %4569 = vmatprep.subr.mxu0 0.0
        %4570 = vmatpush2.msra.mxu0 0.0
        %4571 = vmatprep.subr.mxu0 0.0
        %4572 = vmatpush2.msra.mxu0 0.0
        %4573 = vmatprep.subr.mxu0 0.0
        %4574 = vmatpush2.msra.mxu0 0.0
        %4575 = vmatprep.subr.mxu0 0.0
        %4576 = vmatpush2.msra.mxu0 0.0
        %4577 = vmatprep.subr.mxu0 0.0
        %4578 = vmatpush2.msra.mxu0 0.0
        %4579 = vmatprep.subr.mxu0 0.0
        %4580 = vmatpush2.msra.mxu0 0.0
        %4581 = vmatprep.subr.mxu0 0.0
        %4582 = vmatpush2.msra.mxu0 0.0
        %4583 = vmatprep.mubr.f32.mxu0 0.0
        %4584 = vmatmul.mubr.f32.gmra.mxu0 %v938
        %v4585 = vpop.f32.mrf.mxu0
        %v4586 = vadd.f32 0.0, %v4585
        %v4587 = vpop.f32.mrf.mxu0
        %4588 = vmatprep.mubr.f32.mxu0 0.0
        %4589 = vmatmul.mubr.f32.gmra.mxu0 %v941
        %v4590 = vpop.f32.mrf.mxu0
        %v4591 = vadd.f32 0.0, %v4590
        %v4592 = vpop.f32.mrf.mxu0
        %4593 = vmatprep.mubr.f32.mxu0 0.0
        %4594 = vmatmul.mubr.f32.gmra.mxu0 %v944
        %v4595 = vpop.f32.mrf.mxu0
        %v4596 = vadd.f32 0.0, %v4595
        %v4597 = vpop.f32.mrf.mxu0
        %4598 = vmatprep.mubr.f32.mxu0 0.0
        %4599 = vmatmul.mubr.f32.gmra.mxu0 %v947
        %v4600 = vpop.f32.mrf.mxu0
        %v4601 = vadd.f32 0.0, %v4600
        %v4602 = vpop.f32.mrf.mxu0
        %4603 = vdwg.mxu0
        %v4605 = vsel %vm332, %v4586, 0
        %v4608 = vsel %vm332, %v4591, 0
        %v4611 = vsel %vm332, %v4596, 0
        %v4614 = vsel %vm332, %v4601, 0
        %4616 = vmatprep.subr.mxu0 0.0
        %4617 = vmatpush1.msra.mxu0 0.0
        %4618 = vmatprep.subr.mxu0 0.0
        %4619 = vmatpush1.msra.mxu0 0.0
        %4620 = vmatprep.subr.mxu0 0.0
        %4621 = vmatpush1.msra.mxu0 0.0
        %4622 = vmatprep.subr.mxu0 0.0
        %4623 = vmatpush1.msra.mxu0 0.0
        %4624 = vmatprep.subr.mxu0 0.0
        %4625 = vmatpush1.msra.mxu0 0.0
        %4626 = vmatprep.subr.mxu0 0.0
        %4627 = vmatpush1.msra.mxu0 0.0
        %4628 = vmatprep.subr.mxu0 0.0
        %4629 = vmatpush1.msra.mxu0 0.0
        %4630 = vmatprep.subr.mxu0 0.0
        %4631 = vmatpush1.msra.mxu0 0.0
        %4632 = vmatprep.subr.mxu0 0.0
        %4633 = vmatpush1.msra.mxu0 0.0
        %4634 = vmatprep.subr.mxu0 0.0
        %4635 = vmatpush1.msra.mxu0 0.0
        %4636 = vmatprep.subr.mxu0 0.0
        %4637 = vmatpush1.msra.mxu0 0.0
        %4638 = vmatprep.subr.mxu0 0.0
        %4639 = vmatpush1.msra.mxu0 0.0
        %4640 = vmatprep.subr.mxu0 0.0
        %4641 = vmatpush1.msra.mxu0 0.0
        %4642 = vmatprep.subr.mxu0 0.0
        %4643 = vmatpush1.msra.mxu0 0.0
        %4644 = vmatprep.subr.mxu0 0.0
        %4645 = vmatpush1.msra.mxu0 %v295
        %4646 = vmatprep.subr.mxu0 0.0
        %4647 = vmatpush1.msra.mxu0 %v294
        %4648 = vmatprep.subr.mxu0 0.0
        %4649 = vmatpush2.msra.mxu0 0.0
        %4650 = vmatprep.subr.mxu0 0.0
        %4651 = vmatpush2.msra.mxu0 0.0
        %4652 = vmatprep.subr.mxu0 0.0
        %4653 = vmatpush2.msra.mxu0 0.0
        %4654 = vmatprep.subr.mxu0 0.0
        %4655 = vmatpush2.msra.mxu0 0.0
        %4656 = vmatprep.subr.mxu0 0.0
        %4657 = vmatpush2.msra.mxu0 0.0
        %4658 = vmatprep.subr.mxu0 0.0
        %4659 = vmatpush2.msra.mxu0 0.0
        %4660 = vmatprep.subr.mxu0 0.0
        %4661 = vmatpush2.msra.mxu0 0.0
        %4662 = vmatprep.subr.mxu0 0.0
        %4663 = vmatpush2.msra.mxu0 0.0
        %4664 = vmatprep.subr.mxu0 0.0
        %4665 = vmatpush2.msra.mxu0 0.0
        %4666 = vmatprep.subr.mxu0 0.0
        %4667 = vmatpush2.msra.mxu0 0.0
        %4668 = vmatprep.subr.mxu0 0.0
        %4669 = vmatpush2.msra.mxu0 0.0
        %4670 = vmatprep.subr.mxu0 0.0
        %4671 = vmatpush2.msra.mxu0 0.0
        %4672 = vmatprep.subr.mxu0 0.0
        %4673 = vmatpush2.msra.mxu0 0.0
        %4674 = vmatprep.subr.mxu0 0.0
        %4675 = vmatpush2.msra.mxu0 0.0
        %4676 = vmatprep.subr.mxu0 0.0
        %4677 = vmatpush2.msra.mxu0 0.0
        %4678 = vmatprep.subr.mxu0 0.0
        %4679 = vmatpush2.msra.mxu0 0.0
        %4680 = vmatprep.mubr.f32.mxu0 0.0
        %4681 = vmatmul.mubr.f32.gmra.mxu0 %v4605
        %v4682 = vpop.f32.mrf.mxu0
        %v4683 = vadd.f32 0.0, %v4682
        %v4684 = vpop.f32.mrf.mxu0
        %4685 = vmatprep.mubr.f32.mxu0 0.0
        %4686 = vmatmul.mubr.f32.gmra.mxu0 %v4608
        %v4687 = vpop.f32.mrf.mxu0
        %v4688 = vadd.f32 0.0, %v4687
        %v4689 = vpop.f32.mrf.mxu0
        %4690 = vmatprep.mubr.f32.mxu0 0.0
        %4691 = vmatmul.mubr.f32.gmra.mxu0 %v4611
        %v4692 = vpop.f32.mrf.mxu0
        %v4693 = vadd.f32 0.0, %v4692
        %v4694 = vpop.f32.mrf.mxu0
        %4695 = vmatprep.mubr.f32.mxu0 0.0
        %4696 = vmatmul.mubr.f32.gmra.mxu0 %v4614
        %v4697 = vpop.f32.mrf.mxu0
        %v4698 = vadd.f32 0.0, %v4697
        %v4699 = vpop.f32.mrf.mxu0
        %4700 = vdwg.mxu0
        %s4701 = sld [smem:[#allocation7 + $0x15]]
        %v4702 = vstv %s4701
        %v4703 = vmul.f32 %v4702, %v4683
        %v4704 = vmul.f32 %v4702, %v4688
        %v4705 = vmul.f32 %v4702, %v4693
        %v4706 = vmul.f32 %v4702, %v4698
        %v4707 = vadd.f32 %v4445, %v4703
        %v4708 = vadd.f32 %v4446, %v4704
        %v4709 = vadd.f32 %v4447, %v4705
        %v4710 = vadd.f32 %v4448, %v4706
        %s4711 = sld [smem:[#allocation7 + $0x39]]
        %v4712 = vstv %s4711
        %v4713 = vmul.f32 %v4712, %v4683
        %v4714 = vmul.f32 %v4712, %v4688
        %v4715 = vmul.f32 %v4712, %v4693
        %v4716 = vmul.f32 %v4712, %v4698
        %v4717 = vadd.f32 %v4455, %v4713
        %v4718 = vadd.f32 %v4456, %v4714
        %v4719 = vadd.f32 %v4457, %v4715
        %v4720 = vadd.f32 %v4458, %v4716
        %s4721 = sld [smem:[#allocation7 + $0x5d]]
        %v4722 = vstv %s4721
        %v4723 = vmul.f32 %v4722, %v4683
        %v4724 = vmul.f32 %v4722, %v4688
        %v4725 = vmul.f32 %v4722, %v4693
        %v4726 = vmul.f32 %v4722, %v4698
        %v4727 = vadd.f32 %v4465, %v4723
        %v4728 = vadd.f32 %v4466, %v4724
        %v4729 = vadd.f32 %v4467, %v4725
        %v4730 = vadd.f32 %v4468, %v4726
        %s4731 = sld [smem:[#allocation7 + $0x81]]
        %v4732 = vstv %s4731
        %v4733 = vmul.f32 %v4732, %v4683
        %v4734 = vmul.f32 %v4732, %v4688
        %v4735 = vmul.f32 %v4732, %v4693
        %v4736 = vmul.f32 %v4732, %v4698
        %v4737 = vadd.f32 %v4475, %v4733
        %v4738 = vadd.f32 %v4476, %v4734
        %v4739 = vadd.f32 %v4477, %v4735
        %v4740 = vadd.f32 %v4478, %v4736
        %s4741 = sld [smem:[#allocation7 + $0xa5]]
        %v4742 = vstv %s4741
        %v4743 = vmul.f32 %v4742, %v4683
        %v4744 = vmul.f32 %v4742, %v4688
        %v4745 = vmul.f32 %v4742, %v4693
        %v4746 = vmul.f32 %v4742, %v4698
        %v4747 = vadd.f32 %v4485, %v4743
        %v4748 = vadd.f32 %v4486, %v4744
        %v4749 = vadd.f32 %v4487, %v4745
        %v4750 = vadd.f32 %v4488, %v4746
        %s4751 = sld [smem:[#allocation7 + $0xc9]]
        %v4752 = vstv %s4751
        %v4753 = vmul.f32 %v4752, %v4683
        %v4754 = vmul.f32 %v4752, %v4688
        %v4755 = vmul.f32 %v4752, %v4693
        %v4756 = vmul.f32 %v4752, %v4698
        %v4757 = vadd.f32 %v4495, %v4753
        %v4758 = vadd.f32 %v4496, %v4754
        %v4759 = vadd.f32 %v4497, %v4755
        %v4760 = vadd.f32 %v4498, %v4756
        %s4761 = sld [smem:[#allocation7 + $0xed]]
        %v4762 = vstv %s4761
        %v4763 = vmul.f32 %v4762, %v4683
        %v4764 = vmul.f32 %v4762, %v4688
        %v4765 = vmul.f32 %v4762, %v4693
        %v4766 = vmul.f32 %v4762, %v4698
        %v4767 = vadd.f32 %v4505, %v4763
        %v4768 = vadd.f32 %v4506, %v4764
        %v4769 = vadd.f32 %v4507, %v4765
        %v4770 = vadd.f32 %v4508, %v4766
        %s4771 = sld [smem:[#allocation7 + $0x111]]
        %v4772 = vstv %s4771
        %v4773 = vmul.f32 %v4772, %v4683
        %v4774 = vmul.f32 %v4772, %v4688
        %v4775 = vmul.f32 %v4772, %v4693
        %v4776 = vmul.f32 %v4772, %v4698
        %v4777 = vadd.f32 %v4515, %v4773
        %v4778 = vadd.f32 %v4516, %v4774
        %v4779 = vadd.f32 %v4517, %v4775
        %v4780 = vadd.f32 %v4518, %v4776
        %4781 = vmatprep.subr.mxu0 0.0
        %4782 = vmatpush1.msra.mxu0 0.0
        %4783 = vmatprep.subr.mxu0 0.0
        %4784 = vmatpush1.msra.mxu0 0.0
        %4785 = vmatprep.subr.mxu0 0.0
        %4786 = vmatpush1.msra.mxu0 0.0
        %4787 = vmatprep.subr.mxu0 0.0
        %4788 = vmatpush1.msra.mxu0 0.0
        %4789 = vmatprep.subr.mxu0 0.0
        %4790 = vmatpush1.msra.mxu0 0.0
        %4791 = vmatprep.subr.mxu0 0.0
        %4792 = vmatpush1.msra.mxu0 0.0
        %4793 = vmatprep.subr.mxu0 0.0
        %4794 = vmatpush1.msra.mxu0 0.0
        %4795 = vmatprep.subr.mxu0 0.0
        %4796 = vmatpush1.msra.mxu0 0.0
        %4797 = vmatprep.subr.mxu0 0.0
        %4798 = vmatpush1.msra.mxu0 0.0
        %4799 = vmatprep.subr.mxu0 0.0
        %4800 = vmatpush1.msra.mxu0 0.0
        %4801 = vmatprep.subr.mxu0 0.0
        %4802 = vmatpush1.msra.mxu0 0.0
        %4803 = vmatprep.subr.mxu0 0.0
        %4804 = vmatpush1.msra.mxu0 0.0
        %4805 = vmatprep.subr.mxu0 0.0
        %4806 = vmatpush1.msra.mxu0 0.0
        %4807 = vmatprep.subr.mxu0 0.0
        %4808 = vmatpush1.msra.mxu0 0.0
        %4809 = vmatprep.subr.mxu0 0.0
        %4810 = vmatpush1.msra.mxu0 %v303
        %4811 = vmatprep.subr.mxu0 0.0
        %4812 = vmatpush1.msra.mxu0 %v302
        %4813 = vmatprep.subr.mxu0 0.0
        %4814 = vmatpush2.msra.mxu0 0.0
        %4815 = vmatprep.subr.mxu0 0.0
        %4816 = vmatpush2.msra.mxu0 0.0
        %4817 = vmatprep.subr.mxu0 0.0
        %4818 = vmatpush2.msra.mxu0 0.0
        %4819 = vmatprep.subr.mxu0 0.0
        %4820 = vmatpush2.msra.mxu0 0.0
        %4821 = vmatprep.subr.mxu0 0.0
        %4822 = vmatpush2.msra.mxu0 0.0
        %4823 = vmatprep.subr.mxu0 0.0
        %4824 = vmatpush2.msra.mxu0 0.0
        %4825 = vmatprep.subr.mxu0 0.0
        %4826 = vmatpush2.msra.mxu0 0.0
        %4827 = vmatprep.subr.mxu0 0.0
        %4828 = vmatpush2.msra.mxu0 0.0
        %4829 = vmatprep.subr.mxu0 0.0
        %4830 = vmatpush2.msra.mxu0 0.0
        %4831 = vmatprep.subr.mxu0 0.0
        %4832 = vmatpush2.msra.mxu0 0.0
        %4833 = vmatprep.subr.mxu0 0.0
        %4834 = vmatpush2.msra.mxu0 0.0
        %4835 = vmatprep.subr.mxu0 0.0
        %4836 = vmatpush2.msra.mxu0 0.0
        %4837 = vmatprep.subr.mxu0 0.0
        %4838 = vmatpush2.msra.mxu0 0.0
        %4839 = vmatprep.subr.mxu0 0.0
        %4840 = vmatpush2.msra.mxu0 0.0
        %4841 = vmatprep.subr.mxu0 0.0
        %4842 = vmatpush2.msra.mxu0 0.0
        %4843 = vmatprep.subr.mxu0 0.0
        %4844 = vmatpush2.msra.mxu0 0.0
        %4845 = vmatprep.mubr.f32.mxu0 0.0
        %4846 = vmatmul.mubr.f32.gmra.mxu0 %v4605
        %v4847 = vpop.f32.mrf.mxu0
        %v4848 = vadd.f32 0.0, %v4847
        %v4849 = vpop.f32.mrf.mxu0
        %4850 = vmatprep.mubr.f32.mxu0 0.0
        %4851 = vmatmul.mubr.f32.gmra.mxu0 %v4608
        %v4852 = vpop.f32.mrf.mxu0
        %v4853 = vadd.f32 0.0, %v4852
        %v4854 = vpop.f32.mrf.mxu0
        %4855 = vmatprep.mubr.f32.mxu0 0.0
        %4856 = vmatmul.mubr.f32.gmra.mxu0 %v4611
        %v4857 = vpop.f32.mrf.mxu0
        %v4858 = vadd.f32 0.0, %v4857
        %v4859 = vpop.f32.mrf.mxu0
        %4860 = vmatprep.mubr.f32.mxu0 0.0
        %4861 = vmatmul.mubr.f32.gmra.mxu0 %v4614
        %v4862 = vpop.f32.mrf.mxu0
        %v4863 = vadd.f32 0.0, %v4862
        %v4864 = vpop.f32.mrf.mxu0
        %4865 = vdwg.mxu0
        %s4866 = sld [smem:[#allocation7 + $0x16]]
        %v4867 = vstv %s4866
        %v4868 = vmul.f32 %v4867, %v4848
        %v4869 = vmul.f32 %v4867, %v4853
        %v4870 = vmul.f32 %v4867, %v4858
        %v4871 = vmul.f32 %v4867, %v4863
        %v4872 = vadd.f32 %v4707, %v4868
        %v4873 = vadd.f32 %v4708, %v4869
        %v4874 = vadd.f32 %v4709, %v4870
        %v4875 = vadd.f32 %v4710, %v4871
        %s4876 = sld [smem:[#allocation7 + $0x3a]]
        %v4877 = vstv %s4876
        %v4878 = vmul.f32 %v4877, %v4848
        %v4879 = vmul.f32 %v4877, %v4853
        %v4880 = vmul.f32 %v4877, %v4858
        %v4881 = vmul.f32 %v4877, %v4863
        %v4882 = vadd.f32 %v4717, %v4878
        %v4883 = vadd.f32 %v4718, %v4879
        %v4884 = vadd.f32 %v4719, %v4880
        %v4885 = vadd.f32 %v4720, %v4881
        %s4886 = sld [smem:[#allocation7 + $0x5e]]
        %v4887 = vstv %s4886
        %v4888 = vmul.f32 %v4887, %v4848
        %v4889 = vmul.f32 %v4887, %v4853
        %v4890 = vmul.f32 %v4887, %v4858
        %v4891 = vmul.f32 %v4887, %v4863
        %v4892 = vadd.f32 %v4727, %v4888
        %v4893 = vadd.f32 %v4728, %v4889
        %v4894 = vadd.f32 %v4729, %v4890
        %v4895 = vadd.f32 %v4730, %v4891
        %s4896 = sld [smem:[#allocation7 + $0x82]]
        %v4897 = vstv %s4896
        %v4898 = vmul.f32 %v4897, %v4848
        %v4899 = vmul.f32 %v4897, %v4853
        %v4900 = vmul.f32 %v4897, %v4858
        %v4901 = vmul.f32 %v4897, %v4863
        %v4902 = vadd.f32 %v4737, %v4898
        %v4903 = vadd.f32 %v4738, %v4899
        %v4904 = vadd.f32 %v4739, %v4900
        %v4905 = vadd.f32 %v4740, %v4901
        %s4906 = sld [smem:[#allocation7 + $0xa6]]
        %v4907 = vstv %s4906
        %v4908 = vmul.f32 %v4907, %v4848
        %v4909 = vmul.f32 %v4907, %v4853
        %v4910 = vmul.f32 %v4907, %v4858
        %v4911 = vmul.f32 %v4907, %v4863
        %v4912 = vadd.f32 %v4747, %v4908
        %v4913 = vadd.f32 %v4748, %v4909
        %v4914 = vadd.f32 %v4749, %v4910
        %v4915 = vadd.f32 %v4750, %v4911
        %s4916 = sld [smem:[#allocation7 + $0xca]]
        %v4917 = vstv %s4916
        %v4918 = vmul.f32 %v4917, %v4848
        %v4919 = vmul.f32 %v4917, %v4853
        %v4920 = vmul.f32 %v4917, %v4858
        %v4921 = vmul.f32 %v4917, %v4863
        %v4922 = vadd.f32 %v4757, %v4918
        %v4923 = vadd.f32 %v4758, %v4919
        %v4924 = vadd.f32 %v4759, %v4920
        %v4925 = vadd.f32 %v4760, %v4921
        %s4926 = sld [smem:[#allocation7 + $0xee]]
        %v4927 = vstv %s4926
        %v4928 = vmul.f32 %v4927, %v4848
        %v4929 = vmul.f32 %v4927, %v4853
        %v4930 = vmul.f32 %v4927, %v4858
        %v4931 = vmul.f32 %v4927, %v4863
        %v4932 = vadd.f32 %v4767, %v4928
        %v4933 = vadd.f32 %v4768, %v4929
        %v4934 = vadd.f32 %v4769, %v4930
        %v4935 = vadd.f32 %v4770, %v4931
        %s4936 = sld [smem:[#allocation7 + $0x112]]
        %v4937 = vstv %s4936
        %v4938 = vmul.f32 %v4937, %v4848
        %v4939 = vmul.f32 %v4937, %v4853
        %v4940 = vmul.f32 %v4937, %v4858
        %v4941 = vmul.f32 %v4937, %v4863
        %v4942 = vadd.f32 %v4777, %v4938
        %v4943 = vadd.f32 %v4778, %v4939
        %v4944 = vadd.f32 %v4779, %v4940
        %v4945 = vadd.f32 %v4780, %v4941
        %4946 = vmatprep.subr.mxu0 0.0
        %4947 = vmatpush1.msra.mxu0 0.0
        %4948 = vmatprep.subr.mxu0 0.0
        %4949 = vmatpush1.msra.mxu0 0.0
        %4950 = vmatprep.subr.mxu0 0.0
        %4951 = vmatpush1.msra.mxu0 0.0
        %4952 = vmatprep.subr.mxu0 0.0
        %4953 = vmatpush1.msra.mxu0 0.0
        %4954 = vmatprep.subr.mxu0 0.0
        %4955 = vmatpush1.msra.mxu0 0.0
        %4956 = vmatprep.subr.mxu0 0.0
        %4957 = vmatpush1.msra.mxu0 0.0
        %4958 = vmatprep.subr.mxu0 0.0
        %4959 = vmatpush1.msra.mxu0 0.0
        %4960 = vmatprep.subr.mxu0 0.0
        %4961 = vmatpush1.msra.mxu0 0.0
        %4962 = vmatprep.subr.mxu0 0.0
        %4963 = vmatpush1.msra.mxu0 0.0
        %4964 = vmatprep.subr.mxu0 0.0
        %4965 = vmatpush1.msra.mxu0 0.0
        %4966 = vmatprep.subr.mxu0 0.0
        %4967 = vmatpush1.msra.mxu0 0.0
        %4968 = vmatprep.subr.mxu0 0.0
        %4969 = vmatpush1.msra.mxu0 0.0
        %4970 = vmatprep.subr.mxu0 0.0
        %4971 = vmatpush1.msra.mxu0 0.0
        %4972 = vmatprep.subr.mxu0 0.0
        %4973 = vmatpush1.msra.mxu0 0.0
        %4974 = vmatprep.subr.mxu0 0.0
        %4975 = vmatpush1.msra.mxu0 %v313
        %4976 = vmatprep.subr.mxu0 0.0
        %4977 = vmatpush1.msra.mxu0 %v312
        %4978 = vmatprep.subr.mxu0 0.0
        %4979 = vmatpush2.msra.mxu0 0.0
        %4980 = vmatprep.subr.mxu0 0.0
        %4981 = vmatpush2.msra.mxu0 0.0
        %4982 = vmatprep.subr.mxu0 0.0
        %4983 = vmatpush2.msra.mxu0 0.0
        %4984 = vmatprep.subr.mxu0 0.0
        %4985 = vmatpush2.msra.mxu0 0.0
        %4986 = vmatprep.subr.mxu0 0.0
        %4987 = vmatpush2.msra.mxu0 0.0
        %4988 = vmatprep.subr.mxu0 0.0
        %4989 = vmatpush2.msra.mxu0 0.0
        %4990 = vmatprep.subr.mxu0 0.0
        %4991 = vmatpush2.msra.mxu0 0.0
        %4992 = vmatprep.subr.mxu0 0.0
        %4993 = vmatpush2.msra.mxu0 0.0
        %4994 = vmatprep.subr.mxu0 0.0
        %4995 = vmatpush2.msra.mxu0 0.0
        %4996 = vmatprep.subr.mxu0 0.0
        %4997 = vmatpush2.msra.mxu0 0.0
        %4998 = vmatprep.subr.mxu0 0.0
        %4999 = vmatpush2.msra.mxu0 0.0
        %5000 = vmatprep.subr.mxu0 0.0
        %5001 = vmatpush2.msra.mxu0 0.0
        %5002 = vmatprep.subr.mxu0 0.0
        %5003 = vmatpush2.msra.mxu0 0.0
        %5004 = vmatprep.subr.mxu0 0.0
        %5005 = vmatpush2.msra.mxu0 0.0
        %5006 = vmatprep.subr.mxu0 0.0
        %5007 = vmatpush2.msra.mxu0 0.0
        %5008 = vmatprep.subr.mxu0 0.0
        %5009 = vmatpush2.msra.mxu0 0.0
        %5010 = vmatprep.mubr.f32.mxu0 0.0
        %5011 = vmatmul.mubr.f32.gmra.mxu0 %v4605
        %v5012 = vpop.f32.mrf.mxu0
        %v5013 = vadd.f32 0.0, %v5012
        %v5014 = vpop.f32.mrf.mxu0
        %5015 = vmatprep.mubr.f32.mxu0 0.0
        %5016 = vmatmul.mubr.f32.gmra.mxu0 %v4608
        %v5017 = vpop.f32.mrf.mxu0
        %v5018 = vadd.f32 0.0, %v5017
        %v5019 = vpop.f32.mrf.mxu0
        %5020 = vmatprep.mubr.f32.mxu0 0.0
        %5021 = vmatmul.mubr.f32.gmra.mxu0 %v4611
        %v5022 = vpop.f32.mrf.mxu0
        %v5023 = vadd.f32 0.0, %v5022
        %v5024 = vpop.f32.mrf.mxu0
        %5025 = vmatprep.mubr.f32.mxu0 0.0
        %5026 = vmatmul.mubr.f32.gmra.mxu0 %v4614
        %v5027 = vpop.f32.mrf.mxu0
        %v5028 = vadd.f32 0.0, %v5027
        %v5029 = vpop.f32.mrf.mxu0
        %5030 = vdwg.mxu0
        %s5031 = sld [smem:[#allocation7 + $0x17]]
        %v5032 = vstv %s5031
        %v5033 = vmul.f32 %v5032, %v5013
        %v5034 = vmul.f32 %v5032, %v5018
        %v5035 = vmul.f32 %v5032, %v5023
        %v5036 = vmul.f32 %v5032, %v5028
        %v5037 = vadd.f32 %v4872, %v5033
        %v5038 = vadd.f32 %v4873, %v5034
        %v5039 = vadd.f32 %v4874, %v5035
        %v5040 = vadd.f32 %v4875, %v5036
        %s5041 = sld [smem:[#allocation7 + $0x3b]]
        %v5042 = vstv %s5041
        %v5043 = vmul.f32 %v5042, %v5013
        %v5044 = vmul.f32 %v5042, %v5018
        %v5045 = vmul.f32 %v5042, %v5023
        %v5046 = vmul.f32 %v5042, %v5028
        %v5047 = vadd.f32 %v4882, %v5043
        %v5048 = vadd.f32 %v4883, %v5044
        %v5049 = vadd.f32 %v4884, %v5045
        %v5050 = vadd.f32 %v4885, %v5046
        %s5051 = sld [smem:[#allocation7 + $0x5f]]
        %v5052 = vstv %s5051
        %v5053 = vmul.f32 %v5052, %v5013
        %v5054 = vmul.f32 %v5052, %v5018
        %v5055 = vmul.f32 %v5052, %v5023
        %v5056 = vmul.f32 %v5052, %v5028
        %v5057 = vadd.f32 %v4892, %v5053
        %v5058 = vadd.f32 %v4893, %v5054
        %v5059 = vadd.f32 %v4894, %v5055
        %v5060 = vadd.f32 %v4895, %v5056
        %s5061 = sld [smem:[#allocation7 + $0x83]]
        %v5062 = vstv %s5061
        %v5063 = vmul.f32 %v5062, %v5013
        %v5064 = vmul.f32 %v5062, %v5018
        %v5065 = vmul.f32 %v5062, %v5023
        %v5066 = vmul.f32 %v5062, %v5028
        %v5067 = vadd.f32 %v4902, %v5063
        %v5068 = vadd.f32 %v4903, %v5064
        %v5069 = vadd.f32 %v4904, %v5065
        %v5070 = vadd.f32 %v4905, %v5066
        %s5071 = sld [smem:[#allocation7 + $0xa7]]
        %v5072 = vstv %s5071
        %v5073 = vmul.f32 %v5072, %v5013
        %v5074 = vmul.f32 %v5072, %v5018
        %v5075 = vmul.f32 %v5072, %v5023
        %v5076 = vmul.f32 %v5072, %v5028
        %v5077 = vadd.f32 %v4912, %v5073
        %v5078 = vadd.f32 %v4913, %v5074
        %v5079 = vadd.f32 %v4914, %v5075
        %v5080 = vadd.f32 %v4915, %v5076
        %s5081 = sld [smem:[#allocation7 + $0xcb]]
        %v5082 = vstv %s5081
        %v5083 = vmul.f32 %v5082, %v5013
        %v5084 = vmul.f32 %v5082, %v5018
        %v5085 = vmul.f32 %v5082, %v5023
        %v5086 = vmul.f32 %v5082, %v5028
        %v5087 = vadd.f32 %v4922, %v5083
        %v5088 = vadd.f32 %v4923, %v5084
        %v5089 = vadd.f32 %v4924, %v5085
        %v5090 = vadd.f32 %v4925, %v5086
        %s5091 = sld [smem:[#allocation7 + $0xef]]
        %v5092 = vstv %s5091
        %v5093 = vmul.f32 %v5092, %v5013
        %v5094 = vmul.f32 %v5092, %v5018
        %v5095 = vmul.f32 %v5092, %v5023
        %v5096 = vmul.f32 %v5092, %v5028
        %v5097 = vadd.f32 %v4932, %v5093
        %v5098 = vadd.f32 %v4933, %v5094
        %v5099 = vadd.f32 %v4934, %v5095
        %v5100 = vadd.f32 %v4935, %v5096
        %s5101 = sld [smem:[#allocation7 + $0x113]]
        %v5102 = vstv %s5101
        %v5103 = vmul.f32 %v5102, %v5013
        %v5104 = vmul.f32 %v5102, %v5018
        %v5105 = vmul.f32 %v5102, %v5023
        %v5106 = vmul.f32 %v5102, %v5028
        %v5107 = vadd.f32 %v4942, %v5103
        %v5108 = vadd.f32 %v4943, %v5104
        %v5109 = vadd.f32 %v4944, %v5105
        %v5110 = vadd.f32 %v4945, %v5106
        %5111 = vmatprep.subr.mxu0 0.0
        %5112 = vmatpush1.msra.mxu0 0.0
        %5113 = vmatprep.subr.mxu0 0.0
        %5114 = vmatpush1.msra.mxu0 0.0
        %5115 = vmatprep.subr.mxu0 0.0
        %5116 = vmatpush1.msra.mxu0 0.0
        %5117 = vmatprep.subr.mxu0 0.0
        %5118 = vmatpush1.msra.mxu0 0.0
        %5119 = vmatprep.subr.mxu0 0.0
        %5120 = vmatpush1.msra.mxu0 0.0
        %5121 = vmatprep.subr.mxu0 0.0
        %5122 = vmatpush1.msra.mxu0 0.0
        %5123 = vmatprep.subr.mxu0 0.0
        %5124 = vmatpush1.msra.mxu0 0.0
        %5125 = vmatprep.subr.mxu0 0.0
        %5126 = vmatpush1.msra.mxu0 0.0
        %5127 = vmatprep.subr.mxu0 0.0
        %5128 = vmatpush1.msra.mxu0 0.0
        %5129 = vmatprep.subr.mxu0 0.0
        %5130 = vmatpush1.msra.mxu0 0.0
        %5131 = vmatprep.subr.mxu0 0.0
        %5132 = vmatpush1.msra.mxu0 0.0
        %5133 = vmatprep.subr.mxu0 0.0
        %5134 = vmatpush1.msra.mxu0 0.0
        %5135 = vmatprep.subr.mxu0 0.0
        %5136 = vmatpush1.msra.mxu0 0.0
        %5137 = vmatprep.subr.mxu0 0.0
        %5138 = vmatpush1.msra.mxu0 0.0
        %5139 = vmatprep.subr.mxu0 0.0
        %5140 = vmatpush1.msra.mxu0 %v3926
        %5141 = vmatprep.subr.mxu0 0.0
        %5142 = vmatpush1.msra.mxu0 %v3925
        %5143 = vmatprep.subr.mxu0 0.0
        %5144 = vmatpush2.msra.mxu0 0.0
        %5145 = vmatprep.subr.mxu0 0.0
        %5146 = vmatpush2.msra.mxu0 0.0
        %5147 = vmatprep.subr.mxu0 0.0
        %5148 = vmatpush2.msra.mxu0 0.0
        %5149 = vmatprep.subr.mxu0 0.0
        %5150 = vmatpush2.msra.mxu0 0.0
        %5151 = vmatprep.subr.mxu0 0.0
        %5152 = vmatpush2.msra.mxu0 0.0
        %5153 = vmatprep.subr.mxu0 0.0
        %5154 = vmatpush2.msra.mxu0 0.0
        %5155 = vmatprep.subr.mxu0 0.0
        %5156 = vmatpush2.msra.mxu0 0.0
        %5157 = vmatprep.subr.mxu0 0.0
        %5158 = vmatpush2.msra.mxu0 0.0
        %5159 = vmatprep.subr.mxu0 0.0
        %5160 = vmatpush2.msra.mxu0 0.0
        %5161 = vmatprep.subr.mxu0 0.0
        %5162 = vmatpush2.msra.mxu0 0.0
        %5163 = vmatprep.subr.mxu0 0.0
        %5164 = vmatpush2.msra.mxu0 0.0
        %5165 = vmatprep.subr.mxu0 0.0
        %5166 = vmatpush2.msra.mxu0 0.0
        %5167 = vmatprep.subr.mxu0 0.0
        %5168 = vmatpush2.msra.mxu0 0.0
        %5169 = vmatprep.subr.mxu0 0.0
        %5170 = vmatpush2.msra.mxu0 0.0
        %5171 = vmatprep.subr.mxu0 0.0
        %5172 = vmatpush2.msra.mxu0 0.0
        %5173 = vmatprep.subr.mxu0 0.0
        %5174 = vmatpush2.msra.mxu0 0.0
        %5175 = vmatprep.mubr.f32.mxu0 0.0
        %5176 = vmatmul.mubr.f32.gmra.mxu0 %v1542
        %v5177 = vpop.f32.mrf.mxu0
        %v5178 = vadd.f32 0.0, %v5177
        %v5179 = vpop.f32.mrf.mxu0
        %5180 = vmatprep.mubr.f32.mxu0 0.0
        %5181 = vmatmul.mubr.f32.gmra.mxu0 %v1545
        %v5182 = vpop.f32.mrf.mxu0
        %v5183 = vadd.f32 0.0, %v5182
        %v5184 = vpop.f32.mrf.mxu0
        %5185 = vmatprep.mubr.f32.mxu0 0.0
        %5186 = vmatmul.mubr.f32.gmra.mxu0 %v1548
        %v5187 = vpop.f32.mrf.mxu0
        %v5188 = vadd.f32 0.0, %v5187
        %v5189 = vpop.f32.mrf.mxu0
        %5190 = vmatprep.mubr.f32.mxu0 0.0
        %5191 = vmatmul.mubr.f32.gmra.mxu0 %v1551
        %v5192 = vpop.f32.mrf.mxu0
        %v5193 = vadd.f32 0.0, %v5192
        %v5194 = vpop.f32.mrf.mxu0
        %5195 = vdwg.mxu0
        %v5197 = vsel %vm332, %v5178, 0
        %v5200 = vsel %vm332, %v5183, 0
        %v5203 = vsel %vm332, %v5188, 0
        %v5206 = vsel %vm332, %v5193, 0
        %5208 = vmatprep.subr.mxu0 0.0
        %5209 = vmatpush1.msra.mxu0 0.0
        %5210 = vmatprep.subr.mxu0 0.0
        %5211 = vmatpush1.msra.mxu0 0.0
        %5212 = vmatprep.subr.mxu0 0.0
        %5213 = vmatpush1.msra.mxu0 0.0
        %5214 = vmatprep.subr.mxu0 0.0
        %5215 = vmatpush1.msra.mxu0 0.0
        %5216 = vmatprep.subr.mxu0 0.0
        %5217 = vmatpush1.msra.mxu0 0.0
        %5218 = vmatprep.subr.mxu0 0.0
        %5219 = vmatpush1.msra.mxu0 0.0
        %5220 = vmatprep.subr.mxu0 0.0
        %5221 = vmatpush1.msra.mxu0 0.0
        %5222 = vmatprep.subr.mxu0 0.0
        %5223 = vmatpush1.msra.mxu0 0.0
        %5224 = vmatprep.subr.mxu0 0.0
        %5225 = vmatpush1.msra.mxu0 0.0
        %5226 = vmatprep.subr.mxu0 0.0
        %5227 = vmatpush1.msra.mxu0 0.0
        %5228 = vmatprep.subr.mxu0 0.0
        %5229 = vmatpush1.msra.mxu0 0.0
        %5230 = vmatprep.subr.mxu0 0.0
        %5231 = vmatpush1.msra.mxu0 0.0
        %5232 = vmatprep.subr.mxu0 0.0
        %5233 = vmatpush1.msra.mxu0 0.0
        %5234 = vmatprep.subr.mxu0 0.0
        %5235 = vmatpush1.msra.mxu0 0.0
        %5236 = vmatprep.subr.mxu0 0.0
        %5237 = vmatpush1.msra.mxu0 %v295
        %5238 = vmatprep.subr.mxu0 0.0
        %5239 = vmatpush1.msra.mxu0 %v294
        %5240 = vmatprep.subr.mxu0 0.0
        %5241 = vmatpush2.msra.mxu0 0.0
        %5242 = vmatprep.subr.mxu0 0.0
        %5243 = vmatpush2.msra.mxu0 0.0
        %5244 = vmatprep.subr.mxu0 0.0
        %5245 = vmatpush2.msra.mxu0 0.0
        %5246 = vmatprep.subr.mxu0 0.0
        %5247 = vmatpush2.msra.mxu0 0.0
        %5248 = vmatprep.subr.mxu0 0.0
        %5249 = vmatpush2.msra.mxu0 0.0
        %5250 = vmatprep.subr.mxu0 0.0
        %5251 = vmatpush2.msra.mxu0 0.0
        %5252 = vmatprep.subr.mxu0 0.0
        %5253 = vmatpush2.msra.mxu0 0.0
        %5254 = vmatprep.subr.mxu0 0.0
        %5255 = vmatpush2.msra.mxu0 0.0
        %5256 = vmatprep.subr.mxu0 0.0
        %5257 = vmatpush2.msra.mxu0 0.0
        %5258 = vmatprep.subr.mxu0 0.0
        %5259 = vmatpush2.msra.mxu0 0.0
        %5260 = vmatprep.subr.mxu0 0.0
        %5261 = vmatpush2.msra.mxu0 0.0
        %5262 = vmatprep.subr.mxu0 0.0
        %5263 = vmatpush2.msra.mxu0 0.0
        %5264 = vmatprep.subr.mxu0 0.0
        %5265 = vmatpush2.msra.mxu0 0.0
        %5266 = vmatprep.subr.mxu0 0.0
        %5267 = vmatpush2.msra.mxu0 0.0
        %5268 = vmatprep.subr.mxu0 0.0
        %5269 = vmatpush2.msra.mxu0 0.0
        %5270 = vmatprep.subr.mxu0 0.0
        %5271 = vmatpush2.msra.mxu0 0.0
        %5272 = vmatprep.mubr.f32.mxu0 0.0
        %5273 = vmatmul.mubr.f32.gmra.mxu0 %v5197
        %v5274 = vpop.f32.mrf.mxu0
        %v5275 = vadd.f32 0.0, %v5274
        %v5276 = vpop.f32.mrf.mxu0
        %5277 = vmatprep.mubr.f32.mxu0 0.0
        %5278 = vmatmul.mubr.f32.gmra.mxu0 %v5200
        %v5279 = vpop.f32.mrf.mxu0
        %v5280 = vadd.f32 0.0, %v5279
        %v5281 = vpop.f32.mrf.mxu0
        %5282 = vmatprep.mubr.f32.mxu0 0.0
        %5283 = vmatmul.mubr.f32.gmra.mxu0 %v5203
        %v5284 = vpop.f32.mrf.mxu0
        %v5285 = vadd.f32 0.0, %v5284
        %v5286 = vpop.f32.mrf.mxu0
        %5287 = vmatprep.mubr.f32.mxu0 0.0
        %5288 = vmatmul.mubr.f32.gmra.mxu0 %v5206
        %v5289 = vpop.f32.mrf.mxu0
        %v5290 = vadd.f32 0.0, %v5289
        %v5291 = vpop.f32.mrf.mxu0
        %5292 = vdwg.mxu0
        %s5293 = sld [smem:[#allocation7 + $0x18]]
        %v5294 = vstv %s5293
        %v5295 = vmul.f32 %v5294, %v5275
        %v5296 = vmul.f32 %v5294, %v5280
        %v5297 = vmul.f32 %v5294, %v5285
        %v5298 = vmul.f32 %v5294, %v5290
        %v5299 = vadd.f32 %v5037, %v5295
        %v5300 = vadd.f32 %v5038, %v5296
        %v5301 = vadd.f32 %v5039, %v5297
        %v5302 = vadd.f32 %v5040, %v5298
        %s5303 = sld [smem:[#allocation7 + $0x3c]]
        %v5304 = vstv %s5303
        %v5305 = vmul.f32 %v5304, %v5275
        %v5306 = vmul.f32 %v5304, %v5280
        %v5307 = vmul.f32 %v5304, %v5285
        %v5308 = vmul.f32 %v5304, %v5290
        %v5309 = vadd.f32 %v5047, %v5305
        %v5310 = vadd.f32 %v5048, %v5306
        %v5311 = vadd.f32 %v5049, %v5307
        %v5312 = vadd.f32 %v5050, %v5308
        %s5313 = sld [smem:[#allocation7 + $0x60]]
        %v5314 = vstv %s5313
        %v5315 = vmul.f32 %v5314, %v5275
        %v5316 = vmul.f32 %v5314, %v5280
        %v5317 = vmul.f32 %v5314, %v5285
        %v5318 = vmul.f32 %v5314, %v5290
        %v5319 = vadd.f32 %v5057, %v5315
        %v5320 = vadd.f32 %v5058, %v5316
        %v5321 = vadd.f32 %v5059, %v5317
        %v5322 = vadd.f32 %v5060, %v5318
        %s5323 = sld [smem:[#allocation7 + $0x84]]
        %v5324 = vstv %s5323
        %v5325 = vmul.f32 %v5324, %v5275
        %v5326 = vmul.f32 %v5324, %v5280
        %v5327 = vmul.f32 %v5324, %v5285
        %v5328 = vmul.f32 %v5324, %v5290
        %v5329 = vadd.f32 %v5067, %v5325
        %v5330 = vadd.f32 %v5068, %v5326
        %v5331 = vadd.f32 %v5069, %v5327
        %v5332 = vadd.f32 %v5070, %v5328
        %s5333 = sld [smem:[#allocation7 + $0xa8]]
        %v5334 = vstv %s5333
        %v5335 = vmul.f32 %v5334, %v5275
        %v5336 = vmul.f32 %v5334, %v5280
        %v5337 = vmul.f32 %v5334, %v5285
        %v5338 = vmul.f32 %v5334, %v5290
        %v5339 = vadd.f32 %v5077, %v5335
        %v5340 = vadd.f32 %v5078, %v5336
        %v5341 = vadd.f32 %v5079, %v5337
        %v5342 = vadd.f32 %v5080, %v5338
        %s5343 = sld [smem:[#allocation7 + $0xcc]]
        %v5344 = vstv %s5343
        %v5345 = vmul.f32 %v5344, %v5275
        %v5346 = vmul.f32 %v5344, %v5280
        %v5347 = vmul.f32 %v5344, %v5285
        %v5348 = vmul.f32 %v5344, %v5290
        %v5349 = vadd.f32 %v5087, %v5345
        %v5350 = vadd.f32 %v5088, %v5346
        %v5351 = vadd.f32 %v5089, %v5347
        %v5352 = vadd.f32 %v5090, %v5348
        %s5353 = sld [smem:[#allocation7 + $0xf0]]
        %v5354 = vstv %s5353
        %v5355 = vmul.f32 %v5354, %v5275
        %v5356 = vmul.f32 %v5354, %v5280
        %v5357 = vmul.f32 %v5354, %v5285
        %v5358 = vmul.f32 %v5354, %v5290
        %v5359 = vadd.f32 %v5097, %v5355
        %v5360 = vadd.f32 %v5098, %v5356
        %v5361 = vadd.f32 %v5099, %v5357
        %v5362 = vadd.f32 %v5100, %v5358
        %s5363 = sld [smem:[#allocation7 + $0x114]]
        %v5364 = vstv %s5363
        %v5365 = vmul.f32 %v5364, %v5275
        %v5366 = vmul.f32 %v5364, %v5280
        %v5367 = vmul.f32 %v5364, %v5285
        %v5368 = vmul.f32 %v5364, %v5290
        %v5369 = vadd.f32 %v5107, %v5365
        %v5370 = vadd.f32 %v5108, %v5366
        %v5371 = vadd.f32 %v5109, %v5367
        %v5372 = vadd.f32 %v5110, %v5368
        %5373 = vmatprep.subr.mxu0 0.0
        %5374 = vmatpush1.msra.mxu0 0.0
        %5375 = vmatprep.subr.mxu0 0.0
        %5376 = vmatpush1.msra.mxu0 0.0
        %5377 = vmatprep.subr.mxu0 0.0
        %5378 = vmatpush1.msra.mxu0 0.0
        %5379 = vmatprep.subr.mxu0 0.0
        %5380 = vmatpush1.msra.mxu0 0.0
        %5381 = vmatprep.subr.mxu0 0.0
        %5382 = vmatpush1.msra.mxu0 0.0
        %5383 = vmatprep.subr.mxu0 0.0
        %5384 = vmatpush1.msra.mxu0 0.0
        %5385 = vmatprep.subr.mxu0 0.0
        %5386 = vmatpush1.msra.mxu0 0.0
        %5387 = vmatprep.subr.mxu0 0.0
        %5388 = vmatpush1.msra.mxu0 0.0
        %5389 = vmatprep.subr.mxu0 0.0
        %5390 = vmatpush1.msra.mxu0 0.0
        %5391 = vmatprep.subr.mxu0 0.0
        %5392 = vmatpush1.msra.mxu0 0.0
        %5393 = vmatprep.subr.mxu0 0.0
        %5394 = vmatpush1.msra.mxu0 0.0
        %5395 = vmatprep.subr.mxu0 0.0
        %5396 = vmatpush1.msra.mxu0 0.0
        %5397 = vmatprep.subr.mxu0 0.0
        %5398 = vmatpush1.msra.mxu0 0.0
        %5399 = vmatprep.subr.mxu0 0.0
        %5400 = vmatpush1.msra.mxu0 0.0
        %5401 = vmatprep.subr.mxu0 0.0
        %5402 = vmatpush1.msra.mxu0 %v303
        %5403 = vmatprep.subr.mxu0 0.0
        %5404 = vmatpush1.msra.mxu0 %v302
        %5405 = vmatprep.subr.mxu0 0.0
        %5406 = vmatpush2.msra.mxu0 0.0
        %5407 = vmatprep.subr.mxu0 0.0
        %5408 = vmatpush2.msra.mxu0 0.0
        %5409 = vmatprep.subr.mxu0 0.0
        %5410 = vmatpush2.msra.mxu0 0.0
        %5411 = vmatprep.subr.mxu0 0.0
        %5412 = vmatpush2.msra.mxu0 0.0
        %5413 = vmatprep.subr.mxu0 0.0
        %5414 = vmatpush2.msra.mxu0 0.0
        %5415 = vmatprep.subr.mxu0 0.0
        %5416 = vmatpush2.msra.mxu0 0.0
        %5417 = vmatprep.subr.mxu0 0.0
        %5418 = vmatpush2.msra.mxu0 0.0
        %5419 = vmatprep.subr.mxu0 0.0
        %5420 = vmatpush2.msra.mxu0 0.0
        %5421 = vmatprep.subr.mxu0 0.0
        %5422 = vmatpush2.msra.mxu0 0.0
        %5423 = vmatprep.subr.mxu0 0.0
        %5424 = vmatpush2.msra.mxu0 0.0
        %5425 = vmatprep.subr.mxu0 0.0
        %5426 = vmatpush2.msra.mxu0 0.0
        %5427 = vmatprep.subr.mxu0 0.0
        %5428 = vmatpush2.msra.mxu0 0.0
        %5429 = vmatprep.subr.mxu0 0.0
        %5430 = vmatpush2.msra.mxu0 0.0
        %5431 = vmatprep.subr.mxu0 0.0
        %5432 = vmatpush2.msra.mxu0 0.0
        %5433 = vmatprep.subr.mxu0 0.0
        %5434 = vmatpush2.msra.mxu0 0.0
        %5435 = vmatprep.subr.mxu0 0.0
        %5436 = vmatpush2.msra.mxu0 0.0
        %5437 = vmatprep.mubr.f32.mxu0 0.0
        %5438 = vmatmul.mubr.f32.gmra.mxu0 %v5197
        %v5439 = vpop.f32.mrf.mxu0
        %v5440 = vadd.f32 0.0, %v5439
        %v5441 = vpop.f32.mrf.mxu0
        %5442 = vmatprep.mubr.f32.mxu0 0.0
        %5443 = vmatmul.mubr.f32.gmra.mxu0 %v5200
        %v5444 = vpop.f32.mrf.mxu0
        %v5445 = vadd.f32 0.0, %v5444
        %v5446 = vpop.f32.mrf.mxu0
        %5447 = vmatprep.mubr.f32.mxu0 0.0
        %5448 = vmatmul.mubr.f32.gmra.mxu0 %v5203
        %v5449 = vpop.f32.mrf.mxu0
        %v5450 = vadd.f32 0.0, %v5449
        %v5451 = vpop.f32.mrf.mxu0
        %5452 = vmatprep.mubr.f32.mxu0 0.0
        %5453 = vmatmul.mubr.f32.gmra.mxu0 %v5206
        %v5454 = vpop.f32.mrf.mxu0
        %v5455 = vadd.f32 0.0, %v5454
        %v5456 = vpop.f32.mrf.mxu0
        %5457 = vdwg.mxu0
        %s5458 = sld [smem:[#allocation7 + $0x19]]
        %v5459 = vstv %s5458
        %v5460 = vmul.f32 %v5459, %v5440
        %v5461 = vmul.f32 %v5459, %v5445
        %v5462 = vmul.f32 %v5459, %v5450
        %v5463 = vmul.f32 %v5459, %v5455
        %v5464 = vadd.f32 %v5299, %v5460
        %v5465 = vadd.f32 %v5300, %v5461
        %v5466 = vadd.f32 %v5301, %v5462
        %v5467 = vadd.f32 %v5302, %v5463
        %s5468 = sld [smem:[#allocation7 + $0x3d]]
        %v5469 = vstv %s5468
        %v5470 = vmul.f32 %v5469, %v5440
        %v5471 = vmul.f32 %v5469, %v5445
        %v5472 = vmul.f32 %v5469, %v5450
        %v5473 = vmul.f32 %v5469, %v5455
        %v5474 = vadd.f32 %v5309, %v5470
        %v5475 = vadd.f32 %v5310, %v5471
        %v5476 = vadd.f32 %v5311, %v5472
        %v5477 = vadd.f32 %v5312, %v5473
        %s5478 = sld [smem:[#allocation7 + $0x61]]
        %v5479 = vstv %s5478
        %v5480 = vmul.f32 %v5479, %v5440
        %v5481 = vmul.f32 %v5479, %v5445
        %v5482 = vmul.f32 %v5479, %v5450
        %v5483 = vmul.f32 %v5479, %v5455
        %v5484 = vadd.f32 %v5319, %v5480
        %v5485 = vadd.f32 %v5320, %v5481
        %v5486 = vadd.f32 %v5321, %v5482
        %v5487 = vadd.f32 %v5322, %v5483
        %s5488 = sld [smem:[#allocation7 + $0x85]]
        %v5489 = vstv %s5488
        %v5490 = vmul.f32 %v5489, %v5440
        %v5491 = vmul.f32 %v5489, %v5445
        %v5492 = vmul.f32 %v5489, %v5450
        %v5493 = vmul.f32 %v5489, %v5455
        %v5494 = vadd.f32 %v5329, %v5490
        %v5495 = vadd.f32 %v5330, %v5491
        %v5496 = vadd.f32 %v5331, %v5492
        %v5497 = vadd.f32 %v5332, %v5493
        %s5498 = sld [smem:[#allocation7 + $0xa9]]
        %v5499 = vstv %s5498
        %v5500 = vmul.f32 %v5499, %v5440
        %v5501 = vmul.f32 %v5499, %v5445
        %v5502 = vmul.f32 %v5499, %v5450
        %v5503 = vmul.f32 %v5499, %v5455
        %v5504 = vadd.f32 %v5339, %v5500
        %v5505 = vadd.f32 %v5340, %v5501
        %v5506 = vadd.f32 %v5341, %v5502
        %v5507 = vadd.f32 %v5342, %v5503
        %s5508 = sld [smem:[#allocation7 + $0xcd]]
        %v5509 = vstv %s5508
        %v5510 = vmul.f32 %v5509, %v5440
        %v5511 = vmul.f32 %v5509, %v5445
        %v5512 = vmul.f32 %v5509, %v5450
        %v5513 = vmul.f32 %v5509, %v5455
        %v5514 = vadd.f32 %v5349, %v5510
        %v5515 = vadd.f32 %v5350, %v5511
        %v5516 = vadd.f32 %v5351, %v5512
        %v5517 = vadd.f32 %v5352, %v5513
        %s5518 = sld [smem:[#allocation7 + $0xf1]]
        %v5519 = vstv %s5518
        %v5520 = vmul.f32 %v5519, %v5440
        %v5521 = vmul.f32 %v5519, %v5445
        %v5522 = vmul.f32 %v5519, %v5450
        %v5523 = vmul.f32 %v5519, %v5455
        %v5524 = vadd.f32 %v5359, %v5520
        %v5525 = vadd.f32 %v5360, %v5521
        %v5526 = vadd.f32 %v5361, %v5522
        %v5527 = vadd.f32 %v5362, %v5523
        %s5528 = sld [smem:[#allocation7 + $0x115]]
        %v5529 = vstv %s5528
        %v5530 = vmul.f32 %v5529, %v5440
        %v5531 = vmul.f32 %v5529, %v5445
        %v5532 = vmul.f32 %v5529, %v5450
        %v5533 = vmul.f32 %v5529, %v5455
        %v5534 = vadd.f32 %v5369, %v5530
        %v5535 = vadd.f32 %v5370, %v5531
        %v5536 = vadd.f32 %v5371, %v5532
        %v5537 = vadd.f32 %v5372, %v5533
        %5538 = vmatprep.subr.mxu0 0.0
        %5539 = vmatpush1.msra.mxu0 0.0
        %5540 = vmatprep.subr.mxu0 0.0
        %5541 = vmatpush1.msra.mxu0 0.0
        %5542 = vmatprep.subr.mxu0 0.0
        %5543 = vmatpush1.msra.mxu0 0.0
        %5544 = vmatprep.subr.mxu0 0.0
        %5545 = vmatpush1.msra.mxu0 0.0
        %5546 = vmatprep.subr.mxu0 0.0
        %5547 = vmatpush1.msra.mxu0 0.0
        %5548 = vmatprep.subr.mxu0 0.0
        %5549 = vmatpush1.msra.mxu0 0.0
        %5550 = vmatprep.subr.mxu0 0.0
        %5551 = vmatpush1.msra.mxu0 0.0
        %5552 = vmatprep.subr.mxu0 0.0
        %5553 = vmatpush1.msra.mxu0 0.0
        %5554 = vmatprep.subr.mxu0 0.0
        %5555 = vmatpush1.msra.mxu0 0.0
        %5556 = vmatprep.subr.mxu0 0.0
        %5557 = vmatpush1.msra.mxu0 0.0
        %5558 = vmatprep.subr.mxu0 0.0
        %5559 = vmatpush1.msra.mxu0 0.0
        %5560 = vmatprep.subr.mxu0 0.0
        %5561 = vmatpush1.msra.mxu0 0.0
        %5562 = vmatprep.subr.mxu0 0.0
        %5563 = vmatpush1.msra.mxu0 0.0
        %5564 = vmatprep.subr.mxu0 0.0
        %5565 = vmatpush1.msra.mxu0 0.0
        %5566 = vmatprep.subr.mxu0 0.0
        %5567 = vmatpush1.msra.mxu0 %v313
        %5568 = vmatprep.subr.mxu0 0.0
        %5569 = vmatpush1.msra.mxu0 %v312
        %5570 = vmatprep.subr.mxu0 0.0
        %5571 = vmatpush2.msra.mxu0 0.0
        %5572 = vmatprep.subr.mxu0 0.0
        %5573 = vmatpush2.msra.mxu0 0.0
        %5574 = vmatprep.subr.mxu0 0.0
        %5575 = vmatpush2.msra.mxu0 0.0
        %5576 = vmatprep.subr.mxu0 0.0
        %5577 = vmatpush2.msra.mxu0 0.0
        %5578 = vmatprep.subr.mxu0 0.0
        %5579 = vmatpush2.msra.mxu0 0.0
        %5580 = vmatprep.subr.mxu0 0.0
        %5581 = vmatpush2.msra.mxu0 0.0
        %5582 = vmatprep.subr.mxu0 0.0
        %5583 = vmatpush2.msra.mxu0 0.0
        %5584 = vmatprep.subr.mxu0 0.0
        %5585 = vmatpush2.msra.mxu0 0.0
        %5586 = vmatprep.subr.mxu0 0.0
        %5587 = vmatpush2.msra.mxu0 0.0
        %5588 = vmatprep.subr.mxu0 0.0
        %5589 = vmatpush2.msra.mxu0 0.0
        %5590 = vmatprep.subr.mxu0 0.0
        %5591 = vmatpush2.msra.mxu0 0.0
        %5592 = vmatprep.subr.mxu0 0.0
        %5593 = vmatpush2.msra.mxu0 0.0
        %5594 = vmatprep.subr.mxu0 0.0
        %5595 = vmatpush2.msra.mxu0 0.0
        %5596 = vmatprep.subr.mxu0 0.0
        %5597 = vmatpush2.msra.mxu0 0.0
        %5598 = vmatprep.subr.mxu0 0.0
        %5599 = vmatpush2.msra.mxu0 0.0
        %5600 = vmatprep.subr.mxu0 0.0
        %5601 = vmatpush2.msra.mxu0 0.0
        %5602 = vmatprep.mubr.f32.mxu0 0.0
        %5603 = vmatmul.mubr.f32.gmra.mxu0 %v5197
        %v5604 = vpop.f32.mrf.mxu0
        %v5605 = vadd.f32 0.0, %v5604
        %v5606 = vpop.f32.mrf.mxu0
        %5607 = vmatprep.mubr.f32.mxu0 0.0
        %5608 = vmatmul.mubr.f32.gmra.mxu0 %v5200
        %v5609 = vpop.f32.mrf.mxu0
        %v5610 = vadd.f32 0.0, %v5609
        %v5611 = vpop.f32.mrf.mxu0
        %5612 = vmatprep.mubr.f32.mxu0 0.0
        %5613 = vmatmul.mubr.f32.gmra.mxu0 %v5203
        %v5614 = vpop.f32.mrf.mxu0
        %v5615 = vadd.f32 0.0, %v5614
        %v5616 = vpop.f32.mrf.mxu0
        %5617 = vmatprep.mubr.f32.mxu0 0.0
        %5618 = vmatmul.mubr.f32.gmra.mxu0 %v5206
        %v5619 = vpop.f32.mrf.mxu0
        %v5620 = vadd.f32 0.0, %v5619
        %v5621 = vpop.f32.mrf.mxu0
        %5622 = vdwg.mxu0
        %s5623 = sld [smem:[#allocation7 + $0x1a]]
        %v5624 = vstv %s5623
        %v5625 = vmul.f32 %v5624, %v5605
        %v5626 = vmul.f32 %v5624, %v5610
        %v5627 = vmul.f32 %v5624, %v5615
        %v5628 = vmul.f32 %v5624, %v5620
        %v5629 = vadd.f32 %v5464, %v5625
        %v5630 = vadd.f32 %v5465, %v5626
        %v5631 = vadd.f32 %v5466, %v5627
        %v5632 = vadd.f32 %v5467, %v5628
        %s5633 = sld [smem:[#allocation7 + $0x3e]]
        %v5634 = vstv %s5633
        %v5635 = vmul.f32 %v5634, %v5605
        %v5636 = vmul.f32 %v5634, %v5610
        %v5637 = vmul.f32 %v5634, %v5615
        %v5638 = vmul.f32 %v5634, %v5620
        %v5639 = vadd.f32 %v5474, %v5635
        %v5640 = vadd.f32 %v5475, %v5636
        %v5641 = vadd.f32 %v5476, %v5637
        %v5642 = vadd.f32 %v5477, %v5638
        %s5643 = sld [smem:[#allocation7 + $0x62]]
        %v5644 = vstv %s5643
        %v5645 = vmul.f32 %v5644, %v5605
        %v5646 = vmul.f32 %v5644, %v5610
        %v5647 = vmul.f32 %v5644, %v5615
        %v5648 = vmul.f32 %v5644, %v5620
        %v5649 = vadd.f32 %v5484, %v5645
        %v5650 = vadd.f32 %v5485, %v5646
        %v5651 = vadd.f32 %v5486, %v5647
        %v5652 = vadd.f32 %v5487, %v5648
        %s5653 = sld [smem:[#allocation7 + $0x86]]
        %v5654 = vstv %s5653
        %v5655 = vmul.f32 %v5654, %v5605
        %v5656 = vmul.f32 %v5654, %v5610
        %v5657 = vmul.f32 %v5654, %v5615
        %v5658 = vmul.f32 %v5654, %v5620
        %v5659 = vadd.f32 %v5494, %v5655
        %v5660 = vadd.f32 %v5495, %v5656
        %v5661 = vadd.f32 %v5496, %v5657
        %v5662 = vadd.f32 %v5497, %v5658
        %s5663 = sld [smem:[#allocation7 + $0xaa]]
        %v5664 = vstv %s5663
        %v5665 = vmul.f32 %v5664, %v5605
        %v5666 = vmul.f32 %v5664, %v5610
        %v5667 = vmul.f32 %v5664, %v5615
        %v5668 = vmul.f32 %v5664, %v5620
        %v5669 = vadd.f32 %v5504, %v5665
        %v5670 = vadd.f32 %v5505, %v5666
        %v5671 = vadd.f32 %v5506, %v5667
        %v5672 = vadd.f32 %v5507, %v5668
        %s5673 = sld [smem:[#allocation7 + $0xce]]
        %v5674 = vstv %s5673
        %v5675 = vmul.f32 %v5674, %v5605
        %v5676 = vmul.f32 %v5674, %v5610
        %v5677 = vmul.f32 %v5674, %v5615
        %v5678 = vmul.f32 %v5674, %v5620
        %v5679 = vadd.f32 %v5514, %v5675
        %v5680 = vadd.f32 %v5515, %v5676
        %v5681 = vadd.f32 %v5516, %v5677
        %v5682 = vadd.f32 %v5517, %v5678
        %s5683 = sld [smem:[#allocation7 + $0xf2]]
        %v5684 = vstv %s5683
        %v5685 = vmul.f32 %v5684, %v5605
        %v5686 = vmul.f32 %v5684, %v5610
        %v5687 = vmul.f32 %v5684, %v5615
        %v5688 = vmul.f32 %v5684, %v5620
        %v5689 = vadd.f32 %v5524, %v5685
        %v5690 = vadd.f32 %v5525, %v5686
        %v5691 = vadd.f32 %v5526, %v5687
        %v5692 = vadd.f32 %v5527, %v5688
        %s5693 = sld [smem:[#allocation7 + $0x116]]
        %v5694 = vstv %s5693
        %v5695 = vmul.f32 %v5694, %v5605
        %v5696 = vmul.f32 %v5694, %v5610
        %v5697 = vmul.f32 %v5694, %v5615
        %v5698 = vmul.f32 %v5694, %v5620
        %v5699 = vadd.f32 %v5534, %v5695
        %v5700 = vadd.f32 %v5535, %v5696
        %v5701 = vadd.f32 %v5536, %v5697
        %v5702 = vadd.f32 %v5537, %v5698
        %s5703 = scalar_lea.vmem %s182, 48 [#allocation2]
        %v5704 = vld [vmem:[%s5703] sm:$0xff]
        %v5705 = vld [vmem:[%s5703 + $0x8] sm:$0xff]
        %5706 = vmatprep.subr.mxu0 0.0
        %5707 = vmatpush1.msra.mxu0 0.0
        %5708 = vmatprep.subr.mxu0 0.0
        %5709 = vmatpush1.msra.mxu0 0.0
        %5710 = vmatprep.subr.mxu0 0.0
        %5711 = vmatpush1.msra.mxu0 0.0
        %5712 = vmatprep.subr.mxu0 0.0
        %5713 = vmatpush1.msra.mxu0 0.0
        %5714 = vmatprep.subr.mxu0 0.0
        %5715 = vmatpush1.msra.mxu0 0.0
        %5716 = vmatprep.subr.mxu0 0.0
        %5717 = vmatpush1.msra.mxu0 0.0
        %5718 = vmatprep.subr.mxu0 0.0
        %5719 = vmatpush1.msra.mxu0 0.0
        %5720 = vmatprep.subr.mxu0 0.0
        %5721 = vmatpush1.msra.mxu0 0.0
        %5722 = vmatprep.subr.mxu0 0.0
        %5723 = vmatpush1.msra.mxu0 0.0
        %5724 = vmatprep.subr.mxu0 0.0
        %5725 = vmatpush1.msra.mxu0 0.0
        %5726 = vmatprep.subr.mxu0 0.0
        %5727 = vmatpush1.msra.mxu0 0.0
        %5728 = vmatprep.subr.mxu0 0.0
        %5729 = vmatpush1.msra.mxu0 0.0
        %5730 = vmatprep.subr.mxu0 0.0
        %5731 = vmatpush1.msra.mxu0 0.0
        %5732 = vmatprep.subr.mxu0 0.0
        %5733 = vmatpush1.msra.mxu0 0.0
        %5734 = vmatprep.subr.mxu0 0.0
        %5735 = vmatpush1.msra.mxu0 %v5705
        %5736 = vmatprep.subr.mxu0 0.0
        %5737 = vmatpush1.msra.mxu0 %v5704
        %5738 = vmatprep.subr.mxu0 0.0
        %5739 = vmatpush2.msra.mxu0 0.0
        %5740 = vmatprep.subr.mxu0 0.0
        %5741 = vmatpush2.msra.mxu0 0.0
        %5742 = vmatprep.subr.mxu0 0.0
        %5743 = vmatpush2.msra.mxu0 0.0
        %5744 = vmatprep.subr.mxu0 0.0
        %5745 = vmatpush2.msra.mxu0 0.0
        %5746 = vmatprep.subr.mxu0 0.0
        %5747 = vmatpush2.msra.mxu0 0.0
        %5748 = vmatprep.subr.mxu0 0.0
        %5749 = vmatpush2.msra.mxu0 0.0
        %5750 = vmatprep.subr.mxu0 0.0
        %5751 = vmatpush2.msra.mxu0 0.0
        %5752 = vmatprep.subr.mxu0 0.0
        %5753 = vmatpush2.msra.mxu0 0.0
        %5754 = vmatprep.subr.mxu0 0.0
        %5755 = vmatpush2.msra.mxu0 0.0
        %5756 = vmatprep.subr.mxu0 0.0
        %5757 = vmatpush2.msra.mxu0 0.0
        %5758 = vmatprep.subr.mxu0 0.0
        %5759 = vmatpush2.msra.mxu0 0.0
        %5760 = vmatprep.subr.mxu0 0.0
        %5761 = vmatpush2.msra.mxu0 0.0
        %5762 = vmatprep.subr.mxu0 0.0
        %5763 = vmatpush2.msra.mxu0 0.0
        %5764 = vmatprep.subr.mxu0 0.0
        %5765 = vmatpush2.msra.mxu0 0.0
        %5766 = vmatprep.subr.mxu0 0.0
        %5767 = vmatpush2.msra.mxu0 0.0
        %5768 = vmatprep.subr.mxu0 0.0
        %5769 = vmatpush2.msra.mxu0 0.0
        %5770 = vmatprep.mubr.f32.mxu0 0.0
        %5771 = vmatmul.mubr.f32.gmra.mxu0 %v334
        %v5772 = vpop.f32.mrf.mxu0
        %v5773 = vadd.f32 0.0, %v5772
        %v5774 = vpop.f32.mrf.mxu0
        %5775 = vmatprep.mubr.f32.mxu0 0.0
        %5776 = vmatmul.mubr.f32.gmra.mxu0 %v337
        %v5777 = vpop.f32.mrf.mxu0
        %v5778 = vadd.f32 0.0, %v5777
        %v5779 = vpop.f32.mrf.mxu0
        %5780 = vmatprep.mubr.f32.mxu0 0.0
        %5781 = vmatmul.mubr.f32.gmra.mxu0 %v340
        %v5782 = vpop.f32.mrf.mxu0
        %v5783 = vadd.f32 0.0, %v5782
        %v5784 = vpop.f32.mrf.mxu0
        %5785 = vmatprep.mubr.f32.mxu0 0.0
        %5786 = vmatmul.mubr.f32.gmra.mxu0 %v343
        %v5787 = vpop.f32.mrf.mxu0
        %v5788 = vadd.f32 0.0, %v5787
        %v5789 = vpop.f32.mrf.mxu0
        %5790 = vdwg.mxu0
        %v5792 = vsel %vm332, %v5773, 0
        %v5795 = vsel %vm332, %v5778, 0
        %v5798 = vsel %vm332, %v5783, 0
        %v5801 = vsel %vm332, %v5788, 0
        %5803 = vmatprep.subr.mxu0 0.0
        %5804 = vmatpush1.msra.mxu0 0.0
        %5805 = vmatprep.subr.mxu0 0.0
        %5806 = vmatpush1.msra.mxu0 0.0
        %5807 = vmatprep.subr.mxu0 0.0
        %5808 = vmatpush1.msra.mxu0 0.0
        %5809 = vmatprep.subr.mxu0 0.0
        %5810 = vmatpush1.msra.mxu0 0.0
        %5811 = vmatprep.subr.mxu0 0.0
        %5812 = vmatpush1.msra.mxu0 0.0
        %5813 = vmatprep.subr.mxu0 0.0
        %5814 = vmatpush1.msra.mxu0 0.0
        %5815 = vmatprep.subr.mxu0 0.0
        %5816 = vmatpush1.msra.mxu0 0.0
        %5817 = vmatprep.subr.mxu0 0.0
        %5818 = vmatpush1.msra.mxu0 0.0
        %5819 = vmatprep.subr.mxu0 0.0
        %5820 = vmatpush1.msra.mxu0 0.0
        %5821 = vmatprep.subr.mxu0 0.0
        %5822 = vmatpush1.msra.mxu0 0.0
        %5823 = vmatprep.subr.mxu0 0.0
        %5824 = vmatpush1.msra.mxu0 0.0
        %5825 = vmatprep.subr.mxu0 0.0
        %5826 = vmatpush1.msra.mxu0 0.0
        %5827 = vmatprep.subr.mxu0 0.0
        %5828 = vmatpush1.msra.mxu0 0.0
        %5829 = vmatprep.subr.mxu0 0.0
        %5830 = vmatpush1.msra.mxu0 0.0
        %5831 = vmatprep.subr.mxu0 0.0
        %5832 = vmatpush1.msra.mxu0 %v295
        %5833 = vmatprep.subr.mxu0 0.0
        %5834 = vmatpush1.msra.mxu0 %v294
        %5835 = vmatprep.subr.mxu0 0.0
        %5836 = vmatpush2.msra.mxu0 0.0
        %5837 = vmatprep.subr.mxu0 0.0
        %5838 = vmatpush2.msra.mxu0 0.0
        %5839 = vmatprep.subr.mxu0 0.0
        %5840 = vmatpush2.msra.mxu0 0.0
        %5841 = vmatprep.subr.mxu0 0.0
        %5842 = vmatpush2.msra.mxu0 0.0
        %5843 = vmatprep.subr.mxu0 0.0
        %5844 = vmatpush2.msra.mxu0 0.0
        %5845 = vmatprep.subr.mxu0 0.0
        %5846 = vmatpush2.msra.mxu0 0.0
        %5847 = vmatprep.subr.mxu0 0.0
        %5848 = vmatpush2.msra.mxu0 0.0
        %5849 = vmatprep.subr.mxu0 0.0
        %5850 = vmatpush2.msra.mxu0 0.0
        %5851 = vmatprep.subr.mxu0 0.0
        %5852 = vmatpush2.msra.mxu0 0.0
        %5853 = vmatprep.subr.mxu0 0.0
        %5854 = vmatpush2.msra.mxu0 0.0
        %5855 = vmatprep.subr.mxu0 0.0
        %5856 = vmatpush2.msra.mxu0 0.0
        %5857 = vmatprep.subr.mxu0 0.0
        %5858 = vmatpush2.msra.mxu0 0.0
        %5859 = vmatprep.subr.mxu0 0.0
        %5860 = vmatpush2.msra.mxu0 0.0
        %5861 = vmatprep.subr.mxu0 0.0
        %5862 = vmatpush2.msra.mxu0 0.0
        %5863 = vmatprep.subr.mxu0 0.0
        %5864 = vmatpush2.msra.mxu0 0.0
        %5865 = vmatprep.subr.mxu0 0.0
        %5866 = vmatpush2.msra.mxu0 0.0
        %5867 = vmatprep.mubr.f32.mxu0 0.0
        %5868 = vmatmul.mubr.f32.gmra.mxu0 %v5792
        %v5869 = vpop.f32.mrf.mxu0
        %v5870 = vadd.f32 0.0, %v5869
        %v5871 = vpop.f32.mrf.mxu0
        %5872 = vmatprep.mubr.f32.mxu0 0.0
        %5873 = vmatmul.mubr.f32.gmra.mxu0 %v5795
        %v5874 = vpop.f32.mrf.mxu0
        %v5875 = vadd.f32 0.0, %v5874
        %v5876 = vpop.f32.mrf.mxu0
        %5877 = vmatprep.mubr.f32.mxu0 0.0
        %5878 = vmatmul.mubr.f32.gmra.mxu0 %v5798
        %v5879 = vpop.f32.mrf.mxu0
        %v5880 = vadd.f32 0.0, %v5879
        %v5881 = vpop.f32.mrf.mxu0
        %5882 = vmatprep.mubr.f32.mxu0 0.0
        %5883 = vmatmul.mubr.f32.gmra.mxu0 %v5801
        %v5884 = vpop.f32.mrf.mxu0
        %v5885 = vadd.f32 0.0, %v5884
        %v5886 = vpop.f32.mrf.mxu0
        %5887 = vdwg.mxu0
        %s5888 = sld [smem:[#allocation7 + $0x1b]]
        %v5889 = vstv %s5888
        %v5890 = vmul.f32 %v5889, %v5870
        %v5891 = vmul.f32 %v5889, %v5875
        %v5892 = vmul.f32 %v5889, %v5880
        %v5893 = vmul.f32 %v5889, %v5885
        %v5894 = vadd.f32 %v5629, %v5890
        %v5895 = vadd.f32 %v5630, %v5891
        %v5896 = vadd.f32 %v5631, %v5892
        %v5897 = vadd.f32 %v5632, %v5893
        %s5898 = sld [smem:[#allocation7 + $0x3f]]
        %v5899 = vstv %s5898
        %v5900 = vmul.f32 %v5899, %v5870
        %v5901 = vmul.f32 %v5899, %v5875
        %v5902 = vmul.f32 %v5899, %v5880
        %v5903 = vmul.f32 %v5899, %v5885
        %v5904 = vadd.f32 %v5639, %v5900
        %v5905 = vadd.f32 %v5640, %v5901
        %v5906 = vadd.f32 %v5641, %v5902
        %v5907 = vadd.f32 %v5642, %v5903
        %s5908 = sld [smem:[#allocation7 + $0x63]]
        %v5909 = vstv %s5908
        %v5910 = vmul.f32 %v5909, %v5870
        %v5911 = vmul.f32 %v5909, %v5875
        %v5912 = vmul.f32 %v5909, %v5880
        %v5913 = vmul.f32 %v5909, %v5885
        %v5914 = vadd.f32 %v5649, %v5910
        %v5915 = vadd.f32 %v5650, %v5911
        %v5916 = vadd.f32 %v5651, %v5912
        %v5917 = vadd.f32 %v5652, %v5913
        %s5918 = sld [smem:[#allocation7 + $0x87]]
        %v5919 = vstv %s5918
        %v5920 = vmul.f32 %v5919, %v5870
        %v5921 = vmul.f32 %v5919, %v5875
        %v5922 = vmul.f32 %v5919, %v5880
        %v5923 = vmul.f32 %v5919, %v5885
        %v5924 = vadd.f32 %v5659, %v5920
        %v5925 = vadd.f32 %v5660, %v5921
        %v5926 = vadd.f32 %v5661, %v5922
        %v5927 = vadd.f32 %v5662, %v5923
        %s5928 = sld [smem:[#allocation7 + $0xab]]
        %v5929 = vstv %s5928
        %v5930 = vmul.f32 %v5929, %v5870
        %v5931 = vmul.f32 %v5929, %v5875
        %v5932 = vmul.f32 %v5929, %v5880
        %v5933 = vmul.f32 %v5929, %v5885
        %v5934 = vadd.f32 %v5669, %v5930
        %v5935 = vadd.f32 %v5670, %v5931
        %v5936 = vadd.f32 %v5671, %v5932
        %v5937 = vadd.f32 %v5672, %v5933
        %s5938 = sld [smem:[#allocation7 + $0xcf]]
        %v5939 = vstv %s5938
        %v5940 = vmul.f32 %v5939, %v5870
        %v5941 = vmul.f32 %v5939, %v5875
        %v5942 = vmul.f32 %v5939, %v5880
        %v5943 = vmul.f32 %v5939, %v5885
        %v5944 = vadd.f32 %v5679, %v5940
        %v5945 = vadd.f32 %v5680, %v5941
        %v5946 = vadd.f32 %v5681, %v5942
        %v5947 = vadd.f32 %v5682, %v5943
        %s5948 = sld [smem:[#allocation7 + $0xf3]]
        %v5949 = vstv %s5948
        %v5950 = vmul.f32 %v5949, %v5870
        %v5951 = vmul.f32 %v5949, %v5875
        %v5952 = vmul.f32 %v5949, %v5880
        %v5953 = vmul.f32 %v5949, %v5885
        %v5954 = vadd.f32 %v5689, %v5950
        %v5955 = vadd.f32 %v5690, %v5951
        %v5956 = vadd.f32 %v5691, %v5952
        %v5957 = vadd.f32 %v5692, %v5953
        %s5958 = sld [smem:[#allocation7 + $0x117]]
        %v5959 = vstv %s5958
        %v5960 = vmul.f32 %v5959, %v5870
        %v5961 = vmul.f32 %v5959, %v5875
        %v5962 = vmul.f32 %v5959, %v5880
        %v5963 = vmul.f32 %v5959, %v5885
        %v5964 = vadd.f32 %v5699, %v5960
        %v5965 = vadd.f32 %v5700, %v5961
        %v5966 = vadd.f32 %v5701, %v5962
        %v5967 = vadd.f32 %v5702, %v5963
        %5968 = vmatprep.subr.mxu0 0.0
        %5969 = vmatpush1.msra.mxu0 0.0
        %5970 = vmatprep.subr.mxu0 0.0
        %5971 = vmatpush1.msra.mxu0 0.0
        %5972 = vmatprep.subr.mxu0 0.0
        %5973 = vmatpush1.msra.mxu0 0.0
        %5974 = vmatprep.subr.mxu0 0.0
        %5975 = vmatpush1.msra.mxu0 0.0
        %5976 = vmatprep.subr.mxu0 0.0
        %5977 = vmatpush1.msra.mxu0 0.0
        %5978 = vmatprep.subr.mxu0 0.0
        %5979 = vmatpush1.msra.mxu0 0.0
        %5980 = vmatprep.subr.mxu0 0.0
        %5981 = vmatpush1.msra.mxu0 0.0
        %5982 = vmatprep.subr.mxu0 0.0
        %5983 = vmatpush1.msra.mxu0 0.0
        %5984 = vmatprep.subr.mxu0 0.0
        %5985 = vmatpush1.msra.mxu0 0.0
        %5986 = vmatprep.subr.mxu0 0.0
        %5987 = vmatpush1.msra.mxu0 0.0
        %5988 = vmatprep.subr.mxu0 0.0
        %5989 = vmatpush1.msra.mxu0 0.0
        %5990 = vmatprep.subr.mxu0 0.0
        %5991 = vmatpush1.msra.mxu0 0.0
        %5992 = vmatprep.subr.mxu0 0.0
        %5993 = vmatpush1.msra.mxu0 0.0
        %5994 = vmatprep.subr.mxu0 0.0
        %5995 = vmatpush1.msra.mxu0 0.0
        %5996 = vmatprep.subr.mxu0 0.0
        %5997 = vmatpush1.msra.mxu0 %v303
        %5998 = vmatprep.subr.mxu0 0.0
        %5999 = vmatpush1.msra.mxu0 %v302
        %6000 = vmatprep.subr.mxu0 0.0
        %6001 = vmatpush2.msra.mxu0 0.0
        %6002 = vmatprep.subr.mxu0 0.0
        %6003 = vmatpush2.msra.mxu0 0.0
        %6004 = vmatprep.subr.mxu0 0.0
        %6005 = vmatpush2.msra.mxu0 0.0
        %6006 = vmatprep.subr.mxu0 0.0
        %6007 = vmatpush2.msra.mxu0 0.0
        %6008 = vmatprep.subr.mxu0 0.0
        %6009 = vmatpush2.msra.mxu0 0.0
        %6010 = vmatprep.subr.mxu0 0.0
        %6011 = vmatpush2.msra.mxu0 0.0
        %6012 = vmatprep.subr.mxu0 0.0
        %6013 = vmatpush2.msra.mxu0 0.0
        %6014 = vmatprep.subr.mxu0 0.0
        %6015 = vmatpush2.msra.mxu0 0.0
        %6016 = vmatprep.subr.mxu0 0.0
        %6017 = vmatpush2.msra.mxu0 0.0
        %6018 = vmatprep.subr.mxu0 0.0
        %6019 = vmatpush2.msra.mxu0 0.0
        %6020 = vmatprep.subr.mxu0 0.0
        %6021 = vmatpush2.msra.mxu0 0.0
        %6022 = vmatprep.subr.mxu0 0.0
        %6023 = vmatpush2.msra.mxu0 0.0
        %6024 = vmatprep.subr.mxu0 0.0
        %6025 = vmatpush2.msra.mxu0 0.0
        %6026 = vmatprep.subr.mxu0 0.0
        %6027 = vmatpush2.msra.mxu0 0.0
        %6028 = vmatprep.subr.mxu0 0.0
        %6029 = vmatpush2.msra.mxu0 0.0
        %6030 = vmatprep.subr.mxu0 0.0
        %6031 = vmatpush2.msra.mxu0 0.0
        %6032 = vmatprep.mubr.f32.mxu0 0.0
        %6033 = vmatmul.mubr.f32.gmra.mxu0 %v5792
        %v6034 = vpop.f32.mrf.mxu0
        %v6035 = vadd.f32 0.0, %v6034
        %v6036 = vpop.f32.mrf.mxu0
        %6037 = vmatprep.mubr.f32.mxu0 0.0
        %6038 = vmatmul.mubr.f32.gmra.mxu0 %v5795
        %v6039 = vpop.f32.mrf.mxu0
        %v6040 = vadd.f32 0.0, %v6039
        %v6041 = vpop.f32.mrf.mxu0
        %6042 = vmatprep.mubr.f32.mxu0 0.0
        %6043 = vmatmul.mubr.f32.gmra.mxu0 %v5798
        %v6044 = vpop.f32.mrf.mxu0
        %v6045 = vadd.f32 0.0, %v6044
        %v6046 = vpop.f32.mrf.mxu0
        %6047 = vmatprep.mubr.f32.mxu0 0.0
        %6048 = vmatmul.mubr.f32.gmra.mxu0 %v5801
        %v6049 = vpop.f32.mrf.mxu0
        %v6050 = vadd.f32 0.0, %v6049
        %v6051 = vpop.f32.mrf.mxu0
        %6052 = vdwg.mxu0
        %s6053 = sld [smem:[#allocation7 + $0x1c]]
        %v6054 = vstv %s6053
        %v6055 = vmul.f32 %v6054, %v6035
        %v6056 = vmul.f32 %v6054, %v6040
        %v6057 = vmul.f32 %v6054, %v6045
        %v6058 = vmul.f32 %v6054, %v6050
        %v6059 = vadd.f32 %v5894, %v6055
        %v6060 = vadd.f32 %v5895, %v6056
        %v6061 = vadd.f32 %v5896, %v6057
        %v6062 = vadd.f32 %v5897, %v6058
        %s6063 = sld [smem:[#allocation7 + $0x40]]
        %v6064 = vstv %s6063
        %v6065 = vmul.f32 %v6064, %v6035
        %v6066 = vmul.f32 %v6064, %v6040
        %v6067 = vmul.f32 %v6064, %v6045
        %v6068 = vmul.f32 %v6064, %v6050
        %v6069 = vadd.f32 %v5904, %v6065
        %v6070 = vadd.f32 %v5905, %v6066
        %v6071 = vadd.f32 %v5906, %v6067
        %v6072 = vadd.f32 %v5907, %v6068
        %s6073 = sld [smem:[#allocation7 + $0x64]]
        %v6074 = vstv %s6073
        %v6075 = vmul.f32 %v6074, %v6035
        %v6076 = vmul.f32 %v6074, %v6040
        %v6077 = vmul.f32 %v6074, %v6045
        %v6078 = vmul.f32 %v6074, %v6050
        %v6079 = vadd.f32 %v5914, %v6075
        %v6080 = vadd.f32 %v5915, %v6076
        %v6081 = vadd.f32 %v5916, %v6077
        %v6082 = vadd.f32 %v5917, %v6078
        %s6083 = sld [smem:[#allocation7 + $0x88]]
        %v6084 = vstv %s6083
        %v6085 = vmul.f32 %v6084, %v6035
        %v6086 = vmul.f32 %v6084, %v6040
        %v6087 = vmul.f32 %v6084, %v6045
        %v6088 = vmul.f32 %v6084, %v6050
        %v6089 = vadd.f32 %v5924, %v6085
        %v6090 = vadd.f32 %v5925, %v6086
        %v6091 = vadd.f32 %v5926, %v6087
        %v6092 = vadd.f32 %v5927, %v6088
        %s6093 = sld [smem:[#allocation7 + $0xac]]
        %v6094 = vstv %s6093
        %v6095 = vmul.f32 %v6094, %v6035
        %v6096 = vmul.f32 %v6094, %v6040
        %v6097 = vmul.f32 %v6094, %v6045
        %v6098 = vmul.f32 %v6094, %v6050
        %v6099 = vadd.f32 %v5934, %v6095
        %v6100 = vadd.f32 %v5935, %v6096
        %v6101 = vadd.f32 %v5936, %v6097
        %v6102 = vadd.f32 %v5937, %v6098
        %s6103 = sld [smem:[#allocation7 + $0xd0]]
        %v6104 = vstv %s6103
        %v6105 = vmul.f32 %v6104, %v6035
        %v6106 = vmul.f32 %v6104, %v6040
        %v6107 = vmul.f32 %v6104, %v6045
        %v6108 = vmul.f32 %v6104, %v6050
        %v6109 = vadd.f32 %v5944, %v6105
        %v6110 = vadd.f32 %v5945, %v6106
        %v6111 = vadd.f32 %v5946, %v6107
        %v6112 = vadd.f32 %v5947, %v6108
        %s6113 = sld [smem:[#allocation7 + $0xf4]]
        %v6114 = vstv %s6113
        %v6115 = vmul.f32 %v6114, %v6035
        %v6116 = vmul.f32 %v6114, %v6040
        %v6117 = vmul.f32 %v6114, %v6045
        %v6118 = vmul.f32 %v6114, %v6050
        %v6119 = vadd.f32 %v5954, %v6115
        %v6120 = vadd.f32 %v5955, %v6116
        %v6121 = vadd.f32 %v5956, %v6117
        %v6122 = vadd.f32 %v5957, %v6118
        %s6123 = sld [smem:[#allocation7 + $0x118]]
        %v6124 = vstv %s6123
        %v6125 = vmul.f32 %v6124, %v6035
        %v6126 = vmul.f32 %v6124, %v6040
        %v6127 = vmul.f32 %v6124, %v6045
        %v6128 = vmul.f32 %v6124, %v6050
        %v6129 = vadd.f32 %v5964, %v6125
        %v6130 = vadd.f32 %v5965, %v6126
        %v6131 = vadd.f32 %v5966, %v6127
        %v6132 = vadd.f32 %v5967, %v6128
        %6133 = vmatprep.subr.mxu0 0.0
        %6134 = vmatpush1.msra.mxu0 0.0
        %6135 = vmatprep.subr.mxu0 0.0
        %6136 = vmatpush1.msra.mxu0 0.0
        %6137 = vmatprep.subr.mxu0 0.0
        %6138 = vmatpush1.msra.mxu0 0.0
        %6139 = vmatprep.subr.mxu0 0.0
        %6140 = vmatpush1.msra.mxu0 0.0
        %6141 = vmatprep.subr.mxu0 0.0
        %6142 = vmatpush1.msra.mxu0 0.0
        %6143 = vmatprep.subr.mxu0 0.0
        %6144 = vmatpush1.msra.mxu0 0.0
        %6145 = vmatprep.subr.mxu0 0.0
        %6146 = vmatpush1.msra.mxu0 0.0
        %6147 = vmatprep.subr.mxu0 0.0
        %6148 = vmatpush1.msra.mxu0 0.0
        %6149 = vmatprep.subr.mxu0 0.0
        %6150 = vmatpush1.msra.mxu0 0.0
        %6151 = vmatprep.subr.mxu0 0.0
        %6152 = vmatpush1.msra.mxu0 0.0
        %6153 = vmatprep.subr.mxu0 0.0
        %6154 = vmatpush1.msra.mxu0 0.0
        %6155 = vmatprep.subr.mxu0 0.0
        %6156 = vmatpush1.msra.mxu0 0.0
        %6157 = vmatprep.subr.mxu0 0.0
        %6158 = vmatpush1.msra.mxu0 0.0
        %6159 = vmatprep.subr.mxu0 0.0
        %6160 = vmatpush1.msra.mxu0 0.0
        %6161 = vmatprep.subr.mxu0 0.0
        %6162 = vmatpush1.msra.mxu0 %v313
        %6163 = vmatprep.subr.mxu0 0.0
        %6164 = vmatpush1.msra.mxu0 %v312
        %6165 = vmatprep.subr.mxu0 0.0
        %6166 = vmatpush2.msra.mxu0 0.0
        %6167 = vmatprep.subr.mxu0 0.0
        %6168 = vmatpush2.msra.mxu0 0.0
        %6169 = vmatprep.subr.mxu0 0.0
        %6170 = vmatpush2.msra.mxu0 0.0
        %6171 = vmatprep.subr.mxu0 0.0
        %6172 = vmatpush2.msra.mxu0 0.0
        %6173 = vmatprep.subr.mxu0 0.0
        %6174 = vmatpush2.msra.mxu0 0.0
        %6175 = vmatprep.subr.mxu0 0.0
        %6176 = vmatpush2.msra.mxu0 0.0
        %6177 = vmatprep.subr.mxu0 0.0
        %6178 = vmatpush2.msra.mxu0 0.0
        %6179 = vmatprep.subr.mxu0 0.0
        %6180 = vmatpush2.msra.mxu0 0.0
        %6181 = vmatprep.subr.mxu0 0.0
        %6182 = vmatpush2.msra.mxu0 0.0
        %6183 = vmatprep.subr.mxu0 0.0
        %6184 = vmatpush2.msra.mxu0 0.0
        %6185 = vmatprep.subr.mxu0 0.0
        %6186 = vmatpush2.msra.mxu0 0.0
        %6187 = vmatprep.subr.mxu0 0.0
        %6188 = vmatpush2.msra.mxu0 0.0
        %6189 = vmatprep.subr.mxu0 0.0
        %6190 = vmatpush2.msra.mxu0 0.0
        %6191 = vmatprep.subr.mxu0 0.0
        %6192 = vmatpush2.msra.mxu0 0.0
        %6193 = vmatprep.subr.mxu0 0.0
        %6194 = vmatpush2.msra.mxu0 0.0
        %6195 = vmatprep.subr.mxu0 0.0
        %6196 = vmatpush2.msra.mxu0 0.0
        %6197 = vmatprep.mubr.f32.mxu0 0.0
        %6198 = vmatmul.mubr.f32.gmra.mxu0 %v5792
        %v6199 = vpop.f32.mrf.mxu0
        %v6200 = vadd.f32 0.0, %v6199
        %v6201 = vpop.f32.mrf.mxu0
        %6202 = vmatprep.mubr.f32.mxu0 0.0
        %6203 = vmatmul.mubr.f32.gmra.mxu0 %v5795
        %v6204 = vpop.f32.mrf.mxu0
        %v6205 = vadd.f32 0.0, %v6204
        %v6206 = vpop.f32.mrf.mxu0
        %6207 = vmatprep.mubr.f32.mxu0 0.0
        %6208 = vmatmul.mubr.f32.gmra.mxu0 %v5798
        %v6209 = vpop.f32.mrf.mxu0
        %v6210 = vadd.f32 0.0, %v6209
        %v6211 = vpop.f32.mrf.mxu0
        %6212 = vmatprep.mubr.f32.mxu0 0.0
        %6213 = vmatmul.mubr.f32.gmra.mxu0 %v5801
        %v6214 = vpop.f32.mrf.mxu0
        %v6215 = vadd.f32 0.0, %v6214
        %v6216 = vpop.f32.mrf.mxu0
        %6217 = vdwg.mxu0
        %s6218 = sld [smem:[#allocation7 + $0x1d]]
        %v6219 = vstv %s6218
        %v6220 = vmul.f32 %v6219, %v6200
        %v6221 = vmul.f32 %v6219, %v6205
        %v6222 = vmul.f32 %v6219, %v6210
        %v6223 = vmul.f32 %v6219, %v6215
        %v6224 = vadd.f32 %v6059, %v6220
        %v6225 = vadd.f32 %v6060, %v6221
        %v6226 = vadd.f32 %v6061, %v6222
        %v6227 = vadd.f32 %v6062, %v6223
        %s6228 = sld [smem:[#allocation7 + $0x41]]
        %v6229 = vstv %s6228
        %v6230 = vmul.f32 %v6229, %v6200
        %v6231 = vmul.f32 %v6229, %v6205
        %v6232 = vmul.f32 %v6229, %v6210
        %v6233 = vmul.f32 %v6229, %v6215
        %v6234 = vadd.f32 %v6069, %v6230
        %v6235 = vadd.f32 %v6070, %v6231
        %v6236 = vadd.f32 %v6071, %v6232
        %v6237 = vadd.f32 %v6072, %v6233
        %s6238 = sld [smem:[#allocation7 + $0x65]]
        %v6239 = vstv %s6238
        %v6240 = vmul.f32 %v6239, %v6200
        %v6241 = vmul.f32 %v6239, %v6205
        %v6242 = vmul.f32 %v6239, %v6210
        %v6243 = vmul.f32 %v6239, %v6215
        %v6244 = vadd.f32 %v6079, %v6240
        %v6245 = vadd.f32 %v6080, %v6241
        %v6246 = vadd.f32 %v6081, %v6242
        %v6247 = vadd.f32 %v6082, %v6243
        %s6248 = sld [smem:[#allocation7 + $0x89]]
        %v6249 = vstv %s6248
        %v6250 = vmul.f32 %v6249, %v6200
        %v6251 = vmul.f32 %v6249, %v6205
        %v6252 = vmul.f32 %v6249, %v6210
        %v6253 = vmul.f32 %v6249, %v6215
        %v6254 = vadd.f32 %v6089, %v6250
        %v6255 = vadd.f32 %v6090, %v6251
        %v6256 = vadd.f32 %v6091, %v6252
        %v6257 = vadd.f32 %v6092, %v6253
        %s6258 = sld [smem:[#allocation7 + $0xad]]
        %v6259 = vstv %s6258
        %v6260 = vmul.f32 %v6259, %v6200
        %v6261 = vmul.f32 %v6259, %v6205
        %v6262 = vmul.f32 %v6259, %v6210
        %v6263 = vmul.f32 %v6259, %v6215
        %v6264 = vadd.f32 %v6099, %v6260
        %v6265 = vadd.f32 %v6100, %v6261
        %v6266 = vadd.f32 %v6101, %v6262
        %v6267 = vadd.f32 %v6102, %v6263
        %s6268 = sld [smem:[#allocation7 + $0xd1]]
        %v6269 = vstv %s6268
        %v6270 = vmul.f32 %v6269, %v6200
        %v6271 = vmul.f32 %v6269, %v6205
        %v6272 = vmul.f32 %v6269, %v6210
        %v6273 = vmul.f32 %v6269, %v6215
        %v6274 = vadd.f32 %v6109, %v6270
        %v6275 = vadd.f32 %v6110, %v6271
        %v6276 = vadd.f32 %v6111, %v6272
        %v6277 = vadd.f32 %v6112, %v6273
        %s6278 = sld [smem:[#allocation7 + $0xf5]]
        %v6279 = vstv %s6278
        %v6280 = vmul.f32 %v6279, %v6200
        %v6281 = vmul.f32 %v6279, %v6205
        %v6282 = vmul.f32 %v6279, %v6210
        %v6283 = vmul.f32 %v6279, %v6215
        %v6284 = vadd.f32 %v6119, %v6280
        %v6285 = vadd.f32 %v6120, %v6281
        %v6286 = vadd.f32 %v6121, %v6282
        %v6287 = vadd.f32 %v6122, %v6283
        %s6288 = sld [smem:[#allocation7 + $0x119]]
        %v6289 = vstv %s6288
        %v6290 = vmul.f32 %v6289, %v6200
        %v6291 = vmul.f32 %v6289, %v6205
        %v6292 = vmul.f32 %v6289, %v6210
        %v6293 = vmul.f32 %v6289, %v6215
        %v6294 = vadd.f32 %v6129, %v6290
        %v6295 = vadd.f32 %v6130, %v6291
        %v6296 = vadd.f32 %v6131, %v6292
        %v6297 = vadd.f32 %v6132, %v6293
        %6298 = vmatprep.subr.mxu0 0.0
        %6299 = vmatpush1.msra.mxu0 0.0
        %6300 = vmatprep.subr.mxu0 0.0
        %6301 = vmatpush1.msra.mxu0 0.0
        %6302 = vmatprep.subr.mxu0 0.0
        %6303 = vmatpush1.msra.mxu0 0.0
        %6304 = vmatprep.subr.mxu0 0.0
        %6305 = vmatpush1.msra.mxu0 0.0
        %6306 = vmatprep.subr.mxu0 0.0
        %6307 = vmatpush1.msra.mxu0 0.0
        %6308 = vmatprep.subr.mxu0 0.0
        %6309 = vmatpush1.msra.mxu0 0.0
        %6310 = vmatprep.subr.mxu0 0.0
        %6311 = vmatpush1.msra.mxu0 0.0
        %6312 = vmatprep.subr.mxu0 0.0
        %6313 = vmatpush1.msra.mxu0 0.0
        %6314 = vmatprep.subr.mxu0 0.0
        %6315 = vmatpush1.msra.mxu0 0.0
        %6316 = vmatprep.subr.mxu0 0.0
        %6317 = vmatpush1.msra.mxu0 0.0
        %6318 = vmatprep.subr.mxu0 0.0
        %6319 = vmatpush1.msra.mxu0 0.0
        %6320 = vmatprep.subr.mxu0 0.0
        %6321 = vmatpush1.msra.mxu0 0.0
        %6322 = vmatprep.subr.mxu0 0.0
        %6323 = vmatpush1.msra.mxu0 0.0
        %6324 = vmatprep.subr.mxu0 0.0
        %6325 = vmatpush1.msra.mxu0 0.0
        %6326 = vmatprep.subr.mxu0 0.0
        %6327 = vmatpush1.msra.mxu0 %v5705
        %6328 = vmatprep.subr.mxu0 0.0
        %6329 = vmatpush1.msra.mxu0 %v5704
        %6330 = vmatprep.subr.mxu0 0.0
        %6331 = vmatpush2.msra.mxu0 0.0
        %6332 = vmatprep.subr.mxu0 0.0
        %6333 = vmatpush2.msra.mxu0 0.0
        %6334 = vmatprep.subr.mxu0 0.0
        %6335 = vmatpush2.msra.mxu0 0.0
        %6336 = vmatprep.subr.mxu0 0.0
        %6337 = vmatpush2.msra.mxu0 0.0
        %6338 = vmatprep.subr.mxu0 0.0
        %6339 = vmatpush2.msra.mxu0 0.0
        %6340 = vmatprep.subr.mxu0 0.0
        %6341 = vmatpush2.msra.mxu0 0.0
        %6342 = vmatprep.subr.mxu0 0.0
        %6343 = vmatpush2.msra.mxu0 0.0
        %6344 = vmatprep.subr.mxu0 0.0
        %6345 = vmatpush2.msra.mxu0 0.0
        %6346 = vmatprep.subr.mxu0 0.0
        %6347 = vmatpush2.msra.mxu0 0.0
        %6348 = vmatprep.subr.mxu0 0.0
        %6349 = vmatpush2.msra.mxu0 0.0
        %6350 = vmatprep.subr.mxu0 0.0
        %6351 = vmatpush2.msra.mxu0 0.0
        %6352 = vmatprep.subr.mxu0 0.0
        %6353 = vmatpush2.msra.mxu0 0.0
        %6354 = vmatprep.subr.mxu0 0.0
        %6355 = vmatpush2.msra.mxu0 0.0
        %6356 = vmatprep.subr.mxu0 0.0
        %6357 = vmatpush2.msra.mxu0 0.0
        %6358 = vmatprep.subr.mxu0 0.0
        %6359 = vmatpush2.msra.mxu0 0.0
        %6360 = vmatprep.subr.mxu0 0.0
        %6361 = vmatpush2.msra.mxu0 0.0
        %6362 = vmatprep.mubr.f32.mxu0 0.0
        %6363 = vmatmul.mubr.f32.gmra.mxu0 %v938
        %v6364 = vpop.f32.mrf.mxu0
        %v6365 = vadd.f32 0.0, %v6364
        %v6366 = vpop.f32.mrf.mxu0
        %6367 = vmatprep.mubr.f32.mxu0 0.0
        %6368 = vmatmul.mubr.f32.gmra.mxu0 %v941
        %v6369 = vpop.f32.mrf.mxu0
        %v6370 = vadd.f32 0.0, %v6369
        %v6371 = vpop.f32.mrf.mxu0
        %6372 = vmatprep.mubr.f32.mxu0 0.0
        %6373 = vmatmul.mubr.f32.gmra.mxu0 %v944
        %v6374 = vpop.f32.mrf.mxu0
        %v6375 = vadd.f32 0.0, %v6374
        %v6376 = vpop.f32.mrf.mxu0
        %6377 = vmatprep.mubr.f32.mxu0 0.0
        %6378 = vmatmul.mubr.f32.gmra.mxu0 %v947
        %v6379 = vpop.f32.mrf.mxu0
        %v6380 = vadd.f32 0.0, %v6379
        %v6381 = vpop.f32.mrf.mxu0
        %6382 = vdwg.mxu0
        %v6384 = vsel %vm332, %v6365, 0
        %v6387 = vsel %vm332, %v6370, 0
        %v6390 = vsel %vm332, %v6375, 0
        %v6393 = vsel %vm332, %v6380, 0
        %6395 = vmatprep.subr.mxu0 0.0
        %6396 = vmatpush1.msra.mxu0 0.0
        %6397 = vmatprep.subr.mxu0 0.0
        %6398 = vmatpush1.msra.mxu0 0.0
        %6399 = vmatprep.subr.mxu0 0.0
        %6400 = vmatpush1.msra.mxu0 0.0
        %6401 = vmatprep.subr.mxu0 0.0
        %6402 = vmatpush1.msra.mxu0 0.0
        %6403 = vmatprep.subr.mxu0 0.0
        %6404 = vmatpush1.msra.mxu0 0.0
        %6405 = vmatprep.subr.mxu0 0.0
        %6406 = vmatpush1.msra.mxu0 0.0
        %6407 = vmatprep.subr.mxu0 0.0
        %6408 = vmatpush1.msra.mxu0 0.0
        %6409 = vmatprep.subr.mxu0 0.0
        %6410 = vmatpush1.msra.mxu0 0.0
        %6411 = vmatprep.subr.mxu0 0.0
        %6412 = vmatpush1.msra.mxu0 0.0
        %6413 = vmatprep.subr.mxu0 0.0
        %6414 = vmatpush1.msra.mxu0 0.0
        %6415 = vmatprep.subr.mxu0 0.0
        %6416 = vmatpush1.msra.mxu0 0.0
        %6417 = vmatprep.subr.mxu0 0.0
        %6418 = vmatpush1.msra.mxu0 0.0
        %6419 = vmatprep.subr.mxu0 0.0
        %6420 = vmatpush1.msra.mxu0 0.0
        %6421 = vmatprep.subr.mxu0 0.0
        %6422 = vmatpush1.msra.mxu0 0.0
        %6423 = vmatprep.subr.mxu0 0.0
        %6424 = vmatpush1.msra.mxu0 %v295
        %6425 = vmatprep.subr.mxu0 0.0
        %6426 = vmatpush1.msra.mxu0 %v294
        %6427 = vmatprep.subr.mxu0 0.0
        %6428 = vmatpush2.msra.mxu0 0.0
        %6429 = vmatprep.subr.mxu0 0.0
        %6430 = vmatpush2.msra.mxu0 0.0
        %6431 = vmatprep.subr.mxu0 0.0
        %6432 = vmatpush2.msra.mxu0 0.0
        %6433 = vmatprep.subr.mxu0 0.0
        %6434 = vmatpush2.msra.mxu0 0.0
        %6435 = vmatprep.subr.mxu0 0.0
        %6436 = vmatpush2.msra.mxu0 0.0
        %6437 = vmatprep.subr.mxu0 0.0
        %6438 = vmatpush2.msra.mxu0 0.0
        %6439 = vmatprep.subr.mxu0 0.0
        %6440 = vmatpush2.msra.mxu0 0.0
        %6441 = vmatprep.subr.mxu0 0.0
        %6442 = vmatpush2.msra.mxu0 0.0
        %6443 = vmatprep.subr.mxu0 0.0
        %6444 = vmatpush2.msra.mxu0 0.0
        %6445 = vmatprep.subr.mxu0 0.0
        %6446 = vmatpush2.msra.mxu0 0.0
        %6447 = vmatprep.subr.mxu0 0.0
        %6448 = vmatpush2.msra.mxu0 0.0
        %6449 = vmatprep.subr.mxu0 0.0
        %6450 = vmatpush2.msra.mxu0 0.0
        %6451 = vmatprep.subr.mxu0 0.0
        %6452 = vmatpush2.msra.mxu0 0.0
        %6453 = vmatprep.subr.mxu0 0.0
        %6454 = vmatpush2.msra.mxu0 0.0
        %6455 = vmatprep.subr.mxu0 0.0
        %6456 = vmatpush2.msra.mxu0 0.0
        %6457 = vmatprep.subr.mxu0 0.0
        %6458 = vmatpush2.msra.mxu0 0.0
        %6459 = vmatprep.mubr.f32.mxu0 0.0
        %6460 = vmatmul.mubr.f32.gmra.mxu0 %v6384
        %v6461 = vpop.f32.mrf.mxu0
        %v6462 = vadd.f32 0.0, %v6461
        %v6463 = vpop.f32.mrf.mxu0
        %6464 = vmatprep.mubr.f32.mxu0 0.0
        %6465 = vmatmul.mubr.f32.gmra.mxu0 %v6387
        %v6466 = vpop.f32.mrf.mxu0
        %v6467 = vadd.f32 0.0, %v6466
        %v6468 = vpop.f32.mrf.mxu0
        %6469 = vmatprep.mubr.f32.mxu0 0.0
        %6470 = vmatmul.mubr.f32.gmra.mxu0 %v6390
        %v6471 = vpop.f32.mrf.mxu0
        %v6472 = vadd.f32 0.0, %v6471
        %v6473 = vpop.f32.mrf.mxu0
        %6474 = vmatprep.mubr.f32.mxu0 0.0
        %6475 = vmatmul.mubr.f32.gmra.mxu0 %v6393
        %v6476 = vpop.f32.mrf.mxu0
        %v6477 = vadd.f32 0.0, %v6476
        %v6478 = vpop.f32.mrf.mxu0
        %6479 = vdwg.mxu0
        %s6480 = sld [smem:[#allocation7 + $0x1e]]
        %v6481 = vstv %s6480
        %v6482 = vmul.f32 %v6481, %v6462
        %v6483 = vmul.f32 %v6481, %v6467
        %v6484 = vmul.f32 %v6481, %v6472
        %v6485 = vmul.f32 %v6481, %v6477
        %v6486 = vadd.f32 %v6224, %v6482
        %v6487 = vadd.f32 %v6225, %v6483
        %v6488 = vadd.f32 %v6226, %v6484
        %v6489 = vadd.f32 %v6227, %v6485
        %s6490 = sld [smem:[#allocation7 + $0x42]]
        %v6491 = vstv %s6490
        %v6492 = vmul.f32 %v6491, %v6462
        %v6493 = vmul.f32 %v6491, %v6467
        %v6494 = vmul.f32 %v6491, %v6472
        %v6495 = vmul.f32 %v6491, %v6477
        %v6496 = vadd.f32 %v6234, %v6492
        %v6497 = vadd.f32 %v6235, %v6493
        %v6498 = vadd.f32 %v6236, %v6494
        %v6499 = vadd.f32 %v6237, %v6495
        %s6500 = sld [smem:[#allocation7 + $0x66]]
        %v6501 = vstv %s6500
        %v6502 = vmul.f32 %v6501, %v6462
        %v6503 = vmul.f32 %v6501, %v6467
        %v6504 = vmul.f32 %v6501, %v6472
        %v6505 = vmul.f32 %v6501, %v6477
        %v6506 = vadd.f32 %v6244, %v6502
        %v6507 = vadd.f32 %v6245, %v6503
        %v6508 = vadd.f32 %v6246, %v6504
        %v6509 = vadd.f32 %v6247, %v6505
        %s6510 = sld [smem:[#allocation7 + $0x8a]]
        %v6511 = vstv %s6510
        %v6512 = vmul.f32 %v6511, %v6462
        %v6513 = vmul.f32 %v6511, %v6467
        %v6514 = vmul.f32 %v6511, %v6472
        %v6515 = vmul.f32 %v6511, %v6477
        %v6516 = vadd.f32 %v6254, %v6512
        %v6517 = vadd.f32 %v6255, %v6513
        %v6518 = vadd.f32 %v6256, %v6514
        %v6519 = vadd.f32 %v6257, %v6515
        %s6520 = sld [smem:[#allocation7 + $0xae]]
        %v6521 = vstv %s6520
        %v6522 = vmul.f32 %v6521, %v6462
        %v6523 = vmul.f32 %v6521, %v6467
        %v6524 = vmul.f32 %v6521, %v6472
        %v6525 = vmul.f32 %v6521, %v6477
        %v6526 = vadd.f32 %v6264, %v6522
        %v6527 = vadd.f32 %v6265, %v6523
        %v6528 = vadd.f32 %v6266, %v6524
        %v6529 = vadd.f32 %v6267, %v6525
        %s6530 = sld [smem:[#allocation7 + $0xd2]]
        %v6531 = vstv %s6530
        %v6532 = vmul.f32 %v6531, %v6462
        %v6533 = vmul.f32 %v6531, %v6467
        %v6534 = vmul.f32 %v6531, %v6472
        %v6535 = vmul.f32 %v6531, %v6477
        %v6536 = vadd.f32 %v6274, %v6532
        %v6537 = vadd.f32 %v6275, %v6533
        %v6538 = vadd.f32 %v6276, %v6534
        %v6539 = vadd.f32 %v6277, %v6535
        %s6540 = sld [smem:[#allocation7 + $0xf6]]
        %v6541 = vstv %s6540
        %v6542 = vmul.f32 %v6541, %v6462
        %v6543 = vmul.f32 %v6541, %v6467
        %v6544 = vmul.f32 %v6541, %v6472
        %v6545 = vmul.f32 %v6541, %v6477
        %v6546 = vadd.f32 %v6284, %v6542
        %v6547 = vadd.f32 %v6285, %v6543
        %v6548 = vadd.f32 %v6286, %v6544
        %v6549 = vadd.f32 %v6287, %v6545
        %s6550 = sld [smem:[#allocation7 + $0x11a]]
        %v6551 = vstv %s6550
        %v6552 = vmul.f32 %v6551, %v6462
        %v6553 = vmul.f32 %v6551, %v6467
        %v6554 = vmul.f32 %v6551, %v6472
        %v6555 = vmul.f32 %v6551, %v6477
        %v6556 = vadd.f32 %v6294, %v6552
        %v6557 = vadd.f32 %v6295, %v6553
        %v6558 = vadd.f32 %v6296, %v6554
        %v6559 = vadd.f32 %v6297, %v6555
        %6560 = vmatprep.subr.mxu0 0.0
        %6561 = vmatpush1.msra.mxu0 0.0
        %6562 = vmatprep.subr.mxu0 0.0
        %6563 = vmatpush1.msra.mxu0 0.0
        %6564 = vmatprep.subr.mxu0 0.0
        %6565 = vmatpush1.msra.mxu0 0.0
        %6566 = vmatprep.subr.mxu0 0.0
        %6567 = vmatpush1.msra.mxu0 0.0
        %6568 = vmatprep.subr.mxu0 0.0
        %6569 = vmatpush1.msra.mxu0 0.0
        %6570 = vmatprep.subr.mxu0 0.0
        %6571 = vmatpush1.msra.mxu0 0.0
        %6572 = vmatprep.subr.mxu0 0.0
        %6573 = vmatpush1.msra.mxu0 0.0
        %6574 = vmatprep.subr.mxu0 0.0
        %6575 = vmatpush1.msra.mxu0 0.0
        %6576 = vmatprep.subr.mxu0 0.0
        %6577 = vmatpush1.msra.mxu0 0.0
        %6578 = vmatprep.subr.mxu0 0.0
        %6579 = vmatpush1.msra.mxu0 0.0
        %6580 = vmatprep.subr.mxu0 0.0
        %6581 = vmatpush1.msra.mxu0 0.0
        %6582 = vmatprep.subr.mxu0 0.0
        %6583 = vmatpush1.msra.mxu0 0.0
        %6584 = vmatprep.subr.mxu0 0.0
        %6585 = vmatpush1.msra.mxu0 0.0
        %6586 = vmatprep.subr.mxu0 0.0
        %6587 = vmatpush1.msra.mxu0 0.0
        %6588 = vmatprep.subr.mxu0 0.0
        %6589 = vmatpush1.msra.mxu0 %v303
        %6590 = vmatprep.subr.mxu0 0.0
        %6591 = vmatpush1.msra.mxu0 %v302
        %6592 = vmatprep.subr.mxu0 0.0
        %6593 = vmatpush2.msra.mxu0 0.0
        %6594 = vmatprep.subr.mxu0 0.0
        %6595 = vmatpush2.msra.mxu0 0.0
        %6596 = vmatprep.subr.mxu0 0.0
        %6597 = vmatpush2.msra.mxu0 0.0
        %6598 = vmatprep.subr.mxu0 0.0
        %6599 = vmatpush2.msra.mxu0 0.0
        %6600 = vmatprep.subr.mxu0 0.0
        %6601 = vmatpush2.msra.mxu0 0.0
        %6602 = vmatprep.subr.mxu0 0.0
        %6603 = vmatpush2.msra.mxu0 0.0
        %6604 = vmatprep.subr.mxu0 0.0
        %6605 = vmatpush2.msra.mxu0 0.0
        %6606 = vmatprep.subr.mxu0 0.0
        %6607 = vmatpush2.msra.mxu0 0.0
        %6608 = vmatprep.subr.mxu0 0.0
        %6609 = vmatpush2.msra.mxu0 0.0
        %6610 = vmatprep.subr.mxu0 0.0
        %6611 = vmatpush2.msra.mxu0 0.0
        %6612 = vmatprep.subr.mxu0 0.0
        %6613 = vmatpush2.msra.mxu0 0.0
        %6614 = vmatprep.subr.mxu0 0.0
        %6615 = vmatpush2.msra.mxu0 0.0
        %6616 = vmatprep.subr.mxu0 0.0
        %6617 = vmatpush2.msra.mxu0 0.0
        %6618 = vmatprep.subr.mxu0 0.0
        %6619 = vmatpush2.msra.mxu0 0.0
        %6620 = vmatprep.subr.mxu0 0.0
        %6621 = vmatpush2.msra.mxu0 0.0
        %6622 = vmatprep.subr.mxu0 0.0
        %6623 = vmatpush2.msra.mxu0 0.0
        %6624 = vmatprep.mubr.f32.mxu0 0.0
        %6625 = vmatmul.mubr.f32.gmra.mxu0 %v6384
        %v6626 = vpop.f32.mrf.mxu0
        %v6627 = vadd.f32 0.0, %v6626
        %v6628 = vpop.f32.mrf.mxu0
        %6629 = vmatprep.mubr.f32.mxu0 0.0
        %6630 = vmatmul.mubr.f32.gmra.mxu0 %v6387
        %v6631 = vpop.f32.mrf.mxu0
        %v6632 = vadd.f32 0.0, %v6631
        %v6633 = vpop.f32.mrf.mxu0
        %6634 = vmatprep.mubr.f32.mxu0 0.0
        %6635 = vmatmul.mubr.f32.gmra.mxu0 %v6390
        %v6636 = vpop.f32.mrf.mxu0
        %v6637 = vadd.f32 0.0, %v6636
        %v6638 = vpop.f32.mrf.mxu0
        %6639 = vmatprep.mubr.f32.mxu0 0.0
        %6640 = vmatmul.mubr.f32.gmra.mxu0 %v6393
        %v6641 = vpop.f32.mrf.mxu0
        %v6642 = vadd.f32 0.0, %v6641
        %v6643 = vpop.f32.mrf.mxu0
        %6644 = vdwg.mxu0
        %s6645 = sld [smem:[#allocation7 + $0x1f]]
        %v6646 = vstv %s6645
        %v6647 = vmul.f32 %v6646, %v6627
        %v6648 = vmul.f32 %v6646, %v6632
        %v6649 = vmul.f32 %v6646, %v6637
        %v6650 = vmul.f32 %v6646, %v6642
        %v6651 = vadd.f32 %v6486, %v6647
        %v6652 = vadd.f32 %v6487, %v6648
        %v6653 = vadd.f32 %v6488, %v6649
        %v6654 = vadd.f32 %v6489, %v6650
        %s6655 = sld [smem:[#allocation7 + $0x43]]
        %v6656 = vstv %s6655
        %v6657 = vmul.f32 %v6656, %v6627
        %v6658 = vmul.f32 %v6656, %v6632
        %v6659 = vmul.f32 %v6656, %v6637
        %v6660 = vmul.f32 %v6656, %v6642
        %v6661 = vadd.f32 %v6496, %v6657
        %v6662 = vadd.f32 %v6497, %v6658
        %v6663 = vadd.f32 %v6498, %v6659
        %v6664 = vadd.f32 %v6499, %v6660
        %s6665 = sld [smem:[#allocation7 + $0x67]]
        %v6666 = vstv %s6665
        %v6667 = vmul.f32 %v6666, %v6627
        %v6668 = vmul.f32 %v6666, %v6632
        %v6669 = vmul.f32 %v6666, %v6637
        %v6670 = vmul.f32 %v6666, %v6642
        %v6671 = vadd.f32 %v6506, %v6667
        %v6672 = vadd.f32 %v6507, %v6668
        %v6673 = vadd.f32 %v6508, %v6669
        %v6674 = vadd.f32 %v6509, %v6670
        %s6675 = sld [smem:[#allocation7 + $0x8b]]
        %v6676 = vstv %s6675
        %v6677 = vmul.f32 %v6676, %v6627
        %v6678 = vmul.f32 %v6676, %v6632
        %v6679 = vmul.f32 %v6676, %v6637
        %v6680 = vmul.f32 %v6676, %v6642
        %v6681 = vadd.f32 %v6516, %v6677
        %v6682 = vadd.f32 %v6517, %v6678
        %v6683 = vadd.f32 %v6518, %v6679
        %v6684 = vadd.f32 %v6519, %v6680
        %s6685 = sld [smem:[#allocation7 + $0xaf]]
        %v6686 = vstv %s6685
        %v6687 = vmul.f32 %v6686, %v6627
        %v6688 = vmul.f32 %v6686, %v6632
        %v6689 = vmul.f32 %v6686, %v6637
        %v6690 = vmul.f32 %v6686, %v6642
        %v6691 = vadd.f32 %v6526, %v6687
        %v6692 = vadd.f32 %v6527, %v6688
        %v6693 = vadd.f32 %v6528, %v6689
        %v6694 = vadd.f32 %v6529, %v6690
        %s6695 = sld [smem:[#allocation7 + $0xd3]]
        %v6696 = vstv %s6695
        %v6697 = vmul.f32 %v6696, %v6627
        %v6698 = vmul.f32 %v6696, %v6632
        %v6699 = vmul.f32 %v6696, %v6637
        %v6700 = vmul.f32 %v6696, %v6642
        %v6701 = vadd.f32 %v6536, %v6697
        %v6702 = vadd.f32 %v6537, %v6698
        %v6703 = vadd.f32 %v6538, %v6699
        %v6704 = vadd.f32 %v6539, %v6700
        %s6705 = sld [smem:[#allocation7 + $0xf7]]
        %v6706 = vstv %s6705
        %v6707 = vmul.f32 %v6706, %v6627
        %v6708 = vmul.f32 %v6706, %v6632
        %v6709 = vmul.f32 %v6706, %v6637
        %v6710 = vmul.f32 %v6706, %v6642
        %v6711 = vadd.f32 %v6546, %v6707
        %v6712 = vadd.f32 %v6547, %v6708
        %v6713 = vadd.f32 %v6548, %v6709
        %v6714 = vadd.f32 %v6549, %v6710
        %s6715 = sld [smem:[#allocation7 + $0x11b]]
        %v6716 = vstv %s6715
        %v6717 = vmul.f32 %v6716, %v6627
        %v6718 = vmul.f32 %v6716, %v6632
        %v6719 = vmul.f32 %v6716, %v6637
        %v6720 = vmul.f32 %v6716, %v6642
        %v6721 = vadd.f32 %v6556, %v6717
        %v6722 = vadd.f32 %v6557, %v6718
        %v6723 = vadd.f32 %v6558, %v6719
        %v6724 = vadd.f32 %v6559, %v6720
        %6725 = vmatprep.subr.mxu0 0.0
        %6726 = vmatpush1.msra.mxu0 0.0
        %6727 = vmatprep.subr.mxu0 0.0
        %6728 = vmatpush1.msra.mxu0 0.0
        %6729 = vmatprep.subr.mxu0 0.0
        %6730 = vmatpush1.msra.mxu0 0.0
        %6731 = vmatprep.subr.mxu0 0.0
        %6732 = vmatpush1.msra.mxu0 0.0
        %6733 = vmatprep.subr.mxu0 0.0
        %6734 = vmatpush1.msra.mxu0 0.0
        %6735 = vmatprep.subr.mxu0 0.0
        %6736 = vmatpush1.msra.mxu0 0.0
        %6737 = vmatprep.subr.mxu0 0.0
        %6738 = vmatpush1.msra.mxu0 0.0
        %6739 = vmatprep.subr.mxu0 0.0
        %6740 = vmatpush1.msra.mxu0 0.0
        %6741 = vmatprep.subr.mxu0 0.0
        %6742 = vmatpush1.msra.mxu0 0.0
        %6743 = vmatprep.subr.mxu0 0.0
        %6744 = vmatpush1.msra.mxu0 0.0
        %6745 = vmatprep.subr.mxu0 0.0
        %6746 = vmatpush1.msra.mxu0 0.0
        %6747 = vmatprep.subr.mxu0 0.0
        %6748 = vmatpush1.msra.mxu0 0.0
        %6749 = vmatprep.subr.mxu0 0.0
        %6750 = vmatpush1.msra.mxu0 0.0
        %6751 = vmatprep.subr.mxu0 0.0
        %6752 = vmatpush1.msra.mxu0 0.0
        %6753 = vmatprep.subr.mxu0 0.0
        %6754 = vmatpush1.msra.mxu0 %v313
        %6755 = vmatprep.subr.mxu0 0.0
        %6756 = vmatpush1.msra.mxu0 %v312
        %6757 = vmatprep.subr.mxu0 0.0
        %6758 = vmatpush2.msra.mxu0 0.0
        %6759 = vmatprep.subr.mxu0 0.0
        %6760 = vmatpush2.msra.mxu0 0.0
        %6761 = vmatprep.subr.mxu0 0.0
        %6762 = vmatpush2.msra.mxu0 0.0
        %6763 = vmatprep.subr.mxu0 0.0
        %6764 = vmatpush2.msra.mxu0 0.0
        %6765 = vmatprep.subr.mxu0 0.0
        %6766 = vmatpush2.msra.mxu0 0.0
        %6767 = vmatprep.subr.mxu0 0.0
        %6768 = vmatpush2.msra.mxu0 0.0
        %6769 = vmatprep.subr.mxu0 0.0
        %6770 = vmatpush2.msra.mxu0 0.0
        %6771 = vmatprep.subr.mxu0 0.0
        %6772 = vmatpush2.msra.mxu0 0.0
        %6773 = vmatprep.subr.mxu0 0.0
        %6774 = vmatpush2.msra.mxu0 0.0
        %6775 = vmatprep.subr.mxu0 0.0
        %6776 = vmatpush2.msra.mxu0 0.0
        %6777 = vmatprep.subr.mxu0 0.0
        %6778 = vmatpush2.msra.mxu0 0.0
        %6779 = vmatprep.subr.mxu0 0.0
        %6780 = vmatpush2.msra.mxu0 0.0
        %6781 = vmatprep.subr.mxu0 0.0
        %6782 = vmatpush2.msra.mxu0 0.0
        %6783 = vmatprep.subr.mxu0 0.0
        %6784 = vmatpush2.msra.mxu0 0.0
        %6785 = vmatprep.subr.mxu0 0.0
        %6786 = vmatpush2.msra.mxu0 0.0
        %6787 = vmatprep.subr.mxu0 0.0
        %6788 = vmatpush2.msra.mxu0 0.0
        %6789 = vmatprep.mubr.f32.mxu0 0.0
        %6790 = vmatmul.mubr.f32.gmra.mxu0 %v6384
        %v6791 = vpop.f32.mrf.mxu0
        %v6792 = vadd.f32 0.0, %v6791
        %v6793 = vpop.f32.mrf.mxu0
        %6794 = vmatprep.mubr.f32.mxu0 0.0
        %6795 = vmatmul.mubr.f32.gmra.mxu0 %v6387
        %v6796 = vpop.f32.mrf.mxu0
        %v6797 = vadd.f32 0.0, %v6796
        %v6798 = vpop.f32.mrf.mxu0
        %6799 = vmatprep.mubr.f32.mxu0 0.0
        %6800 = vmatmul.mubr.f32.gmra.mxu0 %v6390
        %v6801 = vpop.f32.mrf.mxu0
        %v6802 = vadd.f32 0.0, %v6801
        %v6803 = vpop.f32.mrf.mxu0
        %6804 = vmatprep.mubr.f32.mxu0 0.0
        %6805 = vmatmul.mubr.f32.gmra.mxu0 %v6393
        %v6806 = vpop.f32.mrf.mxu0
        %v6807 = vadd.f32 0.0, %v6806
        %v6808 = vpop.f32.mrf.mxu0
        %6809 = vdwg.mxu0
        %s6810 = sld [smem:[#allocation7 + $0x20]]
        %v6811 = vstv %s6810
        %v6812 = vmul.f32 %v6811, %v6792
        %v6813 = vmul.f32 %v6811, %v6797
        %v6814 = vmul.f32 %v6811, %v6802
        %v6815 = vmul.f32 %v6811, %v6807
        %v6816 = vadd.f32 %v6651, %v6812
        %v6817 = vadd.f32 %v6652, %v6813
        %v6818 = vadd.f32 %v6653, %v6814
        %v6819 = vadd.f32 %v6654, %v6815
        %s6820 = sld [smem:[#allocation7 + $0x44]]
        %v6821 = vstv %s6820
        %v6822 = vmul.f32 %v6821, %v6792
        %v6823 = vmul.f32 %v6821, %v6797
        %v6824 = vmul.f32 %v6821, %v6802
        %v6825 = vmul.f32 %v6821, %v6807
        %v6826 = vadd.f32 %v6661, %v6822
        %v6827 = vadd.f32 %v6662, %v6823
        %v6828 = vadd.f32 %v6663, %v6824
        %v6829 = vadd.f32 %v6664, %v6825
        %s6830 = sld [smem:[#allocation7 + $0x68]]
        %v6831 = vstv %s6830
        %v6832 = vmul.f32 %v6831, %v6792
        %v6833 = vmul.f32 %v6831, %v6797
        %v6834 = vmul.f32 %v6831, %v6802
        %v6835 = vmul.f32 %v6831, %v6807
        %v6836 = vadd.f32 %v6671, %v6832
        %v6837 = vadd.f32 %v6672, %v6833
        %v6838 = vadd.f32 %v6673, %v6834
        %v6839 = vadd.f32 %v6674, %v6835
        %s6840 = sld [smem:[#allocation7 + $0x8c]]
        %v6841 = vstv %s6840
        %v6842 = vmul.f32 %v6841, %v6792
        %v6843 = vmul.f32 %v6841, %v6797
        %v6844 = vmul.f32 %v6841, %v6802
        %v6845 = vmul.f32 %v6841, %v6807
        %v6846 = vadd.f32 %v6681, %v6842
        %v6847 = vadd.f32 %v6682, %v6843
        %v6848 = vadd.f32 %v6683, %v6844
        %v6849 = vadd.f32 %v6684, %v6845
        %s6850 = sld [smem:[#allocation7 + $0xb0]]
        %v6851 = vstv %s6850
        %v6852 = vmul.f32 %v6851, %v6792
        %v6853 = vmul.f32 %v6851, %v6797
        %v6854 = vmul.f32 %v6851, %v6802
        %v6855 = vmul.f32 %v6851, %v6807
        %v6856 = vadd.f32 %v6691, %v6852
        %v6857 = vadd.f32 %v6692, %v6853
        %v6858 = vadd.f32 %v6693, %v6854
        %v6859 = vadd.f32 %v6694, %v6855
        %s6860 = sld [smem:[#allocation7 + $0xd4]]
        %v6861 = vstv %s6860
        %v6862 = vmul.f32 %v6861, %v6792
        %v6863 = vmul.f32 %v6861, %v6797
        %v6864 = vmul.f32 %v6861, %v6802
        %v6865 = vmul.f32 %v6861, %v6807
        %v6866 = vadd.f32 %v6701, %v6862
        %v6867 = vadd.f32 %v6702, %v6863
        %v6868 = vadd.f32 %v6703, %v6864
        %v6869 = vadd.f32 %v6704, %v6865
        %s6870 = sld [smem:[#allocation7 + $0xf8]]
        %v6871 = vstv %s6870
        %v6872 = vmul.f32 %v6871, %v6792
        %v6873 = vmul.f32 %v6871, %v6797
        %v6874 = vmul.f32 %v6871, %v6802
        %v6875 = vmul.f32 %v6871, %v6807
        %v6876 = vadd.f32 %v6711, %v6872
        %v6877 = vadd.f32 %v6712, %v6873
        %v6878 = vadd.f32 %v6713, %v6874
        %v6879 = vadd.f32 %v6714, %v6875
        %s6880 = sld [smem:[#allocation7 + $0x11c]]
        %v6881 = vstv %s6880
        %v6882 = vmul.f32 %v6881, %v6792
        %v6883 = vmul.f32 %v6881, %v6797
        %v6884 = vmul.f32 %v6881, %v6802
        %v6885 = vmul.f32 %v6881, %v6807
        %v6886 = vadd.f32 %v6721, %v6882
        %v6887 = vadd.f32 %v6722, %v6883
        %v6888 = vadd.f32 %v6723, %v6884
        %v6889 = vadd.f32 %v6724, %v6885
        %6890 = vmatprep.subr.mxu0 0.0
        %6891 = vmatpush1.msra.mxu0 0.0
        %6892 = vmatprep.subr.mxu0 0.0
        %6893 = vmatpush1.msra.mxu0 0.0
        %6894 = vmatprep.subr.mxu0 0.0
        %6895 = vmatpush1.msra.mxu0 0.0
        %6896 = vmatprep.subr.mxu0 0.0
        %6897 = vmatpush1.msra.mxu0 0.0
        %6898 = vmatprep.subr.mxu0 0.0
        %6899 = vmatpush1.msra.mxu0 0.0
        %6900 = vmatprep.subr.mxu0 0.0
        %6901 = vmatpush1.msra.mxu0 0.0
        %6902 = vmatprep.subr.mxu0 0.0
        %6903 = vmatpush1.msra.mxu0 0.0
        %6904 = vmatprep.subr.mxu0 0.0
        %6905 = vmatpush1.msra.mxu0 0.0
        %6906 = vmatprep.subr.mxu0 0.0
        %6907 = vmatpush1.msra.mxu0 0.0
        %6908 = vmatprep.subr.mxu0 0.0
        %6909 = vmatpush1.msra.mxu0 0.0
        %6910 = vmatprep.subr.mxu0 0.0
        %6911 = vmatpush1.msra.mxu0 0.0
        %6912 = vmatprep.subr.mxu0 0.0
        %6913 = vmatpush1.msra.mxu0 0.0
        %6914 = vmatprep.subr.mxu0 0.0
        %6915 = vmatpush1.msra.mxu0 0.0
        %6916 = vmatprep.subr.mxu0 0.0
        %6917 = vmatpush1.msra.mxu0 0.0
        %6918 = vmatprep.subr.mxu0 0.0
        %6919 = vmatpush1.msra.mxu0 %v5705
        %6920 = vmatprep.subr.mxu0 0.0
        %6921 = vmatpush1.msra.mxu0 %v5704
        %6922 = vmatprep.subr.mxu0 0.0
        %6923 = vmatpush2.msra.mxu0 0.0
        %6924 = vmatprep.subr.mxu0 0.0
        %6925 = vmatpush2.msra.mxu0 0.0
        %6926 = vmatprep.subr.mxu0 0.0
        %6927 = vmatpush2.msra.mxu0 0.0
        %6928 = vmatprep.subr.mxu0 0.0
        %6929 = vmatpush2.msra.mxu0 0.0
        %6930 = vmatprep.subr.mxu0 0.0
        %6931 = vmatpush2.msra.mxu0 0.0
        %6932 = vmatprep.subr.mxu0 0.0
        %6933 = vmatpush2.msra.mxu0 0.0
        %6934 = vmatprep.subr.mxu0 0.0
        %6935 = vmatpush2.msra.mxu0 0.0
        %6936 = vmatprep.subr.mxu0 0.0
        %6937 = vmatpush2.msra.mxu0 0.0
        %6938 = vmatprep.subr.mxu0 0.0
        %6939 = vmatpush2.msra.mxu0 0.0
        %6940 = vmatprep.subr.mxu0 0.0
        %6941 = vmatpush2.msra.mxu0 0.0
        %6942 = vmatprep.subr.mxu0 0.0
        %6943 = vmatpush2.msra.mxu0 0.0
        %6944 = vmatprep.subr.mxu0 0.0
        %6945 = vmatpush2.msra.mxu0 0.0
        %6946 = vmatprep.subr.mxu0 0.0
        %6947 = vmatpush2.msra.mxu0 0.0
        %6948 = vmatprep.subr.mxu0 0.0
        %6949 = vmatpush2.msra.mxu0 0.0
        %6950 = vmatprep.subr.mxu0 0.0
        %6951 = vmatpush2.msra.mxu0 0.0
        %6952 = vmatprep.subr.mxu0 0.0
        %6953 = vmatpush2.msra.mxu0 0.0
        %6954 = vmatprep.mubr.f32.mxu0 0.0
        %6955 = vmatmul.mubr.f32.gmra.mxu0 %v1542
        %v6956 = vpop.f32.mrf.mxu0
        %v6957 = vadd.f32 0.0, %v6956
        %v6958 = vpop.f32.mrf.mxu0
        %6959 = vmatprep.mubr.f32.mxu0 0.0
        %6960 = vmatmul.mubr.f32.gmra.mxu0 %v1545
        %v6961 = vpop.f32.mrf.mxu0
        %v6962 = vadd.f32 0.0, %v6961
        %v6963 = vpop.f32.mrf.mxu0
        %6964 = vmatprep.mubr.f32.mxu0 0.0
        %6965 = vmatmul.mubr.f32.gmra.mxu0 %v1548
        %v6966 = vpop.f32.mrf.mxu0
        %v6967 = vadd.f32 0.0, %v6966
        %v6968 = vpop.f32.mrf.mxu0
        %6969 = vmatprep.mubr.f32.mxu0 0.0
        %6970 = vmatmul.mubr.f32.gmra.mxu0 %v1551
        %v6971 = vpop.f32.mrf.mxu0
        %v6972 = vadd.f32 0.0, %v6971
        %v6973 = vpop.f32.mrf.mxu0
        %6974 = vdwg.mxu0
        %v6976 = vsel %vm332, %v6957, 0
        %v6979 = vsel %vm332, %v6962, 0
        %v6982 = vsel %vm332, %v6967, 0
        %v6985 = vsel %vm332, %v6972, 0
        %6987 = vmatprep.subr.mxu0 0.0
        %6988 = vmatpush1.msra.mxu0 0.0
        %6989 = vmatprep.subr.mxu0 0.0
        %6990 = vmatpush1.msra.mxu0 0.0
        %6991 = vmatprep.subr.mxu0 0.0
        %6992 = vmatpush1.msra.mxu0 0.0
        %6993 = vmatprep.subr.mxu0 0.0
        %6994 = vmatpush1.msra.mxu0 0.0
        %6995 = vmatprep.subr.mxu0 0.0
        %6996 = vmatpush1.msra.mxu0 0.0
        %6997 = vmatprep.subr.mxu0 0.0
        %6998 = vmatpush1.msra.mxu0 0.0
        %6999 = vmatprep.subr.mxu0 0.0
        %7000 = vmatpush1.msra.mxu0 0.0
        %7001 = vmatprep.subr.mxu0 0.0
        %7002 = vmatpush1.msra.mxu0 0.0
        %7003 = vmatprep.subr.mxu0 0.0
        %7004 = vmatpush1.msra.mxu0 0.0
        %7005 = vmatprep.subr.mxu0 0.0
        %7006 = vmatpush1.msra.mxu0 0.0
        %7007 = vmatprep.subr.mxu0 0.0
        %7008 = vmatpush1.msra.mxu0 0.0
        %7009 = vmatprep.subr.mxu0 0.0
        %7010 = vmatpush1.msra.mxu0 0.0
        %7011 = vmatprep.subr.mxu0 0.0
        %7012 = vmatpush1.msra.mxu0 0.0
        %7013 = vmatprep.subr.mxu0 0.0
        %7014 = vmatpush1.msra.mxu0 0.0
        %7015 = vmatprep.subr.mxu0 0.0
        %7016 = vmatpush1.msra.mxu0 %v295
        %7017 = vmatprep.subr.mxu0 0.0
        %7018 = vmatpush1.msra.mxu0 %v294
        %7019 = vmatprep.subr.mxu0 0.0
        %7020 = vmatpush2.msra.mxu0 0.0
        %7021 = vmatprep.subr.mxu0 0.0
        %7022 = vmatpush2.msra.mxu0 0.0
        %7023 = vmatprep.subr.mxu0 0.0
        %7024 = vmatpush2.msra.mxu0 0.0
        %7025 = vmatprep.subr.mxu0 0.0
        %7026 = vmatpush2.msra.mxu0 0.0
        %7027 = vmatprep.subr.mxu0 0.0
        %7028 = vmatpush2.msra.mxu0 0.0
        %7029 = vmatprep.subr.mxu0 0.0
        %7030 = vmatpush2.msra.mxu0 0.0
        %7031 = vmatprep.subr.mxu0 0.0
        %7032 = vmatpush2.msra.mxu0 0.0
        %7033 = vmatprep.subr.mxu0 0.0
        %7034 = vmatpush2.msra.mxu0 0.0
        %7035 = vmatprep.subr.mxu0 0.0
        %7036 = vmatpush2.msra.mxu0 0.0
        %7037 = vmatprep.subr.mxu0 0.0
        %7038 = vmatpush2.msra.mxu0 0.0
        %7039 = vmatprep.subr.mxu0 0.0
        %7040 = vmatpush2.msra.mxu0 0.0
        %7041 = vmatprep.subr.mxu0 0.0
        %7042 = vmatpush2.msra.mxu0 0.0
        %7043 = vmatprep.subr.mxu0 0.0
        %7044 = vmatpush2.msra.mxu0 0.0
        %7045 = vmatprep.subr.mxu0 0.0
        %7046 = vmatpush2.msra.mxu0 0.0
        %7047 = vmatprep.subr.mxu0 0.0
        %7048 = vmatpush2.msra.mxu0 0.0
        %7049 = vmatprep.subr.mxu0 0.0
        %7050 = vmatpush2.msra.mxu0 0.0
        %7051 = vmatprep.mubr.f32.mxu0 0.0
        %7052 = vmatmul.mubr.f32.gmra.mxu0 %v6976
        %v7053 = vpop.f32.mrf.mxu0
        %v7054 = vadd.f32 0.0, %v7053
        %v7055 = vpop.f32.mrf.mxu0
        %7056 = vmatprep.mubr.f32.mxu0 0.0
        %7057 = vmatmul.mubr.f32.gmra.mxu0 %v6979
        %v7058 = vpop.f32.mrf.mxu0
        %v7059 = vadd.f32 0.0, %v7058
        %v7060 = vpop.f32.mrf.mxu0
        %7061 = vmatprep.mubr.f32.mxu0 0.0
        %7062 = vmatmul.mubr.f32.gmra.mxu0 %v6982
        %v7063 = vpop.f32.mrf.mxu0
        %v7064 = vadd.f32 0.0, %v7063
        %v7065 = vpop.f32.mrf.mxu0
        %7066 = vmatprep.mubr.f32.mxu0 0.0
        %7067 = vmatmul.mubr.f32.gmra.mxu0 %v6985
        %v7068 = vpop.f32.mrf.mxu0
        %v7069 = vadd.f32 0.0, %v7068
        %v7070 = vpop.f32.mrf.mxu0
        %7071 = vdwg.mxu0
        %s7072 = sld [smem:[#allocation7 + $0x21]]
        %v7073 = vstv %s7072
        %v7074 = vmul.f32 %v7073, %v7054
        %v7075 = vmul.f32 %v7073, %v7059
        %v7076 = vmul.f32 %v7073, %v7064
        %v7077 = vmul.f32 %v7073, %v7069
        %v7078 = vadd.f32 %v6816, %v7074
        %v7079 = vadd.f32 %v6817, %v7075
        %v7080 = vadd.f32 %v6818, %v7076
        %v7081 = vadd.f32 %v6819, %v7077
        %s7082 = sld [smem:[#allocation7 + $0x45]]
        %v7083 = vstv %s7082
        %v7084 = vmul.f32 %v7083, %v7054
        %v7085 = vmul.f32 %v7083, %v7059
        %v7086 = vmul.f32 %v7083, %v7064
        %v7087 = vmul.f32 %v7083, %v7069
        %v7088 = vadd.f32 %v6826, %v7084
        %v7089 = vadd.f32 %v6827, %v7085
        %v7090 = vadd.f32 %v6828, %v7086
        %v7091 = vadd.f32 %v6829, %v7087
        %s7092 = sld [smem:[#allocation7 + $0x69]]
        %v7093 = vstv %s7092
        %v7094 = vmul.f32 %v7093, %v7054
        %v7095 = vmul.f32 %v7093, %v7059
        %v7096 = vmul.f32 %v7093, %v7064
        %v7097 = vmul.f32 %v7093, %v7069
        %v7098 = vadd.f32 %v6836, %v7094
        %v7099 = vadd.f32 %v6837, %v7095
        %v7100 = vadd.f32 %v6838, %v7096
        %v7101 = vadd.f32 %v6839, %v7097
        %s7102 = sld [smem:[#allocation7 + $0x8d]]
        %v7103 = vstv %s7102
        %v7104 = vmul.f32 %v7103, %v7054
        %v7105 = vmul.f32 %v7103, %v7059
        %v7106 = vmul.f32 %v7103, %v7064
        %v7107 = vmul.f32 %v7103, %v7069
        %v7108 = vadd.f32 %v6846, %v7104
        %v7109 = vadd.f32 %v6847, %v7105
        %v7110 = vadd.f32 %v6848, %v7106
        %v7111 = vadd.f32 %v6849, %v7107
        %s7112 = sld [smem:[#allocation7 + $0xb1]]
        %v7113 = vstv %s7112
        %v7114 = vmul.f32 %v7113, %v7054
        %v7115 = vmul.f32 %v7113, %v7059
        %v7116 = vmul.f32 %v7113, %v7064
        %v7117 = vmul.f32 %v7113, %v7069
        %v7118 = vadd.f32 %v6856, %v7114
        %v7119 = vadd.f32 %v6857, %v7115
        %v7120 = vadd.f32 %v6858, %v7116
        %v7121 = vadd.f32 %v6859, %v7117
        %s7122 = sld [smem:[#allocation7 + $0xd5]]
        %v7123 = vstv %s7122
        %v7124 = vmul.f32 %v7123, %v7054
        %v7125 = vmul.f32 %v7123, %v7059
        %v7126 = vmul.f32 %v7123, %v7064
        %v7127 = vmul.f32 %v7123, %v7069
        %v7128 = vadd.f32 %v6866, %v7124
        %v7129 = vadd.f32 %v6867, %v7125
        %v7130 = vadd.f32 %v6868, %v7126
        %v7131 = vadd.f32 %v6869, %v7127
        %s7132 = sld [smem:[#allocation7 + $0xf9]]
        %v7133 = vstv %s7132
        %v7134 = vmul.f32 %v7133, %v7054
        %v7135 = vmul.f32 %v7133, %v7059
        %v7136 = vmul.f32 %v7133, %v7064
        %v7137 = vmul.f32 %v7133, %v7069
        %v7138 = vadd.f32 %v6876, %v7134
        %v7139 = vadd.f32 %v6877, %v7135
        %v7140 = vadd.f32 %v6878, %v7136
        %v7141 = vadd.f32 %v6879, %v7137
        %s7142 = sld [smem:[#allocation7 + $0x11d]]
        %v7143 = vstv %s7142
        %v7144 = vmul.f32 %v7143, %v7054
        %v7145 = vmul.f32 %v7143, %v7059
        %v7146 = vmul.f32 %v7143, %v7064
        %v7147 = vmul.f32 %v7143, %v7069
        %v7148 = vadd.f32 %v6886, %v7144
        %v7149 = vadd.f32 %v6887, %v7145
        %v7150 = vadd.f32 %v6888, %v7146
        %v7151 = vadd.f32 %v6889, %v7147
        %7152 = vmatprep.subr.mxu0 0.0
        %7153 = vmatpush1.msra.mxu0 0.0
        %7154 = vmatprep.subr.mxu0 0.0
        %7155 = vmatpush1.msra.mxu0 0.0
        %7156 = vmatprep.subr.mxu0 0.0
        %7157 = vmatpush1.msra.mxu0 0.0
        %7158 = vmatprep.subr.mxu0 0.0
        %7159 = vmatpush1.msra.mxu0 0.0
        %7160 = vmatprep.subr.mxu0 0.0
        %7161 = vmatpush1.msra.mxu0 0.0
        %7162 = vmatprep.subr.mxu0 0.0
        %7163 = vmatpush1.msra.mxu0 0.0
        %7164 = vmatprep.subr.mxu0 0.0
        %7165 = vmatpush1.msra.mxu0 0.0
        %7166 = vmatprep.subr.mxu0 0.0
        %7167 = vmatpush1.msra.mxu0 0.0
        %7168 = vmatprep.subr.mxu0 0.0
        %7169 = vmatpush1.msra.mxu0 0.0
        %7170 = vmatprep.subr.mxu0 0.0
        %7171 = vmatpush1.msra.mxu0 0.0
        %7172 = vmatprep.subr.mxu0 0.0
        %7173 = vmatpush1.msra.mxu0 0.0
        %7174 = vmatprep.subr.mxu0 0.0
        %7175 = vmatpush1.msra.mxu0 0.0
        %7176 = vmatprep.subr.mxu0 0.0
        %7177 = vmatpush1.msra.mxu0 0.0
        %7178 = vmatprep.subr.mxu0 0.0
        %7179 = vmatpush1.msra.mxu0 0.0
        %7180 = vmatprep.subr.mxu0 0.0
        %7181 = vmatpush1.msra.mxu0 %v303
        %7182 = vmatprep.subr.mxu0 0.0
        %7183 = vmatpush1.msra.mxu0 %v302
        %7184 = vmatprep.subr.mxu0 0.0
        %7185 = vmatpush2.msra.mxu0 0.0
        %7186 = vmatprep.subr.mxu0 0.0
        %7187 = vmatpush2.msra.mxu0 0.0
        %7188 = vmatprep.subr.mxu0 0.0
        %7189 = vmatpush2.msra.mxu0 0.0
        %7190 = vmatprep.subr.mxu0 0.0
        %7191 = vmatpush2.msra.mxu0 0.0
        %7192 = vmatprep.subr.mxu0 0.0
        %7193 = vmatpush2.msra.mxu0 0.0
        %7194 = vmatprep.subr.mxu0 0.0
        %7195 = vmatpush2.msra.mxu0 0.0
        %7196 = vmatprep.subr.mxu0 0.0
        %7197 = vmatpush2.msra.mxu0 0.0
        %7198 = vmatprep.subr.mxu0 0.0
        %7199 = vmatpush2.msra.mxu0 0.0
        %7200 = vmatprep.subr.mxu0 0.0
        %7201 = vmatpush2.msra.mxu0 0.0
        %7202 = vmatprep.subr.mxu0 0.0
        %7203 = vmatpush2.msra.mxu0 0.0
        %7204 = vmatprep.subr.mxu0 0.0
        %7205 = vmatpush2.msra.mxu0 0.0
        %7206 = vmatprep.subr.mxu0 0.0
        %7207 = vmatpush2.msra.mxu0 0.0
        %7208 = vmatprep.subr.mxu0 0.0
        %7209 = vmatpush2.msra.mxu0 0.0
        %7210 = vmatprep.subr.mxu0 0.0
        %7211 = vmatpush2.msra.mxu0 0.0
        %7212 = vmatprep.subr.mxu0 0.0
        %7213 = vmatpush2.msra.mxu0 0.0
        %7214 = vmatprep.subr.mxu0 0.0
        %7215 = vmatpush2.msra.mxu0 0.0
        %7216 = vmatprep.mubr.f32.mxu0 0.0
        %7217 = vmatmul.mubr.f32.gmra.mxu0 %v6976
        %v7218 = vpop.f32.mrf.mxu0
        %v7219 = vadd.f32 0.0, %v7218
        %v7220 = vpop.f32.mrf.mxu0
        %7221 = vmatprep.mubr.f32.mxu0 0.0
        %7222 = vmatmul.mubr.f32.gmra.mxu0 %v6979
        %v7223 = vpop.f32.mrf.mxu0
        %v7224 = vadd.f32 0.0, %v7223
        %v7225 = vpop.f32.mrf.mxu0
        %7226 = vmatprep.mubr.f32.mxu0 0.0
        %7227 = vmatmul.mubr.f32.gmra.mxu0 %v6982
        %v7228 = vpop.f32.mrf.mxu0
        %v7229 = vadd.f32 0.0, %v7228
        %v7230 = vpop.f32.mrf.mxu0
        %7231 = vmatprep.mubr.f32.mxu0 0.0
        %7232 = vmatmul.mubr.f32.gmra.mxu0 %v6985
        %v7233 = vpop.f32.mrf.mxu0
        %v7234 = vadd.f32 0.0, %v7233
        %v7235 = vpop.f32.mrf.mxu0
        %7236 = vdwg.mxu0
        %s7237 = sld [smem:[#allocation7 + $0x22]]
        %v7238 = vstv %s7237
        %v7239 = vmul.f32 %v7238, %v7219
        %v7240 = vmul.f32 %v7238, %v7224
        %v7241 = vmul.f32 %v7238, %v7229
        %v7242 = vmul.f32 %v7238, %v7234
        %v7243 = vadd.f32 %v7078, %v7239
        %v7244 = vadd.f32 %v7079, %v7240
        %v7245 = vadd.f32 %v7080, %v7241
        %v7246 = vadd.f32 %v7081, %v7242
        %s7247 = sld [smem:[#allocation7 + $0x46]]
        %v7248 = vstv %s7247
        %v7249 = vmul.f32 %v7248, %v7219
        %v7250 = vmul.f32 %v7248, %v7224
        %v7251 = vmul.f32 %v7248, %v7229
        %v7252 = vmul.f32 %v7248, %v7234
        %v7253 = vadd.f32 %v7088, %v7249
        %v7254 = vadd.f32 %v7089, %v7250
        %v7255 = vadd.f32 %v7090, %v7251
        %v7256 = vadd.f32 %v7091, %v7252
        %s7257 = sld [smem:[#allocation7 + $0x6a]]
        %v7258 = vstv %s7257
        %v7259 = vmul.f32 %v7258, %v7219
        %v7260 = vmul.f32 %v7258, %v7224
        %v7261 = vmul.f32 %v7258, %v7229
        %v7262 = vmul.f32 %v7258, %v7234
        %v7263 = vadd.f32 %v7098, %v7259
        %v7264 = vadd.f32 %v7099, %v7260
        %v7265 = vadd.f32 %v7100, %v7261
        %v7266 = vadd.f32 %v7101, %v7262
        %s7267 = sld [smem:[#allocation7 + $0x8e]]
        %v7268 = vstv %s7267
        %v7269 = vmul.f32 %v7268, %v7219
        %v7270 = vmul.f32 %v7268, %v7224
        %v7271 = vmul.f32 %v7268, %v7229
        %v7272 = vmul.f32 %v7268, %v7234
        %v7273 = vadd.f32 %v7108, %v7269
        %v7274 = vadd.f32 %v7109, %v7270
        %v7275 = vadd.f32 %v7110, %v7271
        %v7276 = vadd.f32 %v7111, %v7272
        %s7277 = sld [smem:[#allocation7 + $0xb2]]
        %v7278 = vstv %s7277
        %v7279 = vmul.f32 %v7278, %v7219
        %v7280 = vmul.f32 %v7278, %v7224
        %v7281 = vmul.f32 %v7278, %v7229
        %v7282 = vmul.f32 %v7278, %v7234
        %v7283 = vadd.f32 %v7118, %v7279
        %v7284 = vadd.f32 %v7119, %v7280
        %v7285 = vadd.f32 %v7120, %v7281
        %v7286 = vadd.f32 %v7121, %v7282
        %s7287 = sld [smem:[#allocation7 + $0xd6]]
        %v7288 = vstv %s7287
        %v7289 = vmul.f32 %v7288, %v7219
        %v7290 = vmul.f32 %v7288, %v7224
        %v7291 = vmul.f32 %v7288, %v7229
        %v7292 = vmul.f32 %v7288, %v7234
        %v7293 = vadd.f32 %v7128, %v7289
        %v7294 = vadd.f32 %v7129, %v7290
        %v7295 = vadd.f32 %v7130, %v7291
        %v7296 = vadd.f32 %v7131, %v7292
        %s7297 = sld [smem:[#allocation7 + $0xfa]]
        %v7298 = vstv %s7297
        %v7299 = vmul.f32 %v7298, %v7219
        %v7300 = vmul.f32 %v7298, %v7224
        %v7301 = vmul.f32 %v7298, %v7229
        %v7302 = vmul.f32 %v7298, %v7234
        %v7303 = vadd.f32 %v7138, %v7299
        %v7304 = vadd.f32 %v7139, %v7300
        %v7305 = vadd.f32 %v7140, %v7301
        %v7306 = vadd.f32 %v7141, %v7302
        %s7307 = sld [smem:[#allocation7 + $0x11e]]
        %v7308 = vstv %s7307
        %v7309 = vmul.f32 %v7308, %v7219
        %v7310 = vmul.f32 %v7308, %v7224
        %v7311 = vmul.f32 %v7308, %v7229
        %v7312 = vmul.f32 %v7308, %v7234
        %v7313 = vadd.f32 %v7148, %v7309
        %v7314 = vadd.f32 %v7149, %v7310
        %v7315 = vadd.f32 %v7150, %v7311
        %v7316 = vadd.f32 %v7151, %v7312
        %7317 = vmatprep.subr.mxu0 0.0
        %7318 = vmatpush1.msra.mxu0 0.0
        %7319 = vmatprep.subr.mxu0 0.0
        %7320 = vmatpush1.msra.mxu0 0.0
        %7321 = vmatprep.subr.mxu0 0.0
        %7322 = vmatpush1.msra.mxu0 0.0
        %7323 = vmatprep.subr.mxu0 0.0
        %7324 = vmatpush1.msra.mxu0 0.0
        %7325 = vmatprep.subr.mxu0 0.0
        %7326 = vmatpush1.msra.mxu0 0.0
        %7327 = vmatprep.subr.mxu0 0.0
        %7328 = vmatpush1.msra.mxu0 0.0
        %7329 = vmatprep.subr.mxu0 0.0
        %7330 = vmatpush1.msra.mxu0 0.0
        %7331 = vmatprep.subr.mxu0 0.0
        %7332 = vmatpush1.msra.mxu0 0.0
        %7333 = vmatprep.subr.mxu0 0.0
        %7334 = vmatpush1.msra.mxu0 0.0
        %7335 = vmatprep.subr.mxu0 0.0
        %7336 = vmatpush1.msra.mxu0 0.0
        %7337 = vmatprep.subr.mxu0 0.0
        %7338 = vmatpush1.msra.mxu0 0.0
        %7339 = vmatprep.subr.mxu0 0.0
        %7340 = vmatpush1.msra.mxu0 0.0
        %7341 = vmatprep.subr.mxu0 0.0
        %7342 = vmatpush1.msra.mxu0 0.0
        %7343 = vmatprep.subr.mxu0 0.0
        %7344 = vmatpush1.msra.mxu0 0.0
        %7345 = vmatprep.subr.mxu0 0.0
        %7346 = vmatpush1.msra.mxu0 %v313
        %7347 = vmatprep.subr.mxu0 0.0
        %7348 = vmatpush1.msra.mxu0 %v312
        %7349 = vmatprep.subr.mxu0 0.0
        %7350 = vmatpush2.msra.mxu0 0.0
        %7351 = vmatprep.subr.mxu0 0.0
        %7352 = vmatpush2.msra.mxu0 0.0
        %7353 = vmatprep.subr.mxu0 0.0
        %7354 = vmatpush2.msra.mxu0 0.0
        %7355 = vmatprep.subr.mxu0 0.0
        %7356 = vmatpush2.msra.mxu0 0.0
        %7357 = vmatprep.subr.mxu0 0.0
        %7358 = vmatpush2.msra.mxu0 0.0
        %7359 = vmatprep.subr.mxu0 0.0
        %7360 = vmatpush2.msra.mxu0 0.0
        %7361 = vmatprep.subr.mxu0 0.0
        %7362 = vmatpush2.msra.mxu0 0.0
        %7363 = vmatprep.subr.mxu0 0.0
        %7364 = vmatpush2.msra.mxu0 0.0
        %7365 = vmatprep.subr.mxu0 0.0
        %7366 = vmatpush2.msra.mxu0 0.0
        %7367 = vmatprep.subr.mxu0 0.0
        %7368 = vmatpush2.msra.mxu0 0.0
        %7369 = vmatprep.subr.mxu0 0.0
        %7370 = vmatpush2.msra.mxu0 0.0
        %7371 = vmatprep.subr.mxu0 0.0
        %7372 = vmatpush2.msra.mxu0 0.0
        %7373 = vmatprep.subr.mxu0 0.0
        %7374 = vmatpush2.msra.mxu0 0.0
        %7375 = vmatprep.subr.mxu0 0.0
        %7376 = vmatpush2.msra.mxu0 0.0
        %7377 = vmatprep.subr.mxu0 0.0
        %7378 = vmatpush2.msra.mxu0 0.0
        %7379 = vmatprep.subr.mxu0 0.0
        %7380 = vmatpush2.msra.mxu0 0.0
        %7381 = vmatprep.mubr.f32.mxu0 0.0
        %7382 = vmatmul.mubr.f32.gmra.mxu0 %v6976
        %v7383 = vpop.f32.mrf.mxu0
        %v7384 = vadd.f32 0.0, %v7383
        %v7385 = vpop.f32.mrf.mxu0
        %7386 = vmatprep.mubr.f32.mxu0 0.0
        %7387 = vmatmul.mubr.f32.gmra.mxu0 %v6979
        %v7388 = vpop.f32.mrf.mxu0
        %v7389 = vadd.f32 0.0, %v7388
        %v7390 = vpop.f32.mrf.mxu0
        %7391 = vmatprep.mubr.f32.mxu0 0.0
        %7392 = vmatmul.mubr.f32.gmra.mxu0 %v6982
        %v7393 = vpop.f32.mrf.mxu0
        %v7394 = vadd.f32 0.0, %v7393
        %v7395 = vpop.f32.mrf.mxu0
        %7396 = vmatprep.mubr.f32.mxu0 0.0
        %7397 = vmatmul.mubr.f32.gmra.mxu0 %v6985
        %v7398 = vpop.f32.mrf.mxu0
        %v7399 = vadd.f32 0.0, %v7398
        %v7400 = vpop.f32.mrf.mxu0
        %7401 = vdwg.mxu0
        %s7402 = sld [smem:[#allocation7 + $0x23]]
        %v7403 = vstv %s7402
        %v7404 = vmul.f32 %v7403, %v7384
        %v7405 = vmul.f32 %v7403, %v7389
        %v7406 = vmul.f32 %v7403, %v7394
        %v7407 = vmul.f32 %v7403, %v7399
        %v7408 = vadd.f32 %v7243, %v7404
        %v7409 = vadd.f32 %v7244, %v7405
        %v7410 = vadd.f32 %v7245, %v7406
        %v7411 = vadd.f32 %v7246, %v7407
        %s7412 = sld [smem:[#allocation7 + $0x47]]
        %v7413 = vstv %s7412
        %v7414 = vmul.f32 %v7413, %v7384
        %v7415 = vmul.f32 %v7413, %v7389
        %v7416 = vmul.f32 %v7413, %v7394
        %v7417 = vmul.f32 %v7413, %v7399
        %v7418 = vadd.f32 %v7253, %v7414
        %v7419 = vadd.f32 %v7254, %v7415
        %v7420 = vadd.f32 %v7255, %v7416
        %v7421 = vadd.f32 %v7256, %v7417
        %s7422 = sld [smem:[#allocation7 + $0x6b]]
        %v7423 = vstv %s7422
        %v7424 = vmul.f32 %v7423, %v7384
        %v7425 = vmul.f32 %v7423, %v7389
        %v7426 = vmul.f32 %v7423, %v7394
        %v7427 = vmul.f32 %v7423, %v7399
        %v7428 = vadd.f32 %v7263, %v7424
        %v7429 = vadd.f32 %v7264, %v7425
        %v7430 = vadd.f32 %v7265, %v7426
        %v7431 = vadd.f32 %v7266, %v7427
        %s7432 = sld [smem:[#allocation7 + $0x8f]]
        %v7433 = vstv %s7432
        %v7434 = vmul.f32 %v7433, %v7384
        %v7435 = vmul.f32 %v7433, %v7389
        %v7436 = vmul.f32 %v7433, %v7394
        %v7437 = vmul.f32 %v7433, %v7399
        %v7438 = vadd.f32 %v7273, %v7434
        %v7439 = vadd.f32 %v7274, %v7435
        %v7440 = vadd.f32 %v7275, %v7436
        %v7441 = vadd.f32 %v7276, %v7437
        %s7442 = sld [smem:[#allocation7 + $0xb3]]
        %v7443 = vstv %s7442
        %v7444 = vmul.f32 %v7443, %v7384
        %v7445 = vmul.f32 %v7443, %v7389
        %v7446 = vmul.f32 %v7443, %v7394
        %v7447 = vmul.f32 %v7443, %v7399
        %v7448 = vadd.f32 %v7283, %v7444
        %v7449 = vadd.f32 %v7284, %v7445
        %v7450 = vadd.f32 %v7285, %v7446
        %v7451 = vadd.f32 %v7286, %v7447
        %s7452 = sld [smem:[#allocation7 + $0xd7]]
        %v7453 = vstv %s7452
        %v7454 = vmul.f32 %v7453, %v7384
        %v7455 = vmul.f32 %v7453, %v7389
        %v7456 = vmul.f32 %v7453, %v7394
        %v7457 = vmul.f32 %v7453, %v7399
        %v7458 = vadd.f32 %v7293, %v7454
        %v7459 = vadd.f32 %v7294, %v7455
        %v7460 = vadd.f32 %v7295, %v7456
        %v7461 = vadd.f32 %v7296, %v7457
        %s7462 = sld [smem:[#allocation7 + $0xfb]]
        %v7463 = vstv %s7462
        %v7464 = vmul.f32 %v7463, %v7384
        %v7465 = vmul.f32 %v7463, %v7389
        %v7466 = vmul.f32 %v7463, %v7394
        %v7467 = vmul.f32 %v7463, %v7399
        %v7468 = vadd.f32 %v7303, %v7464
        %v7469 = vadd.f32 %v7304, %v7465
        %v7470 = vadd.f32 %v7305, %v7466
        %v7471 = vadd.f32 %v7306, %v7467
        %s7472 = sld [smem:[#allocation7 + $0x11f]]
        %v7473 = vstv %s7472
        %v7474 = vmul.f32 %v7473, %v7384
        %v7475 = vmul.f32 %v7473, %v7389
        %v7476 = vmul.f32 %v7473, %v7394
        %v7477 = vmul.f32 %v7473, %v7399
        %v7478 = vadd.f32 %v7313, %v7474
        %v7479 = vadd.f32 %v7314, %v7475
        %v7480 = vadd.f32 %v7315, %v7476
        %v7481 = vadd.f32 %v7316, %v7477
        %vm7482 = vcmask 261120
        %7483 = vst.msk [vmem:[%s213] sm:$0xff] %vm7482, %v7408
        %7484 = vst.msk [vmem:[%s213 + $0x8] sm:$0xff] %vm7482, %v7409
        %7485 = vst.msk [vmem:[%s213 + $0x10] sm:$0xff] %vm7482, %v7410
        %7486 = vst.msk [vmem:[%s213 + $0x18] sm:$0xff] %vm7482, %v7411
        %s7487 = scalar_lea.vmem %s213, 32 [#allocation9]
        %7488 = vst.msk [vmem:[%s7487] sm:$0xff] %vm7482, %v7418
        %7489 = vst.msk [vmem:[%s7487 + $0x8] sm:$0xff] %vm7482, %v7419
        %7490 = vst.msk [vmem:[%s7487 + $0x10] sm:$0xff] %vm7482, %v7420
        %7491 = vst.msk [vmem:[%s7487 + $0x18] sm:$0xff] %vm7482, %v7421
        %s7492 = scalar_lea.vmem %s213, 64 [#allocation9]
        %7493 = vst.msk [vmem:[%s7492] sm:$0xff] %vm7482, %v7428
        %7494 = vst.msk [vmem:[%s7492 + $0x8] sm:$0xff] %vm7482, %v7429
        %7495 = vst.msk [vmem:[%s7492 + $0x10] sm:$0xff] %vm7482, %v7430
        %7496 = vst.msk [vmem:[%s7492 + $0x18] sm:$0xff] %vm7482, %v7431
        %s7497 = scalar_lea.vmem %s213, 96 [#allocation9]
        %7498 = vst.msk [vmem:[%s7497] sm:$0xff] %vm7482, %v7438
        %7499 = vst.msk [vmem:[%s7497 + $0x8] sm:$0xff] %vm7482, %v7439
        %7500 = vst.msk [vmem:[%s7497 + $0x10] sm:$0xff] %vm7482, %v7440
        %7501 = vst.msk [vmem:[%s7497 + $0x18] sm:$0xff] %vm7482, %v7441
        %s7502 = scalar_lea.vmem %s213, 128 [#allocation9]
        %7503 = vst.msk [vmem:[%s7502] sm:$0xff] %vm7482, %v7448
        %7504 = vst.msk [vmem:[%s7502 + $0x8] sm:$0xff] %vm7482, %v7449
        %7505 = vst.msk [vmem:[%s7502 + $0x10] sm:$0xff] %vm7482, %v7450
        %7506 = vst.msk [vmem:[%s7502 + $0x18] sm:$0xff] %vm7482, %v7451
        %s7507 = scalar_lea.vmem %s213, 160 [#allocation9]
        %7508 = vst.msk [vmem:[%s7507] sm:$0xff] %vm7482, %v7458
        %7509 = vst.msk [vmem:[%s7507 + $0x8] sm:$0xff] %vm7482, %v7459
        %7510 = vst.msk [vmem:[%s7507 + $0x10] sm:$0xff] %vm7482, %v7460
        %7511 = vst.msk [vmem:[%s7507 + $0x18] sm:$0xff] %vm7482, %v7461
        %s7512 = scalar_lea.vmem %s213, 192 [#allocation9]
        %7513 = vst.msk [vmem:[%s7512] sm:$0xff] %vm7482, %v7468
        %7514 = vst.msk [vmem:[%s7512 + $0x8] sm:$0xff] %vm7482, %v7469
        %7515 = vst.msk [vmem:[%s7512 + $0x10] sm:$0xff] %vm7482, %v7470
        %7516 = vst.msk [vmem:[%s7512 + $0x18] sm:$0xff] %vm7482, %v7471
        %s7517 = scalar_lea.vmem %s213, 224 [#allocation9]
        %7518 = vst.msk [vmem:[%s7517] sm:$0xff] %vm7482, %v7478
        %7519 = vst.msk [vmem:[%s7517 + $0x8] sm:$0xff] %vm7482, %v7479
        %7520 = vst.msk [vmem:[%s7517 + $0x10] sm:$0xff] %vm7482, %v7480
        %7521 = vst.msk [vmem:[%s7517 + $0x18] sm:$0xff] %vm7482, %v7481
        %s7522 = sand.u32 %s98, 1
        %s7523 = scalar_lea.sflag [#allocation4], %s7522
        %s7524 = sand.u32 %s98, 1
        %s7525 = smul.addr %s7524, 256
        %s7526 = scalar_lea.vmem [#allocation9], %s7525
        // Predicated region
        $region45: #{tpu_custom_call.1} parent=31 // pred_check
          %p7527 = pneg %p108
        $region46: #{tpu_custom_call.1} parent=31 // pred_check_branch
          %7529 = sbr.rel (%p7527) target = $region48
        $region47: #{tpu_custom_call.1} parent=31 // pred_region
          %s7531 = ssub.s32 4096, 4096
          %7532 = vsyncadd %s7523, %s7531
          %s7533 = smul.addr %s22, 32
          %s7534 = smul.addr %s7533, 128
          %s7535 = scalar_lea.hbm %s3, %s7534
          %s7536 = sshll.u32 %s7526, 4
          %s7537 = int_to_ptr.vmem [resolvable:$true] %s7536
          %7542 = dma.vmem_to_hbm [thread:$0]  %s7537, 4096, %s7535, %s7523, 128, 128, 8
        $region48: #{tpu_custom_call.1} parent=31 // pred_fallthru
          _
      $region32: #{tpu_custom_call.1} parent=5 // pred_fallthru
        _
      %p7543 = scmp.le.s32.totalorder 2, %s17
      // Predicated region
      $region49: #{tpu_custom_call.1} parent=5 // pred_check
        %p7544 = pneg %p7543
      $region50: #{tpu_custom_call.1} parent=5 // pred_check_branch
        %7546 = sbr.rel (%p7544) target = $region52
      $region51: #{tpu_custom_call.1} parent=5 // pred_region
        %s7547 = ssub.s32 %s17, 2
        // Predicated region
        $region53: #{tpu_custom_call.1} parent=51 // pred_check
          %p7548 = pneg %p114
        $region54: #{tpu_custom_call.1} parent=51 // pred_check_branch
          %7550 = sbr.rel (%p7548) target = $region56
        $region55: #{tpu_custom_call.1} parent=51 // pred_region
          %s7551 = sand.u32 %s99, 1
          %s7552 = scalar_lea.sflag [#allocation4], %s7551
          %s7553 = sand.u32 %s99, 1
          %s7554 = smul.addr %s7553, 256
          %s7555 = scalar_lea.vmem [#allocation9], %s7554
          %7556 = dma.done %s7552, 4096
        $region56: #{tpu_custom_call.1} parent=51 // pred_fallthru
          _
      $region52: #{tpu_custom_call.1} parent=5 // pred_fallthru
        _
    $region6: #{tpu_custom_call.1} parent=1 // loop_footer
      %s21 = sadd.s32 1, %s17
    $region7: #{tpu_custom_call.1} parent=1 // loop_footer_branch
      %16 = sbr.rel target = $region3
    $region8: #{tpu_custom_call.1} parent=1 // loop_exit
      _
    %7557 = vsyncpa [#allocation3], 1
    %s7558 = scalar_lea.sflag [#allocation3], 1
    %7559 = vsyncpa %s7558, 1
    %7560 = vsyncpa [#allocation4], 1
    %s7561 = scalar_lea.sflag [#allocation4], 1
    %7562 = vsyncpa %s7561, 1
    %7563 = vsyncpa [#allocation5], 1
    %s7564 = scalar_lea.sflag [#allocation5], 1
    %7565 = vsyncpa %s7564, 1
    %7566 = vsyncpa [#allocation6], 1
    %s7567 = scalar_lea.sflag [#allocation6], 1
    %7568 = vsyncpa %s7567, 1

</llo_original>
